<compile_context>
chip_gen: v7x
topology: tpu7x:2x2x1
jax: 0.10.0
libtpu: 0.0.40
codegen_flags: <defaults>
</compile_context>

<pallas_src>
import functools
import math

import jax
import jax.numpy as jnp
from jax.experimental import pallas as pl
from jax.experimental.pallas import tpu as pltpu

COMPUTE_DTYPE = jnp.float32   # flip to jnp.bfloat16 for MXU-native inputs

NUM_LAYERS = 8
GROWTH = 16                    # every conv in the block emits 16 channels
OUT_CH = NUM_LAYERS * GROWTH   # 128


def _prelu(v, alpha):
    return jnp.where(v >= 0.0, v, alpha * v)


def _dense_block_kernel(x_ref, mask_ref, alpha_ref, *rest, sp, wp):
    """One grid step == one image.

      x_ref:    (Cin0, sp)     zero-padded flattened-spatial slab
      mask_ref: (1, sp)        1.0 at interior pixels, 0.0 at pad positions
      alpha_ref:(1, 1)         PReLU slope (SMEM)
      w_i:      (144, Cin_i)   9 taps stacked along rows (tap t -> rows 16t:16t+16)
      b_i:      (16, 1)
      out_ref:  (128, sp)      cout8_dense slab (also serves as the growing concat)
      tmp_ref:  (16, sp) VMEM  holds conv1 (single-activated) for conv2's input
    """
    w_refs = rest[:NUM_LAYERS]
    b_refs = rest[NUM_LAYERS:2 * NUM_LAYERS]
    out_ref = rest[2 * NUM_LAYERS]
    tmp_ref = rest[2 * NUM_LAYERS + 1]

    alpha = alpha_ref[0, 0]
    mask = mask_ref[...]                                    # (1, sp)

    def conv3x3(src, w_ref, b_ref):
        # src: (Cin, sp) value.  One stacked matmul for all 9 taps, then shift
        # the 16-row tap outputs (cheaper than shifting the wide input).
        z = jnp.dot(w_ref[...].astype(COMPUTE_DTYPE),
                    src.astype(COMPUTE_DTYPE),
                    preferred_element_type=jnp.float32)      # (144, sp)
        acc = z[4 * GROWTH:5 * GROWTH, :]                    # center tap, shift 0
        for t in range(9):
            if t == 4:
                continue
            di, dj = divmod(t, 3)
            shift = (di - 1) * wp + (dj - 1)
            # want acc[q] += z_tap[q + shift]  =>  roll amount = (-shift) mod sp
            acc = acc + pltpu.roll(z[t * GROWTH:(t + 1) * GROWTH, :],
                                   (-shift) % sp, axis=1)
        y = acc + b_ref[...]                                 # (16,1) lane-broadcast
        return mask * _prelu(y, alpha)                       # re-zero pad positions

    # conv1: input is x itself; keep the single-activated result for conv2.
    tmp_ref[...] = conv3x3(x_ref[...], w_refs[0], b_refs[0])
    # conv2: input is conv1 (single-activated), NOT a re-activated concat.
    conv2 = conv3x3(tmp_ref[...], w_refs[1], b_refs[1])
    # cout_dense rows are PReLU(conv_i); grow the concat in the output buffer.
    out_ref[0:GROWTH, :] = _prelu(tmp_ref[...], alpha)
    out_ref[GROWTH:2 * GROWTH, :] = _prelu(conv2, alpha)
    # conv3..conv8: input is PReLU(concat(conv1..conv_{i})) == out_ref[0:rows].
    for i in range(2, NUM_LAYERS):
        rows = i * GROWTH
        conv_i = conv3x3(out_ref[0:rows, :], w_refs[i], b_refs[i])
        out_ref[rows:rows + GROWTH, :] = _prelu(conv_i, alpha)
    # out_ref now holds cout8_dense = PReLU(concat(conv1..conv8)).


def dense_block_forward(x, params):
    """x: (N, C_in, H, W) float32 (NCHW).  Returns (N, 128, H, W)."""
    n, c0, h, w = x.shape
    alpha = jnp.asarray(params["alpha"], jnp.float32).reshape(1, 1)
    w_list = list(params["w"])
    b_list = list(params["b"])

    # Pad channel_in up to a sublane multiple (zero channels contribute zero).
    c0p = ((c0 + 7) // 8) * 8
    if c0p != c0:
        x = jnp.pad(x, ((0, 0), (0, c0p - c0), (0, 0), (0, 0)))
        w_list[0] = jnp.pad(w_list[0], ((0, 0), (0, c0p - c0), (0, 0), (0, 0)))

    hp, wp = h + 2, w + 2
    sp_raw = hp * wp
    sp = max(128, ((sp_raw + 127) // 128) * 128)            # lane-dense flat size

    # One zero-padded (channels, flat-spatial) slab per image (single relayout).
    x_pad = jnp.pad(x, ((0, 0), (0, 0), (1, 1), (1, 1))).reshape(n, c0p, sp_raw)
    x_slab = jnp.pad(x_pad, ((0, 0), (0, 0), (0, sp - sp_raw)))

    # Interior mask in flat padded coordinates.
    q = jnp.arange(sp)
    r, c = q // wp, q % wp
    mask = ((q < sp_raw) & (r >= 1) & (r <= h) & (c >= 1) & (c <= w))
    mask = mask.astype(jnp.float32).reshape(1, sp)

    # Per-layer weights as (9 taps * 16, Cin); biases as (16, 1).
    w_all = [jnp.transpose(wi, (2, 3, 0, 1)).reshape(9 * GROWTH, wi.shape[1])
             .astype(jnp.float32) for wi in w_list]
    b_cols = [bi.reshape(GROWTH, 1).astype(jnp.float32) for bi in b_list]
    cins = [wi.shape[1] for wi in w_list]

    kernel = functools.partial(_dense_block_kernel, sp=sp, wp=wp)
    in_specs = (
        [pl.BlockSpec((None, c0p, sp), lambda i: (i, 0, 0)),          # x slab
         pl.BlockSpec((1, sp), lambda i: (0, 0)),                     # mask
         pl.BlockSpec(memory_space=pltpu.MemorySpace.SMEM)]           # alpha
        + [pl.BlockSpec((9 * GROWTH, ci), lambda i: (0, 0)) for ci in cins]
        + [pl.BlockSpec((GROWTH, 1), lambda i: (0, 0)) for _ in range(NUM_LAYERS)]
    )

    out_slab = pl.pallas_call(
        kernel,
        out_shape=jax.ShapeDtypeStruct((n, OUT_CH, sp), jnp.float32),
        grid=(n,),
        in_specs=in_specs,
        out_specs=pl.BlockSpec((None, OUT_CH, sp), lambda i: (i, 0, 0)),
        scratch_shapes=[pltpu.VMEM((GROWTH, sp), jnp.float32)],       # conv1 slab
        compiler_params=pltpu.CompilerParams(
            dimension_semantics=("parallel",)),
    )(x_slab, mask, alpha, *w_all, *b_cols)

    out = out_slab[:, :, :sp_raw].reshape(n, OUT_CH, hp, wp)
    return out[:, :, 1:1 + h, 1:1 + w]


# ----------------------------------------------------------------------------
# Parameter init (mirrors PyTorch nn.Conv2d / nn.PReLU defaults)
# ----------------------------------------------------------------------------
def init_dense_block(key, channel_in):
    cins = [channel_in] + [GROWTH * i for i in range(1, NUM_LAYERS)]
    ws, bs = [], []
    for kk, cin in zip(jax.random.split(key, NUM_LAYERS), cins):
        fan_in = cin * 9
        bound = 1.0 / math.sqrt(fan_in)
        wk, bk = jax.random.split(kk)
        ws.append(jax.random.uniform(wk, (GROWTH, cin, 3, 3), jnp.float32,
                                     -bound, bound))
        bs.append(jax.random.uniform(bk, (GROWTH,), jnp.float32, -bound, bound))
    return {"w": ws, "b": bs, "alpha": jnp.array(0.25, jnp.float32)}


# ----------------------------------------------------------------------------
# Pure-JAX reference (matches the PyTorch module semantics exactly)
# ----------------------------------------------------------------------------
def dense_block_reference(x, params):
    alpha = params["alpha"]
    act = lambda v: jnp.where(v >= 0.0, v, alpha * v)

    def conv(v, wi, bi):
        y = jax.lax.conv_general_dilated(
            v, wi, window_strides=(1, 1), padding=((1, 1), (1, 1)),
            dimension_numbers=("NCHW", "OIHW", "NCHW"),
            precision=jax.lax.Precision.HIGHEST)
        return y + bi.reshape(1, -1, 1, 1)

    feats = []
    cur = x
    for i in range(NUM_LAYERS):
        ci = act(conv(cur, params["w"][i], params["b"][i]))
        feats.append(ci)
        cur = ci if i == 0 else act(jnp.concatenate(feats, axis=1))
    return cur


# ----------------------------------------------------------------------------
if __name__ == "__main__":
    key = jax.random.PRNGKey(0)
    n, c_in, h, w = 2, 8, 16, 16                      # small but module-consistent
    x = jax.random.uniform(key, (n, c_in, h, w), jnp.float32)
    params = init_dense_block(jax.random.PRNGKey(42), c_in)

    fwd = jax.jit(dense_block_forward)
    out = fwd(x, params)
    jax.block_until_ready(out)

    assert out.shape == (n, OUT_CH, h, w)
    assert bool(jnp.all(jnp.isfinite(out)))

    ref = dense_block_reference(x, params)
    rel_err = float(jnp.max(jnp.abs(out - ref)) / (jnp.max(jnp.abs(ref)) + 1e-8))
    assert rel_err < 3e-2, f"mismatch vs reference: rel_err={rel_err}"

    print("KERNEL_OK")
</pallas_src>

<mosaic_0001>
module attributes {stable_mosaic.version = 11 : i64} {
  func.func @_dense_block_kernel(%arg0: i32, %arg1: memref<1x8x384xf32, #tpu.memory_space<vmem>>, %arg2: memref<1x384xf32, #tpu.memory_space<vmem>>, %arg3: memref<1x1xf32, #tpu.memory_space<smem>>, %arg4: memref<144x8xf32, #tpu.memory_space<vmem>>, %arg5: memref<144x16xf32, #tpu.memory_space<vmem>>, %arg6: memref<144x32xf32, #tpu.memory_space<vmem>>, %arg7: memref<144x48xf32, #tpu.memory_space<vmem>>, %arg8: memref<144x64xf32, #tpu.memory_space<vmem>>, %arg9: memref<144x80xf32, #tpu.memory_space<vmem>>, %arg10: memref<144x96xf32, #tpu.memory_space<vmem>>, %arg11: memref<144x112xf32, #tpu.memory_space<vmem>>, %arg12: memref<16x1xf32, #tpu.memory_space<vmem>>, %arg13: memref<16x1xf32, #tpu.memory_space<vmem>>, %arg14: memref<16x1xf32, #tpu.memory_space<vmem>>, %arg15: memref<16x1xf32, #tpu.memory_space<vmem>>, %arg16: memref<16x1xf32, #tpu.memory_space<vmem>>, %arg17: memref<16x1xf32, #tpu.memory_space<vmem>>, %arg18: memref<16x1xf32, #tpu.memory_space<vmem>>, %arg19: memref<16x1xf32, #tpu.memory_space<vmem>>, %arg20: memref<1x128x384xf32, #tpu.memory_space<vmem>>, %arg21: memref<16x384xf32, #tpu.memory_space<vmem>>) attributes {dimension_semantics = [#tpu.dimension_semantics<parallel>], iteration_bounds = array<i64: 2>, scalar_prefetch = 0 : i64, scratch_operands = 1 : i64, tpu.core_type = #tpu.core_type<tc>, window_params = [{transform_indices = @transform_0, window_bounds = array<i64: 1, 8, 384>}, {pipeline_mode = #tpu.pipeline_mode<synchronous>, transform_indices = @transform_1, window_bounds = array<i64: 1, 384>}, {transform_indices = @transform_2, window_bounds = array<i64: 1, 1>}, {pipeline_mode = #tpu.pipeline_mode<synchronous>, transform_indices = @transform_3, window_bounds = array<i64: 144, 8>}, {pipeline_mode = #tpu.pipeline_mode<synchronous>, transform_indices = @transform_4, window_bounds = array<i64: 144, 16>}, {pipeline_mode = #tpu.pipeline_mode<synchronous>, transform_indices = @transform_5, window_bounds = array<i64: 144, 32>}, {pipeline_mode = #tpu.pipeline_mode<synchronous>, transform_indices = @transform_6, window_bounds = array<i64: 144, 48>}, {pipeline_mode = #tpu.pipeline_mode<synchronous>, transform_indices = @transform_7, window_bounds = array<i64: 144, 64>}, {pipeline_mode = #tpu.pipeline_mode<synchronous>, transform_indices = @transform_8, window_bounds = array<i64: 144, 80>}, {pipeline_mode = #tpu.pipeline_mode<synchronous>, transform_indices = @transform_9, window_bounds = array<i64: 144, 96>}, {pipeline_mode = #tpu.pipeline_mode<synchronous>, transform_indices = @transform_10, window_bounds = array<i64: 144, 112>}, {pipeline_mode = #tpu.pipeline_mode<synchronous>, transform_indices = @transform_11, window_bounds = array<i64: 16, 1>}, {pipeline_mode = #tpu.pipeline_mode<synchronous>, transform_indices = @transform_12, window_bounds = array<i64: 16, 1>}, {pipeline_mode = #tpu.pipeline_mode<synchronous>, transform_indices = @transform_13, window_bounds = array<i64: 16, 1>}, {pipeline_mode = #tpu.pipeline_mode<synchronous>, transform_indices = @transform_14, window_bounds = array<i64: 16, 1>}, {pipeline_mode = #tpu.pipeline_mode<synchronous>, transform_indices = @transform_15, window_bounds = array<i64: 16, 1>}, {pipeline_mode = #tpu.pipeline_mode<synchronous>, transform_indices = @transform_16, window_bounds = array<i64: 16, 1>}, {pipeline_mode = #tpu.pipeline_mode<synchronous>, transform_indices = @transform_17, window_bounds = array<i64: 16, 1>}, {pipeline_mode = #tpu.pipeline_mode<synchronous>, transform_indices = @transform_18, window_bounds = array<i64: 16, 1>}, {transform_indices = @transform_19, window_bounds = array<i64: 1, 128, 384>}]} {
    %c0 = arith.constant 0 : index
    %c0_0 = arith.constant 0 : index
    %0 = memref.load %arg3[%c0, %c0_0] : memref<1x1xf32, #tpu.memory_space<smem>>
    %c0_1 = arith.constant 0 : index
    %c0_2 = arith.constant 0 : index
    %1 = vector.load %arg2[%c0_1, %c0_2] : memref<1x384xf32, #tpu.memory_space<vmem>>, vector<1x384xf32>
    %c0_3 = arith.constant 0 : index
    %c0_4 = arith.constant 0 : index
    %c0_5 = arith.constant 0 : index
    %2 = vector.load %arg1[%c0_3, %c0_4, %c0_5] : memref<1x8x384xf32, #tpu.memory_space<vmem>>, vector<1x8x384xf32>
    %3 = vector.shape_cast %2 : vector<1x8x384xf32> to vector<8x384xf32>
    %c0_6 = arith.constant 0 : index
    %c0_7 = arith.constant 0 : index
    %4 = vector.load %arg4[%c0_6, %c0_7] : memref<144x8xf32, #tpu.memory_space<vmem>>, vector<144x8xf32>
    %cst = arith.constant dense<0.000000e+00> : vector<144x384xf32>
    %5 = tpu.matmul %4, %3, %cst {dimension_numbers = #tpu.dot_dimension_numbers<[1], [0], [0], [1], [0, 0, 1, 1], [], []>} : vector<144x8xf32>, vector<8x384xf32>, vector<144x384xf32> -> vector<144x384xf32>
    %6 = vector.extract_strided_slice %5 {offsets = [64, 0], sizes = [16, 384], strides = [1, 1]} : vector<144x384xf32> to vector<16x384xf32>
    %7 = vector.extract_strided_slice %5 {offsets = [0, 0], sizes = [16, 384], strides = [1, 1]} : vector<144x384xf32> to vector<16x384xf32>
    %c19_i32 = arith.constant 19 : i32
    %8 = tpu.dynamic_rotate %7 by %c19_i32 dim 1 : vector<16x384xf32>, i32 -> vector<16x384xf32>
    %9 = arith.addf %6, %8 : vector<16x384xf32>
    %10 = vector.extract_strided_slice %5 {offsets = [16, 0], sizes = [16, 384], strides = [1, 1]} : vector<144x384xf32> to vector<16x384xf32>
    %c18_i32 = arith.constant 18 : i32
    %11 = tpu.dynamic_rotate %10 by %c18_i32 dim 1 : vector<16x384xf32>, i32 -> vector<16x384xf32>
    %12 = arith.addf %9, %11 : vector<16x384xf32>
    %13 = vector.extract_strided_slice %5 {offsets = [32, 0], sizes = [16, 384], strides = [1, 1]} : vector<144x384xf32> to vector<16x384xf32>
    %c17_i32 = arith.constant 17 : i32
    %14 = tpu.dynamic_rotate %13 by %c17_i32 dim 1 : vector<16x384xf32>, i32 -> vector<16x384xf32>
    %15 = arith.addf %12, %14 : vector<16x384xf32>
    %16 = vector.extract_strided_slice %5 {offsets = [48, 0], sizes = [16, 384], strides = [1, 1]} : vector<144x384xf32> to vector<16x384xf32>
    %c1_i32 = arith.constant 1 : i32
    %17 = tpu.dynamic_rotate %16 by %c1_i32 dim 1 : vector<16x384xf32>, i32 -> vector<16x384xf32>
    %18 = arith.addf %15, %17 : vector<16x384xf32>
    %19 = vector.extract_strided_slice %5 {offsets = [80, 0], sizes = [16, 384], strides = [1, 1]} : vector<144x384xf32> to vector<16x384xf32>
    %c383_i32 = arith.constant 383 : i32
    %20 = tpu.dynamic_rotate %19 by %c383_i32 dim 1 : vector<16x384xf32>, i32 -> vector<16x384xf32>
    %21 = arith.addf %18, %20 : vector<16x384xf32>
    %22 = vector.extract_strided_slice %5 {offsets = [96, 0], sizes = [16, 384], strides = [1, 1]} : vector<144x384xf32> to vector<16x384xf32>
    %c367_i32 = arith.constant 367 : i32
    %23 = tpu.dynamic_rotate %22 by %c367_i32 dim 1 : vector<16x384xf32>, i32 -> vector<16x384xf32>
    %24 = arith.addf %21, %23 : vector<16x384xf32>
    %25 = vector.extract_strided_slice %5 {offsets = [112, 0], sizes = [16, 384], strides = [1, 1]} : vector<144x384xf32> to vector<16x384xf32>
    %c366_i32 = arith.constant 366 : i32
    %26 = tpu.dynamic_rotate %25 by %c366_i32 dim 1 : vector<16x384xf32>, i32 -> vector<16x384xf32>
    %27 = arith.addf %24, %26 : vector<16x384xf32>
    %28 = vector.extract_strided_slice %5 {offsets = [128, 0], sizes = [16, 384], strides = [1, 1]} : vector<144x384xf32> to vector<16x384xf32>
    %c365_i32 = arith.constant 365 : i32
    %29 = tpu.dynamic_rotate %28 by %c365_i32 dim 1 : vector<16x384xf32>, i32 -> vector<16x384xf32>
    %30 = arith.addf %27, %29 : vector<16x384xf32>
    %c0_8 = arith.constant 0 : index
    %c0_9 = arith.constant 0 : index
    %31 = vector.load %arg12[%c0_8, %c0_9] : memref<16x1xf32, #tpu.memory_space<vmem>>, vector<16x1xf32>
    %32 = vector.broadcast %31 : vector<16x1xf32> to vector<16x384xf32>
    %33 = arith.addf %30, %32 : vector<16x384xf32>
    %cst_10 = arith.constant 0.000000e+00 : f32
    %34 = vector.broadcast %cst_10 : f32 to vector<16x384xf32>
    %35 = arith.cmpf oge, %33, %34 : vector<16x384xf32>
    %36 = vector.broadcast %0 : f32 to vector<16x384xf32>
    %37 = arith.mulf %36, %33 : vector<16x384xf32>
    %38 = arith.select %35, %33, %37 : vector<16x384xi1>, vector<16x384xf32>
    %39 = vector.broadcast %1 : vector<1x384xf32> to vector<16x384xf32>
    %40 = arith.mulf %39, %38 : vector<16x384xf32>
    %c0_11 = arith.constant 0 : index
    %c0_12 = arith.constant 0 : index
    %41 = vector.load %arg21[%c0_11, %c0_12] : memref<16x384xf32, #tpu.memory_space<vmem>>, vector<16x384xf32>
    tpu.vector_store %arg21[%c0_11, %c0_12], %40 {strides = array<i32>} : memref<16x384xf32, #tpu.memory_space<vmem>>, vector<16x384xf32>,
    %c0_13 = arith.constant 0 : index
    %c0_14 = arith.constant 0 : index
    %42 = vector.load %arg21[%c0_13, %c0_14] : memref<16x384xf32, #tpu.memory_space<vmem>>, vector<16x384xf32>
    %c0_15 = arith.constant 0 : index
    %c0_16 = arith.constant 0 : index
    %43 = vector.load %arg5[%c0_15, %c0_16] : memref<144x16xf32, #tpu.memory_space<vmem>>, vector<144x16xf32>
    %cst_17 = arith.constant dense<0.000000e+00> : vector<144x384xf32>
    %44 = tpu.matmul %43, %42, %cst_17 {dimension_numbers = #tpu.dot_dimension_numbers<[1], [0], [0], [1], [0, 0, 1, 1], [], []>} : vector<144x16xf32>, vector<16x384xf32>, vector<144x384xf32> -> vector<144x384xf32>
    %45 = vector.extract_strided_slice %44 {offsets = [64, 0], sizes = [16, 384], strides = [1, 1]} : vector<144x384xf32> to vector<16x384xf32>
    %46 = vector.extract_strided_slice %44 {offsets = [0, 0], sizes = [16, 384], strides = [1, 1]} : vector<144x384xf32> to vector<16x384xf32>
    %c19_i32_18 = arith.constant 19 : i32
    %47 = tpu.dynamic_rotate %46 by %c19_i32_18 dim 1 : vector<16x384xf32>, i32 -> vector<16x384xf32>
    %48 = arith.addf %45, %47 : vector<16x384xf32>
    %49 = vector.extract_strided_slice %44 {offsets = [16, 0], sizes = [16, 384], strides = [1, 1]} : vector<144x384xf32> to vector<16x384xf32>
    %c18_i32_19 = arith.constant 18 : i32
    %50 = tpu.dynamic_rotate %49 by %c18_i32_19 dim 1 : vector<16x384xf32>, i32 -> vector<16x384xf32>
    %51 = arith.addf %48, %50 : vector<16x384xf32>
    %52 = vector.extract_strided_slice %44 {offsets = [32, 0], sizes = [16, 384], strides = [1, 1]} : vector<144x384xf32> to vector<16x384xf32>
    %c17_i32_20 = arith.constant 17 : i32
    %53 = tpu.dynamic_rotate %52 by %c17_i32_20 dim 1 : vector<16x384xf32>, i32 -> vector<16x384xf32>
    %54 = arith.addf %51, %53 : vector<16x384xf32>
    %55 = vector.extract_strided_slice %44 {offsets = [48, 0], sizes = [16, 384], strides = [1, 1]} : vector<144x384xf32> to vector<16x384xf32>
    %c1_i32_21 = arith.constant 1 : i32
    %56 = tpu.dynamic_rotate %55 by %c1_i32_21 dim 1 : vector<16x384xf32>, i32 -> vector<16x384xf32>
    %57 = arith.addf %54, %56 : vector<16x384xf32>
    %58 = vector.extract_strided_slice %44 {offsets = [80, 0], sizes = [16, 384], strides = [1, 1]} : vector<144x384xf32> to vector<16x384xf32>
    %c383_i32_22 = arith.constant 383 : i32
    %59 = tpu.dynamic_rotate %58 by %c383_i32_22 dim 1 : vector<16x384xf32>, i32 -> vector<16x384xf32>
    %60 = arith.addf %57, %59 : vector<16x384xf32>
    %61 = vector.extract_strided_slice %44 {offsets = [96, 0], sizes = [16, 384], strides = [1, 1]} : vector<144x384xf32> to vector<16x384xf32>
    %c367_i32_23 = arith.constant 367 : i32
    %62 = tpu.dynamic_rotate %61 by %c367_i32_23 dim 1 : vector<16x384xf32>, i32 -> vector<16x384xf32>
    %63 = arith.addf %60, %62 : vector<16x384xf32>
    %64 = vector.extract_strided_slice %44 {offsets = [112, 0], sizes = [16, 384], strides = [1, 1]} : vector<144x384xf32> to vector<16x384xf32>
    %c366_i32_24 = arith.constant 366 : i32
    %65 = tpu.dynamic_rotate %64 by %c366_i32_24 dim 1 : vector<16x384xf32>, i32 -> vector<16x384xf32>
    %66 = arith.addf %63, %65 : vector<16x384xf32>
    %67 = vector.extract_strided_slice %44 {offsets = [128, 0], sizes = [16, 384], strides = [1, 1]} : vector<144x384xf32> to vector<16x384xf32>
    %c365_i32_25 = arith.constant 365 : i32
    %68 = tpu.dynamic_rotate %67 by %c365_i32_25 dim 1 : vector<16x384xf32>, i32 -> vector<16x384xf32>
    %69 = arith.addf %66, %68 : vector<16x384xf32>
    %c0_26 = arith.constant 0 : index
    %c0_27 = arith.constant 0 : index
    %70 = vector.load %arg13[%c0_26, %c0_27] : memref<16x1xf32, #tpu.memory_space<vmem>>, vector<16x1xf32>
    %71 = vector.broadcast %70 : vector<16x1xf32> to vector<16x384xf32>
    %72 = arith.addf %69, %71 : vector<16x384xf32>
    %cst_28 = arith.constant 0.000000e+00 : f32
    %73 = vector.broadcast %cst_28 : f32 to vector<16x384xf32>
    %74 = arith.cmpf oge, %72, %73 : vector<16x384xf32>
    %75 = vector.broadcast %0 : f32 to vector<16x384xf32>
    %76 = arith.mulf %75, %72 : vector<16x384xf32>
    %77 = arith.select %74, %72, %76 : vector<16x384xi1>, vector<16x384xf32>
    %78 = vector.broadcast %1 : vector<1x384xf32> to vector<16x384xf32>
    %79 = arith.mulf %78, %77 : vector<16x384xf32>
    %c0_29 = arith.constant 0 : index
    %c0_30 = arith.constant 0 : index
    %80 = vector.load %arg21[%c0_29, %c0_30] : memref<16x384xf32, #tpu.memory_space<vmem>>, vector<16x384xf32>
    %cst_31 = arith.constant 0.000000e+00 : f32
    %81 = vector.broadcast %cst_31 : f32 to vector<16x384xf32>
    %82 = arith.cmpf oge, %80, %81 : vector<16x384xf32>
    %83 = vector.broadcast %0 : f32 to vector<16x384xf32>
    %84 = arith.mulf %83, %80 : vector<16x384xf32>
    %85 = arith.select %82, %80, %84 : vector<16x384xi1>, vector<16x384xf32>
    %c0_32 = arith.constant 0 : index
    %c0_33 = arith.constant 0 : index
    %c0_34 = arith.constant 0 : index
    %86 = vector.load %arg20[%c0_32, %c0_33, %c0_34] : memref<1x128x384xf32, #tpu.memory_space<vmem>>, vector<1x16x384xf32>
    %87 = vector.shape_cast %86 : vector<1x16x384xf32> to vector<16x384xf32>
    %88 = vector.shape_cast %85 : vector<16x384xf32> to vector<1x16x384xf32>
    tpu.vector_store %arg20[%c0_32, %c0_33, %c0_34], %88 {strides = array<i32>} : memref<1x128x384xf32, #tpu.memory_space<vmem>>, vector<1x16x384xf32>,
    %cst_35 = arith.constant 0.000000e+00 : f32
    %89 = vector.broadcast %cst_35 : f32 to vector<16x384xf32>
    %90 = arith.cmpf oge, %79, %89 : vector<16x384xf32>
    %91 = vector.broadcast %0 : f32 to vector<16x384xf32>
    %92 = arith.mulf %91, %79 : vector<16x384xf32>
    %93 = arith.select %90, %79, %92 : vector<16x384xi1>, vector<16x384xf32>
    %c0_36 = arith.constant 0 : index
    %c16 = arith.constant 16 : index
    %c0_37 = arith.constant 0 : index
    %94 = vector.load %arg20[%c0_36, %c16, %c0_37] : memref<1x128x384xf32, #tpu.memory_space<vmem>>, vector<1x16x384xf32>
    %95 = vector.shape_cast %94 : vector<1x16x384xf32> to vector<16x384xf32>
    %96 = vector.shape_cast %93 : vector<16x384xf32> to vector<1x16x384xf32>
    tpu.vector_store %arg20[%c0_36, %c16, %c0_37], %96 {strides = array<i32>} : memref<1x128x384xf32, #tpu.memory_space<vmem>>, vector<1x16x384xf32>,
    %c0_38 = arith.constant 0 : index
    %c0_39 = arith.constant 0 : index
    %c0_40 = arith.constant 0 : index
    %97 = vector.load %arg20[%c0_38, %c0_39, %c0_40] : memref<1x128x384xf32, #tpu.memory_space<vmem>>, vector<1x32x384xf32>
    %98 = vector.shape_cast %97 : vector<1x32x384xf32> to vector<32x384xf32>
    %c0_41 = arith.constant 0 : index
    %c0_42 = arith.constant 0 : index
    %99 = vector.load %arg6[%c0_41, %c0_42] : memref<144x32xf32, #tpu.memory_space<vmem>>, vector<144x32xf32>
    %cst_43 = arith.constant dense<0.000000e+00> : vector<144x384xf32>
    %100 = tpu.matmul %99, %98, %cst_43 {dimension_numbers = #tpu.dot_dimension_numbers<[1], [0], [0], [1], [0, 0, 1, 1], [], []>} : vector<144x32xf32>, vector<32x384xf32>, vector<144x384xf32> -> vector<144x384xf32>
    %101 = vector.extract_strided_slice %100 {offsets = [64, 0], sizes = [16, 384], strides = [1, 1]} : vector<144x384xf32> to vector<16x384xf32>
    %102 = vector.extract_strided_slice %100 {offsets = [0, 0], sizes = [16, 384], strides = [1, 1]} : vector<144x384xf32> to vector<16x384xf32>
    %c19_i32_44 = arith.constant 19 : i32
    %103 = tpu.dynamic_rotate %102 by %c19_i32_44 dim 1 : vector<16x384xf32>, i32 -> vector<16x384xf32>
    %104 = arith.addf %101, %103 : vector<16x384xf32>
    %105 = vector.extract_strided_slice %100 {offsets = [16, 0], sizes = [16, 384], strides = [1, 1]} : vector<144x384xf32> to vector<16x384xf32>
    %c18_i32_45 = arith.constant 18 : i32
    %106 = tpu.dynamic_rotate %105 by %c18_i32_45 dim 1 : vector<16x384xf32>, i32 -> vector<16x384xf32>
    %107 = arith.addf %104, %106 : vector<16x384xf32>
    %108 = vector.extract_strided_slice %100 {offsets = [32, 0], sizes = [16, 384], strides = [1, 1]} : vector<144x384xf32> to vector<16x384xf32>
    %c17_i32_46 = arith.constant 17 : i32
    %109 = tpu.dynamic_rotate %108 by %c17_i32_46 dim 1 : vector<16x384xf32>, i32 -> vector<16x384xf32>
    %110 = arith.addf %107, %109 : vector<16x384xf32>
    %111 = vector.extract_strided_slice %100 {offsets = [48, 0], sizes = [16, 384], strides = [1, 1]} : vector<144x384xf32> to vector<16x384xf32>
    %c1_i32_47 = arith.constant 1 : i32
    %112 = tpu.dynamic_rotate %111 by %c1_i32_47 dim 1 : vector<16x384xf32>, i32 -> vector<16x384xf32>
    %113 = arith.addf %110, %112 : vector<16x384xf32>
    %114 = vector.extract_strided_slice %100 {offsets = [80, 0], sizes = [16, 384], strides = [1, 1]} : vector<144x384xf32> to vector<16x384xf32>
    %c383_i32_48 = arith.constant 383 : i32
    %115 = tpu.dynamic_rotate %114 by %c383_i32_48 dim 1 : vector<16x384xf32>, i32 -> vector<16x384xf32>
    %116 = arith.addf %113, %115 : vector<16x384xf32>
    %117 = vector.extract_strided_slice %100 {offsets = [96, 0], sizes = [16, 384], strides = [1, 1]} : vector<144x384xf32> to vector<16x384xf32>
    %c367_i32_49 = arith.constant 367 : i32
    %118 = tpu.dynamic_rotate %117 by %c367_i32_49 dim 1 : vector<16x384xf32>, i32 -> vector<16x384xf32>
    %119 = arith.addf %116, %118 : vector<16x384xf32>
    %120 = vector.extract_strided_slice %100 {offsets = [112, 0], sizes = [16, 384], strides = [1, 1]} : vector<144x384xf32> to vector<16x384xf32>
    %c366_i32_50 = arith.constant 366 : i32
    %121 = tpu.dynamic_rotate %120 by %c366_i32_50 dim 1 : vector<16x384xf32>, i32 -> vector<16x384xf32>
    %122 = arith.addf %119, %121 : vector<16x384xf32>
    %123 = vector.extract_strided_slice %100 {offsets = [128, 0], sizes = [16, 384], strides = [1, 1]} : vector<144x384xf32> to vector<16x384xf32>
    %c365_i32_51 = arith.constant 365 : i32
    %124 = tpu.dynamic_rotate %123 by %c365_i32_51 dim 1 : vector<16x384xf32>, i32 -> vector<16x384xf32>
    %125 = arith.addf %122, %124 : vector<16x384xf32>
    %c0_52 = arith.constant 0 : index
    %c0_53 = arith.constant 0 : index
    %126 = vector.load %arg14[%c0_52, %c0_53] : memref<16x1xf32, #tpu.memory_space<vmem>>, vector<16x1xf32>
    %127 = vector.broadcast %126 : vector<16x1xf32> to vector<16x384xf32>
    %128 = arith.addf %125, %127 : vector<16x384xf32>
    %cst_54 = arith.constant 0.000000e+00 : f32
    %129 = vector.broadcast %cst_54 : f32 to vector<16x384xf32>
    %130 = arith.cmpf oge, %128, %129 : vector<16x384xf32>
    %131 = vector.broadcast %0 : f32 to vector<16x384xf32>
    %132 = arith.mulf %131, %128 : vector<16x384xf32>
    %133 = arith.select %130, %128, %132 : vector<16x384xi1>, vector<16x384xf32>
    %134 = vector.broadcast %1 : vector<1x384xf32> to vector<16x384xf32>
    %135 = arith.mulf %134, %133 : vector<16x384xf32>
    %cst_55 = arith.constant 0.000000e+00 : f32
    %136 = vector.broadcast %cst_55 : f32 to vector<16x384xf32>
    %137 = arith.cmpf oge, %135, %136 : vector<16x384xf32>
    %138 = vector.broadcast %0 : f32 to vector<16x384xf32>
    %139 = arith.mulf %138, %135 : vector<16x384xf32>
    %140 = arith.select %137, %135, %139 : vector<16x384xi1>, vector<16x384xf32>
    %c0_56 = arith.constant 0 : index
    %c32 = arith.constant 32 : index
    %c0_57 = arith.constant 0 : index
    %141 = vector.load %arg20[%c0_56, %c32, %c0_57] : memref<1x128x384xf32, #tpu.memory_space<vmem>>, vector<1x16x384xf32>
    %142 = vector.shape_cast %141 : vector<1x16x384xf32> to vector<16x384xf32>
    %143 = vector.shape_cast %140 : vector<16x384xf32> to vector<1x16x384xf32>
    tpu.vector_store %arg20[%c0_56, %c32, %c0_57], %143 {strides = array<i32>} : memref<1x128x384xf32, #tpu.memory_space<vmem>>, vector<1x16x384xf32>,
    %c0_58 = arith.constant 0 : index
    %c0_59 = arith.constant 0 : index
    %c0_60 = arith.constant 0 : index
    %144 = vector.load %arg20[%c0_58, %c0_59, %c0_60] : memref<1x128x384xf32, #tpu.memory_space<vmem>>, vector<1x48x384xf32>
    %145 = vector.shape_cast %144 : vector<1x48x384xf32> to vector<48x384xf32>
    %c0_61 = arith.constant 0 : index
    %c0_62 = arith.constant 0 : index
    %146 = vector.load %arg7[%c0_61, %c0_62] : memref<144x48xf32, #tpu.memory_space<vmem>>, vector<144x48xf32>
    %cst_63 = arith.constant dense<0.000000e+00> : vector<144x384xf32>
    %147 = tpu.matmul %146, %145, %cst_63 {dimension_numbers = #tpu.dot_dimension_numbers<[1], [0], [0], [1], [0, 0, 1, 1], [], []>} : vector<144x48xf32>, vector<48x384xf32>, vector<144x384xf32> -> vector<144x384xf32>
    %148 = vector.extract_strided_slice %147 {offsets = [64, 0], sizes = [16, 384], strides = [1, 1]} : vector<144x384xf32> to vector<16x384xf32>
    %149 = vector.extract_strided_slice %147 {offsets = [0, 0], sizes = [16, 384], strides = [1, 1]} : vector<144x384xf32> to vector<16x384xf32>
    %c19_i32_64 = arith.constant 19 : i32
    %150 = tpu.dynamic_rotate %149 by %c19_i32_64 dim 1 : vector<16x384xf32>, i32 -> vector<16x384xf32>
    %151 = arith.addf %148, %150 : vector<16x384xf32>
    %152 = vector.extract_strided_slice %147 {offsets = [16, 0], sizes = [16, 384], strides = [1, 1]} : vector<144x384xf32> to vector<16x384xf32>
    %c18_i32_65 = arith.constant 18 : i32
    %153 = tpu.dynamic_rotate %152 by %c18_i32_65 dim 1 : vector<16x384xf32>, i32 -> vector<16x384xf32>
    %154 = arith.addf %151, %153 : vector<16x384xf32>
    %155 = vector.extract_strided_slice %147 {offsets = [32, 0], sizes = [16, 384], strides = [1, 1]} : vector<144x384xf32> to vector<16x384xf32>
    %c17_i32_66 = arith.constant 17 : i32
    %156 = tpu.dynamic_rotate %155 by %c17_i32_66 dim 1 : vector<16x384xf32>, i32 -> vector<16x384xf32>
    %157 = arith.addf %154, %156 : vector<16x384xf32>
    %158 = vector.extract_strided_slice %147 {offsets = [48, 0], sizes = [16, 384], strides = [1, 1]} : vector<144x384xf32> to vector<16x384xf32>
    %c1_i32_67 = arith.constant 1 : i32
    %159 = tpu.dynamic_rotate %158 by %c1_i32_67 dim 1 : vector<16x384xf32>, i32 -> vector<16x384xf32>
    %160 = arith.addf %157, %159 : vector<16x384xf32>
    %161 = vector.extract_strided_slice %147 {offsets = [80, 0], sizes = [16, 384], strides = [1, 1]} : vector<144x384xf32> to vector<16x384xf32>
    %c383_i32_68 = arith.constant 383 : i32
    %162 = tpu.dynamic_rotate %161 by %c383_i32_68 dim 1 : vector<16x384xf32>, i32 -> vector<16x384xf32>
    %163 = arith.addf %160, %162 : vector<16x384xf32>
    %164 = vector.extract_strided_slice %147 {offsets = [96, 0], sizes = [16, 384], strides = [1, 1]} : vector<144x384xf32> to vector<16x384xf32>
    %c367_i32_69 = arith.constant 367 : i32
    %165 = tpu.dynamic_rotate %164 by %c367_i32_69 dim 1 : vector<16x384xf32>, i32 -> vector<16x384xf32>
    %166 = arith.addf %163, %165 : vector<16x384xf32>
    %167 = vector.extract_strided_slice %147 {offsets = [112, 0], sizes = [16, 384], strides = [1, 1]} : vector<144x384xf32> to vector<16x384xf32>
    %c366_i32_70 = arith.constant 366 : i32
    %168 = tpu.dynamic_rotate %167 by %c366_i32_70 dim 1 : vector<16x384xf32>, i32 -> vector<16x384xf32>
    %169 = arith.addf %166, %168 : vector<16x384xf32>
    %170 = vector.extract_strided_slice %147 {offsets = [128, 0], sizes = [16, 384], strides = [1, 1]} : vector<144x384xf32> to vector<16x384xf32>
    %c365_i32_71 = arith.constant 365 : i32
    %171 = tpu.dynamic_rotate %170 by %c365_i32_71 dim 1 : vector<16x384xf32>, i32 -> vector<16x384xf32>
    %172 = arith.addf %169, %171 : vector<16x384xf32>
    %c0_72 = arith.constant 0 : index
    %c0_73 = arith.constant 0 : index
    %173 = vector.load %arg15[%c0_72, %c0_73] : memref<16x1xf32, #tpu.memory_space<vmem>>, vector<16x1xf32>
    %174 = vector.broadcast %173 : vector<16x1xf32> to vector<16x384xf32>
    %175 = arith.addf %172, %174 : vector<16x384xf32>
    %cst_74 = arith.constant 0.000000e+00 : f32
    %176 = vector.broadcast %cst_74 : f32 to vector<16x384xf32>
    %177 = arith.cmpf oge, %175, %176 : vector<16x384xf32>
    %178 = vector.broadcast %0 : f32 to vector<16x384xf32>
    %179 = arith.mulf %178, %175 : vector<16x384xf32>
    %180 = arith.select %177, %175, %179 : vector<16x384xi1>, vector<16x384xf32>
    %181 = vector.broadcast %1 : vector<1x384xf32> to vector<16x384xf32>
    %182 = arith.mulf %181, %180 : vector<16x384xf32>
    %cst_75 = arith.constant 0.000000e+00 : f32
    %183 = vector.broadcast %cst_75 : f32 to vector<16x384xf32>
    %184 = arith.cmpf oge, %182, %183 : vector<16x384xf32>
    %185 = vector.broadcast %0 : f32 to vector<16x384xf32>
    %186 = arith.mulf %185, %182 : vector<16x384xf32>
    %187 = arith.select %184, %182, %186 : vector<16x384xi1>, vector<16x384xf32>
    %c0_76 = arith.constant 0 : index
    %c48 = arith.constant 48 : index
    %c0_77 = arith.constant 0 : index
    %188 = vector.load %arg20[%c0_76, %c48, %c0_77] : memref<1x128x384xf32, #tpu.memory_space<vmem>>, vector<1x16x384xf32>
    %189 = vector.shape_cast %188 : vector<1x16x384xf32> to vector<16x384xf32>
    %190 = vector.shape_cast %187 : vector<16x384xf32> to vector<1x16x384xf32>
    tpu.vector_store %arg20[%c0_76, %c48, %c0_77], %190 {strides = array<i32>} : memref<1x128x384xf32, #tpu.memory_space<vmem>>, vector<1x16x384xf32>,
    %c0_78 = arith.constant 0 : index
    %c0_79 = arith.constant 0 : index
    %c0_80 = arith.constant 0 : index
    %191 = vector.load %arg20[%c0_78, %c0_79, %c0_80] : memref<1x128x384xf32, #tpu.memory_space<vmem>>, vector<1x64x384xf32>
    %192 = vector.shape_cast %191 : vector<1x64x384xf32> to vector<64x384xf32>
    %c0_81 = arith.constant 0 : index
    %c0_82 = arith.constant 0 : index
    %193 = vector.load %arg8[%c0_81, %c0_82] : memref<144x64xf32, #tpu.memory_space<vmem>>, vector<144x64xf32>
    %cst_83 = arith.constant dense<0.000000e+00> : vector<144x384xf32>
    %194 = tpu.matmul %193, %192, %cst_83 {dimension_numbers = #tpu.dot_dimension_numbers<[1], [0], [0], [1], [0, 0, 1, 1], [], []>} : vector<144x64xf32>, vector<64x384xf32>, vector<144x384xf32> -> vector<144x384xf32>
    %195 = vector.extract_strided_slice %194 {offsets = [64, 0], sizes = [16, 384], strides = [1, 1]} : vector<144x384xf32> to vector<16x384xf32>
    %196 = vector.extract_strided_slice %194 {offsets = [0, 0], sizes = [16, 384], strides = [1, 1]} : vector<144x384xf32> to vector<16x384xf32>
    %c19_i32_84 = arith.constant 19 : i32
    %197 = tpu.dynamic_rotate %196 by %c19_i32_84 dim 1 : vector<16x384xf32>, i32 -> vector<16x384xf32>
    %198 = arith.addf %195, %197 : vector<16x384xf32>
    %199 = vector.extract_strided_slice %194 {offsets = [16, 0], sizes = [16, 384], strides = [1, 1]} : vector<144x384xf32> to vector<16x384xf32>
    %c18_i32_85 = arith.constant 18 : i32
    %200 = tpu.dynamic_rotate %199 by %c18_i32_85 dim 1 : vector<16x384xf32>, i32 -> vector<16x384xf32>
    %201 = arith.addf %198, %200 : vector<16x384xf32>
    %202 = vector.extract_strided_slice %194 {offsets = [32, 0], sizes = [16, 384], strides = [1, 1]} : vector<144x384xf32> to vector<16x384xf32>
    %c17_i32_86 = arith.constant 17 : i32
    %203 = tpu.dynamic_rotate %202 by %c17_i32_86 dim 1 : vector<16x384xf32>, i32 -> vector<16x384xf32>
    %204 = arith.addf %201, %203 : vector<16x384xf32>
    %205 = vector.extract_strided_slice %194 {offsets = [48, 0], sizes = [16, 384], strides = [1, 1]} : vector<144x384xf32> to vector<16x384xf32>
    %c1_i32_87 = arith.constant 1 : i32
    %206 = tpu.dynamic_rotate %205 by %c1_i32_87 dim 1 : vector<16x384xf32>, i32 -> vector<16x384xf32>
    %207 = arith.addf %204, %206 : vector<16x384xf32>
    %208 = vector.extract_strided_slice %194 {offsets = [80, 0], sizes = [16, 384], strides = [1, 1]} : vector<144x384xf32> to vector<16x384xf32>
    %c383_i32_88 = arith.constant 383 : i32
    %209 = tpu.dynamic_rotate %208 by %c383_i32_88 dim 1 : vector<16x384xf32>, i32 -> vector<16x384xf32>
    %210 = arith.addf %207, %209 : vector<16x384xf32>
    %211 = vector.extract_strided_slice %194 {offsets = [96, 0], sizes = [16, 384], strides = [1, 1]} : vector<144x384xf32> to vector<16x384xf32>
    %c367_i32_89 = arith.constant 367 : i32
    %212 = tpu.dynamic_rotate %211 by %c367_i32_89 dim 1 : vector<16x384xf32>, i32 -> vector<16x384xf32>
    %213 = arith.addf %210, %212 : vector<16x384xf32>
    %214 = vector.extract_strided_slice %194 {offsets = [112, 0], sizes = [16, 384], strides = [1, 1]} : vector<144x384xf32> to vector<16x384xf32>
    %c366_i32_90 = arith.constant 366 : i32
    %215 = tpu.dynamic_rotate %214 by %c366_i32_90 dim 1 : vector<16x384xf32>, i32 -> vector<16x384xf32>
    %216 = arith.addf %213, %215 : vector<16x384xf32>
    %217 = vector.extract_strided_slice %194 {offsets = [128, 0], sizes = [16, 384], strides = [1, 1]} : vector<144x384xf32> to vector<16x384xf32>
    %c365_i32_91 = arith.constant 365 : i32
    %218 = tpu.dynamic_rotate %217 by %c365_i32_91 dim 1 : vector<16x384xf32>, i32 -> vector<16x384xf32>
    %219 = arith.addf %216, %218 : vector<16x384xf32>
    %c0_92 = arith.constant 0 : index
    %c0_93 = arith.constant 0 : index
    %220 = vector.load %arg16[%c0_92, %c0_93] : memref<16x1xf32, #tpu.memory_space<vmem>>, vector<16x1xf32>
    %221 = vector.broadcast %220 : vector<16x1xf32> to vector<16x384xf32>
    %222 = arith.addf %219, %221 : vector<16x384xf32>
    %cst_94 = arith.constant 0.000000e+00 : f32
    %223 = vector.broadcast %cst_94 : f32 to vector<16x384xf32>
    %224 = arith.cmpf oge, %222, %223 : vector<16x384xf32>
    %225 = vector.broadcast %0 : f32 to vector<16x384xf32>
    %226 = arith.mulf %225, %222 : vector<16x384xf32>
    %227 = arith.select %224, %222, %226 : vector<16x384xi1>, vector<16x384xf32>
    %228 = vector.broadcast %1 : vector<1x384xf32> to vector<16x384xf32>
    %229 = arith.mulf %228, %227 : vector<16x384xf32>
    %cst_95 = arith.constant 0.000000e+00 : f32
    %230 = vector.broadcast %cst_95 : f32 to vector<16x384xf32>
    %231 = arith.cmpf oge, %229, %230 : vector<16x384xf32>
    %232 = vector.broadcast %0 : f32 to vector<16x384xf32>
    %233 = arith.mulf %232, %229 : vector<16x384xf32>
    %234 = arith.select %231, %229, %233 : vector<16x384xi1>, vector<16x384xf32>
    %c0_96 = arith.constant 0 : index
    %c64 = arith.constant 64 : index
    %c0_97 = arith.constant 0 : index
    %235 = vector.load %arg20[%c0_96, %c64, %c0_97] : memref<1x128x384xf32, #tpu.memory_space<vmem>>, vector<1x16x384xf32>
    %236 = vector.shape_cast %235 : vector<1x16x384xf32> to vector<16x384xf32>
    %237 = vector.shape_cast %234 : vector<16x384xf32> to vector<1x16x384xf32>
    tpu.vector_store %arg20[%c0_96, %c64, %c0_97], %237 {strides = array<i32>} : memref<1x128x384xf32, #tpu.memory_space<vmem>>, vector<1x16x384xf32>,
    %c0_98 = arith.constant 0 : index
    %c0_99 = arith.constant 0 : index
    %c0_100 = arith.constant 0 : index
    %238 = vector.load %arg20[%c0_98, %c0_99, %c0_100] : memref<1x128x384xf32, #tpu.memory_space<vmem>>, vector<1x80x384xf32>
    %239 = vector.shape_cast %238 : vector<1x80x384xf32> to vector<80x384xf32>
    %c0_101 = arith.constant 0 : index
    %c0_102 = arith.constant 0 : index
    %240 = vector.load %arg9[%c0_101, %c0_102] : memref<144x80xf32, #tpu.memory_space<vmem>>, vector<144x80xf32>
    %cst_103 = arith.constant dense<0.000000e+00> : vector<144x384xf32>
    %241 = tpu.matmul %240, %239, %cst_103 {dimension_numbers = #tpu.dot_dimension_numbers<[1], [0], [0], [1], [0, 0, 1, 1], [], []>} : vector<144x80xf32>, vector<80x384xf32>, vector<144x384xf32> -> vector<144x384xf32>
    %242 = vector.extract_strided_slice %241 {offsets = [64, 0], sizes = [16, 384], strides = [1, 1]} : vector<144x384xf32> to vector<16x384xf32>
    %243 = vector.extract_strided_slice %241 {offsets = [0, 0], sizes = [16, 384], strides = [1, 1]} : vector<144x384xf32> to vector<16x384xf32>
    %c19_i32_104 = arith.constant 19 : i32
    %244 = tpu.dynamic_rotate %243 by %c19_i32_104 dim 1 : vector<16x384xf32>, i32 -> vector<16x384xf32>
    %245 = arith.addf %242, %244 : vector<16x384xf32>
    %246 = vector.extract_strided_slice %241 {offsets = [16, 0], sizes = [16, 384], strides = [1, 1]} : vector<144x384xf32> to vector<16x384xf32>
    %c18_i32_105 = arith.constant 18 : i32
    %247 = tpu.dynamic_rotate %246 by %c18_i32_105 dim 1 : vector<16x384xf32>, i32 -> vector<16x384xf32>
    %248 = arith.addf %245, %247 : vector<16x384xf32>
    %249 = vector.extract_strided_slice %241 {offsets = [32, 0], sizes = [16, 384], strides = [1, 1]} : vector<144x384xf32> to vector<16x384xf32>
    %c17_i32_106 = arith.constant 17 : i32
    %250 = tpu.dynamic_rotate %249 by %c17_i32_106 dim 1 : vector<16x384xf32>, i32 -> vector<16x384xf32>
    %251 = arith.addf %248, %250 : vector<16x384xf32>
    %252 = vector.extract_strided_slice %241 {offsets = [48, 0], sizes = [16, 384], strides = [1, 1]} : vector<144x384xf32> to vector<16x384xf32>
    %c1_i32_107 = arith.constant 1 : i32
    %253 = tpu.dynamic_rotate %252 by %c1_i32_107 dim 1 : vector<16x384xf32>, i32 -> vector<16x384xf32>
    %254 = arith.addf %251, %253 : vector<16x384xf32>
    %255 = vector.extract_strided_slice %241 {offsets = [80, 0], sizes = [16, 384], strides = [1, 1]} : vector<144x384xf32> to vector<16x384xf32>
    %c383_i32_108 = arith.constant 383 : i32
    %256 = tpu.dynamic_rotate %255 by %c383_i32_108 dim 1 : vector<16x384xf32>, i32 -> vector<16x384xf32>
    %257 = arith.addf %254, %256 : vector<16x384xf32>
    %258 = vector.extract_strided_slice %241 {offsets = [96, 0], sizes = [16, 384], strides = [1, 1]} : vector<144x384xf32> to vector<16x384xf32>
    %c367_i32_109 = arith.constant 367 : i32
    %259 = tpu.dynamic_rotate %258 by %c367_i32_109 dim 1 : vector<16x384xf32>, i32 -> vector<16x384xf32>
    %260 = arith.addf %257, %259 : vector<16x384xf32>
    %261 = vector.extract_strided_slice %241 {offsets = [112, 0], sizes = [16, 384], strides = [1, 1]} : vector<144x384xf32> to vector<16x384xf32>
    %c366_i32_110 = arith.constant 366 : i32
    %262 = tpu.dynamic_rotate %261 by %c366_i32_110 dim 1 : vector<16x384xf32>, i32 -> vector<16x384xf32>
    %263 = arith.addf %260, %262 : vector<16x384xf32>
    %264 = vector.extract_strided_slice %241 {offsets = [128, 0], sizes = [16, 384], strides = [1, 1]} : vector<144x384xf32> to vector<16x384xf32>
    %c365_i32_111 = arith.constant 365 : i32
    %265 = tpu.dynamic_rotate %264 by %c365_i32_111 dim 1 : vector<16x384xf32>, i32 -> vector<16x384xf32>
    %266 = arith.addf %263, %265 : vector<16x384xf32>
    %c0_112 = arith.constant 0 : index
    %c0_113 = arith.constant 0 : index
    %267 = vector.load %arg17[%c0_112, %c0_113] : memref<16x1xf32, #tpu.memory_space<vmem>>, vector<16x1xf32>
    %268 = vector.broadcast %267 : vector<16x1xf32> to vector<16x384xf32>
    %269 = arith.addf %266, %268 : vector<16x384xf32>
    %cst_114 = arith.constant 0.000000e+00 : f32
    %270 = vector.broadcast %cst_114 : f32 to vector<16x384xf32>
    %271 = arith.cmpf oge, %269, %270 : vector<16x384xf32>
    %272 = vector.broadcast %0 : f32 to vector<16x384xf32>
    %273 = arith.mulf %272, %269 : vector<16x384xf32>
    %274 = arith.select %271, %269, %273 : vector<16x384xi1>, vector<16x384xf32>
    %275 = vector.broadcast %1 : vector<1x384xf32> to vector<16x384xf32>
    %276 = arith.mulf %275, %274 : vector<16x384xf32>
    %cst_115 = arith.constant 0.000000e+00 : f32
    %277 = vector.broadcast %cst_115 : f32 to vector<16x384xf32>
    %278 = arith.cmpf oge, %276, %277 : vector<16x384xf32>
    %279 = vector.broadcast %0 : f32 to vector<16x384xf32>
    %280 = arith.mulf %279, %276 : vector<16x384xf32>
    %281 = arith.select %278, %276, %280 : vector<16x384xi1>, vector<16x384xf32>
    %c0_116 = arith.constant 0 : index
    %c80 = arith.constant 80 : index
    %c0_117 = arith.constant 0 : index
    %282 = vector.load %arg20[%c0_116, %c80, %c0_117] : memref<1x128x384xf32, #tpu.memory_space<vmem>>, vector<1x16x384xf32>
    %283 = vector.shape_cast %282 : vector<1x16x384xf32> to vector<16x384xf32>
    %284 = vector.shape_cast %281 : vector<16x384xf32> to vector<1x16x384xf32>
    tpu.vector_store %arg20[%c0_116, %c80, %c0_117], %284 {strides = array<i32>} : memref<1x128x384xf32, #tpu.memory_space<vmem>>, vector<1x16x384xf32>,
    %c0_118 = arith.constant 0 : index
    %c0_119 = arith.constant 0 : index
    %c0_120 = arith.constant 0 : index
    %285 = vector.load %arg20[%c0_118, %c0_119, %c0_120] : memref<1x128x384xf32, #tpu.memory_space<vmem>>, vector<1x96x384xf32>
    %286 = vector.shape_cast %285 : vector<1x96x384xf32> to vector<96x384xf32>
    %c0_121 = arith.constant 0 : index
    %c0_122 = arith.constant 0 : index
    %287 = vector.load %arg10[%c0_121, %c0_122] : memref<144x96xf32, #tpu.memory_space<vmem>>, vector<144x96xf32>
    %cst_123 = arith.constant dense<0.000000e+00> : vector<144x384xf32>
    %288 = tpu.matmul %287, %286, %cst_123 {dimension_numbers = #tpu.dot_dimension_numbers<[1], [0], [0], [1], [0, 0, 1, 1], [], []>} : vector<144x96xf32>, vector<96x384xf32>, vector<144x384xf32> -> vector<144x384xf32>
    %289 = vector.extract_strided_slice %288 {offsets = [64, 0], sizes = [16, 384], strides = [1, 1]} : vector<144x384xf32> to vector<16x384xf32>
    %290 = vector.extract_strided_slice %288 {offsets = [0, 0], sizes = [16, 384], strides = [1, 1]} : vector<144x384xf32> to vector<16x384xf32>
    %c19_i32_124 = arith.constant 19 : i32
    %291 = tpu.dynamic_rotate %290 by %c19_i32_124 dim 1 : vector<16x384xf32>, i32 -> vector<16x384xf32>
    %292 = arith.addf %289, %291 : vector<16x384xf32>
    %293 = vector.extract_strided_slice %288 {offsets = [16, 0], sizes = [16, 384], strides = [1, 1]} : vector<144x384xf32> to vector<16x384xf32>
    %c18_i32_125 = arith.constant 18 : i32
    %294 = tpu.dynamic_rotate %293 by %c18_i32_125 dim 1 : vector<16x384xf32>, i32 -> vector<16x384xf32>
    %295 = arith.addf %292, %294 : vector<16x384xf32>
    %296 = vector.extract_strided_slice %288 {offsets = [32, 0], sizes = [16, 384], strides = [1, 1]} : vector<144x384xf32> to vector<16x384xf32>
    %c17_i32_126 = arith.constant 17 : i32
    %297 = tpu.dynamic_rotate %296 by %c17_i32_126 dim 1 : vector<16x384xf32>, i32 -> vector<16x384xf32>
    %298 = arith.addf %295, %297 : vector<16x384xf32>
    %299 = vector.extract_strided_slice %288 {offsets = [48, 0], sizes = [16, 384], strides = [1, 1]} : vector<144x384xf32> to vector<16x384xf32>
    %c1_i32_127 = arith.constant 1 : i32
    %300 = tpu.dynamic_rotate %299 by %c1_i32_127 dim 1 : vector<16x384xf32>, i32 -> vector<16x384xf32>
    %301 = arith.addf %298, %300 : vector<16x384xf32>
    %302 = vector.extract_strided_slice %288 {offsets = [80, 0], sizes = [16, 384], strides = [1, 1]} : vector<144x384xf32> to vector<16x384xf32>
    %c383_i32_128 = arith.constant 383 : i32
    %303 = tpu.dynamic_rotate %302 by %c383_i32_128 dim 1 : vector<16x384xf32>, i32 -> vector<16x384xf32>
    %304 = arith.addf %301, %303 : vector<16x384xf32>
    %305 = vector.extract_strided_slice %288 {offsets = [96, 0], sizes = [16, 384], strides = [1, 1]} : vector<144x384xf32> to vector<16x384xf32>
    %c367_i32_129 = arith.constant 367 : i32
    %306 = tpu.dynamic_rotate %305 by %c367_i32_129 dim 1 : vector<16x384xf32>, i32 -> vector<16x384xf32>
    %307 = arith.addf %304, %306 : vector<16x384xf32>
    %308 = vector.extract_strided_slice %288 {offsets = [112, 0], sizes = [16, 384], strides = [1, 1]} : vector<144x384xf32> to vector<16x384xf32>
    %c366_i32_130 = arith.constant 366 : i32
    %309 = tpu.dynamic_rotate %308 by %c366_i32_130 dim 1 : vector<16x384xf32>, i32 -> vector<16x384xf32>
    %310 = arith.addf %307, %309 : vector<16x384xf32>
    %311 = vector.extract_strided_slice %288 {offsets = [128, 0], sizes = [16, 384], strides = [1, 1]} : vector<144x384xf32> to vector<16x384xf32>
    %c365_i32_131 = arith.constant 365 : i32
    %312 = tpu.dynamic_rotate %311 by %c365_i32_131 dim 1 : vector<16x384xf32>, i32 -> vector<16x384xf32>
    %313 = arith.addf %310, %312 : vector<16x384xf32>
    %c0_132 = arith.constant 0 : index
    %c0_133 = arith.constant 0 : index
    %314 = vector.load %arg18[%c0_132, %c0_133] : memref<16x1xf32, #tpu.memory_space<vmem>>, vector<16x1xf32>
    %315 = vector.broadcast %314 : vector<16x1xf32> to vector<16x384xf32>
    %316 = arith.addf %313, %315 : vector<16x384xf32>
    %cst_134 = arith.constant 0.000000e+00 : f32
    %317 = vector.broadcast %cst_134 : f32 to vector<16x384xf32>
    %318 = arith.cmpf oge, %316, %317 : vector<16x384xf32>
    %319 = vector.broadcast %0 : f32 to vector<16x384xf32>
    %320 = arith.mulf %319, %316 : vector<16x384xf32>
    %321 = arith.select %318, %316, %320 : vector<16x384xi1>, vector<16x384xf32>
    %322 = vector.broadcast %1 : vector<1x384xf32> to vector<16x384xf32>
    %323 = arith.mulf %322, %321 : vector<16x384xf32>
    %cst_135 = arith.constant 0.000000e+00 : f32
    %324 = vector.broadcast %cst_135 : f32 to vector<16x384xf32>
    %325 = arith.cmpf oge, %323, %324 : vector<16x384xf32>
    %326 = vector.broadcast %0 : f32 to vector<16x384xf32>
    %327 = arith.mulf %326, %323 : vector<16x384xf32>
    %328 = arith.select %325, %323, %327 : vector<16x384xi1>, vector<16x384xf32>
    %c0_136 = arith.constant 0 : index
    %c96 = arith.constant 96 : index
    %c0_137 = arith.constant 0 : index
    %329 = vector.load %arg20[%c0_136, %c96, %c0_137] : memref<1x128x384xf32, #tpu.memory_space<vmem>>, vector<1x16x384xf32>
    %330 = vector.shape_cast %329 : vector<1x16x384xf32> to vector<16x384xf32>
    %331 = vector.shape_cast %328 : vector<16x384xf32> to vector<1x16x384xf32>
    tpu.vector_store %arg20[%c0_136, %c96, %c0_137], %331 {strides = array<i32>} : memref<1x128x384xf32, #tpu.memory_space<vmem>>, vector<1x16x384xf32>,
    %c0_138 = arith.constant 0 : index
    %c0_139 = arith.constant 0 : index
    %c0_140 = arith.constant 0 : index
    %332 = vector.load %arg20[%c0_138, %c0_139, %c0_140] : memref<1x128x384xf32, #tpu.memory_space<vmem>>, vector<1x112x384xf32>
    %333 = vector.shape_cast %332 : vector<1x112x384xf32> to vector<112x384xf32>
    %c0_141 = arith.constant 0 : index
    %c0_142 = arith.constant 0 : index
    %334 = vector.load %arg11[%c0_141, %c0_142] : memref<144x112xf32, #tpu.memory_space<vmem>>, vector<144x112xf32>
    %cst_143 = arith.constant dense<0.000000e+00> : vector<144x384xf32>
    %335 = tpu.matmul %334, %333, %cst_143 {dimension_numbers = #tpu.dot_dimension_numbers<[1], [0], [0], [1], [0, 0, 1, 1], [], []>} : vector<144x112xf32>, vector<112x384xf32>, vector<144x384xf32> -> vector<144x384xf32>
    %336 = vector.extract_strided_slice %335 {offsets = [64, 0], sizes = [16, 384], strides = [1, 1]} : vector<144x384xf32> to vector<16x384xf32>
    %337 = vector.extract_strided_slice %335 {offsets = [0, 0], sizes = [16, 384], strides = [1, 1]} : vector<144x384xf32> to vector<16x384xf32>
    %c19_i32_144 = arith.constant 19 : i32
    %338 = tpu.dynamic_rotate %337 by %c19_i32_144 dim 1 : vector<16x384xf32>, i32 -> vector<16x384xf32>
    %339 = arith.addf %336, %338 : vector<16x384xf32>
    %340 = vector.extract_strided_slice %335 {offsets = [16, 0], sizes = [16, 384], strides = [1, 1]} : vector<144x384xf32> to vector<16x384xf32>
    %c18_i32_145 = arith.constant 18 : i32
    %341 = tpu.dynamic_rotate %340 by %c18_i32_145 dim 1 : vector<16x384xf32>, i32 -> vector<16x384xf32>
    %342 = arith.addf %339, %341 : vector<16x384xf32>
    %343 = vector.extract_strided_slice %335 {offsets = [32, 0], sizes = [16, 384], strides = [1, 1]} : vector<144x384xf32> to vector<16x384xf32>
    %c17_i32_146 = arith.constant 17 : i32
    %344 = tpu.dynamic_rotate %343 by %c17_i32_146 dim 1 : vector<16x384xf32>, i32 -> vector<16x384xf32>
    %345 = arith.addf %342, %344 : vector<16x384xf32>
    %346 = vector.extract_strided_slice %335 {offsets = [48, 0], sizes = [16, 384], strides = [1, 1]} : vector<144x384xf32> to vector<16x384xf32>
    %c1_i32_147 = arith.constant 1 : i32
    %347 = tpu.dynamic_rotate %346 by %c1_i32_147 dim 1 : vector<16x384xf32>, i32 -> vector<16x384xf32>
    %348 = arith.addf %345, %347 : vector<16x384xf32>
    %349 = vector.extract_strided_slice %335 {offsets = [80, 0], sizes = [16, 384], strides = [1, 1]} : vector<144x384xf32> to vector<16x384xf32>
    %c383_i32_148 = arith.constant 383 : i32
    %350 = tpu.dynamic_rotate %349 by %c383_i32_148 dim 1 : vector<16x384xf32>, i32 -> vector<16x384xf32>
    %351 = arith.addf %348, %350 : vector<16x384xf32>
    %352 = vector.extract_strided_slice %335 {offsets = [96, 0], sizes = [16, 384], strides = [1, 1]} : vector<144x384xf32> to vector<16x384xf32>
    %c367_i32_149 = arith.constant 367 : i32
    %353 = tpu.dynamic_rotate %352 by %c367_i32_149 dim 1 : vector<16x384xf32>, i32 -> vector<16x384xf32>
    %354 = arith.addf %351, %353 : vector<16x384xf32>
    %355 = vector.extract_strided_slice %335 {offsets = [112, 0], sizes = [16, 384], strides = [1, 1]} : vector<144x384xf32> to vector<16x384xf32>
    %c366_i32_150 = arith.constant 366 : i32
    %356 = tpu.dynamic_rotate %355 by %c366_i32_150 dim 1 : vector<16x384xf32>, i32 -> vector<16x384xf32>
    %357 = arith.addf %354, %356 : vector<16x384xf32>
    %358 = vector.extract_strided_slice %335 {offsets = [128, 0], sizes = [16, 384], strides = [1, 1]} : vector<144x384xf32> to vector<16x384xf32>
    %c365_i32_151 = arith.constant 365 : i32
    %359 = tpu.dynamic_rotate %358 by %c365_i32_151 dim 1 : vector<16x384xf32>, i32 -> vector<16x384xf32>
    %360 = arith.addf %357, %359 : vector<16x384xf32>
    %c0_152 = arith.constant 0 : index
    %c0_153 = arith.constant 0 : index
    %361 = vector.load %arg19[%c0_152, %c0_153] : memref<16x1xf32, #tpu.memory_space<vmem>>, vector<16x1xf32>
    %362 = vector.broadcast %361 : vector<16x1xf32> to vector<16x384xf32>
    %363 = arith.addf %360, %362 : vector<16x384xf32>
    %cst_154 = arith.constant 0.000000e+00 : f32
    %364 = vector.broadcast %cst_154 : f32 to vector<16x384xf32>
    %365 = arith.cmpf oge, %363, %364 : vector<16x384xf32>
    %366 = vector.broadcast %0 : f32 to vector<16x384xf32>
    %367 = arith.mulf %366, %363 : vector<16x384xf32>
    %368 = arith.select %365, %363, %367 : vector<16x384xi1>, vector<16x384xf32>
    %369 = vector.broadcast %1 : vector<1x384xf32> to vector<16x384xf32>
    %370 = arith.mulf %369, %368 : vector<16x384xf32>
    %cst_155 = arith.constant 0.000000e+00 : f32
    %371 = vector.broadcast %cst_155 : f32 to vector<16x384xf32>
    %372 = arith.cmpf oge, %370, %371 : vector<16x384xf32>
    %373 = vector.broadcast %0 : f32 to vector<16x384xf32>
    %374 = arith.mulf %373, %370 : vector<16x384xf32>
    %375 = arith.select %372, %370, %374 : vector<16x384xi1>, vector<16x384xf32>
    %c0_156 = arith.constant 0 : index
    %c112 = arith.constant 112 : index
    %c0_157 = arith.constant 0 : index
    %376 = vector.load %arg20[%c0_156, %c112, %c0_157] : memref<1x128x384xf32, #tpu.memory_space<vmem>>, vector<1x16x384xf32>
    %377 = vector.shape_cast %376 : vector<1x16x384xf32> to vector<16x384xf32>
    %378 = vector.shape_cast %375 : vector<16x384xf32> to vector<1x16x384xf32>
    tpu.vector_store %arg20[%c0_156, %c112, %c0_157], %378 {strides = array<i32>} : memref<1x128x384xf32, #tpu.memory_space<vmem>>, vector<1x16x384xf32>,
    return
  }
  func.func @transform_0(%arg0: i32) -> (i32, i32, i32) {
    %c0_i32 = arith.constant 0 : i32
    %c0_i32_0 = arith.constant 0 : i32
    %c0_i32_1 = arith.constant 0 : i32
    return %arg0, %c0_i32, %c0_i32_0 : i32, i32, i32
  }
  func.func @transform_1(%arg0: i32) -> (i32, i32) {
    %c0_i32 = arith.constant 0 : i32
    %c0_i32_0 = arith.constant 0 : i32
    %c0_i32_1 = arith.constant 0 : i32
    return %c0_i32, %c0_i32_0 : i32, i32
  }
  func.func @transform_2(%arg0: i32) -> (i32, i32) {
    %c0_i32 = arith.constant 0 : i32
    %c0_i32_0 = arith.constant 0 : i32
    %c0_i32_1 = arith.constant 0 : i32
    return %c0_i32, %c0_i32_0 : i32, i32
  }
  func.func @transform_3(%arg0: i32) -> (i32, i32) {
    %c0_i32 = arith.constant 0 : i32
    %c0_i32_0 = arith.constant 0 : i32
    %c0_i32_1 = arith.constant 0 : i32
    return %c0_i32, %c0_i32_0 : i32, i32
  }
  func.func @transform_4(%arg0: i32) -> (i32, i32) {
    %c0_i32 = arith.constant 0 : i32
    %c0_i32_0 = arith.constant 0 : i32
    %c0_i32_1 = arith.constant 0 : i32
    return %c0_i32, %c0_i32_0 : i32, i32
  }
  func.func @transform_5(%arg0: i32) -> (i32, i32) {
    %c0_i32 = arith.constant 0 : i32
    %c0_i32_0 = arith.constant 0 : i32
    %c0_i32_1 = arith.constant 0 : i32
    return %c0_i32, %c0_i32_0 : i32, i32
  }
  func.func @transform_6(%arg0: i32) -> (i32, i32) {
    %c0_i32 = arith.constant 0 : i32
    %c0_i32_0 = arith.constant 0 : i32
    %c0_i32_1 = arith.constant 0 : i32
    return %c0_i32, %c0_i32_0 : i32, i32
  }
  func.func @transform_7(%arg0: i32) -> (i32, i32) {
    %c0_i32 = arith.constant 0 : i32
    %c0_i32_0 = arith.constant 0 : i32
    %c0_i32_1 = arith.constant 0 : i32
    return %c0_i32, %c0_i32_0 : i32, i32
  }
  func.func @transform_8(%arg0: i32) -> (i32, i32) {
    %c0_i32 = arith.constant 0 : i32
    %c0_i32_0 = arith.constant 0 : i32
    %c0_i32_1 = arith.constant 0 : i32
    return %c0_i32, %c0_i32_0 : i32, i32
  }
  func.func @transform_9(%arg0: i32) -> (i32, i32) {
    %c0_i32 = arith.constant 0 : i32
    %c0_i32_0 = arith.constant 0 : i32
    %c0_i32_1 = arith.constant 0 : i32
    return %c0_i32, %c0_i32_0 : i32, i32
  }
  func.func @transform_10(%arg0: i32) -> (i32, i32) {
    %c0_i32 = arith.constant 0 : i32
    %c0_i32_0 = arith.constant 0 : i32
    %c0_i32_1 = arith.constant 0 : i32
    return %c0_i32, %c0_i32_0 : i32, i32
  }
  func.func @transform_11(%arg0: i32) -> (i32, i32) {
    %c0_i32 = arith.constant 0 : i32
    %c0_i32_0 = arith.constant 0 : i32
    %c0_i32_1 = arith.constant 0 : i32
    return %c0_i32, %c0_i32_0 : i32, i32
  }
  func.func @transform_12(%arg0: i32) -> (i32, i32) {
    %c0_i32 = arith.constant 0 : i32
    %c0_i32_0 = arith.constant 0 : i32
    %c0_i32_1 = arith.constant 0 : i32
    return %c0_i32, %c0_i32_0 : i32, i32
  }
  func.func @transform_13(%arg0: i32) -> (i32, i32) {
    %c0_i32 = arith.constant 0 : i32
    %c0_i32_0 = arith.constant 0 : i32
    %c0_i32_1 = arith.constant 0 : i32
    return %c0_i32, %c0_i32_0 : i32, i32
  }
  func.func @transform_14(%arg0: i32) -> (i32, i32) {
    %c0_i32 = arith.constant 0 : i32
    %c0_i32_0 = arith.constant 0 : i32
    %c0_i32_1 = arith.constant 0 : i32
    return %c0_i32, %c0_i32_0 : i32, i32
  }
  func.func @transform_15(%arg0: i32) -> (i32, i32) {
    %c0_i32 = arith.constant 0 : i32
    %c0_i32_0 = arith.constant 0 : i32
    %c0_i32_1 = arith.constant 0 : i32
    return %c0_i32, %c0_i32_0 : i32, i32
  }
  func.func @transform_16(%arg0: i32) -> (i32, i32) {
    %c0_i32 = arith.constant 0 : i32
    %c0_i32_0 = arith.constant 0 : i32
    %c0_i32_1 = arith.constant 0 : i32
    return %c0_i32, %c0_i32_0 : i32, i32
  }
  func.func @transform_17(%arg0: i32) -> (i32, i32) {
    %c0_i32 = arith.constant 0 : i32
    %c0_i32_0 = arith.constant 0 : i32
    %c0_i32_1 = arith.constant 0 : i32
    return %c0_i32, %c0_i32_0 : i32, i32
  }
  func.func @transform_18(%arg0: i32) -> (i32, i32) {
    %c0_i32 = arith.constant 0 : i32
    %c0_i32_0 = arith.constant 0 : i32
    %c0_i32_1 = arith.constant 0 : i32
    return %c0_i32, %c0_i32_0 : i32, i32
  }
  func.func @transform_19(%arg0: i32) -> (i32, i32, i32) {
    %c0_i32 = arith.constant 0 : i32
    %c0_i32_0 = arith.constant 0 : i32
    %c0_i32_1 = arith.constant 0 : i32
    return %arg0, %c0_i32, %c0_i32_0 : i32, i32, i32
  }
}

</mosaic_0001>

<llo_original>
// kernel: dense_block_forward.1
$region0: #{dense_block_forward.1}
  #allocation0 [shape = 'u32[]', space=smem, size = 0x4, offset = 0x4, fixed_abs, tag = 'smem constant byte address 0x4 - core index']
  #allocation1 [shape = 'u32[144,128]{1,0:T(1,128)}', space=vmem, size = 0x12000, scoped, tag = 'internal scratch']
  #allocation2 [shape = 'f32[16,384]{1,0:T(8,128)}', space=vmem, size = 0x6000, scoped, tag = 'scratch operand']
  #allocation3 [shape = 'f32[1,1]{1,0:T(1,128)S(6)}', space=smem, size = 0x200, scoped, tag = 'scoped memory for dense_block_forward.1']
  %s0 = inlined_call_operand.vmem [shape: f32[2,8,384], index: 0, kind: input, shape index: {}]
  %s1 = inlined_call_operand.vmem [shape: f32[1,384], index: 1, kind: input, shape index: {}]
  %s2 = inlined_call_operand.<no memory space> [shape: f32[1,1], index: 2, kind: input, shape index: {}]
  %s3 = inlined_call_operand.vmem [shape: f32[144,8], index: 3, kind: input, shape index: {}]
  %s4 = inlined_call_operand.vmem [shape: f32[144,16], index: 4, kind: input, shape index: {}]
  %s5 = inlined_call_operand.vmem [shape: f32[144,32], index: 5, kind: input, shape index: {}]
  %s6 = inlined_call_operand.vmem [shape: f32[144,48], index: 6, kind: input, shape index: {}]
  %s7 = inlined_call_operand.vmem [shape: f32[144,64], index: 7, kind: input, shape index: {}]
  %s8 = inlined_call_operand.vmem [shape: f32[144,80], index: 8, kind: input, shape index: {}]
  %s9 = inlined_call_operand.vmem [shape: f32[144,96], index: 9, kind: input, shape index: {}]
  %s10 = inlined_call_operand.vmem [shape: f32[144,112], index: 10, kind: input, shape index: {}]
  %s11 = inlined_call_operand.vmem [shape: f32[16,1], index: 11, kind: input, shape index: {}]
  %s12 = inlined_call_operand.vmem [shape: f32[16,1], index: 12, kind: input, shape index: {}]
  %s13 = inlined_call_operand.vmem [shape: f32[16,1], index: 13, kind: input, shape index: {}]
  %s14 = inlined_call_operand.vmem [shape: f32[16,1], index: 14, kind: input, shape index: {}]
  %s15 = inlined_call_operand.vmem [shape: f32[16,1], index: 15, kind: input, shape index: {}]
  %s16 = inlined_call_operand.vmem [shape: f32[16,1], index: 16, kind: input, shape index: {}]
  %s17 = inlined_call_operand.vmem [shape: f32[16,1], index: 17, kind: input, shape index: {}]
  %s18 = inlined_call_operand.vmem [shape: f32[16,1], index: 18, kind: input, shape index: {}]
  %s19 = inlined_call_operand.vmem [shape: f32[2,128,384], index: 19, kind: output, shape index: {}]
  %s20 = sld [smem:[#allocation0]]
  $region109: #{dense_block_forward.1} parent=0
    _
  %s22 = ssub.s32 1, %s20
  %s23 = scalar_select 0, %s22, %s20
  %24 = sst [smem:[#allocation3]] %s2
  loop: start=0, step=1, limit=4
  $region2: #{dense_block_forward.1} parent=0 // loop_pre_header
    _
  $region3: #{dense_block_forward.1} parent=0 // loop_header
    %s26 = sphi 0, %s30
    %p27 = scmp.ge.s32.totalorder %s26, 4
    %s36 = sphi 0, %s38
    %s39 = sphi 0, %s36
    %s40 = sphi 0, %s39
    %s56 = sphi 0, %s40
    %s60 = sphi 0, %s60
    %s62 = sphi 0, %s60
    %s63 = sphi 0, %s62
    %s77 = sphi 0, %s63
    %s81 = sphi 0, %s81
    %s83 = sphi 0, %s81
    %s84 = sphi 0, %s83
    %s98 = sphi 0, %s84
    %s102 = sphi 0, %s102
    %s104 = sphi 0, %s102
    %s105 = sphi 0, %s104
    %s119 = sphi 0, %s105
    %s123 = sphi 0, %s123
    %s125 = sphi 0, %s123
    %s126 = sphi 0, %s125
    %s140 = sphi 0, %s126
    %s144 = sphi 0, %s144
    %s146 = sphi 0, %s144
    %s147 = sphi 0, %s146
    %s161 = sphi 0, %s147
    %s165 = sphi 0, %s165
    %s167 = sphi 0, %s165
    %s168 = sphi 0, %s167
    %s182 = sphi 0, %s168
    %s186 = sphi 0, %s186
    %s188 = sphi 0, %s186
    %s189 = sphi 0, %s188
    %s203 = sphi 0, %s189
    %s207 = sphi 0, %s207
    %s209 = sphi 0, %s207
    %s210 = sphi 0, %s209
    %s224 = sphi 0, %s210
    %s228 = sphi 0, %s228
    %s230 = sphi 0, %s228
    %s231 = sphi 0, %s230
    %s245 = sphi 0, %s231
    %s249 = sphi 0, %s249
    %s251 = sphi 0, %s249
    %s252 = sphi 0, %s251
    %s266 = sphi 0, %s252
    %s270 = sphi 0, %s270
    %s272 = sphi 0, %s270
    %s273 = sphi 0, %s272
    %s287 = sphi 0, %s273
    %s291 = sphi 0, %s291
    %s293 = sphi 0, %s291
    %s294 = sphi 0, %s293
    %s308 = sphi 0, %s294
    %s312 = sphi 0, %s312
    %s314 = sphi 0, %s312
    %s315 = sphi 0, %s314
    %s329 = sphi 0, %s315
    %s333 = sphi 0, %s333
    %s335 = sphi 0, %s333
    %s336 = sphi 0, %s335
    %s350 = sphi 0, %s336
    %s354 = sphi 0, %s354
    %s356 = sphi 0, %s354
    %s357 = sphi 0, %s356
    %s371 = sphi 0, %s357
    %s375 = sphi 0, %s375
    %s377 = sphi 0, %s375
    %s378 = sphi 0, %s377
    %s392 = sphi 0, %s378
    %s396 = sphi 0, %s396
    %s398 = sphi 0, %s396
    %s399 = sphi 0, %s398
    %s413 = sphi 0, %s399
    %s417 = sphi 0, %s417
    %s419 = sphi 0, %s417
    %s420 = sphi 0, %s419
    %s434 = sphi 0, %s420
    %s440 = sphi 0, %s442
    %s443 = sphi 0, %s440
    %s444 = sphi 0, %s443
    %s460 = sphi 0, %s444
  $region4: #{dense_block_forward.1} parent=0 // loop_header_branch
    %29 = sbr.rel (%p27) target = $region8
  $region5: #{dense_block_forward.1} parent=0 // loop_body
    %s31 = ssub.s32 %s26, 1
    %s32 = ssub.s32 %s26, 2
    %s33 = sadd.s32 %s26, 1
    %s34 = ssub.s32 %s26, %s33
    %p35 = scmp.eq.s32.totalorder %s34, 0
    %s37 = sadd.s32 %s36, 1
    %s38 = scalar_select %p35, %s36, %s37
    %p41 = pneg %p35
    %p42 = scmp.eq.s32.totalorder %s26, 1
    %p43 = por %p41, %p42
    %p44 = scmp.ne.s32.totalorder %s36, %s39
    %p45 = scmp.eq.s32.totalorder %s26, 0
    %p46 = por %p44, %p45
    %p47 = scmp.ne.s32.totalorder %s36, %s39
    %p48 = scmp.eq.s32.totalorder %s31, 1
    %p49 = por %p47, %p48
    %p50 = scmp.ne.s32.totalorder %s39, %s40
    %p51 = scmp.eq.s32.totalorder %s31, 0
    %p52 = por %p50, %p51
    %p53 = scmp.ne.s32.totalorder %s39, %s40
    %p54 = scmp.eq.s32.totalorder %s32, 1
    %p55 = por %p53, %p54
    %p57 = scmp.ne.s32.totalorder %s40, %s56
    %p58 = scmp.eq.s32.totalorder %s32, 0
    %p59 = por %p57, %p58
    %s61 = sadd.s32 %s60, 1
    %p64 = scmp.eq.s32.totalorder %s26, 1
    %p65 = scmp.ne.s32.totalorder %s60, %s62
    %p66 = scmp.eq.s32.totalorder %s26, 0
    %p67 = por %p65, %p66
    %p68 = scmp.ne.s32.totalorder %s60, %s62
    %p69 = scmp.eq.s32.totalorder %s31, 1
    %p70 = por %p68, %p69
    %p71 = scmp.ne.s32.totalorder %s62, %s63
    %p72 = scmp.eq.s32.totalorder %s31, 0
    %p73 = por %p71, %p72
    %p74 = scmp.ne.s32.totalorder %s62, %s63
    %p75 = scmp.eq.s32.totalorder %s32, 1
    %p76 = por %p74, %p75
    %p78 = scmp.ne.s32.totalorder %s63, %s77
    %p79 = scmp.eq.s32.totalorder %s32, 0
    %p80 = por %p78, %p79
    %s82 = sadd.s32 %s81, 1
    %p85 = scmp.eq.s32.totalorder %s26, 1
    %p86 = scmp.ne.s32.totalorder %s81, %s83
    %p87 = scmp.eq.s32.totalorder %s26, 0
    %p88 = por %p86, %p87
    %p89 = scmp.ne.s32.totalorder %s81, %s83
    %p90 = scmp.eq.s32.totalorder %s31, 1
    %p91 = por %p89, %p90
    %p92 = scmp.ne.s32.totalorder %s83, %s84
    %p93 = scmp.eq.s32.totalorder %s31, 0
    %p94 = por %p92, %p93
    %p95 = scmp.ne.s32.totalorder %s83, %s84
    %p96 = scmp.eq.s32.totalorder %s32, 1
    %p97 = por %p95, %p96
    %p99 = scmp.ne.s32.totalorder %s84, %s98
    %p100 = scmp.eq.s32.totalorder %s32, 0
    %p101 = por %p99, %p100
    %s103 = sadd.s32 %s102, 1
    %p106 = scmp.eq.s32.totalorder %s26, 1
    %p107 = scmp.ne.s32.totalorder %s102, %s104
    %p108 = scmp.eq.s32.totalorder %s26, 0
    %p109 = por %p107, %p108
    %p110 = scmp.ne.s32.totalorder %s102, %s104
    %p111 = scmp.eq.s32.totalorder %s31, 1
    %p112 = por %p110, %p111
    %p113 = scmp.ne.s32.totalorder %s104, %s105
    %p114 = scmp.eq.s32.totalorder %s31, 0
    %p115 = por %p113, %p114
    %p116 = scmp.ne.s32.totalorder %s104, %s105
    %p117 = scmp.eq.s32.totalorder %s32, 1
    %p118 = por %p116, %p117
    %p120 = scmp.ne.s32.totalorder %s105, %s119
    %p121 = scmp.eq.s32.totalorder %s32, 0
    %p122 = por %p120, %p121
    %s124 = sadd.s32 %s123, 1
    %p127 = scmp.eq.s32.totalorder %s26, 1
    %p128 = scmp.ne.s32.totalorder %s123, %s125
    %p129 = scmp.eq.s32.totalorder %s26, 0
    %p130 = por %p128, %p129
    %p131 = scmp.ne.s32.totalorder %s123, %s125
    %p132 = scmp.eq.s32.totalorder %s31, 1
    %p133 = por %p131, %p132
    %p134 = scmp.ne.s32.totalorder %s125, %s126
    %p135 = scmp.eq.s32.totalorder %s31, 0
    %p136 = por %p134, %p135
    %p137 = scmp.ne.s32.totalorder %s125, %s126
    %p138 = scmp.eq.s32.totalorder %s32, 1
    %p139 = por %p137, %p138
    %p141 = scmp.ne.s32.totalorder %s126, %s140
    %p142 = scmp.eq.s32.totalorder %s32, 0
    %p143 = por %p141, %p142
    %s145 = sadd.s32 %s144, 1
    %p148 = scmp.eq.s32.totalorder %s26, 1
    %p149 = scmp.ne.s32.totalorder %s144, %s146
    %p150 = scmp.eq.s32.totalorder %s26, 0
    %p151 = por %p149, %p150
    %p152 = scmp.ne.s32.totalorder %s144, %s146
    %p153 = scmp.eq.s32.totalorder %s31, 1
    %p154 = por %p152, %p153
    %p155 = scmp.ne.s32.totalorder %s146, %s147
    %p156 = scmp.eq.s32.totalorder %s31, 0
    %p157 = por %p155, %p156
    %p158 = scmp.ne.s32.totalorder %s146, %s147
    %p159 = scmp.eq.s32.totalorder %s32, 1
    %p160 = por %p158, %p159
    %p162 = scmp.ne.s32.totalorder %s147, %s161
    %p163 = scmp.eq.s32.totalorder %s32, 0
    %p164 = por %p162, %p163
    %s166 = sadd.s32 %s165, 1
    %p169 = scmp.eq.s32.totalorder %s26, 1
    %p170 = scmp.ne.s32.totalorder %s165, %s167
    %p171 = scmp.eq.s32.totalorder %s26, 0
    %p172 = por %p170, %p171
    %p173 = scmp.ne.s32.totalorder %s165, %s167
    %p174 = scmp.eq.s32.totalorder %s31, 1
    %p175 = por %p173, %p174
    %p176 = scmp.ne.s32.totalorder %s167, %s168
    %p177 = scmp.eq.s32.totalorder %s31, 0
    %p178 = por %p176, %p177
    %p179 = scmp.ne.s32.totalorder %s167, %s168
    %p180 = scmp.eq.s32.totalorder %s32, 1
    %p181 = por %p179, %p180
    %p183 = scmp.ne.s32.totalorder %s168, %s182
    %p184 = scmp.eq.s32.totalorder %s32, 0
    %p185 = por %p183, %p184
    %s187 = sadd.s32 %s186, 1
    %p190 = scmp.eq.s32.totalorder %s26, 1
    %p191 = scmp.ne.s32.totalorder %s186, %s188
    %p192 = scmp.eq.s32.totalorder %s26, 0
    %p193 = por %p191, %p192
    %p194 = scmp.ne.s32.totalorder %s186, %s188
    %p195 = scmp.eq.s32.totalorder %s31, 1
    %p196 = por %p194, %p195
    %p197 = scmp.ne.s32.totalorder %s188, %s189
    %p198 = scmp.eq.s32.totalorder %s31, 0
    %p199 = por %p197, %p198
    %p200 = scmp.ne.s32.totalorder %s188, %s189
    %p201 = scmp.eq.s32.totalorder %s32, 1
    %p202 = por %p200, %p201
    %p204 = scmp.ne.s32.totalorder %s189, %s203
    %p205 = scmp.eq.s32.totalorder %s32, 0
    %p206 = por %p204, %p205
    %s208 = sadd.s32 %s207, 1
    %p211 = scmp.eq.s32.totalorder %s26, 1
    %p212 = scmp.ne.s32.totalorder %s207, %s209
    %p213 = scmp.eq.s32.totalorder %s26, 0
    %p214 = por %p212, %p213
    %p215 = scmp.ne.s32.totalorder %s207, %s209
    %p216 = scmp.eq.s32.totalorder %s31, 1
    %p217 = por %p215, %p216
    %p218 = scmp.ne.s32.totalorder %s209, %s210
    %p219 = scmp.eq.s32.totalorder %s31, 0
    %p220 = por %p218, %p219
    %p221 = scmp.ne.s32.totalorder %s209, %s210
    %p222 = scmp.eq.s32.totalorder %s32, 1
    %p223 = por %p221, %p222
    %p225 = scmp.ne.s32.totalorder %s210, %s224
    %p226 = scmp.eq.s32.totalorder %s32, 0
    %p227 = por %p225, %p226
    %s229 = sadd.s32 %s228, 1
    %p232 = scmp.eq.s32.totalorder %s26, 1
    %p233 = scmp.ne.s32.totalorder %s228, %s230
    %p234 = scmp.eq.s32.totalorder %s26, 0
    %p235 = por %p233, %p234
    %p236 = scmp.ne.s32.totalorder %s228, %s230
    %p237 = scmp.eq.s32.totalorder %s31, 1
    %p238 = por %p236, %p237
    %p239 = scmp.ne.s32.totalorder %s230, %s231
    %p240 = scmp.eq.s32.totalorder %s31, 0
    %p241 = por %p239, %p240
    %p242 = scmp.ne.s32.totalorder %s230, %s231
    %p243 = scmp.eq.s32.totalorder %s32, 1
    %p244 = por %p242, %p243
    %p246 = scmp.ne.s32.totalorder %s231, %s245
    %p247 = scmp.eq.s32.totalorder %s32, 0
    %p248 = por %p246, %p247
    %s250 = sadd.s32 %s249, 1
    %p253 = scmp.eq.s32.totalorder %s26, 1
    %p254 = scmp.ne.s32.totalorder %s249, %s251
    %p255 = scmp.eq.s32.totalorder %s26, 0
    %p256 = por %p254, %p255
    %p257 = scmp.ne.s32.totalorder %s249, %s251
    %p258 = scmp.eq.s32.totalorder %s31, 1
    %p259 = por %p257, %p258
    %p260 = scmp.ne.s32.totalorder %s251, %s252
    %p261 = scmp.eq.s32.totalorder %s31, 0
    %p262 = por %p260, %p261
    %p263 = scmp.ne.s32.totalorder %s251, %s252
    %p264 = scmp.eq.s32.totalorder %s32, 1
    %p265 = por %p263, %p264
    %p267 = scmp.ne.s32.totalorder %s252, %s266
    %p268 = scmp.eq.s32.totalorder %s32, 0
    %p269 = por %p267, %p268
    %s271 = sadd.s32 %s270, 1
    %p274 = scmp.eq.s32.totalorder %s26, 1
    %p275 = scmp.ne.s32.totalorder %s270, %s272
    %p276 = scmp.eq.s32.totalorder %s26, 0
    %p277 = por %p275, %p276
    %p278 = scmp.ne.s32.totalorder %s270, %s272
    %p279 = scmp.eq.s32.totalorder %s31, 1
    %p280 = por %p278, %p279
    %p281 = scmp.ne.s32.totalorder %s272, %s273
    %p282 = scmp.eq.s32.totalorder %s31, 0
    %p283 = por %p281, %p282
    %p284 = scmp.ne.s32.totalorder %s272, %s273
    %p285 = scmp.eq.s32.totalorder %s32, 1
    %p286 = por %p284, %p285
    %p288 = scmp.ne.s32.totalorder %s273, %s287
    %p289 = scmp.eq.s32.totalorder %s32, 0
    %p290 = por %p288, %p289
    %s292 = sadd.s32 %s291, 1
    %p295 = scmp.eq.s32.totalorder %s26, 1
    %p296 = scmp.ne.s32.totalorder %s291, %s293
    %p297 = scmp.eq.s32.totalorder %s26, 0
    %p298 = por %p296, %p297
    %p299 = scmp.ne.s32.totalorder %s291, %s293
    %p300 = scmp.eq.s32.totalorder %s31, 1
    %p301 = por %p299, %p300
    %p302 = scmp.ne.s32.totalorder %s293, %s294
    %p303 = scmp.eq.s32.totalorder %s31, 0
    %p304 = por %p302, %p303
    %p305 = scmp.ne.s32.totalorder %s293, %s294
    %p306 = scmp.eq.s32.totalorder %s32, 1
    %p307 = por %p305, %p306
    %p309 = scmp.ne.s32.totalorder %s294, %s308
    %p310 = scmp.eq.s32.totalorder %s32, 0
    %p311 = por %p309, %p310
    %s313 = sadd.s32 %s312, 1
    %p316 = scmp.eq.s32.totalorder %s26, 1
    %p317 = scmp.ne.s32.totalorder %s312, %s314
    %p318 = scmp.eq.s32.totalorder %s26, 0
    %p319 = por %p317, %p318
    %p320 = scmp.ne.s32.totalorder %s312, %s314
    %p321 = scmp.eq.s32.totalorder %s31, 1
    %p322 = por %p320, %p321
    %p323 = scmp.ne.s32.totalorder %s314, %s315
    %p324 = scmp.eq.s32.totalorder %s31, 0
    %p325 = por %p323, %p324
    %p326 = scmp.ne.s32.totalorder %s314, %s315
    %p327 = scmp.eq.s32.totalorder %s32, 1
    %p328 = por %p326, %p327
    %p330 = scmp.ne.s32.totalorder %s315, %s329
    %p331 = scmp.eq.s32.totalorder %s32, 0
    %p332 = por %p330, %p331
    %s334 = sadd.s32 %s333, 1
    %p337 = scmp.eq.s32.totalorder %s26, 1
    %p338 = scmp.ne.s32.totalorder %s333, %s335
    %p339 = scmp.eq.s32.totalorder %s26, 0
    %p340 = por %p338, %p339
    %p341 = scmp.ne.s32.totalorder %s333, %s335
    %p342 = scmp.eq.s32.totalorder %s31, 1
    %p343 = por %p341, %p342
    %p344 = scmp.ne.s32.totalorder %s335, %s336
    %p345 = scmp.eq.s32.totalorder %s31, 0
    %p346 = por %p344, %p345
    %p347 = scmp.ne.s32.totalorder %s335, %s336
    %p348 = scmp.eq.s32.totalorder %s32, 1
    %p349 = por %p347, %p348
    %p351 = scmp.ne.s32.totalorder %s336, %s350
    %p352 = scmp.eq.s32.totalorder %s32, 0
    %p353 = por %p351, %p352
    %s355 = sadd.s32 %s354, 1
    %p358 = scmp.eq.s32.totalorder %s26, 1
    %p359 = scmp.ne.s32.totalorder %s354, %s356
    %p360 = scmp.eq.s32.totalorder %s26, 0
    %p361 = por %p359, %p360
    %p362 = scmp.ne.s32.totalorder %s354, %s356
    %p363 = scmp.eq.s32.totalorder %s31, 1
    %p364 = por %p362, %p363
    %p365 = scmp.ne.s32.totalorder %s356, %s357
    %p366 = scmp.eq.s32.totalorder %s31, 0
    %p367 = por %p365, %p366
    %p368 = scmp.ne.s32.totalorder %s356, %s357
    %p369 = scmp.eq.s32.totalorder %s32, 1
    %p370 = por %p368, %p369
    %p372 = scmp.ne.s32.totalorder %s357, %s371
    %p373 = scmp.eq.s32.totalorder %s32, 0
    %p374 = por %p372, %p373
    %s376 = sadd.s32 %s375, 1
    %p379 = scmp.eq.s32.totalorder %s26, 1
    %p380 = scmp.ne.s32.totalorder %s375, %s377
    %p381 = scmp.eq.s32.totalorder %s26, 0
    %p382 = por %p380, %p381
    %p383 = scmp.ne.s32.totalorder %s375, %s377
    %p384 = scmp.eq.s32.totalorder %s31, 1
    %p385 = por %p383, %p384
    %p386 = scmp.ne.s32.totalorder %s377, %s378
    %p387 = scmp.eq.s32.totalorder %s31, 0
    %p388 = por %p386, %p387
    %p389 = scmp.ne.s32.totalorder %s377, %s378
    %p390 = scmp.eq.s32.totalorder %s32, 1
    %p391 = por %p389, %p390
    %p393 = scmp.ne.s32.totalorder %s378, %s392
    %p394 = scmp.eq.s32.totalorder %s32, 0
    %p395 = por %p393, %p394
    %s397 = sadd.s32 %s396, 1
    %p400 = scmp.eq.s32.totalorder %s26, 1
    %p401 = scmp.ne.s32.totalorder %s396, %s398
    %p402 = scmp.eq.s32.totalorder %s26, 0
    %p403 = por %p401, %p402
    %p404 = scmp.ne.s32.totalorder %s396, %s398
    %p405 = scmp.eq.s32.totalorder %s31, 1
    %p406 = por %p404, %p405
    %p407 = scmp.ne.s32.totalorder %s398, %s399
    %p408 = scmp.eq.s32.totalorder %s31, 0
    %p409 = por %p407, %p408
    %p410 = scmp.ne.s32.totalorder %s398, %s399
    %p411 = scmp.eq.s32.totalorder %s32, 1
    %p412 = por %p410, %p411
    %p414 = scmp.ne.s32.totalorder %s399, %s413
    %p415 = scmp.eq.s32.totalorder %s32, 0
    %p416 = por %p414, %p415
    %s418 = sadd.s32 %s417, 1
    %p421 = scmp.eq.s32.totalorder %s26, 1
    %p422 = scmp.ne.s32.totalorder %s417, %s419
    %p423 = scmp.eq.s32.totalorder %s26, 0
    %p424 = por %p422, %p423
    %p425 = scmp.ne.s32.totalorder %s417, %s419
    %p426 = scmp.eq.s32.totalorder %s31, 1
    %p427 = por %p425, %p426
    %p428 = scmp.ne.s32.totalorder %s419, %s420
    %p429 = scmp.eq.s32.totalorder %s31, 0
    %p430 = por %p428, %p429
    %p431 = scmp.ne.s32.totalorder %s419, %s420
    %p432 = scmp.eq.s32.totalorder %s32, 1
    %p433 = por %p431, %p432
    %p435 = scmp.ne.s32.totalorder %s420, %s434
    %p436 = scmp.eq.s32.totalorder %s32, 0
    %p437 = por %p435, %p436
    %s438 = ssub.s32 %s26, %s33
    %p439 = scmp.eq.s32.totalorder %s438, 0
    %s441 = sadd.s32 %s440, 1
    %s442 = scalar_select %p439, %s440, %s441
    %p445 = pneg %p439
    %p446 = scmp.eq.s32.totalorder %s26, 1
    %p447 = por %p445, %p446
    %p448 = scmp.ne.s32.totalorder %s440, %s443
    %p449 = scmp.eq.s32.totalorder %s26, 0
    %p450 = por %p448, %p449
    %p451 = scmp.ne.s32.totalorder %s440, %s443
    %p452 = scmp.eq.s32.totalorder %s31, 1
    %p453 = por %p451, %p452
    %p454 = scmp.ne.s32.totalorder %s443, %s444
    %p455 = scmp.eq.s32.totalorder %s31, 0
    %p456 = por %p454, %p455
    %p457 = scmp.ne.s32.totalorder %s443, %s444
    %p458 = scmp.eq.s32.totalorder %s32, 1
    %p459 = por %p457, %p458
    %p461 = scmp.ne.s32.totalorder %s444, %s460
    %p462 = scmp.eq.s32.totalorder %s32, 0
    %p463 = por %p461, %p462
    %p464 = scmp.le.s32.totalorder 1, %s26
    %p465 = scmp.lt.s32.totalorder %s26, 3
    %p466 = pnand %p464, %p465
    %p467 = pneg %p466
    // Predicated region
    $region9: #{dense_block_forward.1} parent=5 // pred_check
      _
    $region10: #{dense_block_forward.1} parent=5 // pred_check_branch
      %469 = sbr.rel (%p466) target = $region12
    $region11: #{dense_block_forward.1} parent=5 // pred_region
      %s470 = ssub.s32 %s26, 1
      // Predicated region
      $region13: #{dense_block_forward.1} parent=11 // pred_check
        %p471 = pneg %p73
      $region14: #{dense_block_forward.1} parent=11 // pred_check_branch
        %473 = sbr.rel (%p471) target = $region16
      $region15: #{dense_block_forward.1} parent=11 // pred_region
        _
      $region16: #{dense_block_forward.1} parent=11 // pred_fallthru
        _
      // Predicated region
      $region17: #{dense_block_forward.1} parent=11 // pred_check
        %p474 = pneg %p94
      $region18: #{dense_block_forward.1} parent=11 // pred_check_branch
        %476 = sbr.rel (%p474) target = $region20
      $region19: #{dense_block_forward.1} parent=11 // pred_region
        _
      $region20: #{dense_block_forward.1} parent=11 // pred_fallthru
        _
      // Predicated region
      $region21: #{dense_block_forward.1} parent=11 // pred_check
        %p477 = pneg %p115
      $region22: #{dense_block_forward.1} parent=11 // pred_check_branch
        %479 = sbr.rel (%p477) target = $region24
      $region23: #{dense_block_forward.1} parent=11 // pred_region
        _
      $region24: #{dense_block_forward.1} parent=11 // pred_fallthru
        _
      // Predicated region
      $region25: #{dense_block_forward.1} parent=11 // pred_check
        %p480 = pneg %p136
      $region26: #{dense_block_forward.1} parent=11 // pred_check_branch
        %482 = sbr.rel (%p480) target = $region28
      $region27: #{dense_block_forward.1} parent=11 // pred_region
        _
      $region28: #{dense_block_forward.1} parent=11 // pred_fallthru
        _
      // Predicated region
      $region29: #{dense_block_forward.1} parent=11 // pred_check
        %p483 = pneg %p157
      $region30: #{dense_block_forward.1} parent=11 // pred_check_branch
        %485 = sbr.rel (%p483) target = $region32
      $region31: #{dense_block_forward.1} parent=11 // pred_region
        _
      $region32: #{dense_block_forward.1} parent=11 // pred_fallthru
        _
      // Predicated region
      $region33: #{dense_block_forward.1} parent=11 // pred_check
        %p486 = pneg %p178
      $region34: #{dense_block_forward.1} parent=11 // pred_check_branch
        %488 = sbr.rel (%p486) target = $region36
      $region35: #{dense_block_forward.1} parent=11 // pred_region
        _
      $region36: #{dense_block_forward.1} parent=11 // pred_fallthru
        _
      // Predicated region
      $region37: #{dense_block_forward.1} parent=11 // pred_check
        %p489 = pneg %p199
      $region38: #{dense_block_forward.1} parent=11 // pred_check_branch
        %491 = sbr.rel (%p489) target = $region40
      $region39: #{dense_block_forward.1} parent=11 // pred_region
        _
      $region40: #{dense_block_forward.1} parent=11 // pred_fallthru
        _
      // Predicated region
      $region41: #{dense_block_forward.1} parent=11 // pred_check
        %p492 = pneg %p220
      $region42: #{dense_block_forward.1} parent=11 // pred_check_branch
        %494 = sbr.rel (%p492) target = $region44
      $region43: #{dense_block_forward.1} parent=11 // pred_region
        _
      $region44: #{dense_block_forward.1} parent=11 // pred_fallthru
        _
      // Predicated region
      $region45: #{dense_block_forward.1} parent=11 // pred_check
        %p495 = pneg %p241
      $region46: #{dense_block_forward.1} parent=11 // pred_check_branch
        %497 = sbr.rel (%p495) target = $region48
      $region47: #{dense_block_forward.1} parent=11 // pred_region
        _
      $region48: #{dense_block_forward.1} parent=11 // pred_fallthru
        _
      // Predicated region
      $region49: #{dense_block_forward.1} parent=11 // pred_check
        %p498 = pneg %p262
      $region50: #{dense_block_forward.1} parent=11 // pred_check_branch
        %500 = sbr.rel (%p498) target = $region52
      $region51: #{dense_block_forward.1} parent=11 // pred_region
        _
      $region52: #{dense_block_forward.1} parent=11 // pred_fallthru
        _
      // Predicated region
      $region53: #{dense_block_forward.1} parent=11 // pred_check
        %p501 = pneg %p283
      $region54: #{dense_block_forward.1} parent=11 // pred_check_branch
        %503 = sbr.rel (%p501) target = $region56
      $region55: #{dense_block_forward.1} parent=11 // pred_region
        _
      $region56: #{dense_block_forward.1} parent=11 // pred_fallthru
        _
      // Predicated region
      $region57: #{dense_block_forward.1} parent=11 // pred_check
        %p504 = pneg %p304
      $region58: #{dense_block_forward.1} parent=11 // pred_check_branch
        %506 = sbr.rel (%p504) target = $region60
      $region59: #{dense_block_forward.1} parent=11 // pred_region
        _
      $region60: #{dense_block_forward.1} parent=11 // pred_fallthru
        _
      // Predicated region
      $region61: #{dense_block_forward.1} parent=11 // pred_check
        %p507 = pneg %p325
      $region62: #{dense_block_forward.1} parent=11 // pred_check_branch
        %509 = sbr.rel (%p507) target = $region64
      $region63: #{dense_block_forward.1} parent=11 // pred_region
        _
      $region64: #{dense_block_forward.1} parent=11 // pred_fallthru
        _
      // Predicated region
      $region65: #{dense_block_forward.1} parent=11 // pred_check
        %p510 = pneg %p346
      $region66: #{dense_block_forward.1} parent=11 // pred_check_branch
        %512 = sbr.rel (%p510) target = $region68
      $region67: #{dense_block_forward.1} parent=11 // pred_region
        _
      $region68: #{dense_block_forward.1} parent=11 // pred_fallthru
        _
      // Predicated region
      $region69: #{dense_block_forward.1} parent=11 // pred_check
        %p513 = pneg %p367
      $region70: #{dense_block_forward.1} parent=11 // pred_check_branch
        %515 = sbr.rel (%p513) target = $region72
      $region71: #{dense_block_forward.1} parent=11 // pred_region
        _
      $region72: #{dense_block_forward.1} parent=11 // pred_fallthru
        _
      // Predicated region
      $region73: #{dense_block_forward.1} parent=11 // pred_check
        %p516 = pneg %p388
      $region74: #{dense_block_forward.1} parent=11 // pred_check_branch
        %518 = sbr.rel (%p516) target = $region76
      $region75: #{dense_block_forward.1} parent=11 // pred_region
        _
      $region76: #{dense_block_forward.1} parent=11 // pred_fallthru
        _
      // Predicated region
      $region77: #{dense_block_forward.1} parent=11 // pred_check
        %p519 = pneg %p409
      $region78: #{dense_block_forward.1} parent=11 // pred_check_branch
        %521 = sbr.rel (%p519) target = $region80
      $region79: #{dense_block_forward.1} parent=11 // pred_region
        _
      $region80: #{dense_block_forward.1} parent=11 // pred_fallthru
        _
      // Predicated region
      $region81: #{dense_block_forward.1} parent=11 // pred_check
        %p522 = pneg %p430
      $region82: #{dense_block_forward.1} parent=11 // pred_check_branch
        %524 = sbr.rel (%p522) target = $region84
      $region83: #{dense_block_forward.1} parent=11 // pred_region
        _
      $region84: #{dense_block_forward.1} parent=11 // pred_fallthru
        _
    $region12: #{dense_block_forward.1} parent=5 // pred_fallthru
      _
    %p525 = scmp.lt.s32.totalorder %s26, 2
    // Predicated region
    $region85: #{dense_block_forward.1} parent=5 // pred_check
      %p526 = pneg %p525
    $region86: #{dense_block_forward.1} parent=5 // pred_check_branch
      %528 = sbr.rel (%p526) target = $region88
    $region87: #{dense_block_forward.1} parent=5 // pred_region
      // Predicated region
      $region89: #{dense_block_forward.1} parent=87 // pred_check
        %p529 = pneg %p46
      $region90: #{dense_block_forward.1} parent=87 // pred_check_branch
        %531 = sbr.rel (%p529) target = $region92
      $region91: #{dense_block_forward.1} parent=87 // pred_region
        %p532 = scmp.lt.s32.totalorder %s26, 1
        %s533 = scalar_select %p532, %s26, 1
        %s534 = smul.addr %s533, 3
        %s535 = smul.addr %s534, 8
        %s536 = scalar_lea.vmem %s0, %s535
      $region92: #{dense_block_forward.1} parent=87 // pred_fallthru
        _
    $region88: #{dense_block_forward.1} parent=5 // pred_fallthru
      _
    %p537 = scmp.le.s32.totalorder 1, %s26
    %p538 = scmp.lt.s32.totalorder %s26, 3
    %p539 = pnand %p537, %p538
    %p540 = pneg %p539
    // Predicated region
    $region93: #{dense_block_forward.1} parent=5 // pred_check
      _
    $region94: #{dense_block_forward.1} parent=5 // pred_check_branch
      %542 = sbr.rel (%p539) target = $region96
    $region95: #{dense_block_forward.1} parent=5 // pred_region
      %s543 = ssub.s32 %s26, 1
      %p544 = scmp.lt.s32.totalorder %s31, 1
      %s545 = scalar_select %p544, %s31, 1
      %s546 = smul.addr %s545, 3
      %s547 = smul.addr %s546, 8
      %s548 = scalar_lea.vmem %s0, %s547
      %p549 = pneg %p52
      %p550 = pneg %p49
      %p551 = pneg %p73
      %p552 = pneg %p70
      %p553 = pneg %p94
      %p554 = pneg %p91
      %p555 = pneg %p115
      %p556 = pneg %p112
      %p557 = pneg %p136
      %p558 = pneg %p133
      %p559 = pneg %p157
      %p560 = pneg %p154
      %p561 = pneg %p178
      %p562 = pneg %p175
      %p563 = pneg %p199
      %p564 = pneg %p196
      %p565 = pneg %p220
      %p566 = pneg %p217
      %p567 = pneg %p241
      %p568 = pneg %p238
      %p569 = pneg %p262
      %p570 = pneg %p259
      %p571 = pneg %p283
      %p572 = pneg %p280
      %p573 = pneg %p304
      %p574 = pneg %p301
      %p575 = pneg %p325
      %p576 = pneg %p322
      %p577 = pneg %p346
      %p578 = pneg %p343
      %p579 = pneg %p367
      %p580 = pneg %p364
      %p581 = pneg %p388
      %p582 = pneg %p385
      %p583 = pneg %p409
      %p584 = pneg %p406
      %p585 = pneg %p430
      %p586 = pneg %p427
      %p587 = pneg %p456
      %p588 = pneg %p453
      %p589 = scmp.lt.s32.totalorder %s31, 1
      %s590 = scalar_select %p589, %s31, 1
      %s591 = smul.addr %s590, 48
      %s592 = smul.addr %s591, 8
      %s593 = scalar_lea.vmem %s19, %s592
      %p594 = scmp.lt.s32.totalorder %s31, 1
      %s595 = scalar_select %p594, %s31, 1
      %s596 = smul.addr %s595, 3
      %s597 = smul.addr %s596, 8
      %s598 = scalar_lea.vmem %s0, %s597
      %p599 = scmp.lt.s32.totalorder %s31, 1
      %s600 = scalar_select %p599, %s31, 1
      %s601 = smul.addr %s600, 48
      %s602 = smul.addr %s601, 8
      %s603 = scalar_lea.vmem %s19, %s602
      %s604 = sld [smem:[#allocation3]]
      %v605 = vld [vmem:[%s1] sm:$0x7]
      %v606 = vld [vmem:[%s598] sm:$0xff]
      %v607 = vld [vmem:[%s598 + $0x8] sm:$0xff]
      %v608 = vld [vmem:[%s598 + $0x10] sm:$0xff]
      %v609 = vld [vmem:[%s3] sm:$0xff]
      %v610 = vld [vmem:[%s3 + $0x8] sm:$0xff]
      %v611 = vld [vmem:[%s3 + $0x10] sm:$0xff]
      %v612 = vld [vmem:[%s3 + $0x18] sm:$0xff]
      %v613 = vld [vmem:[%s3 + $0x20] sm:$0xff]
      %v614 = vld [vmem:[%s3 + $0x28] sm:$0xff]
      %v615 = vld [vmem:[%s3 + $0x30] sm:$0xff]
      %v616 = vld [vmem:[%s3 + $0x38] sm:$0xff]
      %v617 = vld [vmem:[%s3 + $0x40] sm:$0xff]
      %v618 = vld [vmem:[%s3 + $0x48] sm:$0xff]
      %v619 = vld [vmem:[%s3 + $0x50] sm:$0xff]
      %v620 = vld [vmem:[%s3 + $0x58] sm:$0xff]
      %v621 = vld [vmem:[%s3 + $0x60] sm:$0xff]
      %v622 = vld [vmem:[%s3 + $0x68] sm:$0xff]
      %v623 = vld [vmem:[%s3 + $0x70] sm:$0xff]
      %v624 = vld [vmem:[%s3 + $0x78] sm:$0xff]
      %v625 = vld [vmem:[%s3 + $0x80] sm:$0xff]
      %v626 = vld [vmem:[%s3 + $0x88] sm:$0xff]
      %vm627 = vcmask 64512
      %v629 = vsel %vm627, %v609, 0
      %v632 = vsel %vm627, %v610, 0
      %v635 = vsel %vm627, %v611, 0
      %v638 = vsel %vm627, %v612, 0
      %v641 = vsel %vm627, %v613, 0
      %v644 = vsel %vm627, %v614, 0
      %v647 = vsel %vm627, %v615, 0
      %v650 = vsel %vm627, %v616, 0
      %v653 = vsel %vm627, %v617, 0
      %v656 = vsel %vm627, %v618, 0
      %v659 = vsel %vm627, %v619, 0
      %v662 = vsel %vm627, %v620, 0
      %v665 = vsel %vm627, %v621, 0
      %v668 = vsel %vm627, %v622, 0
      %v671 = vsel %vm627, %v623, 0
      %v674 = vsel %vm627, %v624, 0
      %v677 = vsel %vm627, %v625, 0
      %v680 = vsel %vm627, %v626, 0
      %682 = vmatprep.subr.mxu0 %v607
      %683 = vmatpush1.msra.mxu0 %v606
      %684 = vmatprep.subr.mxu0 0.0
      %685 = vmatpush1.msra.mxu0 0.0
      %686 = vmatprep.subr.mxu0 0.0
      %687 = vmatpush1.msra.mxu0 0.0
      %688 = vmatprep.subr.mxu0 0.0
      %689 = vmatpush1.msra.mxu0 0.0
      %690 = vmatprep.subr.mxu0 0.0
      %691 = vmatpush1.msra.mxu0 0.0
      %692 = vmatprep.subr.mxu0 0.0
      %693 = vmatpush1.msra.mxu0 0.0
      %694 = vmatprep.subr.mxu0 0.0
      %695 = vmatpush1.msra.mxu0 0.0
      %696 = vmatprep.subr.mxu0 0.0
      %697 = vmatpush1.msra.mxu0 0.0
      %698 = vmatprep.subr.mxu0 0.0
      %699 = vmatpush1.msra.mxu0 0.0
      %700 = vmatprep.subr.mxu0 0.0
      %701 = vmatpush1.msra.mxu0 0.0
      %702 = vmatprep.subr.mxu0 0.0
      %703 = vmatpush1.msra.mxu0 0.0
      %704 = vmatprep.subr.mxu0 0.0
      %705 = vmatpush1.msra.mxu0 0.0
      %706 = vmatprep.subr.mxu0 0.0
      %707 = vmatpush1.msra.mxu0 0.0
      %708 = vmatprep.subr.mxu0 0.0
      %709 = vmatpush1.msra.mxu0 0.0
      %710 = vmatprep.subr.mxu0 0.0
      %711 = vmatpush1.msra.mxu0 0.0
      %712 = vmatprep.subr.mxu0 0.0
      %713 = vmatpush1.msra.mxu0 0.0
      %714 = vmatprep.subr.mxu0 0.0
      %715 = vmatpush1.msra.mxu0 0.0
      %716 = vmatprep.subr.mxu0 0.0
      %717 = vmatpush1.msra.mxu0 0.0
      %718 = vmatprep.subr.mxu0 0.0
      %719 = vmatpush1.msra.mxu0 0.0
      %720 = vmatprep.subr.mxu0 0.0
      %721 = vmatpush1.msra.mxu0 0.0
      %722 = vmatprep.subr.mxu0 0.0
      %723 = vmatpush1.msra.mxu0 0.0
      %724 = vmatprep.subr.mxu0 0.0
      %725 = vmatpush1.msra.mxu0 0.0
      %726 = vmatprep.subr.mxu0 0.0
      %727 = vmatpush1.msra.mxu0 0.0
      %728 = vmatprep.subr.mxu0 0.0
      %729 = vmatpush1.msra.mxu0 0.0
      %730 = vmatprep.subr.mxu0 0.0
      %731 = vmatpush1.msra.mxu0 0.0
      %732 = vmatprep.subr.mxu0 0.0
      %733 = vmatpush1.msra.mxu0 0.0
      %734 = vmatprep.subr.mxu0 0.0
      %735 = vmatpush1.msra.mxu0 0.0
      %736 = vmatprep.subr.mxu0 0.0
      %737 = vmatpush1.msra.mxu0 0.0
      %738 = vmatprep.subr.mxu0 0.0
      %739 = vmatpush1.msra.mxu0 0.0
      %740 = vmatprep.subr.mxu0 0.0
      %741 = vmatpush1.msra.mxu0 0.0
      %742 = vmatprep.subr.mxu0 0.0
      %743 = vmatpush1.msra.mxu0 0.0
      %744 = vmatprep.subr.mxu0 0.0
      %745 = vmatpush1.msra.mxu0 0.0
      %746 = vmatprep.mubr.f32.mxu0 0.0
      %747 = vmatmul.mubr.f32.gmra.mrb[0].mxu0 %v629
      %v748 = vpop.f32.mrb[0].mxu0
      %v749 = vadd.f32 0.0, %v748
      %v750 = vpop.f32.mrb[0].mxu0
      %v751 = vadd.f32 0.0, %v750
      %752 = vmatprep.mubr.f32.mxu0 0.0
      %753 = vmatmul.mubr.f32.gmra.mrb[0].mxu0 %v632
      %v754 = vpop.f32.mrb[0].mxu0
      %v755 = vadd.f32 0.0, %v754
      %v756 = vpop.f32.mrb[0].mxu0
      %v757 = vadd.f32 0.0, %v756
      %758 = vmatprep.mubr.f32.mxu0 0.0
      %759 = vmatmul.mubr.f32.gmra.mrb[0].mxu0 %v635
      %v760 = vpop.f32.mrb[0].mxu0
      %v761 = vadd.f32 0.0, %v760
      %v762 = vpop.f32.mrb[0].mxu0
      %v763 = vadd.f32 0.0, %v762
      %764 = vmatprep.mubr.f32.mxu0 0.0
      %765 = vmatmul.mubr.f32.gmra.mrb[0].mxu0 %v638
      %v766 = vpop.f32.mrb[0].mxu0
      %v767 = vadd.f32 0.0, %v766
      %v768 = vpop.f32.mrb[0].mxu0
      %v769 = vadd.f32 0.0, %v768
      %770 = vmatprep.mubr.f32.mxu0 0.0
      %771 = vmatmul.mubr.f32.gmra.mrb[0].mxu0 %v641
      %v772 = vpop.f32.mrb[0].mxu0
      %v773 = vadd.f32 0.0, %v772
      %v774 = vpop.f32.mrb[0].mxu0
      %v775 = vadd.f32 0.0, %v774
      %776 = vmatprep.mubr.f32.mxu0 0.0
      %777 = vmatmul.mubr.f32.gmra.mrb[0].mxu0 %v644
      %v778 = vpop.f32.mrb[0].mxu0
      %v779 = vadd.f32 0.0, %v778
      %v780 = vpop.f32.mrb[0].mxu0
      %v781 = vadd.f32 0.0, %v780
      %782 = vmatprep.mubr.f32.mxu0 0.0
      %783 = vmatmul.mubr.f32.gmra.mrb[0].mxu0 %v647
      %v784 = vpop.f32.mrb[0].mxu0
      %v785 = vadd.f32 0.0, %v784
      %v786 = vpop.f32.mrb[0].mxu0
      %v787 = vadd.f32 0.0, %v786
      %788 = vmatprep.mubr.f32.mxu0 0.0
      %789 = vmatmul.mubr.f32.gmra.mrb[0].mxu0 %v650
      %v790 = vpop.f32.mrb[0].mxu0
      %v791 = vadd.f32 0.0, %v790
      %v792 = vpop.f32.mrb[0].mxu0
      %v793 = vadd.f32 0.0, %v792
      %794 = vmatprep.mubr.f32.mxu0 0.0
      %795 = vmatmul.mubr.f32.gmra.mrb[0].mxu0 %v653
      %v796 = vpop.f32.mrb[0].mxu0
      %v797 = vadd.f32 0.0, %v796
      %v798 = vpop.f32.mrb[0].mxu0
      %v799 = vadd.f32 0.0, %v798
      %800 = vmatprep.mubr.f32.mxu0 0.0
      %801 = vmatmul.mubr.f32.gmra.mrb[0].mxu0 %v656
      %v802 = vpop.f32.mrb[0].mxu0
      %v803 = vadd.f32 0.0, %v802
      %v804 = vpop.f32.mrb[0].mxu0
      %v805 = vadd.f32 0.0, %v804
      %806 = vmatprep.mubr.f32.mxu0 0.0
      %807 = vmatmul.mubr.f32.gmra.mrb[0].mxu0 %v659
      %v808 = vpop.f32.mrb[0].mxu0
      %v809 = vadd.f32 0.0, %v808
      %v810 = vpop.f32.mrb[0].mxu0
      %v811 = vadd.f32 0.0, %v810
      %812 = vmatprep.mubr.f32.mxu0 0.0
      %813 = vmatmul.mubr.f32.gmra.mrb[0].mxu0 %v662
      %v814 = vpop.f32.mrb[0].mxu0
      %v815 = vadd.f32 0.0, %v814
      %v816 = vpop.f32.mrb[0].mxu0
      %v817 = vadd.f32 0.0, %v816
      %818 = vmatprep.mubr.f32.mxu0 0.0
      %819 = vmatmul.mubr.f32.gmra.mrb[0].mxu0 %v665
      %v820 = vpop.f32.mrb[0].mxu0
      %v821 = vadd.f32 0.0, %v820
      %v822 = vpop.f32.mrb[0].mxu0
      %v823 = vadd.f32 0.0, %v822
      %824 = vmatprep.mubr.f32.mxu0 0.0
      %825 = vmatmul.mubr.f32.gmra.mrb[0].mxu0 %v668
      %v826 = vpop.f32.mrb[0].mxu0
      %v827 = vadd.f32 0.0, %v826
      %v828 = vpop.f32.mrb[0].mxu0
      %v829 = vadd.f32 0.0, %v828
      %830 = vmatprep.mubr.f32.mxu0 0.0
      %831 = vmatmul.mubr.f32.gmra.mrb[0].mxu0 %v671
      %v832 = vpop.f32.mrb[0].mxu0
      %v833 = vadd.f32 0.0, %v832
      %v834 = vpop.f32.mrb[0].mxu0
      %v835 = vadd.f32 0.0, %v834
      %836 = vmatprep.mubr.f32.mxu0 0.0
      %837 = vmatmul.mubr.f32.gmra.mrb[0].mxu0 %v674
      %v838 = vpop.f32.mrb[0].mxu0
      %v839 = vadd.f32 0.0, %v838
      %v840 = vpop.f32.mrb[0].mxu0
      %v841 = vadd.f32 0.0, %v840
      %842 = vmatprep.mubr.f32.mxu0 0.0
      %843 = vmatmul.mubr.f32.gmra.mrb[0].mxu0 %v677
      %v844 = vpop.f32.mrb[0].mxu0
      %v845 = vadd.f32 0.0, %v844
      %v846 = vpop.f32.mrb[0].mxu0
      %v847 = vadd.f32 0.0, %v846
      %848 = vmatprep.mubr.f32.mxu0 0.0
      %849 = vmatmul.mubr.f32.gmra.mrb[0].mxu0 %v680
      %v850 = vpop.f32.mrb[0].mxu0
      %v851 = vadd.f32 0.0, %v850
      %v852 = vpop.f32.mrb[0].mxu0
      %v853 = vadd.f32 0.0, %v852
      %854 = vdwg.mxu0
      %855 = vmatprep.subr.mxu0 0.0
      %856 = vmatpush1.msra.mxu0 %v608
      %857 = vmatprep.subr.mxu0 0.0
      %858 = vmatpush1.msra.mxu0 0.0
      %859 = vmatprep.subr.mxu0 0.0
      %860 = vmatpush1.msra.mxu0 0.0
      %861 = vmatprep.subr.mxu0 0.0
      %862 = vmatpush1.msra.mxu0 0.0
      %863 = vmatprep.subr.mxu0 0.0
      %864 = vmatpush1.msra.mxu0 0.0
      %865 = vmatprep.subr.mxu0 0.0
      %866 = vmatpush1.msra.mxu0 0.0
      %867 = vmatprep.subr.mxu0 0.0
      %868 = vmatpush1.msra.mxu0 0.0
      %869 = vmatprep.subr.mxu0 0.0
      %870 = vmatpush1.msra.mxu0 0.0
      %871 = vmatprep.subr.mxu0 0.0
      %872 = vmatpush1.msra.mxu0 0.0
      %873 = vmatprep.subr.mxu0 0.0
      %874 = vmatpush1.msra.mxu0 0.0
      %875 = vmatprep.subr.mxu0 0.0
      %876 = vmatpush1.msra.mxu0 0.0
      %877 = vmatprep.subr.mxu0 0.0
      %878 = vmatpush1.msra.mxu0 0.0
      %879 = vmatprep.subr.mxu0 0.0
      %880 = vmatpush1.msra.mxu0 0.0
      %881 = vmatprep.subr.mxu0 0.0
      %882 = vmatpush1.msra.mxu0 0.0
      %883 = vmatprep.subr.mxu0 0.0
      %884 = vmatpush1.msra.mxu0 0.0
      %885 = vmatprep.subr.mxu0 0.0
      %886 = vmatpush1.msra.mxu0 0.0
      %887 = vmatprep.subr.mxu0 0.0
      %888 = vmatpush1.msra.mxu0 0.0
      %889 = vmatprep.subr.mxu0 0.0
      %890 = vmatpush1.msra.mxu0 0.0
      %891 = vmatprep.subr.mxu0 0.0
      %892 = vmatpush1.msra.mxu0 0.0
      %893 = vmatprep.subr.mxu0 0.0
      %894 = vmatpush1.msra.mxu0 0.0
      %895 = vmatprep.subr.mxu0 0.0
      %896 = vmatpush1.msra.mxu0 0.0
      %897 = vmatprep.subr.mxu0 0.0
      %898 = vmatpush1.msra.mxu0 0.0
      %899 = vmatprep.subr.mxu0 0.0
      %900 = vmatpush1.msra.mxu0 0.0
      %901 = vmatprep.subr.mxu0 0.0
      %902 = vmatpush1.msra.mxu0 0.0
      %903 = vmatprep.subr.mxu0 0.0
      %904 = vmatpush1.msra.mxu0 0.0
      %905 = vmatprep.subr.mxu0 0.0
      %906 = vmatpush1.msra.mxu0 0.0
      %907 = vmatprep.subr.mxu0 0.0
      %908 = vmatpush1.msra.mxu0 0.0
      %909 = vmatprep.subr.mxu0 0.0
      %910 = vmatpush1.msra.mxu0 0.0
      %911 = vmatprep.subr.mxu0 0.0
      %912 = vmatpush1.msra.mxu0 0.0
      %913 = vmatprep.subr.mxu0 0.0
      %914 = vmatpush1.msra.mxu0 0.0
      %915 = vmatprep.subr.mxu0 0.0
      %916 = vmatpush1.msra.mxu0 0.0
      %917 = vmatprep.subr.mxu0 0.0
      %918 = vmatpush1.msra.mxu0 0.0
      %919 = vmatprep.mubr.f32.mxu0 0.0
      %920 = vmatmul.mubr.f32.gmra.mrb[0].mxu0 %v629
      %v921 = vpop.f32.mrb[0].mxu0
      %v922 = vadd.f32 0.0, %v921
      %v923 = vpop.f32.mrb[0].mxu0
      %924 = vmatprep.mubr.f32.mxu0 0.0
      %925 = vmatmul.mubr.f32.gmra.mrb[0].mxu0 %v632
      %v926 = vpop.f32.mrb[0].mxu0
      %v927 = vadd.f32 0.0, %v926
      %v928 = vpop.f32.mrb[0].mxu0
      %929 = vmatprep.mubr.f32.mxu0 0.0
      %930 = vmatmul.mubr.f32.gmra.mrb[0].mxu0 %v635
      %v931 = vpop.f32.mrb[0].mxu0
      %v932 = vadd.f32 0.0, %v931
      %v933 = vpop.f32.mrb[0].mxu0
      %934 = vmatprep.mubr.f32.mxu0 0.0
      %935 = vmatmul.mubr.f32.gmra.mrb[0].mxu0 %v638
      %v936 = vpop.f32.mrb[0].mxu0
      %v937 = vadd.f32 0.0, %v936
      %v938 = vpop.f32.mrb[0].mxu0
      %939 = vmatprep.mubr.f32.mxu0 0.0
      %940 = vmatmul.mubr.f32.gmra.mrb[0].mxu0 %v641
      %v941 = vpop.f32.mrb[0].mxu0
      %v942 = vadd.f32 0.0, %v941
      %v943 = vpop.f32.mrb[0].mxu0
      %944 = vmatprep.mubr.f32.mxu0 0.0
      %945 = vmatmul.mubr.f32.gmra.mrb[0].mxu0 %v644
      %v946 = vpop.f32.mrb[0].mxu0
      %v947 = vadd.f32 0.0, %v946
      %v948 = vpop.f32.mrb[0].mxu0
      %949 = vmatprep.mubr.f32.mxu0 0.0
      %950 = vmatmul.mubr.f32.gmra.mrb[0].mxu0 %v647
      %v951 = vpop.f32.mrb[0].mxu0
      %v952 = vadd.f32 0.0, %v951
      %v953 = vpop.f32.mrb[0].mxu0
      %954 = vmatprep.mubr.f32.mxu0 0.0
      %955 = vmatmul.mubr.f32.gmra.mrb[0].mxu0 %v650
      %v956 = vpop.f32.mrb[0].mxu0
      %v957 = vadd.f32 0.0, %v956
      %v958 = vpop.f32.mrb[0].mxu0
      %959 = vmatprep.mubr.f32.mxu0 0.0
      %960 = vmatmul.mubr.f32.gmra.mrb[0].mxu0 %v653
      %v961 = vpop.f32.mrb[0].mxu0
      %v962 = vadd.f32 0.0, %v961
      %v963 = vpop.f32.mrb[0].mxu0
      %964 = vmatprep.mubr.f32.mxu0 0.0
      %965 = vmatmul.mubr.f32.gmra.mrb[0].mxu0 %v656
      %v966 = vpop.f32.mrb[0].mxu0
      %v967 = vadd.f32 0.0, %v966
      %v968 = vpop.f32.mrb[0].mxu0
      %969 = vmatprep.mubr.f32.mxu0 0.0
      %970 = vmatmul.mubr.f32.gmra.mrb[0].mxu0 %v659
      %v971 = vpop.f32.mrb[0].mxu0
      %v972 = vadd.f32 0.0, %v971
      %v973 = vpop.f32.mrb[0].mxu0
      %974 = vmatprep.mubr.f32.mxu0 0.0
      %975 = vmatmul.mubr.f32.gmra.mrb[0].mxu0 %v662
      %v976 = vpop.f32.mrb[0].mxu0
      %v977 = vadd.f32 0.0, %v976
      %v978 = vpop.f32.mrb[0].mxu0
      %979 = vmatprep.mubr.f32.mxu0 0.0
      %980 = vmatmul.mubr.f32.gmra.mrb[0].mxu0 %v665
      %v981 = vpop.f32.mrb[0].mxu0
      %v982 = vadd.f32 0.0, %v981
      %v983 = vpop.f32.mrb[0].mxu0
      %984 = vmatprep.mubr.f32.mxu0 0.0
      %985 = vmatmul.mubr.f32.gmra.mrb[0].mxu0 %v668
      %v986 = vpop.f32.mrb[0].mxu0
      %v987 = vadd.f32 0.0, %v986
      %v988 = vpop.f32.mrb[0].mxu0
      %989 = vmatprep.mubr.f32.mxu0 0.0
      %990 = vmatmul.mubr.f32.gmra.mrb[0].mxu0 %v671
      %v991 = vpop.f32.mrb[0].mxu0
      %v992 = vadd.f32 0.0, %v991
      %v993 = vpop.f32.mrb[0].mxu0
      %994 = vmatprep.mubr.f32.mxu0 0.0
      %995 = vmatmul.mubr.f32.gmra.mrb[0].mxu0 %v674
      %v996 = vpop.f32.mrb[0].mxu0
      %v997 = vadd.f32 0.0, %v996
      %v998 = vpop.f32.mrb[0].mxu0
      %999 = vmatprep.mubr.f32.mxu0 0.0
      %1000 = vmatmul.mubr.f32.gmra.mrb[0].mxu0 %v677
      %v1001 = vpop.f32.mrb[0].mxu0
      %v1002 = vadd.f32 0.0, %v1001
      %v1003 = vpop.f32.mrb[0].mxu0
      %1004 = vmatprep.mubr.f32.mxu0 0.0
      %1005 = vmatmul.mubr.f32.gmra.mrb[0].mxu0 %v680
      %v1006 = vpop.f32.mrb[0].mxu0
      %v1007 = vadd.f32 0.0, %v1006
      %v1008 = vpop.f32.mrb[0].mxu0
      %1009 = vdwg.mxu0
      %1010 = vrot.lane.b32.xlu0 %v749, 19
      %v1011 = vpop.permute.xlu0 %1010
      %1012 = vrot.lane.b32.xlu0 %v755, 19
      %v1013 = vpop.permute.xlu0 %1012
      %1014 = vrot.lane.b32.xlu0 %v751, 19
      %v1015 = vpop.permute.xlu0 %1014
      %1016 = vrot.lane.b32.xlu0 %v757, 19
      %v1017 = vpop.permute.xlu0 %1016
      %1018 = vrot.lane.b32.xlu0 %v922, 19
      %v1019 = vpop.permute.xlu0 %1018
      %1020 = vrot.lane.b32.xlu0 %v927, 19
      %v1021 = vpop.permute.xlu0 %1020
      %v1022 = vlaneseq
      %v1023 = vand.u32 %v1022, 127
      %vm1024 = vcmp.lt.s32.totalorder %v1023, 19
      %v1025 = vsel %vm1024, %v1015, %v1019
      %v1026 = vsel %vm1024, %v1017, %v1021
      %v1027 = vsel %vm1024, %v1011, %v1015
      %v1028 = vsel %vm1024, %v1013, %v1017
      %v1029 = vsel %vm1024, %v1019, %v1011
      %v1030 = vsel %vm1024, %v1021, %v1013
      %v1031 = vadd.f32 %v797, %v1029
      %v1032 = vadd.f32 %v799, %v1027
      %v1033 = vadd.f32 %v962, %v1025
      %v1034 = vadd.f32 %v803, %v1030
      %v1035 = vadd.f32 %v805, %v1028
      %v1036 = vadd.f32 %v967, %v1026
      %1037 = vrot.lane.b32.xlu0 %v761, 18
      %v1038 = vpop.permute.xlu0 %1037
      %1039 = vrot.lane.b32.xlu0 %v767, 18
      %v1040 = vpop.permute.xlu0 %1039
      %1041 = vrot.lane.b32.xlu0 %v763, 18
      %v1042 = vpop.permute.xlu0 %1041
      %1043 = vrot.lane.b32.xlu0 %v769, 18
      %v1044 = vpop.permute.xlu0 %1043
      %1045 = vrot.lane.b32.xlu0 %v932, 18
      %v1046 = vpop.permute.xlu0 %1045
      %1047 = vrot.lane.b32.xlu0 %v937, 18
      %v1048 = vpop.permute.xlu0 %1047
      %vm1049 = vcmp.lt.s32.totalorder %v1023, 18
      %v1050 = vsel %vm1049, %v1042, %v1046
      %v1051 = vsel %vm1049, %v1044, %v1048
      %v1052 = vsel %vm1049, %v1038, %v1042
      %v1053 = vsel %vm1049, %v1040, %v1044
      %v1054 = vsel %vm1049, %v1046, %v1038
      %v1055 = vsel %vm1049, %v1048, %v1040
      %v1056 = vadd.f32 %v1031, %v1054
      %v1057 = vadd.f32 %v1032, %v1052
      %v1058 = vadd.f32 %v1033, %v1050
      %v1059 = vadd.f32 %v1034, %v1055
      %v1060 = vadd.f32 %v1035, %v1053
      %v1061 = vadd.f32 %v1036, %v1051
      %1062 = vrot.lane.b32.xlu0 %v773, 17
      %v1063 = vpop.permute.xlu0 %1062
      %1064 = vrot.lane.b32.xlu0 %v779, 17
      %v1065 = vpop.permute.xlu0 %1064
      %1066 = vrot.lane.b32.xlu0 %v775, 17
      %v1067 = vpop.permute.xlu0 %1066
      %1068 = vrot.lane.b32.xlu0 %v781, 17
      %v1069 = vpop.permute.xlu0 %1068
      %1070 = vrot.lane.b32.xlu0 %v942, 17
      %v1071 = vpop.permute.xlu0 %1070
      %1072 = vrot.lane.b32.xlu0 %v947, 17
      %v1073 = vpop.permute.xlu0 %1072
      %vm1074 = vcmp.lt.s32.totalorder %v1023, 17
      %v1075 = vsel %vm1074, %v1067, %v1071
      %v1076 = vsel %vm1074, %v1069, %v1073
      %v1077 = vsel %vm1074, %v1063, %v1067
      %v1078 = vsel %vm1074, %v1065, %v1069
      %v1079 = vsel %vm1074, %v1071, %v1063
      %v1080 = vsel %vm1074, %v1073, %v1065
      %v1081 = vadd.f32 %v1056, %v1079
      %v1082 = vadd.f32 %v1057, %v1077
      %v1083 = vadd.f32 %v1058, %v1075
      %v1084 = vadd.f32 %v1059, %v1080
      %v1085 = vadd.f32 %v1060, %v1078
      %v1086 = vadd.f32 %v1061, %v1076
      %1087 = vrot.lane.b32.xlu0 %v785, 1
      %v1088 = vpop.permute.xlu0 %1087
      %1089 = vrot.lane.b32.xlu0 %v791, 1
      %v1090 = vpop.permute.xlu0 %1089
      %1091 = vrot.lane.b32.xlu0 %v787, 1
      %v1092 = vpop.permute.xlu0 %1091
      %1093 = vrot.lane.b32.xlu0 %v793, 1
      %v1094 = vpop.permute.xlu0 %1093
      %1095 = vrot.lane.b32.xlu0 %v952, 1
      %v1096 = vpop.permute.xlu0 %1095
      %1097 = vrot.lane.b32.xlu0 %v957, 1
      %v1098 = vpop.permute.xlu0 %1097
      %vm1099 = vcmp.lt.s32.totalorder %v1023, 1
      %v1100 = vsel %vm1099, %v1092, %v1096
      %v1101 = vsel %vm1099, %v1094, %v1098
      %v1102 = vsel %vm1099, %v1088, %v1092
      %v1103 = vsel %vm1099, %v1090, %v1094
      %v1104 = vsel %vm1099, %v1096, %v1088
      %v1105 = vsel %vm1099, %v1098, %v1090
      %v1106 = vadd.f32 %v1081, %v1104
      %v1107 = vadd.f32 %v1082, %v1102
      %v1108 = vadd.f32 %v1083, %v1100
      %v1109 = vadd.f32 %v1084, %v1105
      %v1110 = vadd.f32 %v1085, %v1103
      %v1111 = vadd.f32 %v1086, %v1101
      %1112 = vrot.lane.b32.xlu0 %v809, 127
      %v1113 = vpop.permute.xlu0 %1112
      %1114 = vrot.lane.b32.xlu0 %v815, 127
      %v1115 = vpop.permute.xlu0 %1114
      %1116 = vrot.lane.b32.xlu0 %v811, 127
      %v1117 = vpop.permute.xlu0 %1116
      %1118 = vrot.lane.b32.xlu0 %v817, 127
      %v1119 = vpop.permute.xlu0 %1118
      %1120 = vrot.lane.b32.xlu0 %v972, 127
      %v1121 = vpop.permute.xlu0 %1120
      %1122 = vrot.lane.b32.xlu0 %v977, 127
      %v1123 = vpop.permute.xlu0 %1122
      %vm1124 = vcmp.lt.s32.totalorder %v1023, 127
      %v1125 = vsel %vm1124, %v1117, %v1121
      %v1126 = vsel %vm1124, %v1119, %v1123
      %v1127 = vsel %vm1124, %v1113, %v1117
      %v1128 = vsel %vm1124, %v1115, %v1119
      %v1129 = vsel %vm1124, %v1121, %v1113
      %v1130 = vsel %vm1124, %v1123, %v1115
      %v1131 = vadd.f32 %v1106, %v1127
      %v1132 = vadd.f32 %v1107, %v1125
      %v1133 = vadd.f32 %v1108, %v1129
      %v1134 = vadd.f32 %v1109, %v1128
      %v1135 = vadd.f32 %v1110, %v1126
      %v1136 = vadd.f32 %v1111, %v1130
      %1137 = vrot.lane.b32.xlu0 %v821, 111
      %v1138 = vpop.permute.xlu0 %1137
      %1139 = vrot.lane.b32.xlu0 %v827, 111
      %v1140 = vpop.permute.xlu0 %1139
      %1141 = vrot.lane.b32.xlu0 %v823, 111
      %v1142 = vpop.permute.xlu0 %1141
      %1143 = vrot.lane.b32.xlu0 %v829, 111
      %v1144 = vpop.permute.xlu0 %1143
      %1145 = vrot.lane.b32.xlu0 %v982, 111
      %v1146 = vpop.permute.xlu0 %1145
      %1147 = vrot.lane.b32.xlu0 %v987, 111
      %v1148 = vpop.permute.xlu0 %1147
      %vm1149 = vcmp.lt.s32.totalorder %v1023, 111
      %v1150 = vsel %vm1149, %v1142, %v1146
      %v1151 = vsel %vm1149, %v1144, %v1148
      %v1152 = vsel %vm1149, %v1138, %v1142
      %v1153 = vsel %vm1149, %v1140, %v1144
      %v1154 = vsel %vm1149, %v1146, %v1138
      %v1155 = vsel %vm1149, %v1148, %v1140
      %v1156 = vadd.f32 %v1131, %v1152
      %v1157 = vadd.f32 %v1132, %v1150
      %v1158 = vadd.f32 %v1133, %v1154
      %v1159 = vadd.f32 %v1134, %v1153
      %v1160 = vadd.f32 %v1135, %v1151
      %v1161 = vadd.f32 %v1136, %v1155
      %1162 = vrot.lane.b32.xlu0 %v833, 110
      %v1163 = vpop.permute.xlu0 %1162
      %1164 = vrot.lane.b32.xlu0 %v839, 110
      %v1165 = vpop.permute.xlu0 %1164
      %1166 = vrot.lane.b32.xlu0 %v835, 110
      %v1167 = vpop.permute.xlu0 %1166
      %1168 = vrot.lane.b32.xlu0 %v841, 110
      %v1169 = vpop.permute.xlu0 %1168
      %1170 = vrot.lane.b32.xlu0 %v992, 110
      %v1171 = vpop.permute.xlu0 %1170
      %1172 = vrot.lane.b32.xlu0 %v997, 110
      %v1173 = vpop.permute.xlu0 %1172
      %vm1174 = vcmp.lt.s32.totalorder %v1023, 110
      %v1175 = vsel %vm1174, %v1167, %v1171
      %v1176 = vsel %vm1174, %v1169, %v1173
      %v1177 = vsel %vm1174, %v1163, %v1167
      %v1178 = vsel %vm1174, %v1165, %v1169
      %v1179 = vsel %vm1174, %v1171, %v1163
      %v1180 = vsel %vm1174, %v1173, %v1165
      %v1181 = vadd.f32 %v1156, %v1177
      %v1182 = vadd.f32 %v1157, %v1175
      %v1183 = vadd.f32 %v1158, %v1179
      %v1184 = vadd.f32 %v1159, %v1178
      %v1185 = vadd.f32 %v1160, %v1176
      %v1186 = vadd.f32 %v1161, %v1180
      %1187 = vrot.lane.b32.xlu0 %v845, 109
      %v1188 = vpop.permute.xlu0 %1187
      %1189 = vrot.lane.b32.xlu0 %v851, 109
      %v1190 = vpop.permute.xlu0 %1189
      %1191 = vrot.lane.b32.xlu0 %v847, 109
      %v1192 = vpop.permute.xlu0 %1191
      %1193 = vrot.lane.b32.xlu0 %v853, 109
      %v1194 = vpop.permute.xlu0 %1193
      %1195 = vrot.lane.b32.xlu0 %v1002, 109
      %v1196 = vpop.permute.xlu0 %1195
      %1197 = vrot.lane.b32.xlu0 %v1007, 109
      %v1198 = vpop.permute.xlu0 %1197
      %vm1199 = vcmp.lt.s32.totalorder %v1023, 109
      %v1200 = vsel %vm1199, %v1192, %v1196
      %v1201 = vsel %vm1199, %v1194, %v1198
      %v1202 = vsel %vm1199, %v1188, %v1192
      %v1203 = vsel %vm1199, %v1190, %v1194
      %v1204 = vsel %vm1199, %v1196, %v1188
      %v1205 = vsel %vm1199, %v1198, %v1190
      %v1206 = vadd.f32 %v1181, %v1202
      %v1207 = vadd.f32 %v1182, %v1200
      %v1208 = vadd.f32 %v1183, %v1204
      %v1209 = vadd.f32 %v1184, %v1203
      %v1210 = vadd.f32 %v1185, %v1201
      %v1211 = vadd.f32 %v1186, %v1205
      %v1212 = vld [vmem:[%s11] sm:$0xff]
      %v1213 = vld [vmem:[%s11 + $0x8] sm:$0xff]
      %1215 = vset.pattern.permute.xlu0 0
      %1216 = vperm.xlu0 %1215, %v1212
      %v1217 = vpop.permute.xlu0 %1216
      %1220 = vset.pattern.permute.xlu0 0
      %1221 = vperm.xlu0 %1220, %v1213
      %v1222 = vpop.permute.xlu0 %1221
      %v1224 = vadd.f32 %v1206, %v1217
      %v1225 = vadd.f32 %v1207, %v1217
      %v1226 = vadd.f32 %v1208, %v1217
      %v1227 = vadd.f32 %v1209, %v1222
      %v1228 = vadd.f32 %v1210, %v1222
      %v1229 = vadd.f32 %v1211, %v1222
      %vm1230 = vcmp.ge.f32.partialorder %v1224, 0.0
      %vm1231 = vcmp.ge.f32.partialorder %v1225, 0.0
      %vm1232 = vcmp.ge.f32.partialorder %v1226, 0.0
      %vm1233 = vcmp.ge.f32.partialorder %v1227, 0.0
      %vm1234 = vcmp.ge.f32.partialorder %v1228, 0.0
      %vm1235 = vcmp.ge.f32.partialorder %v1229, 0.0
      %v1236 = vstv %s604
      %v1237 = vmul.f32 %v1236, %v1224
      %v1238 = vmul.f32 %v1236, %v1225
      %v1239 = vmul.f32 %v1236, %v1226
      %v1240 = vmul.f32 %v1236, %v1227
      %v1241 = vmul.f32 %v1236, %v1228
      %v1242 = vmul.f32 %v1236, %v1229
      %v1243 = vsel %vm1230, %v1224, %v1237
      %v1244 = vsel %vm1231, %v1225, %v1238
      %v1245 = vsel %vm1232, %v1226, %v1239
      %v1246 = vsel %vm1233, %v1227, %v1240
      %v1247 = vsel %vm1234, %v1228, %v1241
      %v1248 = vsel %vm1235, %v1229, %v1242
      %v1250 = vlaneseq
      %v1251 = vshrl.u32 %v1250, 7
      %v1252 = vsub.s32 0, %v1251
      %v1253 = vrot.slane %v605, %v1252
      %v1254 = vlaneseq
      %v1255 = vshrl.u32 %v1254, 7
      %v1256 = vsub.s32 1, %v1255
      %v1257 = vrot.slane %v605, %v1256
      %v1258 = vlaneseq
      %v1259 = vshrl.u32 %v1258, 7
      %v1260 = vsub.s32 2, %v1259
      %v1261 = vrot.slane %v605, %v1260
      %v1265 = vmul.f32 %v1253, %v1243
      %v1266 = vmul.f32 %v1257, %v1244
      %v1267 = vmul.f32 %v1261, %v1245
      %v1268 = vmul.f32 %v1253, %v1246
      %v1269 = vmul.f32 %v1257, %v1247
      %v1270 = vmul.f32 %v1261, %v1248
      %1271 = vst [vmem:[#allocation2] sm:$0xff] %v1265
      %1272 = vst [vmem:[#allocation2 + $0x8] sm:$0xff] %v1266
      %1273 = vst [vmem:[#allocation2 + $0x10] sm:$0xff] %v1267
      %1274 = vst [vmem:[#allocation2 + $0x18] sm:$0xff] %v1268
      %1275 = vst [vmem:[#allocation2 + $0x20] sm:$0xff] %v1269
      %1276 = vst [vmem:[#allocation2 + $0x28] sm:$0xff] %v1270
      %v1277 = vld [vmem:[#allocation2] sm:$0xff]
      %v1278 = vld [vmem:[#allocation2 + $0x8] sm:$0xff]
      %v1279 = vld [vmem:[#allocation2 + $0x10] sm:$0xff]
      %v1280 = vld [vmem:[#allocation2 + $0x18] sm:$0xff]
      %v1281 = vld [vmem:[#allocation2 + $0x20] sm:$0xff]
      %v1282 = vld [vmem:[#allocation2 + $0x28] sm:$0xff]
      %v1283 = vld [vmem:[%s4] sm:$0xff]
      %v1284 = vld [vmem:[%s4 + $0x8] sm:$0xff]
      %v1285 = vld [vmem:[%s4 + $0x10] sm:$0xff]
      %v1286 = vld [vmem:[%s4 + $0x18] sm:$0xff]
      %v1287 = vld [vmem:[%s4 + $0x20] sm:$0xff]
      %v1288 = vld [vmem:[%s4 + $0x28] sm:$0xff]
      %v1289 = vld [vmem:[%s4 + $0x30] sm:$0xff]
      %v1290 = vld [vmem:[%s4 + $0x38] sm:$0xff]
      %v1291 = vld [vmem:[%s4 + $0x40] sm:$0xff]
      %v1292 = vld [vmem:[%s4 + $0x48] sm:$0xff]
      %v1293 = vld [vmem:[%s4 + $0x50] sm:$0xff]
      %v1294 = vld [vmem:[%s4 + $0x58] sm:$0xff]
      %v1295 = vld [vmem:[%s4 + $0x60] sm:$0xff]
      %v1296 = vld [vmem:[%s4 + $0x68] sm:$0xff]
      %v1297 = vld [vmem:[%s4 + $0x70] sm:$0xff]
      %v1298 = vld [vmem:[%s4 + $0x78] sm:$0xff]
      %v1299 = vld [vmem:[%s4 + $0x80] sm:$0xff]
      %v1300 = vld [vmem:[%s4 + $0x88] sm:$0xff]
      %vm1301 = vcmask 130048
      %v1303 = vsel %vm1301, %v1283, 0
      %v1306 = vsel %vm1301, %v1284, 0
      %v1309 = vsel %vm1301, %v1285, 0
      %v1312 = vsel %vm1301, %v1286, 0
      %v1315 = vsel %vm1301, %v1287, 0
      %v1318 = vsel %vm1301, %v1288, 0
      %v1321 = vsel %vm1301, %v1289, 0
      %v1324 = vsel %vm1301, %v1290, 0
      %v1327 = vsel %vm1301, %v1291, 0
      %v1330 = vsel %vm1301, %v1292, 0
      %v1333 = vsel %vm1301, %v1293, 0
      %v1336 = vsel %vm1301, %v1294, 0
      %v1339 = vsel %vm1301, %v1295, 0
      %v1342 = vsel %vm1301, %v1296, 0
      %v1345 = vsel %vm1301, %v1297, 0
      %v1348 = vsel %vm1301, %v1298, 0
      %v1351 = vsel %vm1301, %v1299, 0
      %v1354 = vsel %vm1301, %v1300, 0
      %1356 = vmatprep.subr.mxu0 %v1278
      %1357 = vmatpush1.msra.mxu0 %v1277
      %1358 = vmatprep.subr.mxu0 %v1281
      %1359 = vmatpush1.msra.mxu0 %v1280
      %1360 = vmatprep.subr.mxu0 0.0
      %1361 = vmatpush1.msra.mxu0 0.0
      %1362 = vmatprep.subr.mxu0 0.0
      %1363 = vmatpush1.msra.mxu0 0.0
      %1364 = vmatprep.subr.mxu0 0.0
      %1365 = vmatpush1.msra.mxu0 0.0
      %1366 = vmatprep.subr.mxu0 0.0
      %1367 = vmatpush1.msra.mxu0 0.0
      %1368 = vmatprep.subr.mxu0 0.0
      %1369 = vmatpush1.msra.mxu0 0.0
      %1370 = vmatprep.subr.mxu0 0.0
      %1371 = vmatpush1.msra.mxu0 0.0
      %1372 = vmatprep.subr.mxu0 0.0
      %1373 = vmatpush1.msra.mxu0 0.0
      %1374 = vmatprep.subr.mxu0 0.0
      %1375 = vmatpush1.msra.mxu0 0.0
      %1376 = vmatprep.subr.mxu0 0.0
      %1377 = vmatpush1.msra.mxu0 0.0
      %1378 = vmatprep.subr.mxu0 0.0
      %1379 = vmatpush1.msra.mxu0 0.0
      %1380 = vmatprep.subr.mxu0 0.0
      %1381 = vmatpush1.msra.mxu0 0.0
      %1382 = vmatprep.subr.mxu0 0.0
      %1383 = vmatpush1.msra.mxu0 0.0
      %1384 = vmatprep.subr.mxu0 0.0
      %1385 = vmatpush1.msra.mxu0 0.0
      %1386 = vmatprep.subr.mxu0 0.0
      %1387 = vmatpush1.msra.mxu0 0.0
      %1388 = vmatprep.subr.mxu0 0.0
      %1389 = vmatpush1.msra.mxu0 0.0
      %1390 = vmatprep.subr.mxu0 0.0
      %1391 = vmatpush1.msra.mxu0 0.0
      %1392 = vmatprep.subr.mxu0 0.0
      %1393 = vmatpush1.msra.mxu0 0.0
      %1394 = vmatprep.subr.mxu0 0.0
      %1395 = vmatpush1.msra.mxu0 0.0
      %1396 = vmatprep.subr.mxu0 0.0
      %1397 = vmatpush1.msra.mxu0 0.0
      %1398 = vmatprep.subr.mxu0 0.0
      %1399 = vmatpush1.msra.mxu0 0.0
      %1400 = vmatprep.subr.mxu0 0.0
      %1401 = vmatpush1.msra.mxu0 0.0
      %1402 = vmatprep.subr.mxu0 0.0
      %1403 = vmatpush1.msra.mxu0 0.0
      %1404 = vmatprep.subr.mxu0 0.0
      %1405 = vmatpush1.msra.mxu0 0.0
      %1406 = vmatprep.subr.mxu0 0.0
      %1407 = vmatpush1.msra.mxu0 0.0
      %1408 = vmatprep.subr.mxu0 0.0
      %1409 = vmatpush1.msra.mxu0 0.0
      %1410 = vmatprep.subr.mxu0 0.0
      %1411 = vmatpush1.msra.mxu0 0.0
      %1412 = vmatprep.subr.mxu0 0.0
      %1413 = vmatpush1.msra.mxu0 0.0
      %1414 = vmatprep.subr.mxu0 0.0
      %1415 = vmatpush1.msra.mxu0 0.0
      %1416 = vmatprep.subr.mxu0 0.0
      %1417 = vmatpush1.msra.mxu0 0.0
      %1418 = vmatprep.subr.mxu0 0.0
      %1419 = vmatpush1.msra.mxu0 0.0
      %1420 = vmatprep.mubr.f32.mxu0 0.0
      %1421 = vmatmul.mubr.f32.gmra.mrb[0].mxu0 %v1303
      %v1422 = vpop.f32.mrb[0].mxu0
      %v1423 = vadd.f32 0.0, %v1422
      %v1424 = vpop.f32.mrb[0].mxu0
      %v1425 = vadd.f32 0.0, %v1424
      %1426 = vmatprep.mubr.f32.mxu0 0.0
      %1427 = vmatmul.mubr.f32.gmra.mrb[0].mxu0 %v1306
      %v1428 = vpop.f32.mrb[0].mxu0
      %v1429 = vadd.f32 0.0, %v1428
      %v1430 = vpop.f32.mrb[0].mxu0
      %v1431 = vadd.f32 0.0, %v1430
      %1432 = vmatprep.mubr.f32.mxu0 0.0
      %1433 = vmatmul.mubr.f32.gmra.mrb[0].mxu0 %v1309
      %v1434 = vpop.f32.mrb[0].mxu0
      %v1435 = vadd.f32 0.0, %v1434
      %v1436 = vpop.f32.mrb[0].mxu0
      %v1437 = vadd.f32 0.0, %v1436
      %1438 = vmatprep.mubr.f32.mxu0 0.0
      %1439 = vmatmul.mubr.f32.gmra.mrb[0].mxu0 %v1312
      %v1440 = vpop.f32.mrb[0].mxu0
      %v1441 = vadd.f32 0.0, %v1440
      %v1442 = vpop.f32.mrb[0].mxu0
      %v1443 = vadd.f32 0.0, %v1442
      %1444 = vmatprep.mubr.f32.mxu0 0.0
      %1445 = vmatmul.mubr.f32.gmra.mrb[0].mxu0 %v1315
      %v1446 = vpop.f32.mrb[0].mxu0
      %v1447 = vadd.f32 0.0, %v1446
      %v1448 = vpop.f32.mrb[0].mxu0
      %v1449 = vadd.f32 0.0, %v1448
      %1450 = vmatprep.mubr.f32.mxu0 0.0
      %1451 = vmatmul.mubr.f32.gmra.mrb[0].mxu0 %v1318
      %v1452 = vpop.f32.mrb[0].mxu0
      %v1453 = vadd.f32 0.0, %v1452
      %v1454 = vpop.f32.mrb[0].mxu0
      %v1455 = vadd.f32 0.0, %v1454
      %1456 = vmatprep.mubr.f32.mxu0 0.0
      %1457 = vmatmul.mubr.f32.gmra.mrb[0].mxu0 %v1321
      %v1458 = vpop.f32.mrb[0].mxu0
      %v1459 = vadd.f32 0.0, %v1458
      %v1460 = vpop.f32.mrb[0].mxu0
      %v1461 = vadd.f32 0.0, %v1460
      %1462 = vmatprep.mubr.f32.mxu0 0.0
      %1463 = vmatmul.mubr.f32.gmra.mrb[0].mxu0 %v1324
      %v1464 = vpop.f32.mrb[0].mxu0
      %v1465 = vadd.f32 0.0, %v1464
      %v1466 = vpop.f32.mrb[0].mxu0
      %v1467 = vadd.f32 0.0, %v1466
      %1468 = vmatprep.mubr.f32.mxu0 0.0
      %1469 = vmatmul.mubr.f32.gmra.mrb[0].mxu0 %v1327
      %v1470 = vpop.f32.mrb[0].mxu0
      %v1471 = vadd.f32 0.0, %v1470
      %v1472 = vpop.f32.mrb[0].mxu0
      %v1473 = vadd.f32 0.0, %v1472
      %1474 = vmatprep.mubr.f32.mxu0 0.0
      %1475 = vmatmul.mubr.f32.gmra.mrb[0].mxu0 %v1330
      %v1476 = vpop.f32.mrb[0].mxu0
      %v1477 = vadd.f32 0.0, %v1476
      %v1478 = vpop.f32.mrb[0].mxu0
      %v1479 = vadd.f32 0.0, %v1478
      %1480 = vmatprep.mubr.f32.mxu0 0.0
      %1481 = vmatmul.mubr.f32.gmra.mrb[0].mxu0 %v1333
      %v1482 = vpop.f32.mrb[0].mxu0
      %v1483 = vadd.f32 0.0, %v1482
      %v1484 = vpop.f32.mrb[0].mxu0
      %v1485 = vadd.f32 0.0, %v1484
      %1486 = vmatprep.mubr.f32.mxu0 0.0
      %1487 = vmatmul.mubr.f32.gmra.mrb[0].mxu0 %v1336
      %v1488 = vpop.f32.mrb[0].mxu0
      %v1489 = vadd.f32 0.0, %v1488
      %v1490 = vpop.f32.mrb[0].mxu0
      %v1491 = vadd.f32 0.0, %v1490
      %1492 = vmatprep.mubr.f32.mxu0 0.0
      %1493 = vmatmul.mubr.f32.gmra.mrb[0].mxu0 %v1339
      %v1494 = vpop.f32.mrb[0].mxu0
      %v1495 = vadd.f32 0.0, %v1494
      %v1496 = vpop.f32.mrb[0].mxu0
      %v1497 = vadd.f32 0.0, %v1496
      %1498 = vmatprep.mubr.f32.mxu0 0.0
      %1499 = vmatmul.mubr.f32.gmra.mrb[0].mxu0 %v1342
      %v1500 = vpop.f32.mrb[0].mxu0
      %v1501 = vadd.f32 0.0, %v1500
      %v1502 = vpop.f32.mrb[0].mxu0
      %v1503 = vadd.f32 0.0, %v1502
      %1504 = vmatprep.mubr.f32.mxu0 0.0
      %1505 = vmatmul.mubr.f32.gmra.mrb[0].mxu0 %v1345
      %v1506 = vpop.f32.mrb[0].mxu0
      %v1507 = vadd.f32 0.0, %v1506
      %v1508 = vpop.f32.mrb[0].mxu0
      %v1509 = vadd.f32 0.0, %v1508
      %1510 = vmatprep.mubr.f32.mxu0 0.0
      %1511 = vmatmul.mubr.f32.gmra.mrb[0].mxu0 %v1348
      %v1512 = vpop.f32.mrb[0].mxu0
      %v1513 = vadd.f32 0.0, %v1512
      %v1514 = vpop.f32.mrb[0].mxu0
      %v1515 = vadd.f32 0.0, %v1514
      %1516 = vmatprep.mubr.f32.mxu0 0.0
      %1517 = vmatmul.mubr.f32.gmra.mrb[0].mxu0 %v1351
      %v1518 = vpop.f32.mrb[0].mxu0
      %v1519 = vadd.f32 0.0, %v1518
      %v1520 = vpop.f32.mrb[0].mxu0
      %v1521 = vadd.f32 0.0, %v1520
      %1522 = vmatprep.mubr.f32.mxu0 0.0
      %1523 = vmatmul.mubr.f32.gmra.mrb[0].mxu0 %v1354
      %v1524 = vpop.f32.mrb[0].mxu0
      %v1525 = vadd.f32 0.0, %v1524
      %v1526 = vpop.f32.mrb[0].mxu0
      %v1527 = vadd.f32 0.0, %v1526
      %1528 = vdwg.mxu0
      %1529 = vmatprep.subr.mxu0 0.0
      %1530 = vmatpush1.msra.mxu0 %v1279
      %1531 = vmatprep.subr.mxu0 0.0
      %1532 = vmatpush1.msra.mxu0 %v1282
      %1533 = vmatprep.subr.mxu0 0.0
      %1534 = vmatpush1.msra.mxu0 0.0
      %1535 = vmatprep.subr.mxu0 0.0
      %1536 = vmatpush1.msra.mxu0 0.0
      %1537 = vmatprep.subr.mxu0 0.0
      %1538 = vmatpush1.msra.mxu0 0.0
      %1539 = vmatprep.subr.mxu0 0.0
      %1540 = vmatpush1.msra.mxu0 0.0
      %1541 = vmatprep.subr.mxu0 0.0
      %1542 = vmatpush1.msra.mxu0 0.0
      %1543 = vmatprep.subr.mxu0 0.0
      %1544 = vmatpush1.msra.mxu0 0.0
      %1545 = vmatprep.subr.mxu0 0.0
      %1546 = vmatpush1.msra.mxu0 0.0
      %1547 = vmatprep.subr.mxu0 0.0
      %1548 = vmatpush1.msra.mxu0 0.0
      %1549 = vmatprep.subr.mxu0 0.0
      %1550 = vmatpush1.msra.mxu0 0.0
      %1551 = vmatprep.subr.mxu0 0.0
      %1552 = vmatpush1.msra.mxu0 0.0
      %1553 = vmatprep.subr.mxu0 0.0
      %1554 = vmatpush1.msra.mxu0 0.0
      %1555 = vmatprep.subr.mxu0 0.0
      %1556 = vmatpush1.msra.mxu0 0.0
      %1557 = vmatprep.subr.mxu0 0.0
      %1558 = vmatpush1.msra.mxu0 0.0
      %1559 = vmatprep.subr.mxu0 0.0
      %1560 = vmatpush1.msra.mxu0 0.0
      %1561 = vmatprep.subr.mxu0 0.0
      %1562 = vmatpush1.msra.mxu0 0.0
      %1563 = vmatprep.subr.mxu0 0.0
      %1564 = vmatpush1.msra.mxu0 0.0
      %1565 = vmatprep.subr.mxu0 0.0
      %1566 = vmatpush1.msra.mxu0 0.0
      %1567 = vmatprep.subr.mxu0 0.0
      %1568 = vmatpush1.msra.mxu0 0.0
      %1569 = vmatprep.subr.mxu0 0.0
      %1570 = vmatpush1.msra.mxu0 0.0
      %1571 = vmatprep.subr.mxu0 0.0
      %1572 = vmatpush1.msra.mxu0 0.0
      %1573 = vmatprep.subr.mxu0 0.0
      %1574 = vmatpush1.msra.mxu0 0.0
      %1575 = vmatprep.subr.mxu0 0.0
      %1576 = vmatpush1.msra.mxu0 0.0
      %1577 = vmatprep.subr.mxu0 0.0
      %1578 = vmatpush1.msra.mxu0 0.0
      %1579 = vmatprep.subr.mxu0 0.0
      %1580 = vmatpush1.msra.mxu0 0.0
      %1581 = vmatprep.subr.mxu0 0.0
      %1582 = vmatpush1.msra.mxu0 0.0
      %1583 = vmatprep.subr.mxu0 0.0
      %1584 = vmatpush1.msra.mxu0 0.0
      %1585 = vmatprep.subr.mxu0 0.0
      %1586 = vmatpush1.msra.mxu0 0.0
      %1587 = vmatprep.subr.mxu0 0.0
      %1588 = vmatpush1.msra.mxu0 0.0
      %1589 = vmatprep.subr.mxu0 0.0
      %1590 = vmatpush1.msra.mxu0 0.0
      %1591 = vmatprep.subr.mxu0 0.0
      %1592 = vmatpush1.msra.mxu0 0.0
      %1593 = vmatprep.mubr.f32.mxu0 0.0
      %1594 = vmatmul.mubr.f32.gmra.mrb[0].mxu0 %v1303
      %v1595 = vpop.f32.mrb[0].mxu0
      %v1596 = vadd.f32 0.0, %v1595
      %v1597 = vpop.f32.mrb[0].mxu0
      %1598 = vmatprep.mubr.f32.mxu0 0.0
      %1599 = vmatmul.mubr.f32.gmra.mrb[0].mxu0 %v1306
      %v1600 = vpop.f32.mrb[0].mxu0
      %v1601 = vadd.f32 0.0, %v1600
      %v1602 = vpop.f32.mrb[0].mxu0
      %1603 = vmatprep.mubr.f32.mxu0 0.0
      %1604 = vmatmul.mubr.f32.gmra.mrb[0].mxu0 %v1309
      %v1605 = vpop.f32.mrb[0].mxu0
      %v1606 = vadd.f32 0.0, %v1605
      %v1607 = vpop.f32.mrb[0].mxu0
      %1608 = vmatprep.mubr.f32.mxu0 0.0
      %1609 = vmatmul.mubr.f32.gmra.mrb[0].mxu0 %v1312
      %v1610 = vpop.f32.mrb[0].mxu0
      %v1611 = vadd.f32 0.0, %v1610
      %v1612 = vpop.f32.mrb[0].mxu0
      %1613 = vmatprep.mubr.f32.mxu0 0.0
      %1614 = vmatmul.mubr.f32.gmra.mrb[0].mxu0 %v1315
      %v1615 = vpop.f32.mrb[0].mxu0
      %v1616 = vadd.f32 0.0, %v1615
      %v1617 = vpop.f32.mrb[0].mxu0
      %1618 = vmatprep.mubr.f32.mxu0 0.0
      %1619 = vmatmul.mubr.f32.gmra.mrb[0].mxu0 %v1318
      %v1620 = vpop.f32.mrb[0].mxu0
      %v1621 = vadd.f32 0.0, %v1620
      %v1622 = vpop.f32.mrb[0].mxu0
      %1623 = vmatprep.mubr.f32.mxu0 0.0
      %1624 = vmatmul.mubr.f32.gmra.mrb[0].mxu0 %v1321
      %v1625 = vpop.f32.mrb[0].mxu0
      %v1626 = vadd.f32 0.0, %v1625
      %v1627 = vpop.f32.mrb[0].mxu0
      %1628 = vmatprep.mubr.f32.mxu0 0.0
      %1629 = vmatmul.mubr.f32.gmra.mrb[0].mxu0 %v1324
      %v1630 = vpop.f32.mrb[0].mxu0
      %v1631 = vadd.f32 0.0, %v1630
      %v1632 = vpop.f32.mrb[0].mxu0
      %1633 = vmatprep.mubr.f32.mxu0 0.0
      %1634 = vmatmul.mubr.f32.gmra.mrb[0].mxu0 %v1327
      %v1635 = vpop.f32.mrb[0].mxu0
      %v1636 = vadd.f32 0.0, %v1635
      %v1637 = vpop.f32.mrb[0].mxu0
      %1638 = vmatprep.mubr.f32.mxu0 0.0
      %1639 = vmatmul.mubr.f32.gmra.mrb[0].mxu0 %v1330
      %v1640 = vpop.f32.mrb[0].mxu0
      %v1641 = vadd.f32 0.0, %v1640
      %v1642 = vpop.f32.mrb[0].mxu0
      %1643 = vmatprep.mubr.f32.mxu0 0.0
      %1644 = vmatmul.mubr.f32.gmra.mrb[0].mxu0 %v1333
      %v1645 = vpop.f32.mrb[0].mxu0
      %v1646 = vadd.f32 0.0, %v1645
      %v1647 = vpop.f32.mrb[0].mxu0
      %1648 = vmatprep.mubr.f32.mxu0 0.0
      %1649 = vmatmul.mubr.f32.gmra.mrb[0].mxu0 %v1336
      %v1650 = vpop.f32.mrb[0].mxu0
      %v1651 = vadd.f32 0.0, %v1650
      %v1652 = vpop.f32.mrb[0].mxu0
      %1653 = vmatprep.mubr.f32.mxu0 0.0
      %1654 = vmatmul.mubr.f32.gmra.mrb[0].mxu0 %v1339
      %v1655 = vpop.f32.mrb[0].mxu0
      %v1656 = vadd.f32 0.0, %v1655
      %v1657 = vpop.f32.mrb[0].mxu0
      %1658 = vmatprep.mubr.f32.mxu0 0.0
      %1659 = vmatmul.mubr.f32.gmra.mrb[0].mxu0 %v1342
      %v1660 = vpop.f32.mrb[0].mxu0
      %v1661 = vadd.f32 0.0, %v1660
      %v1662 = vpop.f32.mrb[0].mxu0
      %1663 = vmatprep.mubr.f32.mxu0 0.0
      %1664 = vmatmul.mubr.f32.gmra.mrb[0].mxu0 %v1345
      %v1665 = vpop.f32.mrb[0].mxu0
      %v1666 = vadd.f32 0.0, %v1665
      %v1667 = vpop.f32.mrb[0].mxu0
      %1668 = vmatprep.mubr.f32.mxu0 0.0
      %1669 = vmatmul.mubr.f32.gmra.mrb[0].mxu0 %v1348
      %v1670 = vpop.f32.mrb[0].mxu0
      %v1671 = vadd.f32 0.0, %v1670
      %v1672 = vpop.f32.mrb[0].mxu0
      %1673 = vmatprep.mubr.f32.mxu0 0.0
      %1674 = vmatmul.mubr.f32.gmra.mrb[0].mxu0 %v1351
      %v1675 = vpop.f32.mrb[0].mxu0
      %v1676 = vadd.f32 0.0, %v1675
      %v1677 = vpop.f32.mrb[0].mxu0
      %1678 = vmatprep.mubr.f32.mxu0 0.0
      %1679 = vmatmul.mubr.f32.gmra.mrb[0].mxu0 %v1354
      %v1680 = vpop.f32.mrb[0].mxu0
      %v1681 = vadd.f32 0.0, %v1680
      %v1682 = vpop.f32.mrb[0].mxu0
      %1683 = vdwg.mxu0
      %1684 = vrot.lane.b32.xlu0 %v1423, 19
      %v1685 = vpop.permute.xlu0 %1684
      %1686 = vrot.lane.b32.xlu0 %v1429, 19
      %v1687 = vpop.permute.xlu0 %1686
      %1688 = vrot.lane.b32.xlu0 %v1425, 19
      %v1689 = vpop.permute.xlu0 %1688
      %1690 = vrot.lane.b32.xlu0 %v1431, 19
      %v1691 = vpop.permute.xlu0 %1690
      %1692 = vrot.lane.b32.xlu0 %v1596, 19
      %v1693 = vpop.permute.xlu0 %1692
      %1694 = vrot.lane.b32.xlu0 %v1601, 19
      %v1695 = vpop.permute.xlu0 %1694
      %v1696 = vsel %vm1024, %v1689, %v1693
      %v1697 = vsel %vm1024, %v1691, %v1695
      %v1698 = vsel %vm1024, %v1685, %v1689
      %v1699 = vsel %vm1024, %v1687, %v1691
      %v1700 = vsel %vm1024, %v1693, %v1685
      %v1701 = vsel %vm1024, %v1695, %v1687
      %v1702 = vadd.f32 %v1471, %v1700
      %v1703 = vadd.f32 %v1473, %v1698
      %v1704 = vadd.f32 %v1636, %v1696
      %v1705 = vadd.f32 %v1477, %v1701
      %v1706 = vadd.f32 %v1479, %v1699
      %v1707 = vadd.f32 %v1641, %v1697
      %1708 = vrot.lane.b32.xlu0 %v1435, 18
      %v1709 = vpop.permute.xlu0 %1708
      %1710 = vrot.lane.b32.xlu0 %v1441, 18
      %v1711 = vpop.permute.xlu0 %1710
      %1712 = vrot.lane.b32.xlu0 %v1437, 18
      %v1713 = vpop.permute.xlu0 %1712
      %1714 = vrot.lane.b32.xlu0 %v1443, 18
      %v1715 = vpop.permute.xlu0 %1714
      %1716 = vrot.lane.b32.xlu0 %v1606, 18
      %v1717 = vpop.permute.xlu0 %1716
      %1718 = vrot.lane.b32.xlu0 %v1611, 18
      %v1719 = vpop.permute.xlu0 %1718
      %v1720 = vsel %vm1049, %v1713, %v1717
      %v1721 = vsel %vm1049, %v1715, %v1719
      %v1722 = vsel %vm1049, %v1709, %v1713
      %v1723 = vsel %vm1049, %v1711, %v1715
      %v1724 = vsel %vm1049, %v1717, %v1709
      %v1725 = vsel %vm1049, %v1719, %v1711
      %v1726 = vadd.f32 %v1702, %v1724
      %v1727 = vadd.f32 %v1703, %v1722
      %v1728 = vadd.f32 %v1704, %v1720
      %v1729 = vadd.f32 %v1705, %v1725
      %v1730 = vadd.f32 %v1706, %v1723
      %v1731 = vadd.f32 %v1707, %v1721
      %1732 = vrot.lane.b32.xlu0 %v1447, 17
      %v1733 = vpop.permute.xlu0 %1732
      %1734 = vrot.lane.b32.xlu0 %v1453, 17
      %v1735 = vpop.permute.xlu0 %1734
      %1736 = vrot.lane.b32.xlu0 %v1449, 17
      %v1737 = vpop.permute.xlu0 %1736
      %1738 = vrot.lane.b32.xlu0 %v1455, 17
      %v1739 = vpop.permute.xlu0 %1738
      %1740 = vrot.lane.b32.xlu0 %v1616, 17
      %v1741 = vpop.permute.xlu0 %1740
      %1742 = vrot.lane.b32.xlu0 %v1621, 17
      %v1743 = vpop.permute.xlu0 %1742
      %v1744 = vsel %vm1074, %v1737, %v1741
      %v1745 = vsel %vm1074, %v1739, %v1743
      %v1746 = vsel %vm1074, %v1733, %v1737
      %v1747 = vsel %vm1074, %v1735, %v1739
      %v1748 = vsel %vm1074, %v1741, %v1733
      %v1749 = vsel %vm1074, %v1743, %v1735
      %v1750 = vadd.f32 %v1726, %v1748
      %v1751 = vadd.f32 %v1727, %v1746
      %v1752 = vadd.f32 %v1728, %v1744
      %v1753 = vadd.f32 %v1729, %v1749
      %v1754 = vadd.f32 %v1730, %v1747
      %v1755 = vadd.f32 %v1731, %v1745
      %1756 = vrot.lane.b32.xlu0 %v1459, 1
      %v1757 = vpop.permute.xlu0 %1756
      %1758 = vrot.lane.b32.xlu0 %v1465, 1
      %v1759 = vpop.permute.xlu0 %1758
      %1760 = vrot.lane.b32.xlu0 %v1461, 1
      %v1761 = vpop.permute.xlu0 %1760
      %1762 = vrot.lane.b32.xlu0 %v1467, 1
      %v1763 = vpop.permute.xlu0 %1762
      %1764 = vrot.lane.b32.xlu0 %v1626, 1
      %v1765 = vpop.permute.xlu0 %1764
      %1766 = vrot.lane.b32.xlu0 %v1631, 1
      %v1767 = vpop.permute.xlu0 %1766
      %v1768 = vsel %vm1099, %v1761, %v1765
      %v1769 = vsel %vm1099, %v1763, %v1767
      %v1770 = vsel %vm1099, %v1757, %v1761
      %v1771 = vsel %vm1099, %v1759, %v1763
      %v1772 = vsel %vm1099, %v1765, %v1757
      %v1773 = vsel %vm1099, %v1767, %v1759
      %v1774 = vadd.f32 %v1750, %v1772
      %v1775 = vadd.f32 %v1751, %v1770
      %v1776 = vadd.f32 %v1752, %v1768
      %v1777 = vadd.f32 %v1753, %v1773
      %v1778 = vadd.f32 %v1754, %v1771
      %v1779 = vadd.f32 %v1755, %v1769
      %1780 = vrot.lane.b32.xlu0 %v1483, 127
      %v1781 = vpop.permute.xlu0 %1780
      %1782 = vrot.lane.b32.xlu0 %v1489, 127
      %v1783 = vpop.permute.xlu0 %1782
      %1784 = vrot.lane.b32.xlu0 %v1485, 127
      %v1785 = vpop.permute.xlu0 %1784
      %1786 = vrot.lane.b32.xlu0 %v1491, 127
      %v1787 = vpop.permute.xlu0 %1786
      %1788 = vrot.lane.b32.xlu0 %v1646, 127
      %v1789 = vpop.permute.xlu0 %1788
      %1790 = vrot.lane.b32.xlu0 %v1651, 127
      %v1791 = vpop.permute.xlu0 %1790
      %v1792 = vsel %vm1124, %v1785, %v1789
      %v1793 = vsel %vm1124, %v1787, %v1791
      %v1794 = vsel %vm1124, %v1781, %v1785
      %v1795 = vsel %vm1124, %v1783, %v1787
      %v1796 = vsel %vm1124, %v1789, %v1781
      %v1797 = vsel %vm1124, %v1791, %v1783
      %v1798 = vadd.f32 %v1774, %v1794
      %v1799 = vadd.f32 %v1775, %v1792
      %v1800 = vadd.f32 %v1776, %v1796
      %v1801 = vadd.f32 %v1777, %v1795
      %v1802 = vadd.f32 %v1778, %v1793
      %v1803 = vadd.f32 %v1779, %v1797
      %1804 = vrot.lane.b32.xlu0 %v1495, 111
      %v1805 = vpop.permute.xlu0 %1804
      %1806 = vrot.lane.b32.xlu0 %v1501, 111
      %v1807 = vpop.permute.xlu0 %1806
      %1808 = vrot.lane.b32.xlu0 %v1497, 111
      %v1809 = vpop.permute.xlu0 %1808
      %1810 = vrot.lane.b32.xlu0 %v1503, 111
      %v1811 = vpop.permute.xlu0 %1810
      %1812 = vrot.lane.b32.xlu0 %v1656, 111
      %v1813 = vpop.permute.xlu0 %1812
      %1814 = vrot.lane.b32.xlu0 %v1661, 111
      %v1815 = vpop.permute.xlu0 %1814
      %v1816 = vsel %vm1149, %v1809, %v1813
      %v1817 = vsel %vm1149, %v1811, %v1815
      %v1818 = vsel %vm1149, %v1805, %v1809
      %v1819 = vsel %vm1149, %v1807, %v1811
      %v1820 = vsel %vm1149, %v1813, %v1805
      %v1821 = vsel %vm1149, %v1815, %v1807
      %v1822 = vadd.f32 %v1798, %v1818
      %v1823 = vadd.f32 %v1799, %v1816
      %v1824 = vadd.f32 %v1800, %v1820
      %v1825 = vadd.f32 %v1801, %v1819
      %v1826 = vadd.f32 %v1802, %v1817
      %v1827 = vadd.f32 %v1803, %v1821
      %1828 = vrot.lane.b32.xlu0 %v1507, 110
      %v1829 = vpop.permute.xlu0 %1828
      %1830 = vrot.lane.b32.xlu0 %v1513, 110
      %v1831 = vpop.permute.xlu0 %1830
      %1832 = vrot.lane.b32.xlu0 %v1509, 110
      %v1833 = vpop.permute.xlu0 %1832
      %1834 = vrot.lane.b32.xlu0 %v1515, 110
      %v1835 = vpop.permute.xlu0 %1834
      %1836 = vrot.lane.b32.xlu0 %v1666, 110
      %v1837 = vpop.permute.xlu0 %1836
      %1838 = vrot.lane.b32.xlu0 %v1671, 110
      %v1839 = vpop.permute.xlu0 %1838
      %v1840 = vsel %vm1174, %v1833, %v1837
      %v1841 = vsel %vm1174, %v1835, %v1839
      %v1842 = vsel %vm1174, %v1829, %v1833
      %v1843 = vsel %vm1174, %v1831, %v1835
      %v1844 = vsel %vm1174, %v1837, %v1829
      %v1845 = vsel %vm1174, %v1839, %v1831
      %v1846 = vadd.f32 %v1822, %v1842
      %v1847 = vadd.f32 %v1823, %v1840
      %v1848 = vadd.f32 %v1824, %v1844
      %v1849 = vadd.f32 %v1825, %v1843
      %v1850 = vadd.f32 %v1826, %v1841
      %v1851 = vadd.f32 %v1827, %v1845
      %1852 = vrot.lane.b32.xlu0 %v1519, 109
      %v1853 = vpop.permute.xlu0 %1852
      %1854 = vrot.lane.b32.xlu0 %v1525, 109
      %v1855 = vpop.permute.xlu0 %1854
      %1856 = vrot.lane.b32.xlu0 %v1521, 109
      %v1857 = vpop.permute.xlu0 %1856
      %1858 = vrot.lane.b32.xlu0 %v1527, 109
      %v1859 = vpop.permute.xlu0 %1858
      %1860 = vrot.lane.b32.xlu0 %v1676, 109
      %v1861 = vpop.permute.xlu0 %1860
      %1862 = vrot.lane.b32.xlu0 %v1681, 109
      %v1863 = vpop.permute.xlu0 %1862
      %v1864 = vsel %vm1199, %v1857, %v1861
      %v1865 = vsel %vm1199, %v1859, %v1863
      %v1866 = vsel %vm1199, %v1853, %v1857
      %v1867 = vsel %vm1199, %v1855, %v1859
      %v1868 = vsel %vm1199, %v1861, %v1853
      %v1869 = vsel %vm1199, %v1863, %v1855
      %v1870 = vadd.f32 %v1846, %v1866
      %v1871 = vadd.f32 %v1847, %v1864
      %v1872 = vadd.f32 %v1848, %v1868
      %v1873 = vadd.f32 %v1849, %v1867
      %v1874 = vadd.f32 %v1850, %v1865
      %v1875 = vadd.f32 %v1851, %v1869
      %v1876 = vld [vmem:[%s12] sm:$0xff]
      %v1877 = vld [vmem:[%s12 + $0x8] sm:$0xff]
      %1879 = vset.pattern.permute.xlu0 0
      %1880 = vperm.xlu0 %1879, %v1876
      %v1881 = vpop.permute.xlu0 %1880
      %1884 = vset.pattern.permute.xlu0 0
      %1885 = vperm.xlu0 %1884, %v1877
      %v1886 = vpop.permute.xlu0 %1885
      %v1888 = vadd.f32 %v1870, %v1881
      %v1889 = vadd.f32 %v1871, %v1881
      %v1890 = vadd.f32 %v1872, %v1881
      %v1891 = vadd.f32 %v1873, %v1886
      %v1892 = vadd.f32 %v1874, %v1886
      %v1893 = vadd.f32 %v1875, %v1886
      %vm1894 = vcmp.ge.f32.partialorder %v1888, 0.0
      %vm1895 = vcmp.ge.f32.partialorder %v1889, 0.0
      %vm1896 = vcmp.ge.f32.partialorder %v1890, 0.0
      %vm1897 = vcmp.ge.f32.partialorder %v1891, 0.0
      %vm1898 = vcmp.ge.f32.partialorder %v1892, 0.0
      %vm1899 = vcmp.ge.f32.partialorder %v1893, 0.0
      %v1900 = vmul.f32 %v1236, %v1888
      %v1901 = vmul.f32 %v1236, %v1889
      %v1902 = vmul.f32 %v1236, %v1890
      %v1903 = vmul.f32 %v1236, %v1891
      %v1904 = vmul.f32 %v1236, %v1892
      %v1905 = vmul.f32 %v1236, %v1893
      %v1906 = vsel %vm1894, %v1888, %v1900
      %v1907 = vsel %vm1895, %v1889, %v1901
      %v1908 = vsel %vm1896, %v1890, %v1902
      %v1909 = vsel %vm1897, %v1891, %v1903
      %v1910 = vsel %vm1898, %v1892, %v1904
      %v1911 = vsel %vm1899, %v1893, %v1905
      %v1912 = vmul.f32 %v1253, %v1906
      %v1913 = vmul.f32 %v1257, %v1907
      %v1914 = vmul.f32 %v1261, %v1908
      %v1915 = vmul.f32 %v1253, %v1909
      %v1916 = vmul.f32 %v1257, %v1910
      %v1917 = vmul.f32 %v1261, %v1911
      %vm1918 = vcmp.ge.f32.partialorder %v1277, 0.0
      %vm1919 = vcmp.ge.f32.partialorder %v1278, 0.0
      %vm1920 = vcmp.ge.f32.partialorder %v1279, 0.0
      %vm1921 = vcmp.ge.f32.partialorder %v1280, 0.0
      %vm1922 = vcmp.ge.f32.partialorder %v1281, 0.0
      %vm1923 = vcmp.ge.f32.partialorder %v1282, 0.0
      %v1924 = vmul.f32 %v1236, %v1277
      %v1925 = vmul.f32 %v1236, %v1278
      %v1926 = vmul.f32 %v1236, %v1279
      %v1927 = vmul.f32 %v1236, %v1280
      %v1928 = vmul.f32 %v1236, %v1281
      %v1929 = vmul.f32 %v1236, %v1282
      %v1930 = vsel %vm1918, %v1277, %v1924
      %v1931 = vsel %vm1919, %v1278, %v1925
      %v1932 = vsel %vm1920, %v1279, %v1926
      %v1933 = vsel %vm1921, %v1280, %v1927
      %v1934 = vsel %vm1922, %v1281, %v1928
      %v1935 = vsel %vm1923, %v1282, %v1929
      %1936 = vst [vmem:[%s603] sm:$0xff] %v1930
      %1937 = vst [vmem:[%s603 + $0x8] sm:$0xff] %v1931
      %1938 = vst [vmem:[%s603 + $0x10] sm:$0xff] %v1932
      %1939 = vst [vmem:[%s603 + $0x18] sm:$0xff] %v1933
      %1940 = vst [vmem:[%s603 + $0x20] sm:$0xff] %v1934
      %1941 = vst [vmem:[%s603 + $0x28] sm:$0xff] %v1935
      %vm1942 = vcmp.ge.f32.partialorder %v1912, 0.0
      %vm1943 = vcmp.ge.f32.partialorder %v1913, 0.0
      %vm1944 = vcmp.ge.f32.partialorder %v1914, 0.0
      %vm1945 = vcmp.ge.f32.partialorder %v1915, 0.0
      %vm1946 = vcmp.ge.f32.partialorder %v1916, 0.0
      %vm1947 = vcmp.ge.f32.partialorder %v1917, 0.0
      %v1948 = vmul.f32 %v1236, %v1912
      %v1949 = vmul.f32 %v1236, %v1913
      %v1950 = vmul.f32 %v1236, %v1914
      %v1951 = vmul.f32 %v1236, %v1915
      %v1952 = vmul.f32 %v1236, %v1916
      %v1953 = vmul.f32 %v1236, %v1917
      %v1954 = vsel %vm1942, %v1912, %v1948
      %v1955 = vsel %vm1943, %v1913, %v1949
      %v1956 = vsel %vm1944, %v1914, %v1950
      %v1957 = vsel %vm1945, %v1915, %v1951
      %v1958 = vsel %vm1946, %v1916, %v1952
      %v1959 = vsel %vm1947, %v1917, %v1953
      %1960 = vst [vmem:[%s603 + $0x30] sm:$0xff] %v1954
      %1961 = vst [vmem:[%s603 + $0x38] sm:$0xff] %v1955
      %1962 = vst [vmem:[%s603 + $0x40] sm:$0xff] %v1956
      %1963 = vst [vmem:[%s603 + $0x48] sm:$0xff] %v1957
      %1964 = vst [vmem:[%s603 + $0x50] sm:$0xff] %v1958
      %1965 = vst [vmem:[%s603 + $0x58] sm:$0xff] %v1959
      %v1966 = vld [vmem:[%s603] sm:$0xff]
      %v1967 = vld [vmem:[%s603 + $0x8] sm:$0xff]
      %v1968 = vld [vmem:[%s603 + $0x10] sm:$0xff]
      %v1969 = vld [vmem:[%s603 + $0x18] sm:$0xff]
      %v1970 = vld [vmem:[%s603 + $0x20] sm:$0xff]
      %v1971 = vld [vmem:[%s603 + $0x28] sm:$0xff]
      %v1972 = vld [vmem:[%s603 + $0x30] sm:$0xff]
      %v1973 = vld [vmem:[%s603 + $0x38] sm:$0xff]
      %v1974 = vld [vmem:[%s603 + $0x40] sm:$0xff]
      %v1975 = vld [vmem:[%s603 + $0x48] sm:$0xff]
      %v1976 = vld [vmem:[%s603 + $0x50] sm:$0xff]
      %v1977 = vld [vmem:[%s603 + $0x58] sm:$0xff]
      %v1978 = vld [vmem:[%s5] sm:$0xff]
      %v1979 = vld [vmem:[%s5 + $0x8] sm:$0xff]
      %v1980 = vld [vmem:[%s5 + $0x10] sm:$0xff]
      %v1981 = vld [vmem:[%s5 + $0x18] sm:$0xff]
      %v1982 = vld [vmem:[%s5 + $0x20] sm:$0xff]
      %v1983 = vld [vmem:[%s5 + $0x28] sm:$0xff]
      %v1984 = vld [vmem:[%s5 + $0x30] sm:$0xff]
      %v1985 = vld [vmem:[%s5 + $0x38] sm:$0xff]
      %v1986 = vld [vmem:[%s5 + $0x40] sm:$0xff]
      %v1987 = vld [vmem:[%s5 + $0x48] sm:$0xff]
      %v1988 = vld [vmem:[%s5 + $0x50] sm:$0xff]
      %v1989 = vld [vmem:[%s5 + $0x58] sm:$0xff]
      %v1990 = vld [vmem:[%s5 + $0x60] sm:$0xff]
      %v1991 = vld [vmem:[%s5 + $0x68] sm:$0xff]
      %v1992 = vld [vmem:[%s5 + $0x70] sm:$0xff]
      %v1993 = vld [vmem:[%s5 + $0x78] sm:$0xff]
      %v1994 = vld [vmem:[%s5 + $0x80] sm:$0xff]
      %v1995 = vld [vmem:[%s5 + $0x88] sm:$0xff]
      %vm1996 = vcmask 261120
      %v1998 = vsel %vm1996, %v1978, 0
      %v2001 = vsel %vm1996, %v1979, 0
      %v2004 = vsel %vm1996, %v1980, 0
      %v2007 = vsel %vm1996, %v1981, 0
      %v2010 = vsel %vm1996, %v1982, 0
      %v2013 = vsel %vm1996, %v1983, 0
      %v2016 = vsel %vm1996, %v1984, 0
      %v2019 = vsel %vm1996, %v1985, 0
      %v2022 = vsel %vm1996, %v1986, 0
      %v2025 = vsel %vm1996, %v1987, 0
      %v2028 = vsel %vm1996, %v1988, 0
      %v2031 = vsel %vm1996, %v1989, 0
      %v2034 = vsel %vm1996, %v1990, 0
      %v2037 = vsel %vm1996, %v1991, 0
      %v2040 = vsel %vm1996, %v1992, 0
      %v2043 = vsel %vm1996, %v1993, 0
      %v2046 = vsel %vm1996, %v1994, 0
      %v2049 = vsel %vm1996, %v1995, 0
      %2051 = vmatprep.subr.mxu0 %v1967
      %2052 = vmatpush1.msra.mxu0 %v1966
      %2053 = vmatprep.subr.mxu0 %v1970
      %2054 = vmatpush1.msra.mxu0 %v1969
      %2055 = vmatprep.subr.mxu0 %v1973
      %2056 = vmatpush1.msra.mxu0 %v1972
      %2057 = vmatprep.subr.mxu0 %v1976
      %2058 = vmatpush1.msra.mxu0 %v1975
      %2059 = vmatprep.subr.mxu0 0.0
      %2060 = vmatpush1.msra.mxu0 0.0
      %2061 = vmatprep.subr.mxu0 0.0
      %2062 = vmatpush1.msra.mxu0 0.0
      %2063 = vmatprep.subr.mxu0 0.0
      %2064 = vmatpush1.msra.mxu0 0.0
      %2065 = vmatprep.subr.mxu0 0.0
      %2066 = vmatpush1.msra.mxu0 0.0
      %2067 = vmatprep.subr.mxu0 0.0
      %2068 = vmatpush1.msra.mxu0 0.0
      %2069 = vmatprep.subr.mxu0 0.0
      %2070 = vmatpush1.msra.mxu0 0.0
      %2071 = vmatprep.subr.mxu0 0.0
      %2072 = vmatpush1.msra.mxu0 0.0
      %2073 = vmatprep.subr.mxu0 0.0
      %2074 = vmatpush1.msra.mxu0 0.0
      %2075 = vmatprep.subr.mxu0 0.0
      %2076 = vmatpush1.msra.mxu0 0.0
      %2077 = vmatprep.subr.mxu0 0.0
      %2078 = vmatpush1.msra.mxu0 0.0
      %2079 = vmatprep.subr.mxu0 0.0
      %2080 = vmatpush1.msra.mxu0 0.0
      %2081 = vmatprep.subr.mxu0 0.0
      %2082 = vmatpush1.msra.mxu0 0.0
      %2083 = vmatprep.subr.mxu0 0.0
      %2084 = vmatpush1.msra.mxu0 0.0
      %2085 = vmatprep.subr.mxu0 0.0
      %2086 = vmatpush1.msra.mxu0 0.0
      %2087 = vmatprep.subr.mxu0 0.0
      %2088 = vmatpush1.msra.mxu0 0.0
      %2089 = vmatprep.subr.mxu0 0.0
      %2090 = vmatpush1.msra.mxu0 0.0
      %2091 = vmatprep.subr.mxu0 0.0
      %2092 = vmatpush1.msra.mxu0 0.0
      %2093 = vmatprep.subr.mxu0 0.0
      %2094 = vmatpush1.msra.mxu0 0.0
      %2095 = vmatprep.subr.mxu0 0.0
      %2096 = vmatpush1.msra.mxu0 0.0
      %2097 = vmatprep.subr.mxu0 0.0
      %2098 = vmatpush1.msra.mxu0 0.0
      %2099 = vmatprep.subr.mxu0 0.0
      %2100 = vmatpush1.msra.mxu0 0.0
      %2101 = vmatprep.subr.mxu0 0.0
      %2102 = vmatpush1.msra.mxu0 0.0
      %2103 = vmatprep.subr.mxu0 0.0
      %2104 = vmatpush1.msra.mxu0 0.0
      %2105 = vmatprep.subr.mxu0 0.0
      %2106 = vmatpush1.msra.mxu0 0.0
      %2107 = vmatprep.subr.mxu0 0.0
      %2108 = vmatpush1.msra.mxu0 0.0
      %2109 = vmatprep.subr.mxu0 0.0
      %2110 = vmatpush1.msra.mxu0 0.0
      %2111 = vmatprep.subr.mxu0 0.0
      %2112 = vmatpush1.msra.mxu0 0.0
      %2113 = vmatprep.subr.mxu0 0.0
      %2114 = vmatpush1.msra.mxu0 0.0
      %2115 = vmatprep.mubr.f32.mxu0 0.0
      %2116 = vmatmul.mubr.f32.gmra.mrb[0].mxu0 %v1998
      %v2117 = vpop.f32.mrb[0].mxu0
      %v2118 = vadd.f32 0.0, %v2117
      %v2119 = vpop.f32.mrb[0].mxu0
      %v2120 = vadd.f32 0.0, %v2119
      %2121 = vmatprep.mubr.f32.mxu0 0.0
      %2122 = vmatmul.mubr.f32.gmra.mrb[0].mxu0 %v2001
      %v2123 = vpop.f32.mrb[0].mxu0
      %v2124 = vadd.f32 0.0, %v2123
      %v2125 = vpop.f32.mrb[0].mxu0
      %v2126 = vadd.f32 0.0, %v2125
      %2127 = vmatprep.mubr.f32.mxu0 0.0
      %2128 = vmatmul.mubr.f32.gmra.mrb[0].mxu0 %v2004
      %v2129 = vpop.f32.mrb[0].mxu0
      %v2130 = vadd.f32 0.0, %v2129
      %v2131 = vpop.f32.mrb[0].mxu0
      %v2132 = vadd.f32 0.0, %v2131
      %2133 = vmatprep.mubr.f32.mxu0 0.0
      %2134 = vmatmul.mubr.f32.gmra.mrb[0].mxu0 %v2007
      %v2135 = vpop.f32.mrb[0].mxu0
      %v2136 = vadd.f32 0.0, %v2135
      %v2137 = vpop.f32.mrb[0].mxu0
      %v2138 = vadd.f32 0.0, %v2137
      %2139 = vmatprep.mubr.f32.mxu0 0.0
      %2140 = vmatmul.mubr.f32.gmra.mrb[0].mxu0 %v2010
      %v2141 = vpop.f32.mrb[0].mxu0
      %v2142 = vadd.f32 0.0, %v2141
      %v2143 = vpop.f32.mrb[0].mxu0
      %v2144 = vadd.f32 0.0, %v2143
      %2145 = vmatprep.mubr.f32.mxu0 0.0
      %2146 = vmatmul.mubr.f32.gmra.mrb[0].mxu0 %v2013
      %v2147 = vpop.f32.mrb[0].mxu0
      %v2148 = vadd.f32 0.0, %v2147
      %v2149 = vpop.f32.mrb[0].mxu0
      %v2150 = vadd.f32 0.0, %v2149
      %2151 = vmatprep.mubr.f32.mxu0 0.0
      %2152 = vmatmul.mubr.f32.gmra.mrb[0].mxu0 %v2016
      %v2153 = vpop.f32.mrb[0].mxu0
      %v2154 = vadd.f32 0.0, %v2153
      %v2155 = vpop.f32.mrb[0].mxu0
      %v2156 = vadd.f32 0.0, %v2155
      %2157 = vmatprep.mubr.f32.mxu0 0.0
      %2158 = vmatmul.mubr.f32.gmra.mrb[0].mxu0 %v2019
      %v2159 = vpop.f32.mrb[0].mxu0
      %v2160 = vadd.f32 0.0, %v2159
      %v2161 = vpop.f32.mrb[0].mxu0
      %v2162 = vadd.f32 0.0, %v2161
      %2163 = vmatprep.mubr.f32.mxu0 0.0
      %2164 = vmatmul.mubr.f32.gmra.mrb[0].mxu0 %v2022
      %v2165 = vpop.f32.mrb[0].mxu0
      %v2166 = vadd.f32 0.0, %v2165
      %v2167 = vpop.f32.mrb[0].mxu0
      %v2168 = vadd.f32 0.0, %v2167
      %2169 = vmatprep.mubr.f32.mxu0 0.0
      %2170 = vmatmul.mubr.f32.gmra.mrb[0].mxu0 %v2025
      %v2171 = vpop.f32.mrb[0].mxu0
      %v2172 = vadd.f32 0.0, %v2171
      %v2173 = vpop.f32.mrb[0].mxu0
      %v2174 = vadd.f32 0.0, %v2173
      %2175 = vmatprep.mubr.f32.mxu0 0.0
      %2176 = vmatmul.mubr.f32.gmra.mrb[0].mxu0 %v2028
      %v2177 = vpop.f32.mrb[0].mxu0
      %v2178 = vadd.f32 0.0, %v2177
      %v2179 = vpop.f32.mrb[0].mxu0
      %v2180 = vadd.f32 0.0, %v2179
      %2181 = vmatprep.mubr.f32.mxu0 0.0
      %2182 = vmatmul.mubr.f32.gmra.mrb[0].mxu0 %v2031
      %v2183 = vpop.f32.mrb[0].mxu0
      %v2184 = vadd.f32 0.0, %v2183
      %v2185 = vpop.f32.mrb[0].mxu0
      %v2186 = vadd.f32 0.0, %v2185
      %2187 = vmatprep.mubr.f32.mxu0 0.0
      %2188 = vmatmul.mubr.f32.gmra.mrb[0].mxu0 %v2034
      %v2189 = vpop.f32.mrb[0].mxu0
      %v2190 = vadd.f32 0.0, %v2189
      %v2191 = vpop.f32.mrb[0].mxu0
      %v2192 = vadd.f32 0.0, %v2191
      %2193 = vmatprep.mubr.f32.mxu0 0.0
      %2194 = vmatmul.mubr.f32.gmra.mrb[0].mxu0 %v2037
      %v2195 = vpop.f32.mrb[0].mxu0
      %v2196 = vadd.f32 0.0, %v2195
      %v2197 = vpop.f32.mrb[0].mxu0
      %v2198 = vadd.f32 0.0, %v2197
      %2199 = vmatprep.mubr.f32.mxu0 0.0
      %2200 = vmatmul.mubr.f32.gmra.mrb[0].mxu0 %v2040
      %v2201 = vpop.f32.mrb[0].mxu0
      %v2202 = vadd.f32 0.0, %v2201
      %v2203 = vpop.f32.mrb[0].mxu0
      %v2204 = vadd.f32 0.0, %v2203
      %2205 = vmatprep.mubr.f32.mxu0 0.0
      %2206 = vmatmul.mubr.f32.gmra.mrb[0].mxu0 %v2043
      %v2207 = vpop.f32.mrb[0].mxu0
      %v2208 = vadd.f32 0.0, %v2207
      %v2209 = vpop.f32.mrb[0].mxu0
      %v2210 = vadd.f32 0.0, %v2209
      %2211 = vmatprep.mubr.f32.mxu0 0.0
      %2212 = vmatmul.mubr.f32.gmra.mrb[0].mxu0 %v2046
      %v2213 = vpop.f32.mrb[0].mxu0
      %v2214 = vadd.f32 0.0, %v2213
      %v2215 = vpop.f32.mrb[0].mxu0
      %v2216 = vadd.f32 0.0, %v2215
      %2217 = vmatprep.mubr.f32.mxu0 0.0
      %2218 = vmatmul.mubr.f32.gmra.mrb[0].mxu0 %v2049
      %v2219 = vpop.f32.mrb[0].mxu0
      %v2220 = vadd.f32 0.0, %v2219
      %v2221 = vpop.f32.mrb[0].mxu0
      %v2222 = vadd.f32 0.0, %v2221
      %2223 = vdwg.mxu0
      %2224 = vmatprep.subr.mxu0 0.0
      %2225 = vmatpush1.msra.mxu0 %v1968
      %2226 = vmatprep.subr.mxu0 0.0
      %2227 = vmatpush1.msra.mxu0 %v1971
      %2228 = vmatprep.subr.mxu0 0.0
      %2229 = vmatpush1.msra.mxu0 %v1974
      %2230 = vmatprep.subr.mxu0 0.0
      %2231 = vmatpush1.msra.mxu0 %v1977
      %2232 = vmatprep.subr.mxu0 0.0
      %2233 = vmatpush1.msra.mxu0 0.0
      %2234 = vmatprep.subr.mxu0 0.0
      %2235 = vmatpush1.msra.mxu0 0.0
      %2236 = vmatprep.subr.mxu0 0.0
      %2237 = vmatpush1.msra.mxu0 0.0
      %2238 = vmatprep.subr.mxu0 0.0
      %2239 = vmatpush1.msra.mxu0 0.0
      %2240 = vmatprep.subr.mxu0 0.0
      %2241 = vmatpush1.msra.mxu0 0.0
      %2242 = vmatprep.subr.mxu0 0.0
      %2243 = vmatpush1.msra.mxu0 0.0
      %2244 = vmatprep.subr.mxu0 0.0
      %2245 = vmatpush1.msra.mxu0 0.0
      %2246 = vmatprep.subr.mxu0 0.0
      %2247 = vmatpush1.msra.mxu0 0.0
      %2248 = vmatprep.subr.mxu0 0.0
      %2249 = vmatpush1.msra.mxu0 0.0
      %2250 = vmatprep.subr.mxu0 0.0
      %2251 = vmatpush1.msra.mxu0 0.0
      %2252 = vmatprep.subr.mxu0 0.0
      %2253 = vmatpush1.msra.mxu0 0.0
      %2254 = vmatprep.subr.mxu0 0.0
      %2255 = vmatpush1.msra.mxu0 0.0
      %2256 = vmatprep.subr.mxu0 0.0
      %2257 = vmatpush1.msra.mxu0 0.0
      %2258 = vmatprep.subr.mxu0 0.0
      %2259 = vmatpush1.msra.mxu0 0.0
      %2260 = vmatprep.subr.mxu0 0.0
      %2261 = vmatpush1.msra.mxu0 0.0
      %2262 = vmatprep.subr.mxu0 0.0
      %2263 = vmatpush1.msra.mxu0 0.0
      %2264 = vmatprep.subr.mxu0 0.0
      %2265 = vmatpush1.msra.mxu0 0.0
      %2266 = vmatprep.subr.mxu0 0.0
      %2267 = vmatpush1.msra.mxu0 0.0
      %2268 = vmatprep.subr.mxu0 0.0
      %2269 = vmatpush1.msra.mxu0 0.0
      %2270 = vmatprep.subr.mxu0 0.0
      %2271 = vmatpush1.msra.mxu0 0.0
      %2272 = vmatprep.subr.mxu0 0.0
      %2273 = vmatpush1.msra.mxu0 0.0
      %2274 = vmatprep.subr.mxu0 0.0
      %2275 = vmatpush1.msra.mxu0 0.0
      %2276 = vmatprep.subr.mxu0 0.0
      %2277 = vmatpush1.msra.mxu0 0.0
      %2278 = vmatprep.subr.mxu0 0.0
      %2279 = vmatpush1.msra.mxu0 0.0
      %2280 = vmatprep.subr.mxu0 0.0
      %2281 = vmatpush1.msra.mxu0 0.0
      %2282 = vmatprep.subr.mxu0 0.0
      %2283 = vmatpush1.msra.mxu0 0.0
      %2284 = vmatprep.subr.mxu0 0.0
      %2285 = vmatpush1.msra.mxu0 0.0
      %2286 = vmatprep.subr.mxu0 0.0
      %2287 = vmatpush1.msra.mxu0 0.0
      %2288 = vmatprep.mubr.f32.mxu0 0.0
      %2289 = vmatmul.mubr.f32.gmra.mrb[0].mxu0 %v1998
      %v2290 = vpop.f32.mrb[0].mxu0
      %v2291 = vadd.f32 0.0, %v2290
      %v2292 = vpop.f32.mrb[0].mxu0
      %2293 = vmatprep.mubr.f32.mxu0 0.0
      %2294 = vmatmul.mubr.f32.gmra.mrb[0].mxu0 %v2001
      %v2295 = vpop.f32.mrb[0].mxu0
      %v2296 = vadd.f32 0.0, %v2295
      %v2297 = vpop.f32.mrb[0].mxu0
      %2298 = vmatprep.mubr.f32.mxu0 0.0
      %2299 = vmatmul.mubr.f32.gmra.mrb[0].mxu0 %v2004
      %v2300 = vpop.f32.mrb[0].mxu0
      %v2301 = vadd.f32 0.0, %v2300
      %v2302 = vpop.f32.mrb[0].mxu0
      %2303 = vmatprep.mubr.f32.mxu0 0.0
      %2304 = vmatmul.mubr.f32.gmra.mrb[0].mxu0 %v2007
      %v2305 = vpop.f32.mrb[0].mxu0
      %v2306 = vadd.f32 0.0, %v2305
      %v2307 = vpop.f32.mrb[0].mxu0
      %2308 = vmatprep.mubr.f32.mxu0 0.0
      %2309 = vmatmul.mubr.f32.gmra.mrb[0].mxu0 %v2010
      %v2310 = vpop.f32.mrb[0].mxu0
      %v2311 = vadd.f32 0.0, %v2310
      %v2312 = vpop.f32.mrb[0].mxu0
      %2313 = vmatprep.mubr.f32.mxu0 0.0
      %2314 = vmatmul.mubr.f32.gmra.mrb[0].mxu0 %v2013
      %v2315 = vpop.f32.mrb[0].mxu0
      %v2316 = vadd.f32 0.0, %v2315
      %v2317 = vpop.f32.mrb[0].mxu0
      %2318 = vmatprep.mubr.f32.mxu0 0.0
      %2319 = vmatmul.mubr.f32.gmra.mrb[0].mxu0 %v2016
      %v2320 = vpop.f32.mrb[0].mxu0
      %v2321 = vadd.f32 0.0, %v2320
      %v2322 = vpop.f32.mrb[0].mxu0
      %2323 = vmatprep.mubr.f32.mxu0 0.0
      %2324 = vmatmul.mubr.f32.gmra.mrb[0].mxu0 %v2019
      %v2325 = vpop.f32.mrb[0].mxu0
      %v2326 = vadd.f32 0.0, %v2325
      %v2327 = vpop.f32.mrb[0].mxu0
      %2328 = vmatprep.mubr.f32.mxu0 0.0
      %2329 = vmatmul.mubr.f32.gmra.mrb[0].mxu0 %v2022
      %v2330 = vpop.f32.mrb[0].mxu0
      %v2331 = vadd.f32 0.0, %v2330
      %v2332 = vpop.f32.mrb[0].mxu0
      %2333 = vmatprep.mubr.f32.mxu0 0.0
      %2334 = vmatmul.mubr.f32.gmra.mrb[0].mxu0 %v2025
      %v2335 = vpop.f32.mrb[0].mxu0
      %v2336 = vadd.f32 0.0, %v2335
      %v2337 = vpop.f32.mrb[0].mxu0
      %2338 = vmatprep.mubr.f32.mxu0 0.0
      %2339 = vmatmul.mubr.f32.gmra.mrb[0].mxu0 %v2028
      %v2340 = vpop.f32.mrb[0].mxu0
      %v2341 = vadd.f32 0.0, %v2340
      %v2342 = vpop.f32.mrb[0].mxu0
      %2343 = vmatprep.mubr.f32.mxu0 0.0
      %2344 = vmatmul.mubr.f32.gmra.mrb[0].mxu0 %v2031
      %v2345 = vpop.f32.mrb[0].mxu0
      %v2346 = vadd.f32 0.0, %v2345
      %v2347 = vpop.f32.mrb[0].mxu0
      %2348 = vmatprep.mubr.f32.mxu0 0.0
      %2349 = vmatmul.mubr.f32.gmra.mrb[0].mxu0 %v2034
      %v2350 = vpop.f32.mrb[0].mxu0
      %v2351 = vadd.f32 0.0, %v2350
      %v2352 = vpop.f32.mrb[0].mxu0
      %2353 = vmatprep.mubr.f32.mxu0 0.0
      %2354 = vmatmul.mubr.f32.gmra.mrb[0].mxu0 %v2037
      %v2355 = vpop.f32.mrb[0].mxu0
      %v2356 = vadd.f32 0.0, %v2355
      %v2357 = vpop.f32.mrb[0].mxu0
      %2358 = vmatprep.mubr.f32.mxu0 0.0
      %2359 = vmatmul.mubr.f32.gmra.mrb[0].mxu0 %v2040
      %v2360 = vpop.f32.mrb[0].mxu0
      %v2361 = vadd.f32 0.0, %v2360
      %v2362 = vpop.f32.mrb[0].mxu0
      %2363 = vmatprep.mubr.f32.mxu0 0.0
      %2364 = vmatmul.mubr.f32.gmra.mrb[0].mxu0 %v2043
      %v2365 = vpop.f32.mrb[0].mxu0
      %v2366 = vadd.f32 0.0, %v2365
      %v2367 = vpop.f32.mrb[0].mxu0
      %2368 = vmatprep.mubr.f32.mxu0 0.0
      %2369 = vmatmul.mubr.f32.gmra.mrb[0].mxu0 %v2046
      %v2370 = vpop.f32.mrb[0].mxu0
      %v2371 = vadd.f32 0.0, %v2370
      %v2372 = vpop.f32.mrb[0].mxu0
      %2373 = vmatprep.mubr.f32.mxu0 0.0
      %2374 = vmatmul.mubr.f32.gmra.mrb[0].mxu0 %v2049
      %v2375 = vpop.f32.mrb[0].mxu0
      %v2376 = vadd.f32 0.0, %v2375
      %v2377 = vpop.f32.mrb[0].mxu0
      %2378 = vdwg.mxu0
      %2379 = vrot.lane.b32.xlu0 %v2118, 19
      %v2380 = vpop.permute.xlu0 %2379
      %2381 = vrot.lane.b32.xlu0 %v2124, 19
      %v2382 = vpop.permute.xlu0 %2381
      %2383 = vrot.lane.b32.xlu0 %v2120, 19
      %v2384 = vpop.permute.xlu0 %2383
      %2385 = vrot.lane.b32.xlu0 %v2126, 19
      %v2386 = vpop.permute.xlu0 %2385
      %2387 = vrot.lane.b32.xlu0 %v2291, 19
      %v2388 = vpop.permute.xlu0 %2387
      %2389 = vrot.lane.b32.xlu0 %v2296, 19
      %v2390 = vpop.permute.xlu0 %2389
      %v2391 = vsel %vm1024, %v2384, %v2388
      %v2392 = vsel %vm1024, %v2386, %v2390
      %v2393 = vsel %vm1024, %v2380, %v2384
      %v2394 = vsel %vm1024, %v2382, %v2386
      %v2395 = vsel %vm1024, %v2388, %v2380
      %v2396 = vsel %vm1024, %v2390, %v2382
      %v2397 = vadd.f32 %v2166, %v2395
      %v2398 = vadd.f32 %v2168, %v2393
      %v2399 = vadd.f32 %v2331, %v2391
      %v2400 = vadd.f32 %v2172, %v2396
      %v2401 = vadd.f32 %v2174, %v2394
      %v2402 = vadd.f32 %v2336, %v2392
      %2403 = vrot.lane.b32.xlu0 %v2130, 18
      %v2404 = vpop.permute.xlu0 %2403
      %2405 = vrot.lane.b32.xlu0 %v2136, 18
      %v2406 = vpop.permute.xlu0 %2405
      %2407 = vrot.lane.b32.xlu0 %v2132, 18
      %v2408 = vpop.permute.xlu0 %2407
      %2409 = vrot.lane.b32.xlu0 %v2138, 18
      %v2410 = vpop.permute.xlu0 %2409
      %2411 = vrot.lane.b32.xlu0 %v2301, 18
      %v2412 = vpop.permute.xlu0 %2411
      %2413 = vrot.lane.b32.xlu0 %v2306, 18
      %v2414 = vpop.permute.xlu0 %2413
      %v2415 = vsel %vm1049, %v2408, %v2412
      %v2416 = vsel %vm1049, %v2410, %v2414
      %v2417 = vsel %vm1049, %v2404, %v2408
      %v2418 = vsel %vm1049, %v2406, %v2410
      %v2419 = vsel %vm1049, %v2412, %v2404
      %v2420 = vsel %vm1049, %v2414, %v2406
      %v2421 = vadd.f32 %v2397, %v2419
      %v2422 = vadd.f32 %v2398, %v2417
      %v2423 = vadd.f32 %v2399, %v2415
      %v2424 = vadd.f32 %v2400, %v2420
      %v2425 = vadd.f32 %v2401, %v2418
      %v2426 = vadd.f32 %v2402, %v2416
      %2427 = vrot.lane.b32.xlu0 %v2142, 17
      %v2428 = vpop.permute.xlu0 %2427
      %2429 = vrot.lane.b32.xlu0 %v2148, 17
      %v2430 = vpop.permute.xlu0 %2429
      %2431 = vrot.lane.b32.xlu0 %v2144, 17
      %v2432 = vpop.permute.xlu0 %2431
      %2433 = vrot.lane.b32.xlu0 %v2150, 17
      %v2434 = vpop.permute.xlu0 %2433
      %2435 = vrot.lane.b32.xlu0 %v2311, 17
      %v2436 = vpop.permute.xlu0 %2435
      %2437 = vrot.lane.b32.xlu0 %v2316, 17
      %v2438 = vpop.permute.xlu0 %2437
      %v2439 = vsel %vm1074, %v2432, %v2436
      %v2440 = vsel %vm1074, %v2434, %v2438
      %v2441 = vsel %vm1074, %v2428, %v2432
      %v2442 = vsel %vm1074, %v2430, %v2434
      %v2443 = vsel %vm1074, %v2436, %v2428
      %v2444 = vsel %vm1074, %v2438, %v2430
      %v2445 = vadd.f32 %v2421, %v2443
      %v2446 = vadd.f32 %v2422, %v2441
      %v2447 = vadd.f32 %v2423, %v2439
      %v2448 = vadd.f32 %v2424, %v2444
      %v2449 = vadd.f32 %v2425, %v2442
      %v2450 = vadd.f32 %v2426, %v2440
      %2451 = vrot.lane.b32.xlu0 %v2154, 1
      %v2452 = vpop.permute.xlu0 %2451
      %2453 = vrot.lane.b32.xlu0 %v2160, 1
      %v2454 = vpop.permute.xlu0 %2453
      %2455 = vrot.lane.b32.xlu0 %v2156, 1
      %v2456 = vpop.permute.xlu0 %2455
      %2457 = vrot.lane.b32.xlu0 %v2162, 1
      %v2458 = vpop.permute.xlu0 %2457
      %2459 = vrot.lane.b32.xlu0 %v2321, 1
      %v2460 = vpop.permute.xlu0 %2459
      %2461 = vrot.lane.b32.xlu0 %v2326, 1
      %v2462 = vpop.permute.xlu0 %2461
      %v2463 = vsel %vm1099, %v2456, %v2460
      %v2464 = vsel %vm1099, %v2458, %v2462
      %v2465 = vsel %vm1099, %v2452, %v2456
      %v2466 = vsel %vm1099, %v2454, %v2458
      %v2467 = vsel %vm1099, %v2460, %v2452
      %v2468 = vsel %vm1099, %v2462, %v2454
      %v2469 = vadd.f32 %v2445, %v2467
      %v2470 = vadd.f32 %v2446, %v2465
      %v2471 = vadd.f32 %v2447, %v2463
      %v2472 = vadd.f32 %v2448, %v2468
      %v2473 = vadd.f32 %v2449, %v2466
      %v2474 = vadd.f32 %v2450, %v2464
      %2475 = vrot.lane.b32.xlu0 %v2178, 127
      %v2476 = vpop.permute.xlu0 %2475
      %2477 = vrot.lane.b32.xlu0 %v2184, 127
      %v2478 = vpop.permute.xlu0 %2477
      %2479 = vrot.lane.b32.xlu0 %v2180, 127
      %v2480 = vpop.permute.xlu0 %2479
      %2481 = vrot.lane.b32.xlu0 %v2186, 127
      %v2482 = vpop.permute.xlu0 %2481
      %2483 = vrot.lane.b32.xlu0 %v2341, 127
      %v2484 = vpop.permute.xlu0 %2483
      %2485 = vrot.lane.b32.xlu0 %v2346, 127
      %v2486 = vpop.permute.xlu0 %2485
      %v2487 = vsel %vm1124, %v2480, %v2484
      %v2488 = vsel %vm1124, %v2482, %v2486
      %v2489 = vsel %vm1124, %v2476, %v2480
      %v2490 = vsel %vm1124, %v2478, %v2482
      %v2491 = vsel %vm1124, %v2484, %v2476
      %v2492 = vsel %vm1124, %v2486, %v2478
      %v2493 = vadd.f32 %v2469, %v2489
      %v2494 = vadd.f32 %v2470, %v2487
      %v2495 = vadd.f32 %v2471, %v2491
      %v2496 = vadd.f32 %v2472, %v2490
      %v2497 = vadd.f32 %v2473, %v2488
      %v2498 = vadd.f32 %v2474, %v2492
      %2499 = vrot.lane.b32.xlu0 %v2190, 111
      %v2500 = vpop.permute.xlu0 %2499
      %2501 = vrot.lane.b32.xlu0 %v2196, 111
      %v2502 = vpop.permute.xlu0 %2501
      %2503 = vrot.lane.b32.xlu0 %v2192, 111
      %v2504 = vpop.permute.xlu0 %2503
      %2505 = vrot.lane.b32.xlu0 %v2198, 111
      %v2506 = vpop.permute.xlu0 %2505
      %2507 = vrot.lane.b32.xlu0 %v2351, 111
      %v2508 = vpop.permute.xlu0 %2507
      %2509 = vrot.lane.b32.xlu0 %v2356, 111
      %v2510 = vpop.permute.xlu0 %2509
      %v2511 = vsel %vm1149, %v2504, %v2508
      %v2512 = vsel %vm1149, %v2506, %v2510
      %v2513 = vsel %vm1149, %v2500, %v2504
      %v2514 = vsel %vm1149, %v2502, %v2506
      %v2515 = vsel %vm1149, %v2508, %v2500
      %v2516 = vsel %vm1149, %v2510, %v2502
      %v2517 = vadd.f32 %v2493, %v2513
      %v2518 = vadd.f32 %v2494, %v2511
      %v2519 = vadd.f32 %v2495, %v2515
      %v2520 = vadd.f32 %v2496, %v2514
      %v2521 = vadd.f32 %v2497, %v2512
      %v2522 = vadd.f32 %v2498, %v2516
      %2523 = vrot.lane.b32.xlu0 %v2202, 110
      %v2524 = vpop.permute.xlu0 %2523
      %2525 = vrot.lane.b32.xlu0 %v2208, 110
      %v2526 = vpop.permute.xlu0 %2525
      %2527 = vrot.lane.b32.xlu0 %v2204, 110
      %v2528 = vpop.permute.xlu0 %2527
      %2529 = vrot.lane.b32.xlu0 %v2210, 110
      %v2530 = vpop.permute.xlu0 %2529
      %2531 = vrot.lane.b32.xlu0 %v2361, 110
      %v2532 = vpop.permute.xlu0 %2531
      %2533 = vrot.lane.b32.xlu0 %v2366, 110
      %v2534 = vpop.permute.xlu0 %2533
      %v2535 = vsel %vm1174, %v2528, %v2532
      %v2536 = vsel %vm1174, %v2530, %v2534
      %v2537 = vsel %vm1174, %v2524, %v2528
      %v2538 = vsel %vm1174, %v2526, %v2530
      %v2539 = vsel %vm1174, %v2532, %v2524
      %v2540 = vsel %vm1174, %v2534, %v2526
      %v2541 = vadd.f32 %v2517, %v2537
      %v2542 = vadd.f32 %v2518, %v2535
      %v2543 = vadd.f32 %v2519, %v2539
      %v2544 = vadd.f32 %v2520, %v2538
      %v2545 = vadd.f32 %v2521, %v2536
      %v2546 = vadd.f32 %v2522, %v2540
      %2547 = vrot.lane.b32.xlu0 %v2214, 109
      %v2548 = vpop.permute.xlu0 %2547
      %2549 = vrot.lane.b32.xlu0 %v2220, 109
      %v2550 = vpop.permute.xlu0 %2549
      %2551 = vrot.lane.b32.xlu0 %v2216, 109
      %v2552 = vpop.permute.xlu0 %2551
      %2553 = vrot.lane.b32.xlu0 %v2222, 109
      %v2554 = vpop.permute.xlu0 %2553
      %2555 = vrot.lane.b32.xlu0 %v2371, 109
      %v2556 = vpop.permute.xlu0 %2555
      %2557 = vrot.lane.b32.xlu0 %v2376, 109
      %v2558 = vpop.permute.xlu0 %2557
      %v2559 = vsel %vm1199, %v2552, %v2556
      %v2560 = vsel %vm1199, %v2554, %v2558
      %v2561 = vsel %vm1199, %v2548, %v2552
      %v2562 = vsel %vm1199, %v2550, %v2554
      %v2563 = vsel %vm1199, %v2556, %v2548
      %v2564 = vsel %vm1199, %v2558, %v2550
      %v2565 = vadd.f32 %v2541, %v2561
      %v2566 = vadd.f32 %v2542, %v2559
      %v2567 = vadd.f32 %v2543, %v2563
      %v2568 = vadd.f32 %v2544, %v2562
      %v2569 = vadd.f32 %v2545, %v2560
      %v2570 = vadd.f32 %v2546, %v2564
      %v2571 = vld [vmem:[%s13] sm:$0xff]
      %v2572 = vld [vmem:[%s13 + $0x8] sm:$0xff]
      %2574 = vset.pattern.permute.xlu0 0
      %2575 = vperm.xlu0 %2574, %v2571
      %v2576 = vpop.permute.xlu0 %2575
      %2579 = vset.pattern.permute.xlu0 0
      %2580 = vperm.xlu0 %2579, %v2572
      %v2581 = vpop.permute.xlu0 %2580
      %v2583 = vadd.f32 %v2565, %v2576
      %v2584 = vadd.f32 %v2566, %v2576
      %v2585 = vadd.f32 %v2567, %v2576
      %v2586 = vadd.f32 %v2568, %v2581
      %v2587 = vadd.f32 %v2569, %v2581
      %v2588 = vadd.f32 %v2570, %v2581
      %vm2589 = vcmp.ge.f32.partialorder %v2583, 0.0
      %vm2590 = vcmp.ge.f32.partialorder %v2584, 0.0
      %vm2591 = vcmp.ge.f32.partialorder %v2585, 0.0
      %vm2592 = vcmp.ge.f32.partialorder %v2586, 0.0
      %vm2593 = vcmp.ge.f32.partialorder %v2587, 0.0
      %vm2594 = vcmp.ge.f32.partialorder %v2588, 0.0
      %v2595 = vmul.f32 %v1236, %v2583
      %v2596 = vmul.f32 %v1236, %v2584
      %v2597 = vmul.f32 %v1236, %v2585
      %v2598 = vmul.f32 %v1236, %v2586
      %v2599 = vmul.f32 %v1236, %v2587
      %v2600 = vmul.f32 %v1236, %v2588
      %v2601 = vsel %vm2589, %v2583, %v2595
      %v2602 = vsel %vm2590, %v2584, %v2596
      %v2603 = vsel %vm2591, %v2585, %v2597
      %v2604 = vsel %vm2592, %v2586, %v2598
      %v2605 = vsel %vm2593, %v2587, %v2599
      %v2606 = vsel %vm2594, %v2588, %v2600
      %v2607 = vmul.f32 %v1253, %v2601
      %v2608 = vmul.f32 %v1257, %v2602
      %v2609 = vmul.f32 %v1261, %v2603
      %v2610 = vmul.f32 %v1253, %v2604
      %v2611 = vmul.f32 %v1257, %v2605
      %v2612 = vmul.f32 %v1261, %v2606
      %vm2613 = vcmp.ge.f32.partialorder %v2607, 0.0
      %vm2614 = vcmp.ge.f32.partialorder %v2608, 0.0
      %vm2615 = vcmp.ge.f32.partialorder %v2609, 0.0
      %vm2616 = vcmp.ge.f32.partialorder %v2610, 0.0
      %vm2617 = vcmp.ge.f32.partialorder %v2611, 0.0
      %vm2618 = vcmp.ge.f32.partialorder %v2612, 0.0
      %v2619 = vmul.f32 %v1236, %v2607
      %v2620 = vmul.f32 %v1236, %v2608
      %v2621 = vmul.f32 %v1236, %v2609
      %v2622 = vmul.f32 %v1236, %v2610
      %v2623 = vmul.f32 %v1236, %v2611
      %v2624 = vmul.f32 %v1236, %v2612
      %v2625 = vsel %vm2613, %v2607, %v2619
      %v2626 = vsel %vm2614, %v2608, %v2620
      %v2627 = vsel %vm2615, %v2609, %v2621
      %v2628 = vsel %vm2616, %v2610, %v2622
      %v2629 = vsel %vm2617, %v2611, %v2623
      %v2630 = vsel %vm2618, %v2612, %v2624
      %2631 = vst [vmem:[%s603 + $0x60] sm:$0xff] %v2625
      %2632 = vst [vmem:[%s603 + $0x68] sm:$0xff] %v2626
      %2633 = vst [vmem:[%s603 + $0x70] sm:$0xff] %v2627
      %2634 = vst [vmem:[%s603 + $0x78] sm:$0xff] %v2628
      %2635 = vst [vmem:[%s603 + $0x80] sm:$0xff] %v2629
      %2636 = vst [vmem:[%s603 + $0x88] sm:$0xff] %v2630
      %v2637 = vld [vmem:[%s603] sm:$0xff]
      %v2638 = vld [vmem:[%s603 + $0x8] sm:$0xff]
      %v2639 = vld [vmem:[%s603 + $0x10] sm:$0xff]
      %v2640 = vld [vmem:[%s603 + $0x18] sm:$0xff]
      %v2641 = vld [vmem:[%s603 + $0x20] sm:$0xff]
      %v2642 = vld [vmem:[%s603 + $0x28] sm:$0xff]
      %v2643 = vld [vmem:[%s603 + $0x30] sm:$0xff]
      %v2644 = vld [vmem:[%s603 + $0x38] sm:$0xff]
      %v2645 = vld [vmem:[%s603 + $0x40] sm:$0xff]
      %v2646 = vld [vmem:[%s603 + $0x48] sm:$0xff]
      %v2647 = vld [vmem:[%s603 + $0x50] sm:$0xff]
      %v2648 = vld [vmem:[%s603 + $0x58] sm:$0xff]
      %v2649 = vld [vmem:[%s603 + $0x60] sm:$0xff]
      %v2650 = vld [vmem:[%s603 + $0x68] sm:$0xff]
      %v2651 = vld [vmem:[%s603 + $0x70] sm:$0xff]
      %v2652 = vld [vmem:[%s603 + $0x78] sm:$0xff]
      %v2653 = vld [vmem:[%s603 + $0x80] sm:$0xff]
      %v2654 = vld [vmem:[%s603 + $0x88] sm:$0xff]
      %v2655 = vld [vmem:[%s6] sm:$0xff]
      %v2656 = vld [vmem:[%s6 + $0x8] sm:$0xff]
      %v2657 = vld [vmem:[%s6 + $0x10] sm:$0xff]
      %v2658 = vld [vmem:[%s6 + $0x18] sm:$0xff]
      %v2659 = vld [vmem:[%s6 + $0x20] sm:$0xff]
      %v2660 = vld [vmem:[%s6 + $0x28] sm:$0xff]
      %v2661 = vld [vmem:[%s6 + $0x30] sm:$0xff]
      %v2662 = vld [vmem:[%s6 + $0x38] sm:$0xff]
      %v2663 = vld [vmem:[%s6 + $0x40] sm:$0xff]
      %v2664 = vld [vmem:[%s6 + $0x48] sm:$0xff]
      %v2665 = vld [vmem:[%s6 + $0x50] sm:$0xff]
      %v2666 = vld [vmem:[%s6 + $0x58] sm:$0xff]
      %v2667 = vld [vmem:[%s6 + $0x60] sm:$0xff]
      %v2668 = vld [vmem:[%s6 + $0x68] sm:$0xff]
      %v2669 = vld [vmem:[%s6 + $0x70] sm:$0xff]
      %v2670 = vld [vmem:[%s6 + $0x78] sm:$0xff]
      %v2671 = vld [vmem:[%s6 + $0x80] sm:$0xff]
      %v2672 = vld [vmem:[%s6 + $0x88] sm:$0xff]
      %vm2673 = vcmask 392192
      %v2675 = vsel %vm2673, %v2655, 0
      %v2678 = vsel %vm2673, %v2656, 0
      %v2681 = vsel %vm2673, %v2657, 0
      %v2684 = vsel %vm2673, %v2658, 0
      %v2687 = vsel %vm2673, %v2659, 0
      %v2690 = vsel %vm2673, %v2660, 0
      %v2693 = vsel %vm2673, %v2661, 0
      %v2696 = vsel %vm2673, %v2662, 0
      %v2699 = vsel %vm2673, %v2663, 0
      %v2702 = vsel %vm2673, %v2664, 0
      %v2705 = vsel %vm2673, %v2665, 0
      %v2708 = vsel %vm2673, %v2666, 0
      %v2711 = vsel %vm2673, %v2667, 0
      %v2714 = vsel %vm2673, %v2668, 0
      %v2717 = vsel %vm2673, %v2669, 0
      %v2720 = vsel %vm2673, %v2670, 0
      %v2723 = vsel %vm2673, %v2671, 0
      %v2726 = vsel %vm2673, %v2672, 0
      %2728 = vmatprep.subr.mxu0 %v2638
      %2729 = vmatpush1.msra.mxu0 %v2637
      %2730 = vmatprep.subr.mxu0 %v2641
      %2731 = vmatpush1.msra.mxu0 %v2640
      %2732 = vmatprep.subr.mxu0 %v2644
      %2733 = vmatpush1.msra.mxu0 %v2643
      %2734 = vmatprep.subr.mxu0 %v2647
      %2735 = vmatpush1.msra.mxu0 %v2646
      %2736 = vmatprep.subr.mxu0 %v2650
      %2737 = vmatpush1.msra.mxu0 %v2649
      %2738 = vmatprep.subr.mxu0 %v2653
      %2739 = vmatpush1.msra.mxu0 %v2652
      %2740 = vmatprep.subr.mxu0 0.0
      %2741 = vmatpush1.msra.mxu0 0.0
      %2742 = vmatprep.subr.mxu0 0.0
      %2743 = vmatpush1.msra.mxu0 0.0
      %2744 = vmatprep.subr.mxu0 0.0
      %2745 = vmatpush1.msra.mxu0 0.0
      %2746 = vmatprep.subr.mxu0 0.0
      %2747 = vmatpush1.msra.mxu0 0.0
      %2748 = vmatprep.subr.mxu0 0.0
      %2749 = vmatpush1.msra.mxu0 0.0
      %2750 = vmatprep.subr.mxu0 0.0
      %2751 = vmatpush1.msra.mxu0 0.0
      %2752 = vmatprep.subr.mxu0 0.0
      %2753 = vmatpush1.msra.mxu0 0.0
      %2754 = vmatprep.subr.mxu0 0.0
      %2755 = vmatpush1.msra.mxu0 0.0
      %2756 = vmatprep.subr.mxu0 0.0
      %2757 = vmatpush1.msra.mxu0 0.0
      %2758 = vmatprep.subr.mxu0 0.0
      %2759 = vmatpush1.msra.mxu0 0.0
      %2760 = vmatprep.subr.mxu0 0.0
      %2761 = vmatpush1.msra.mxu0 0.0
      %2762 = vmatprep.subr.mxu0 0.0
      %2763 = vmatpush1.msra.mxu0 0.0
      %2764 = vmatprep.subr.mxu0 0.0
      %2765 = vmatpush1.msra.mxu0 0.0
      %2766 = vmatprep.subr.mxu0 0.0
      %2767 = vmatpush1.msra.mxu0 0.0
      %2768 = vmatprep.subr.mxu0 0.0
      %2769 = vmatpush1.msra.mxu0 0.0
      %2770 = vmatprep.subr.mxu0 0.0
      %2771 = vmatpush1.msra.mxu0 0.0
      %2772 = vmatprep.subr.mxu0 0.0
      %2773 = vmatpush1.msra.mxu0 0.0
      %2774 = vmatprep.subr.mxu0 0.0
      %2775 = vmatpush1.msra.mxu0 0.0
      %2776 = vmatprep.subr.mxu0 0.0
      %2777 = vmatpush1.msra.mxu0 0.0
      %2778 = vmatprep.subr.mxu0 0.0
      %2779 = vmatpush1.msra.mxu0 0.0
      %2780 = vmatprep.subr.mxu0 0.0
      %2781 = vmatpush1.msra.mxu0 0.0
      %2782 = vmatprep.subr.mxu0 0.0
      %2783 = vmatpush1.msra.mxu0 0.0
      %2784 = vmatprep.subr.mxu0 0.0
      %2785 = vmatpush1.msra.mxu0 0.0
      %2786 = vmatprep.subr.mxu0 0.0
      %2787 = vmatpush1.msra.mxu0 0.0
      %2788 = vmatprep.subr.mxu0 0.0
      %2789 = vmatpush1.msra.mxu0 0.0
      %2790 = vmatprep.subr.mxu0 0.0
      %2791 = vmatpush1.msra.mxu0 0.0
      %2792 = vmatprep.mubr.f32.mxu0 0.0
      %2793 = vmatmul.mubr.f32.gmra.mrb[0].mxu0 %v2675
      %v2794 = vpop.f32.mrb[0].mxu0
      %v2795 = vadd.f32 0.0, %v2794
      %v2796 = vpop.f32.mrb[0].mxu0
      %v2797 = vadd.f32 0.0, %v2796
      %2798 = vmatprep.mubr.f32.mxu0 0.0
      %2799 = vmatmul.mubr.f32.gmra.mrb[0].mxu0 %v2678
      %v2800 = vpop.f32.mrb[0].mxu0
      %v2801 = vadd.f32 0.0, %v2800
      %v2802 = vpop.f32.mrb[0].mxu0
      %v2803 = vadd.f32 0.0, %v2802
      %2804 = vmatprep.mubr.f32.mxu0 0.0
      %2805 = vmatmul.mubr.f32.gmra.mrb[0].mxu0 %v2681
      %v2806 = vpop.f32.mrb[0].mxu0
      %v2807 = vadd.f32 0.0, %v2806
      %v2808 = vpop.f32.mrb[0].mxu0
      %v2809 = vadd.f32 0.0, %v2808
      %2810 = vmatprep.mubr.f32.mxu0 0.0
      %2811 = vmatmul.mubr.f32.gmra.mrb[0].mxu0 %v2684
      %v2812 = vpop.f32.mrb[0].mxu0
      %v2813 = vadd.f32 0.0, %v2812
      %v2814 = vpop.f32.mrb[0].mxu0
      %v2815 = vadd.f32 0.0, %v2814
      %2816 = vmatprep.mubr.f32.mxu0 0.0
      %2817 = vmatmul.mubr.f32.gmra.mrb[0].mxu0 %v2687
      %v2818 = vpop.f32.mrb[0].mxu0
      %v2819 = vadd.f32 0.0, %v2818
      %v2820 = vpop.f32.mrb[0].mxu0
      %v2821 = vadd.f32 0.0, %v2820
      %2822 = vmatprep.mubr.f32.mxu0 0.0
      %2823 = vmatmul.mubr.f32.gmra.mrb[0].mxu0 %v2690
      %v2824 = vpop.f32.mrb[0].mxu0
      %v2825 = vadd.f32 0.0, %v2824
      %v2826 = vpop.f32.mrb[0].mxu0
      %v2827 = vadd.f32 0.0, %v2826
      %2828 = vmatprep.mubr.f32.mxu0 0.0
      %2829 = vmatmul.mubr.f32.gmra.mrb[0].mxu0 %v2693
      %v2830 = vpop.f32.mrb[0].mxu0
      %v2831 = vadd.f32 0.0, %v2830
      %v2832 = vpop.f32.mrb[0].mxu0
      %v2833 = vadd.f32 0.0, %v2832
      %2834 = vmatprep.mubr.f32.mxu0 0.0
      %2835 = vmatmul.mubr.f32.gmra.mrb[0].mxu0 %v2696
      %v2836 = vpop.f32.mrb[0].mxu0
      %v2837 = vadd.f32 0.0, %v2836
      %v2838 = vpop.f32.mrb[0].mxu0
      %v2839 = vadd.f32 0.0, %v2838
      %2840 = vmatprep.mubr.f32.mxu0 0.0
      %2841 = vmatmul.mubr.f32.gmra.mrb[0].mxu0 %v2699
      %v2842 = vpop.f32.mrb[0].mxu0
      %v2843 = vadd.f32 0.0, %v2842
      %v2844 = vpop.f32.mrb[0].mxu0
      %v2845 = vadd.f32 0.0, %v2844
      %2846 = vmatprep.mubr.f32.mxu0 0.0
      %2847 = vmatmul.mubr.f32.gmra.mrb[0].mxu0 %v2702
      %v2848 = vpop.f32.mrb[0].mxu0
      %v2849 = vadd.f32 0.0, %v2848
      %v2850 = vpop.f32.mrb[0].mxu0
      %v2851 = vadd.f32 0.0, %v2850
      %2852 = vmatprep.mubr.f32.mxu0 0.0
      %2853 = vmatmul.mubr.f32.gmra.mrb[0].mxu0 %v2705
      %v2854 = vpop.f32.mrb[0].mxu0
      %v2855 = vadd.f32 0.0, %v2854
      %v2856 = vpop.f32.mrb[0].mxu0
      %v2857 = vadd.f32 0.0, %v2856
      %2858 = vmatprep.mubr.f32.mxu0 0.0
      %2859 = vmatmul.mubr.f32.gmra.mrb[0].mxu0 %v2708
      %v2860 = vpop.f32.mrb[0].mxu0
      %v2861 = vadd.f32 0.0, %v2860
      %v2862 = vpop.f32.mrb[0].mxu0
      %v2863 = vadd.f32 0.0, %v2862
      %2864 = vmatprep.mubr.f32.mxu0 0.0
      %2865 = vmatmul.mubr.f32.gmra.mrb[0].mxu0 %v2711
      %v2866 = vpop.f32.mrb[0].mxu0
      %v2867 = vadd.f32 0.0, %v2866
      %v2868 = vpop.f32.mrb[0].mxu0
      %v2869 = vadd.f32 0.0, %v2868
      %2870 = vmatprep.mubr.f32.mxu0 0.0
      %2871 = vmatmul.mubr.f32.gmra.mrb[0].mxu0 %v2714
      %v2872 = vpop.f32.mrb[0].mxu0
      %v2873 = vadd.f32 0.0, %v2872
      %v2874 = vpop.f32.mrb[0].mxu0
      %v2875 = vadd.f32 0.0, %v2874
      %2876 = vmatprep.mubr.f32.mxu0 0.0
      %2877 = vmatmul.mubr.f32.gmra.mrb[0].mxu0 %v2717
      %v2878 = vpop.f32.mrb[0].mxu0
      %v2879 = vadd.f32 0.0, %v2878
      %v2880 = vpop.f32.mrb[0].mxu0
      %v2881 = vadd.f32 0.0, %v2880
      %2882 = vmatprep.mubr.f32.mxu0 0.0
      %2883 = vmatmul.mubr.f32.gmra.mrb[0].mxu0 %v2720
      %v2884 = vpop.f32.mrb[0].mxu0
      %v2885 = vadd.f32 0.0, %v2884
      %v2886 = vpop.f32.mrb[0].mxu0
      %v2887 = vadd.f32 0.0, %v2886
      %2888 = vmatprep.mubr.f32.mxu0 0.0
      %2889 = vmatmul.mubr.f32.gmra.mrb[0].mxu0 %v2723
      %v2890 = vpop.f32.mrb[0].mxu0
      %v2891 = vadd.f32 0.0, %v2890
      %v2892 = vpop.f32.mrb[0].mxu0
      %v2893 = vadd.f32 0.0, %v2892
      %2894 = vmatprep.mubr.f32.mxu0 0.0
      %2895 = vmatmul.mubr.f32.gmra.mrb[0].mxu0 %v2726
      %v2896 = vpop.f32.mrb[0].mxu0
      %v2897 = vadd.f32 0.0, %v2896
      %v2898 = vpop.f32.mrb[0].mxu0
      %v2899 = vadd.f32 0.0, %v2898
      %2900 = vdwg.mxu0
      %2901 = vmatprep.subr.mxu0 0.0
      %2902 = vmatpush1.msra.mxu0 %v2639
      %2903 = vmatprep.subr.mxu0 0.0
      %2904 = vmatpush1.msra.mxu0 %v2642
      %2905 = vmatprep.subr.mxu0 0.0
      %2906 = vmatpush1.msra.mxu0 %v2645
      %2907 = vmatprep.subr.mxu0 0.0
      %2908 = vmatpush1.msra.mxu0 %v2648
      %2909 = vmatprep.subr.mxu0 0.0
      %2910 = vmatpush1.msra.mxu0 %v2651
      %2911 = vmatprep.subr.mxu0 0.0
      %2912 = vmatpush1.msra.mxu0 %v2654
      %2913 = vmatprep.subr.mxu0 0.0
      %2914 = vmatpush1.msra.mxu0 0.0
      %2915 = vmatprep.subr.mxu0 0.0
      %2916 = vmatpush1.msra.mxu0 0.0
      %2917 = vmatprep.subr.mxu0 0.0
      %2918 = vmatpush1.msra.mxu0 0.0
      %2919 = vmatprep.subr.mxu0 0.0
      %2920 = vmatpush1.msra.mxu0 0.0
      %2921 = vmatprep.subr.mxu0 0.0
      %2922 = vmatpush1.msra.mxu0 0.0
      %2923 = vmatprep.subr.mxu0 0.0
      %2924 = vmatpush1.msra.mxu0 0.0
      %2925 = vmatprep.subr.mxu0 0.0
      %2926 = vmatpush1.msra.mxu0 0.0
      %2927 = vmatprep.subr.mxu0 0.0
      %2928 = vmatpush1.msra.mxu0 0.0
      %2929 = vmatprep.subr.mxu0 0.0
      %2930 = vmatpush1.msra.mxu0 0.0
      %2931 = vmatprep.subr.mxu0 0.0
      %2932 = vmatpush1.msra.mxu0 0.0
      %2933 = vmatprep.subr.mxu0 0.0
      %2934 = vmatpush1.msra.mxu0 0.0
      %2935 = vmatprep.subr.mxu0 0.0
      %2936 = vmatpush1.msra.mxu0 0.0
      %2937 = vmatprep.subr.mxu0 0.0
      %2938 = vmatpush1.msra.mxu0 0.0
      %2939 = vmatprep.subr.mxu0 0.0
      %2940 = vmatpush1.msra.mxu0 0.0
      %2941 = vmatprep.subr.mxu0 0.0
      %2942 = vmatpush1.msra.mxu0 0.0
      %2943 = vmatprep.subr.mxu0 0.0
      %2944 = vmatpush1.msra.mxu0 0.0
      %2945 = vmatprep.subr.mxu0 0.0
      %2946 = vmatpush1.msra.mxu0 0.0
      %2947 = vmatprep.subr.mxu0 0.0
      %2948 = vmatpush1.msra.mxu0 0.0
      %2949 = vmatprep.subr.mxu0 0.0
      %2950 = vmatpush1.msra.mxu0 0.0
      %2951 = vmatprep.subr.mxu0 0.0
      %2952 = vmatpush1.msra.mxu0 0.0
      %2953 = vmatprep.subr.mxu0 0.0
      %2954 = vmatpush1.msra.mxu0 0.0
      %2955 = vmatprep.subr.mxu0 0.0
      %2956 = vmatpush1.msra.mxu0 0.0
      %2957 = vmatprep.subr.mxu0 0.0
      %2958 = vmatpush1.msra.mxu0 0.0
      %2959 = vmatprep.subr.mxu0 0.0
      %2960 = vmatpush1.msra.mxu0 0.0
      %2961 = vmatprep.subr.mxu0 0.0
      %2962 = vmatpush1.msra.mxu0 0.0
      %2963 = vmatprep.subr.mxu0 0.0
      %2964 = vmatpush1.msra.mxu0 0.0
      %2965 = vmatprep.mubr.f32.mxu0 0.0
      %2966 = vmatmul.mubr.f32.gmra.mrb[0].mxu0 %v2675
      %v2967 = vpop.f32.mrb[0].mxu0
      %v2968 = vadd.f32 0.0, %v2967
      %v2969 = vpop.f32.mrb[0].mxu0
      %2970 = vmatprep.mubr.f32.mxu0 0.0
      %2971 = vmatmul.mubr.f32.gmra.mrb[0].mxu0 %v2678
      %v2972 = vpop.f32.mrb[0].mxu0
      %v2973 = vadd.f32 0.0, %v2972
      %v2974 = vpop.f32.mrb[0].mxu0
      %2975 = vmatprep.mubr.f32.mxu0 0.0
      %2976 = vmatmul.mubr.f32.gmra.mrb[0].mxu0 %v2681
      %v2977 = vpop.f32.mrb[0].mxu0
      %v2978 = vadd.f32 0.0, %v2977
      %v2979 = vpop.f32.mrb[0].mxu0
      %2980 = vmatprep.mubr.f32.mxu0 0.0
      %2981 = vmatmul.mubr.f32.gmra.mrb[0].mxu0 %v2684
      %v2982 = vpop.f32.mrb[0].mxu0
      %v2983 = vadd.f32 0.0, %v2982
      %v2984 = vpop.f32.mrb[0].mxu0
      %2985 = vmatprep.mubr.f32.mxu0 0.0
      %2986 = vmatmul.mubr.f32.gmra.mrb[0].mxu0 %v2687
      %v2987 = vpop.f32.mrb[0].mxu0
      %v2988 = vadd.f32 0.0, %v2987
      %v2989 = vpop.f32.mrb[0].mxu0
      %2990 = vmatprep.mubr.f32.mxu0 0.0
      %2991 = vmatmul.mubr.f32.gmra.mrb[0].mxu0 %v2690
      %v2992 = vpop.f32.mrb[0].mxu0
      %v2993 = vadd.f32 0.0, %v2992
      %v2994 = vpop.f32.mrb[0].mxu0
      %2995 = vmatprep.mubr.f32.mxu0 0.0
      %2996 = vmatmul.mubr.f32.gmra.mrb[0].mxu0 %v2693
      %v2997 = vpop.f32.mrb[0].mxu0
      %v2998 = vadd.f32 0.0, %v2997
      %v2999 = vpop.f32.mrb[0].mxu0
      %3000 = vmatprep.mubr.f32.mxu0 0.0
      %3001 = vmatmul.mubr.f32.gmra.mrb[0].mxu0 %v2696
      %v3002 = vpop.f32.mrb[0].mxu0
      %v3003 = vadd.f32 0.0, %v3002
      %v3004 = vpop.f32.mrb[0].mxu0
      %3005 = vmatprep.mubr.f32.mxu0 0.0
      %3006 = vmatmul.mubr.f32.gmra.mrb[0].mxu0 %v2699
      %v3007 = vpop.f32.mrb[0].mxu0
      %v3008 = vadd.f32 0.0, %v3007
      %v3009 = vpop.f32.mrb[0].mxu0
      %3010 = vmatprep.mubr.f32.mxu0 0.0
      %3011 = vmatmul.mubr.f32.gmra.mrb[0].mxu0 %v2702
      %v3012 = vpop.f32.mrb[0].mxu0
      %v3013 = vadd.f32 0.0, %v3012
      %v3014 = vpop.f32.mrb[0].mxu0
      %3015 = vmatprep.mubr.f32.mxu0 0.0
      %3016 = vmatmul.mubr.f32.gmra.mrb[0].mxu0 %v2705
      %v3017 = vpop.f32.mrb[0].mxu0
      %v3018 = vadd.f32 0.0, %v3017
      %v3019 = vpop.f32.mrb[0].mxu0
      %3020 = vmatprep.mubr.f32.mxu0 0.0
      %3021 = vmatmul.mubr.f32.gmra.mrb[0].mxu0 %v2708
      %v3022 = vpop.f32.mrb[0].mxu0
      %v3023 = vadd.f32 0.0, %v3022
      %v3024 = vpop.f32.mrb[0].mxu0
      %3025 = vmatprep.mubr.f32.mxu0 0.0
      %3026 = vmatmul.mubr.f32.gmra.mrb[0].mxu0 %v2711
      %v3027 = vpop.f32.mrb[0].mxu0
      %v3028 = vadd.f32 0.0, %v3027
      %v3029 = vpop.f32.mrb[0].mxu0
      %3030 = vmatprep.mubr.f32.mxu0 0.0
      %3031 = vmatmul.mubr.f32.gmra.mrb[0].mxu0 %v2714
      %v3032 = vpop.f32.mrb[0].mxu0
      %v3033 = vadd.f32 0.0, %v3032
      %v3034 = vpop.f32.mrb[0].mxu0
      %3035 = vmatprep.mubr.f32.mxu0 0.0
      %3036 = vmatmul.mubr.f32.gmra.mrb[0].mxu0 %v2717
      %v3037 = vpop.f32.mrb[0].mxu0
      %v3038 = vadd.f32 0.0, %v3037
      %v3039 = vpop.f32.mrb[0].mxu0
      %3040 = vmatprep.mubr.f32.mxu0 0.0
      %3041 = vmatmul.mubr.f32.gmra.mrb[0].mxu0 %v2720
      %v3042 = vpop.f32.mrb[0].mxu0
      %v3043 = vadd.f32 0.0, %v3042
      %v3044 = vpop.f32.mrb[0].mxu0
      %3045 = vmatprep.mubr.f32.mxu0 0.0
      %3046 = vmatmul.mubr.f32.gmra.mrb[0].mxu0 %v2723
      %v3047 = vpop.f32.mrb[0].mxu0
      %v3048 = vadd.f32 0.0, %v3047
      %v3049 = vpop.f32.mrb[0].mxu0
      %3050 = vmatprep.mubr.f32.mxu0 0.0
      %3051 = vmatmul.mubr.f32.gmra.mrb[0].mxu0 %v2726
      %v3052 = vpop.f32.mrb[0].mxu0
      %v3053 = vadd.f32 0.0, %v3052
      %v3054 = vpop.f32.mrb[0].mxu0
      %3055 = vdwg.mxu0
      %3056 = vrot.lane.b32.xlu0 %v2795, 19
      %v3057 = vpop.permute.xlu0 %3056
      %3058 = vrot.lane.b32.xlu0 %v2801, 19
      %v3059 = vpop.permute.xlu0 %3058
      %3060 = vrot.lane.b32.xlu0 %v2797, 19
      %v3061 = vpop.permute.xlu0 %3060
      %3062 = vrot.lane.b32.xlu0 %v2803, 19
      %v3063 = vpop.permute.xlu0 %3062
      %3064 = vrot.lane.b32.xlu0 %v2968, 19
      %v3065 = vpop.permute.xlu0 %3064
      %3066 = vrot.lane.b32.xlu0 %v2973, 19
      %v3067 = vpop.permute.xlu0 %3066
      %v3068 = vsel %vm1024, %v3061, %v3065
      %v3069 = vsel %vm1024, %v3063, %v3067
      %v3070 = vsel %vm1024, %v3057, %v3061
      %v3071 = vsel %vm1024, %v3059, %v3063
      %v3072 = vsel %vm1024, %v3065, %v3057
      %v3073 = vsel %vm1024, %v3067, %v3059
      %v3074 = vadd.f32 %v2843, %v3072
      %v3075 = vadd.f32 %v2845, %v3070
      %v3076 = vadd.f32 %v3008, %v3068
      %v3077 = vadd.f32 %v2849, %v3073
      %v3078 = vadd.f32 %v2851, %v3071
      %v3079 = vadd.f32 %v3013, %v3069
      %3080 = vrot.lane.b32.xlu0 %v2807, 18
      %v3081 = vpop.permute.xlu0 %3080
      %3082 = vrot.lane.b32.xlu0 %v2813, 18
      %v3083 = vpop.permute.xlu0 %3082
      %3084 = vrot.lane.b32.xlu0 %v2809, 18
      %v3085 = vpop.permute.xlu0 %3084
      %3086 = vrot.lane.b32.xlu0 %v2815, 18
      %v3087 = vpop.permute.xlu0 %3086
      %3088 = vrot.lane.b32.xlu0 %v2978, 18
      %v3089 = vpop.permute.xlu0 %3088
      %3090 = vrot.lane.b32.xlu0 %v2983, 18
      %v3091 = vpop.permute.xlu0 %3090
      %v3092 = vsel %vm1049, %v3085, %v3089
      %v3093 = vsel %vm1049, %v3087, %v3091
      %v3094 = vsel %vm1049, %v3081, %v3085
      %v3095 = vsel %vm1049, %v3083, %v3087
      %v3096 = vsel %vm1049, %v3089, %v3081
      %v3097 = vsel %vm1049, %v3091, %v3083
      %v3098 = vadd.f32 %v3074, %v3096
      %v3099 = vadd.f32 %v3075, %v3094
      %v3100 = vadd.f32 %v3076, %v3092
      %v3101 = vadd.f32 %v3077, %v3097
      %v3102 = vadd.f32 %v3078, %v3095
      %v3103 = vadd.f32 %v3079, %v3093
      %3104 = vrot.lane.b32.xlu0 %v2819, 17
      %v3105 = vpop.permute.xlu0 %3104
      %3106 = vrot.lane.b32.xlu0 %v2825, 17
      %v3107 = vpop.permute.xlu0 %3106
      %3108 = vrot.lane.b32.xlu0 %v2821, 17
      %v3109 = vpop.permute.xlu0 %3108
      %3110 = vrot.lane.b32.xlu0 %v2827, 17
      %v3111 = vpop.permute.xlu0 %3110
      %3112 = vrot.lane.b32.xlu0 %v2988, 17
      %v3113 = vpop.permute.xlu0 %3112
      %3114 = vrot.lane.b32.xlu0 %v2993, 17
      %v3115 = vpop.permute.xlu0 %3114
      %v3116 = vsel %vm1074, %v3109, %v3113
      %v3117 = vsel %vm1074, %v3111, %v3115
      %v3118 = vsel %vm1074, %v3105, %v3109
      %v3119 = vsel %vm1074, %v3107, %v3111
      %v3120 = vsel %vm1074, %v3113, %v3105
      %v3121 = vsel %vm1074, %v3115, %v3107
      %v3122 = vadd.f32 %v3098, %v3120
      %v3123 = vadd.f32 %v3099, %v3118
      %v3124 = vadd.f32 %v3100, %v3116
      %v3125 = vadd.f32 %v3101, %v3121
      %v3126 = vadd.f32 %v3102, %v3119
      %v3127 = vadd.f32 %v3103, %v3117
      %3128 = vrot.lane.b32.xlu0 %v2831, 1
      %v3129 = vpop.permute.xlu0 %3128
      %3130 = vrot.lane.b32.xlu0 %v2837, 1
      %v3131 = vpop.permute.xlu0 %3130
      %3132 = vrot.lane.b32.xlu0 %v2833, 1
      %v3133 = vpop.permute.xlu0 %3132
      %3134 = vrot.lane.b32.xlu0 %v2839, 1
      %v3135 = vpop.permute.xlu0 %3134
      %3136 = vrot.lane.b32.xlu0 %v2998, 1
      %v3137 = vpop.permute.xlu0 %3136
      %3138 = vrot.lane.b32.xlu0 %v3003, 1
      %v3139 = vpop.permute.xlu0 %3138
      %v3140 = vsel %vm1099, %v3133, %v3137
      %v3141 = vsel %vm1099, %v3135, %v3139
      %v3142 = vsel %vm1099, %v3129, %v3133
      %v3143 = vsel %vm1099, %v3131, %v3135
      %v3144 = vsel %vm1099, %v3137, %v3129
      %v3145 = vsel %vm1099, %v3139, %v3131
      %v3146 = vadd.f32 %v3122, %v3144
      %v3147 = vadd.f32 %v3123, %v3142
      %v3148 = vadd.f32 %v3124, %v3140
      %v3149 = vadd.f32 %v3125, %v3145
      %v3150 = vadd.f32 %v3126, %v3143
      %v3151 = vadd.f32 %v3127, %v3141
      %3152 = vrot.lane.b32.xlu0 %v2855, 127
      %v3153 = vpop.permute.xlu0 %3152
      %3154 = vrot.lane.b32.xlu0 %v2861, 127
      %v3155 = vpop.permute.xlu0 %3154
      %3156 = vrot.lane.b32.xlu0 %v2857, 127
      %v3157 = vpop.permute.xlu0 %3156
      %3158 = vrot.lane.b32.xlu0 %v2863, 127
      %v3159 = vpop.permute.xlu0 %3158
      %3160 = vrot.lane.b32.xlu0 %v3018, 127
      %v3161 = vpop.permute.xlu0 %3160
      %3162 = vrot.lane.b32.xlu0 %v3023, 127
      %v3163 = vpop.permute.xlu0 %3162
      %v3164 = vsel %vm1124, %v3157, %v3161
      %v3165 = vsel %vm1124, %v3159, %v3163
      %v3166 = vsel %vm1124, %v3153, %v3157
      %v3167 = vsel %vm1124, %v3155, %v3159
      %v3168 = vsel %vm1124, %v3161, %v3153
      %v3169 = vsel %vm1124, %v3163, %v3155
      %v3170 = vadd.f32 %v3146, %v3166
      %v3171 = vadd.f32 %v3147, %v3164
      %v3172 = vadd.f32 %v3148, %v3168
      %v3173 = vadd.f32 %v3149, %v3167
      %v3174 = vadd.f32 %v3150, %v3165
      %v3175 = vadd.f32 %v3151, %v3169
      %3176 = vrot.lane.b32.xlu0 %v2867, 111
      %v3177 = vpop.permute.xlu0 %3176
      %3178 = vrot.lane.b32.xlu0 %v2873, 111
      %v3179 = vpop.permute.xlu0 %3178
      %3180 = vrot.lane.b32.xlu0 %v2869, 111
      %v3181 = vpop.permute.xlu0 %3180
      %3182 = vrot.lane.b32.xlu0 %v2875, 111
      %v3183 = vpop.permute.xlu0 %3182
      %3184 = vrot.lane.b32.xlu0 %v3028, 111
      %v3185 = vpop.permute.xlu0 %3184
      %3186 = vrot.lane.b32.xlu0 %v3033, 111
      %v3187 = vpop.permute.xlu0 %3186
      %v3188 = vsel %vm1149, %v3181, %v3185
      %v3189 = vsel %vm1149, %v3183, %v3187
      %v3190 = vsel %vm1149, %v3177, %v3181
      %v3191 = vsel %vm1149, %v3179, %v3183
      %v3192 = vsel %vm1149, %v3185, %v3177
      %v3193 = vsel %vm1149, %v3187, %v3179
      %v3194 = vadd.f32 %v3170, %v3190
      %v3195 = vadd.f32 %v3171, %v3188
      %v3196 = vadd.f32 %v3172, %v3192
      %v3197 = vadd.f32 %v3173, %v3191
      %v3198 = vadd.f32 %v3174, %v3189
      %v3199 = vadd.f32 %v3175, %v3193
      %3200 = vrot.lane.b32.xlu0 %v2879, 110
      %v3201 = vpop.permute.xlu0 %3200
      %3202 = vrot.lane.b32.xlu0 %v2885, 110
      %v3203 = vpop.permute.xlu0 %3202
      %3204 = vrot.lane.b32.xlu0 %v2881, 110
      %v3205 = vpop.permute.xlu0 %3204
      %3206 = vrot.lane.b32.xlu0 %v2887, 110
      %v3207 = vpop.permute.xlu0 %3206
      %3208 = vrot.lane.b32.xlu0 %v3038, 110
      %v3209 = vpop.permute.xlu0 %3208
      %3210 = vrot.lane.b32.xlu0 %v3043, 110
      %v3211 = vpop.permute.xlu0 %3210
      %v3212 = vsel %vm1174, %v3205, %v3209
      %v3213 = vsel %vm1174, %v3207, %v3211
      %v3214 = vsel %vm1174, %v3201, %v3205
      %v3215 = vsel %vm1174, %v3203, %v3207
      %v3216 = vsel %vm1174, %v3209, %v3201
      %v3217 = vsel %vm1174, %v3211, %v3203
      %v3218 = vadd.f32 %v3194, %v3214
      %v3219 = vadd.f32 %v3195, %v3212
      %v3220 = vadd.f32 %v3196, %v3216
      %v3221 = vadd.f32 %v3197, %v3215
      %v3222 = vadd.f32 %v3198, %v3213
      %v3223 = vadd.f32 %v3199, %v3217
      %3224 = vrot.lane.b32.xlu0 %v2891, 109
      %v3225 = vpop.permute.xlu0 %3224
      %3226 = vrot.lane.b32.xlu0 %v2897, 109
      %v3227 = vpop.permute.xlu0 %3226
      %3228 = vrot.lane.b32.xlu0 %v2893, 109
      %v3229 = vpop.permute.xlu0 %3228
      %3230 = vrot.lane.b32.xlu0 %v2899, 109
      %v3231 = vpop.permute.xlu0 %3230
      %3232 = vrot.lane.b32.xlu0 %v3048, 109
      %v3233 = vpop.permute.xlu0 %3232
      %3234 = vrot.lane.b32.xlu0 %v3053, 109
      %v3235 = vpop.permute.xlu0 %3234
      %v3236 = vsel %vm1199, %v3229, %v3233
      %v3237 = vsel %vm1199, %v3231, %v3235
      %v3238 = vsel %vm1199, %v3225, %v3229
      %v3239 = vsel %vm1199, %v3227, %v3231
      %v3240 = vsel %vm1199, %v3233, %v3225
      %v3241 = vsel %vm1199, %v3235, %v3227
      %v3242 = vadd.f32 %v3218, %v3238
      %v3243 = vadd.f32 %v3219, %v3236
      %v3244 = vadd.f32 %v3220, %v3240
      %v3245 = vadd.f32 %v3221, %v3239
      %v3246 = vadd.f32 %v3222, %v3237
      %v3247 = vadd.f32 %v3223, %v3241
      %v3248 = vld [vmem:[%s14] sm:$0xff]
      %v3249 = vld [vmem:[%s14 + $0x8] sm:$0xff]
      %3251 = vset.pattern.permute.xlu0 0
      %3252 = vperm.xlu0 %3251, %v3248
      %v3253 = vpop.permute.xlu0 %3252
      %3256 = vset.pattern.permute.xlu0 0
      %3257 = vperm.xlu0 %3256, %v3249
      %v3258 = vpop.permute.xlu0 %3257
      %v3260 = vadd.f32 %v3242, %v3253
      %v3261 = vadd.f32 %v3243, %v3253
      %v3262 = vadd.f32 %v3244, %v3253
      %v3263 = vadd.f32 %v3245, %v3258
      %v3264 = vadd.f32 %v3246, %v3258
      %v3265 = vadd.f32 %v3247, %v3258
      %vm3266 = vcmp.ge.f32.partialorder %v3260, 0.0
      %vm3267 = vcmp.ge.f32.partialorder %v3261, 0.0
      %vm3268 = vcmp.ge.f32.partialorder %v3262, 0.0
      %vm3269 = vcmp.ge.f32.partialorder %v3263, 0.0
      %vm3270 = vcmp.ge.f32.partialorder %v3264, 0.0
      %vm3271 = vcmp.ge.f32.partialorder %v3265, 0.0
      %v3272 = vmul.f32 %v1236, %v3260
      %v3273 = vmul.f32 %v1236, %v3261
      %v3274 = vmul.f32 %v1236, %v3262
      %v3275 = vmul.f32 %v1236, %v3263
      %v3276 = vmul.f32 %v1236, %v3264
      %v3277 = vmul.f32 %v1236, %v3265
      %v3278 = vsel %vm3266, %v3260, %v3272
      %v3279 = vsel %vm3267, %v3261, %v3273
      %v3280 = vsel %vm3268, %v3262, %v3274
      %v3281 = vsel %vm3269, %v3263, %v3275
      %v3282 = vsel %vm3270, %v3264, %v3276
      %v3283 = vsel %vm3271, %v3265, %v3277
      %v3284 = vmul.f32 %v1253, %v3278
      %v3285 = vmul.f32 %v1257, %v3279
      %v3286 = vmul.f32 %v1261, %v3280
      %v3287 = vmul.f32 %v1253, %v3281
      %v3288 = vmul.f32 %v1257, %v3282
      %v3289 = vmul.f32 %v1261, %v3283
      %vm3290 = vcmp.ge.f32.partialorder %v3284, 0.0
      %vm3291 = vcmp.ge.f32.partialorder %v3285, 0.0
      %vm3292 = vcmp.ge.f32.partialorder %v3286, 0.0
      %vm3293 = vcmp.ge.f32.partialorder %v3287, 0.0
      %vm3294 = vcmp.ge.f32.partialorder %v3288, 0.0
      %vm3295 = vcmp.ge.f32.partialorder %v3289, 0.0
      %v3296 = vmul.f32 %v1236, %v3284
      %v3297 = vmul.f32 %v1236, %v3285
      %v3298 = vmul.f32 %v1236, %v3286
      %v3299 = vmul.f32 %v1236, %v3287
      %v3300 = vmul.f32 %v1236, %v3288
      %v3301 = vmul.f32 %v1236, %v3289
      %v3302 = vsel %vm3290, %v3284, %v3296
      %v3303 = vsel %vm3291, %v3285, %v3297
      %v3304 = vsel %vm3292, %v3286, %v3298
      %v3305 = vsel %vm3293, %v3287, %v3299
      %v3306 = vsel %vm3294, %v3288, %v3300
      %v3307 = vsel %vm3295, %v3289, %v3301
      %3308 = vst [vmem:[%s603 + $0x90] sm:$0xff] %v3302
      %3309 = vst [vmem:[%s603 + $0x98] sm:$0xff] %v3303
      %3310 = vst [vmem:[%s603 + $0xa0] sm:$0xff] %v3304
      %3311 = vst [vmem:[%s603 + $0xa8] sm:$0xff] %v3305
      %3312 = vst [vmem:[%s603 + $0xb0] sm:$0xff] %v3306
      %3313 = vst [vmem:[%s603 + $0xb8] sm:$0xff] %v3307
      %v3314 = vld [vmem:[%s603] sm:$0xff]
      %v3315 = vld [vmem:[%s603 + $0x8] sm:$0xff]
      %v3316 = vld [vmem:[%s603 + $0x10] sm:$0xff]
      %v3317 = vld [vmem:[%s603 + $0x18] sm:$0xff]
      %v3318 = vld [vmem:[%s603 + $0x20] sm:$0xff]
      %v3319 = vld [vmem:[%s603 + $0x28] sm:$0xff]
      %v3320 = vld [vmem:[%s603 + $0x30] sm:$0xff]
      %v3321 = vld [vmem:[%s603 + $0x38] sm:$0xff]
      %v3322 = vld [vmem:[%s603 + $0x40] sm:$0xff]
      %v3323 = vld [vmem:[%s603 + $0x48] sm:$0xff]
      %v3324 = vld [vmem:[%s603 + $0x50] sm:$0xff]
      %v3325 = vld [vmem:[%s603 + $0x58] sm:$0xff]
      %v3326 = vld [vmem:[%s603 + $0x60] sm:$0xff]
      %v3327 = vld [vmem:[%s603 + $0x68] sm:$0xff]
      %v3328 = vld [vmem:[%s603 + $0x70] sm:$0xff]
      %v3329 = vld [vmem:[%s603 + $0x78] sm:$0xff]
      %v3330 = vld [vmem:[%s603 + $0x80] sm:$0xff]
      %v3331 = vld [vmem:[%s603 + $0x88] sm:$0xff]
      %v3332 = vld [vmem:[%s603 + $0x90] sm:$0xff]
      %v3333 = vld [vmem:[%s603 + $0x98] sm:$0xff]
      %v3334 = vld [vmem:[%s603 + $0xa0] sm:$0xff]
      %v3335 = vld [vmem:[%s603 + $0xa8] sm:$0xff]
      %v3336 = vld [vmem:[%s603 + $0xb0] sm:$0xff]
      %v3337 = vld [vmem:[%s603 + $0xb8] sm:$0xff]
      %v3338 = vld [vmem:[%s7] sm:$0xff]
      %v3339 = vld [vmem:[%s7 + $0x8] sm:$0xff]
      %v3340 = vld [vmem:[%s7 + $0x10] sm:$0xff]
      %v3341 = vld [vmem:[%s7 + $0x18] sm:$0xff]
      %v3342 = vld [vmem:[%s7 + $0x20] sm:$0xff]
      %v3343 = vld [vmem:[%s7 + $0x28] sm:$0xff]
      %v3344 = vld [vmem:[%s7 + $0x30] sm:$0xff]
      %v3345 = vld [vmem:[%s7 + $0x38] sm:$0xff]
      %v3346 = vld [vmem:[%s7 + $0x40] sm:$0xff]
      %v3347 = vld [vmem:[%s7 + $0x48] sm:$0xff]
      %v3348 = vld [vmem:[%s7 + $0x50] sm:$0xff]
      %v3349 = vld [vmem:[%s7 + $0x58] sm:$0xff]
      %v3350 = vld [vmem:[%s7 + $0x60] sm:$0xff]
      %v3351 = vld [vmem:[%s7 + $0x68] sm:$0xff]
      %v3352 = vld [vmem:[%s7 + $0x70] sm:$0xff]
      %v3353 = vld [vmem:[%s7 + $0x78] sm:$0xff]
      %v3354 = vld [vmem:[%s7 + $0x80] sm:$0xff]
      %v3355 = vld [vmem:[%s7 + $0x88] sm:$0xff]
      %vm3356 = vcmask 523264
      %v3358 = vsel %vm3356, %v3338, 0
      %v3361 = vsel %vm3356, %v3339, 0
      %v3364 = vsel %vm3356, %v3340, 0
      %v3367 = vsel %vm3356, %v3341, 0
      %v3370 = vsel %vm3356, %v3342, 0
      %v3373 = vsel %vm3356, %v3343, 0
      %v3376 = vsel %vm3356, %v3344, 0
      %v3379 = vsel %vm3356, %v3345, 0
      %v3382 = vsel %vm3356, %v3346, 0
      %v3385 = vsel %vm3356, %v3347, 0
      %v3388 = vsel %vm3356, %v3348, 0
      %v3391 = vsel %vm3356, %v3349, 0
      %v3394 = vsel %vm3356, %v3350, 0
      %v3397 = vsel %vm3356, %v3351, 0
      %v3400 = vsel %vm3356, %v3352, 0
      %v3403 = vsel %vm3356, %v3353, 0
      %v3406 = vsel %vm3356, %v3354, 0
      %v3409 = vsel %vm3356, %v3355, 0
      %3411 = vmatprep.subr.mxu0 %v3315
      %3412 = vmatpush1.msra.mxu0 %v3314
      %3413 = vmatprep.subr.mxu0 %v3318
      %3414 = vmatpush1.msra.mxu0 %v3317
      %3415 = vmatprep.subr.mxu0 %v3321
      %3416 = vmatpush1.msra.mxu0 %v3320
      %3417 = vmatprep.subr.mxu0 %v3324
      %3418 = vmatpush1.msra.mxu0 %v3323
      %3419 = vmatprep.subr.mxu0 %v3327
      %3420 = vmatpush1.msra.mxu0 %v3326
      %3421 = vmatprep.subr.mxu0 %v3330
      %3422 = vmatpush1.msra.mxu0 %v3329
      %3423 = vmatprep.subr.mxu0 %v3333
      %3424 = vmatpush1.msra.mxu0 %v3332
      %3425 = vmatprep.subr.mxu0 %v3336
      %3426 = vmatpush1.msra.mxu0 %v3335
      %3427 = vmatprep.subr.mxu0 0.0
      %3428 = vmatpush1.msra.mxu0 0.0
      %3429 = vmatprep.subr.mxu0 0.0
      %3430 = vmatpush1.msra.mxu0 0.0
      %3431 = vmatprep.subr.mxu0 0.0
      %3432 = vmatpush1.msra.mxu0 0.0
      %3433 = vmatprep.subr.mxu0 0.0
      %3434 = vmatpush1.msra.mxu0 0.0
      %3435 = vmatprep.subr.mxu0 0.0
      %3436 = vmatpush1.msra.mxu0 0.0
      %3437 = vmatprep.subr.mxu0 0.0
      %3438 = vmatpush1.msra.mxu0 0.0
      %3439 = vmatprep.subr.mxu0 0.0
      %3440 = vmatpush1.msra.mxu0 0.0
      %3441 = vmatprep.subr.mxu0 0.0
      %3442 = vmatpush1.msra.mxu0 0.0
      %3443 = vmatprep.subr.mxu0 0.0
      %3444 = vmatpush1.msra.mxu0 0.0
      %3445 = vmatprep.subr.mxu0 0.0
      %3446 = vmatpush1.msra.mxu0 0.0
      %3447 = vmatprep.subr.mxu0 0.0
      %3448 = vmatpush1.msra.mxu0 0.0
      %3449 = vmatprep.subr.mxu0 0.0
      %3450 = vmatpush1.msra.mxu0 0.0
      %3451 = vmatprep.subr.mxu0 0.0
      %3452 = vmatpush1.msra.mxu0 0.0
      %3453 = vmatprep.subr.mxu0 0.0
      %3454 = vmatpush1.msra.mxu0 0.0
      %3455 = vmatprep.subr.mxu0 0.0
      %3456 = vmatpush1.msra.mxu0 0.0
      %3457 = vmatprep.subr.mxu0 0.0
      %3458 = vmatpush1.msra.mxu0 0.0
      %3459 = vmatprep.subr.mxu0 0.0
      %3460 = vmatpush1.msra.mxu0 0.0
      %3461 = vmatprep.subr.mxu0 0.0
      %3462 = vmatpush1.msra.mxu0 0.0
      %3463 = vmatprep.subr.mxu0 0.0
      %3464 = vmatpush1.msra.mxu0 0.0
      %3465 = vmatprep.subr.mxu0 0.0
      %3466 = vmatpush1.msra.mxu0 0.0
      %3467 = vmatprep.subr.mxu0 0.0
      %3468 = vmatpush1.msra.mxu0 0.0
      %3469 = vmatprep.subr.mxu0 0.0
      %3470 = vmatpush1.msra.mxu0 0.0
      %3471 = vmatprep.subr.mxu0 0.0
      %3472 = vmatpush1.msra.mxu0 0.0
      %3473 = vmatprep.subr.mxu0 0.0
      %3474 = vmatpush1.msra.mxu0 0.0
      %3475 = vmatprep.mubr.f32.mxu0 0.0
      %3476 = vmatmul.mubr.f32.gmra.mrb[0].mxu0 %v3358
      %v3477 = vpop.f32.mrb[0].mxu0
      %v3478 = vadd.f32 0.0, %v3477
      %v3479 = vpop.f32.mrb[0].mxu0
      %v3480 = vadd.f32 0.0, %v3479
      %3481 = vmatprep.mubr.f32.mxu0 0.0
      %3482 = vmatmul.mubr.f32.gmra.mrb[0].mxu0 %v3361
      %v3483 = vpop.f32.mrb[0].mxu0
      %v3484 = vadd.f32 0.0, %v3483
      %v3485 = vpop.f32.mrb[0].mxu0
      %v3486 = vadd.f32 0.0, %v3485
      %3487 = vmatprep.mubr.f32.mxu0 0.0
      %3488 = vmatmul.mubr.f32.gmra.mrb[0].mxu0 %v3364
      %v3489 = vpop.f32.mrb[0].mxu0
      %v3490 = vadd.f32 0.0, %v3489
      %v3491 = vpop.f32.mrb[0].mxu0
      %v3492 = vadd.f32 0.0, %v3491
      %3493 = vmatprep.mubr.f32.mxu0 0.0
      %3494 = vmatmul.mubr.f32.gmra.mrb[0].mxu0 %v3367
      %v3495 = vpop.f32.mrb[0].mxu0
      %v3496 = vadd.f32 0.0, %v3495
      %v3497 = vpop.f32.mrb[0].mxu0
      %v3498 = vadd.f32 0.0, %v3497
      %3499 = vmatprep.mubr.f32.mxu0 0.0
      %3500 = vmatmul.mubr.f32.gmra.mrb[0].mxu0 %v3370
      %v3501 = vpop.f32.mrb[0].mxu0
      %v3502 = vadd.f32 0.0, %v3501
      %v3503 = vpop.f32.mrb[0].mxu0
      %v3504 = vadd.f32 0.0, %v3503
      %3505 = vmatprep.mubr.f32.mxu0 0.0
      %3506 = vmatmul.mubr.f32.gmra.mrb[0].mxu0 %v3373
      %v3507 = vpop.f32.mrb[0].mxu0
      %v3508 = vadd.f32 0.0, %v3507
      %v3509 = vpop.f32.mrb[0].mxu0
      %v3510 = vadd.f32 0.0, %v3509
      %3511 = vmatprep.mubr.f32.mxu0 0.0
      %3512 = vmatmul.mubr.f32.gmra.mrb[0].mxu0 %v3376
      %v3513 = vpop.f32.mrb[0].mxu0
      %v3514 = vadd.f32 0.0, %v3513
      %v3515 = vpop.f32.mrb[0].mxu0
      %v3516 = vadd.f32 0.0, %v3515
      %3517 = vmatprep.mubr.f32.mxu0 0.0
      %3518 = vmatmul.mubr.f32.gmra.mrb[0].mxu0 %v3379
      %v3519 = vpop.f32.mrb[0].mxu0
      %v3520 = vadd.f32 0.0, %v3519
      %v3521 = vpop.f32.mrb[0].mxu0
      %v3522 = vadd.f32 0.0, %v3521
      %3523 = vmatprep.mubr.f32.mxu0 0.0
      %3524 = vmatmul.mubr.f32.gmra.mrb[0].mxu0 %v3382
      %v3525 = vpop.f32.mrb[0].mxu0
      %v3526 = vadd.f32 0.0, %v3525
      %v3527 = vpop.f32.mrb[0].mxu0
      %v3528 = vadd.f32 0.0, %v3527
      %3529 = vmatprep.mubr.f32.mxu0 0.0
      %3530 = vmatmul.mubr.f32.gmra.mrb[0].mxu0 %v3385
      %v3531 = vpop.f32.mrb[0].mxu0
      %v3532 = vadd.f32 0.0, %v3531
      %v3533 = vpop.f32.mrb[0].mxu0
      %v3534 = vadd.f32 0.0, %v3533
      %3535 = vmatprep.mubr.f32.mxu0 0.0
      %3536 = vmatmul.mubr.f32.gmra.mrb[0].mxu0 %v3388
      %v3537 = vpop.f32.mrb[0].mxu0
      %v3538 = vadd.f32 0.0, %v3537
      %v3539 = vpop.f32.mrb[0].mxu0
      %v3540 = vadd.f32 0.0, %v3539
      %3541 = vmatprep.mubr.f32.mxu0 0.0
      %3542 = vmatmul.mubr.f32.gmra.mrb[0].mxu0 %v3391
      %v3543 = vpop.f32.mrb[0].mxu0
      %v3544 = vadd.f32 0.0, %v3543
      %v3545 = vpop.f32.mrb[0].mxu0
      %v3546 = vadd.f32 0.0, %v3545
      %3547 = vmatprep.mubr.f32.mxu0 0.0
      %3548 = vmatmul.mubr.f32.gmra.mrb[0].mxu0 %v3394
      %v3549 = vpop.f32.mrb[0].mxu0
      %v3550 = vadd.f32 0.0, %v3549
      %v3551 = vpop.f32.mrb[0].mxu0
      %v3552 = vadd.f32 0.0, %v3551
      %3553 = vmatprep.mubr.f32.mxu0 0.0
      %3554 = vmatmul.mubr.f32.gmra.mrb[0].mxu0 %v3397
      %v3555 = vpop.f32.mrb[0].mxu0
      %v3556 = vadd.f32 0.0, %v3555
      %v3557 = vpop.f32.mrb[0].mxu0
      %v3558 = vadd.f32 0.0, %v3557
      %3559 = vmatprep.mubr.f32.mxu0 0.0
      %3560 = vmatmul.mubr.f32.gmra.mrb[0].mxu0 %v3400
      %v3561 = vpop.f32.mrb[0].mxu0
      %v3562 = vadd.f32 0.0, %v3561
      %v3563 = vpop.f32.mrb[0].mxu0
      %v3564 = vadd.f32 0.0, %v3563
      %3565 = vmatprep.mubr.f32.mxu0 0.0
      %3566 = vmatmul.mubr.f32.gmra.mrb[0].mxu0 %v3403
      %v3567 = vpop.f32.mrb[0].mxu0
      %v3568 = vadd.f32 0.0, %v3567
      %v3569 = vpop.f32.mrb[0].mxu0
      %v3570 = vadd.f32 0.0, %v3569
      %3571 = vmatprep.mubr.f32.mxu0 0.0
      %3572 = vmatmul.mubr.f32.gmra.mrb[0].mxu0 %v3406
      %v3573 = vpop.f32.mrb[0].mxu0
      %v3574 = vadd.f32 0.0, %v3573
      %v3575 = vpop.f32.mrb[0].mxu0
      %v3576 = vadd.f32 0.0, %v3575
      %3577 = vmatprep.mubr.f32.mxu0 0.0
      %3578 = vmatmul.mubr.f32.gmra.mrb[0].mxu0 %v3409
      %v3579 = vpop.f32.mrb[0].mxu0
      %v3580 = vadd.f32 0.0, %v3579
      %v3581 = vpop.f32.mrb[0].mxu0
      %v3582 = vadd.f32 0.0, %v3581
      %3583 = vdwg.mxu0
      %3584 = vmatprep.subr.mxu0 0.0
      %3585 = vmatpush1.msra.mxu0 %v3316
      %3586 = vmatprep.subr.mxu0 0.0
      %3587 = vmatpush1.msra.mxu0 %v3319
      %3588 = vmatprep.subr.mxu0 0.0
      %3589 = vmatpush1.msra.mxu0 %v3322
      %3590 = vmatprep.subr.mxu0 0.0
      %3591 = vmatpush1.msra.mxu0 %v3325
      %3592 = vmatprep.subr.mxu0 0.0
      %3593 = vmatpush1.msra.mxu0 %v3328
      %3594 = vmatprep.subr.mxu0 0.0
      %3595 = vmatpush1.msra.mxu0 %v3331
      %3596 = vmatprep.subr.mxu0 0.0
      %3597 = vmatpush1.msra.mxu0 %v3334
      %3598 = vmatprep.subr.mxu0 0.0
      %3599 = vmatpush1.msra.mxu0 %v3337
      %3600 = vmatprep.subr.mxu0 0.0
      %3601 = vmatpush1.msra.mxu0 0.0
      %3602 = vmatprep.subr.mxu0 0.0
      %3603 = vmatpush1.msra.mxu0 0.0
      %3604 = vmatprep.subr.mxu0 0.0
      %3605 = vmatpush1.msra.mxu0 0.0
      %3606 = vmatprep.subr.mxu0 0.0
      %3607 = vmatpush1.msra.mxu0 0.0
      %3608 = vmatprep.subr.mxu0 0.0
      %3609 = vmatpush1.msra.mxu0 0.0
      %3610 = vmatprep.subr.mxu0 0.0
      %3611 = vmatpush1.msra.mxu0 0.0
      %3612 = vmatprep.subr.mxu0 0.0
      %3613 = vmatpush1.msra.mxu0 0.0
      %3614 = vmatprep.subr.mxu0 0.0
      %3615 = vmatpush1.msra.mxu0 0.0
      %3616 = vmatprep.subr.mxu0 0.0
      %3617 = vmatpush1.msra.mxu0 0.0
      %3618 = vmatprep.subr.mxu0 0.0
      %3619 = vmatpush1.msra.mxu0 0.0
      %3620 = vmatprep.subr.mxu0 0.0
      %3621 = vmatpush1.msra.mxu0 0.0
      %3622 = vmatprep.subr.mxu0 0.0
      %3623 = vmatpush1.msra.mxu0 0.0
      %3624 = vmatprep.subr.mxu0 0.0
      %3625 = vmatpush1.msra.mxu0 0.0
      %3626 = vmatprep.subr.mxu0 0.0
      %3627 = vmatpush1.msra.mxu0 0.0
      %3628 = vmatprep.subr.mxu0 0.0
      %3629 = vmatpush1.msra.mxu0 0.0
      %3630 = vmatprep.subr.mxu0 0.0
      %3631 = vmatpush1.msra.mxu0 0.0
      %3632 = vmatprep.subr.mxu0 0.0
      %3633 = vmatpush1.msra.mxu0 0.0
      %3634 = vmatprep.subr.mxu0 0.0
      %3635 = vmatpush1.msra.mxu0 0.0
      %3636 = vmatprep.subr.mxu0 0.0
      %3637 = vmatpush1.msra.mxu0 0.0
      %3638 = vmatprep.subr.mxu0 0.0
      %3639 = vmatpush1.msra.mxu0 0.0
      %3640 = vmatprep.subr.mxu0 0.0
      %3641 = vmatpush1.msra.mxu0 0.0
      %3642 = vmatprep.subr.mxu0 0.0
      %3643 = vmatpush1.msra.mxu0 0.0
      %3644 = vmatprep.subr.mxu0 0.0
      %3645 = vmatpush1.msra.mxu0 0.0
      %3646 = vmatprep.subr.mxu0 0.0
      %3647 = vmatpush1.msra.mxu0 0.0
      %3648 = vmatprep.mubr.f32.mxu0 0.0
      %3649 = vmatmul.mubr.f32.gmra.mrb[0].mxu0 %v3358
      %v3650 = vpop.f32.mrb[0].mxu0
      %v3651 = vadd.f32 0.0, %v3650
      %v3652 = vpop.f32.mrb[0].mxu0
      %3653 = vmatprep.mubr.f32.mxu0 0.0
      %3654 = vmatmul.mubr.f32.gmra.mrb[0].mxu0 %v3361
      %v3655 = vpop.f32.mrb[0].mxu0
      %v3656 = vadd.f32 0.0, %v3655
      %v3657 = vpop.f32.mrb[0].mxu0
      %3658 = vmatprep.mubr.f32.mxu0 0.0
      %3659 = vmatmul.mubr.f32.gmra.mrb[0].mxu0 %v3364
      %v3660 = vpop.f32.mrb[0].mxu0
      %v3661 = vadd.f32 0.0, %v3660
      %v3662 = vpop.f32.mrb[0].mxu0
      %3663 = vmatprep.mubr.f32.mxu0 0.0
      %3664 = vmatmul.mubr.f32.gmra.mrb[0].mxu0 %v3367
      %v3665 = vpop.f32.mrb[0].mxu0
      %v3666 = vadd.f32 0.0, %v3665
      %v3667 = vpop.f32.mrb[0].mxu0
      %3668 = vmatprep.mubr.f32.mxu0 0.0
      %3669 = vmatmul.mubr.f32.gmra.mrb[0].mxu0 %v3370
      %v3670 = vpop.f32.mrb[0].mxu0
      %v3671 = vadd.f32 0.0, %v3670
      %v3672 = vpop.f32.mrb[0].mxu0
      %3673 = vmatprep.mubr.f32.mxu0 0.0
      %3674 = vmatmul.mubr.f32.gmra.mrb[0].mxu0 %v3373
      %v3675 = vpop.f32.mrb[0].mxu0
      %v3676 = vadd.f32 0.0, %v3675
      %v3677 = vpop.f32.mrb[0].mxu0
      %3678 = vmatprep.mubr.f32.mxu0 0.0
      %3679 = vmatmul.mubr.f32.gmra.mrb[0].mxu0 %v3376
      %v3680 = vpop.f32.mrb[0].mxu0
      %v3681 = vadd.f32 0.0, %v3680
      %v3682 = vpop.f32.mrb[0].mxu0
      %3683 = vmatprep.mubr.f32.mxu0 0.0
      %3684 = vmatmul.mubr.f32.gmra.mrb[0].mxu0 %v3379
      %v3685 = vpop.f32.mrb[0].mxu0
      %v3686 = vadd.f32 0.0, %v3685
      %v3687 = vpop.f32.mrb[0].mxu0
      %3688 = vmatprep.mubr.f32.mxu0 0.0
      %3689 = vmatmul.mubr.f32.gmra.mrb[0].mxu0 %v3382
      %v3690 = vpop.f32.mrb[0].mxu0
      %v3691 = vadd.f32 0.0, %v3690
      %v3692 = vpop.f32.mrb[0].mxu0
      %3693 = vmatprep.mubr.f32.mxu0 0.0
      %3694 = vmatmul.mubr.f32.gmra.mrb[0].mxu0 %v3385
      %v3695 = vpop.f32.mrb[0].mxu0
      %v3696 = vadd.f32 0.0, %v3695
      %v3697 = vpop.f32.mrb[0].mxu0
      %3698 = vmatprep.mubr.f32.mxu0 0.0
      %3699 = vmatmul.mubr.f32.gmra.mrb[0].mxu0 %v3388
      %v3700 = vpop.f32.mrb[0].mxu0
      %v3701 = vadd.f32 0.0, %v3700
      %v3702 = vpop.f32.mrb[0].mxu0
      %3703 = vmatprep.mubr.f32.mxu0 0.0
      %3704 = vmatmul.mubr.f32.gmra.mrb[0].mxu0 %v3391
      %v3705 = vpop.f32.mrb[0].mxu0
      %v3706 = vadd.f32 0.0, %v3705
      %v3707 = vpop.f32.mrb[0].mxu0
      %3708 = vmatprep.mubr.f32.mxu0 0.0
      %3709 = vmatmul.mubr.f32.gmra.mrb[0].mxu0 %v3394
      %v3710 = vpop.f32.mrb[0].mxu0
      %v3711 = vadd.f32 0.0, %v3710
      %v3712 = vpop.f32.mrb[0].mxu0
      %3713 = vmatprep.mubr.f32.mxu0 0.0
      %3714 = vmatmul.mubr.f32.gmra.mrb[0].mxu0 %v3397
      %v3715 = vpop.f32.mrb[0].mxu0
      %v3716 = vadd.f32 0.0, %v3715
      %v3717 = vpop.f32.mrb[0].mxu0
      %3718 = vmatprep.mubr.f32.mxu0 0.0
      %3719 = vmatmul.mubr.f32.gmra.mrb[0].mxu0 %v3400
      %v3720 = vpop.f32.mrb[0].mxu0
      %v3721 = vadd.f32 0.0, %v3720
      %v3722 = vpop.f32.mrb[0].mxu0
      %3723 = vmatprep.mubr.f32.mxu0 0.0
      %3724 = vmatmul.mubr.f32.gmra.mrb[0].mxu0 %v3403
      %v3725 = vpop.f32.mrb[0].mxu0
      %v3726 = vadd.f32 0.0, %v3725
      %v3727 = vpop.f32.mrb[0].mxu0
      %3728 = vmatprep.mubr.f32.mxu0 0.0
      %3729 = vmatmul.mubr.f32.gmra.mrb[0].mxu0 %v3406
      %v3730 = vpop.f32.mrb[0].mxu0
      %v3731 = vadd.f32 0.0, %v3730
      %v3732 = vpop.f32.mrb[0].mxu0
      %3733 = vmatprep.mubr.f32.mxu0 0.0
      %3734 = vmatmul.mubr.f32.gmra.mrb[0].mxu0 %v3409
      %v3735 = vpop.f32.mrb[0].mxu0
      %v3736 = vadd.f32 0.0, %v3735
      %v3737 = vpop.f32.mrb[0].mxu0
      %3738 = vdwg.mxu0
      %3739 = vrot.lane.b32.xlu0 %v3478, 19
      %v3740 = vpop.permute.xlu0 %3739
      %3741 = vrot.lane.b32.xlu0 %v3484, 19
      %v3742 = vpop.permute.xlu0 %3741
      %3743 = vrot.lane.b32.xlu0 %v3480, 19
      %v3744 = vpop.permute.xlu0 %3743
      %3745 = vrot.lane.b32.xlu0 %v3486, 19
      %v3746 = vpop.permute.xlu0 %3745
      %3747 = vrot.lane.b32.xlu0 %v3651, 19
      %v3748 = vpop.permute.xlu0 %3747
      %3749 = vrot.lane.b32.xlu0 %v3656, 19
      %v3750 = vpop.permute.xlu0 %3749
      %v3751 = vsel %vm1024, %v3744, %v3748
      %v3752 = vsel %vm1024, %v3746, %v3750
      %v3753 = vsel %vm1024, %v3740, %v3744
      %v3754 = vsel %vm1024, %v3742, %v3746
      %v3755 = vsel %vm1024, %v3748, %v3740
      %v3756 = vsel %vm1024, %v3750, %v3742
      %v3757 = vadd.f32 %v3526, %v3755
      %v3758 = vadd.f32 %v3528, %v3753
      %v3759 = vadd.f32 %v3691, %v3751
      %v3760 = vadd.f32 %v3532, %v3756
      %v3761 = vadd.f32 %v3534, %v3754
      %v3762 = vadd.f32 %v3696, %v3752
      %3763 = vrot.lane.b32.xlu0 %v3490, 18
      %v3764 = vpop.permute.xlu0 %3763
      %3765 = vrot.lane.b32.xlu0 %v3496, 18
      %v3766 = vpop.permute.xlu0 %3765
      %3767 = vrot.lane.b32.xlu0 %v3492, 18
      %v3768 = vpop.permute.xlu0 %3767
      %3769 = vrot.lane.b32.xlu0 %v3498, 18
      %v3770 = vpop.permute.xlu0 %3769
      %3771 = vrot.lane.b32.xlu0 %v3661, 18
      %v3772 = vpop.permute.xlu0 %3771
      %3773 = vrot.lane.b32.xlu0 %v3666, 18
      %v3774 = vpop.permute.xlu0 %3773
      %v3775 = vsel %vm1049, %v3768, %v3772
      %v3776 = vsel %vm1049, %v3770, %v3774
      %v3777 = vsel %vm1049, %v3764, %v3768
      %v3778 = vsel %vm1049, %v3766, %v3770
      %v3779 = vsel %vm1049, %v3772, %v3764
      %v3780 = vsel %vm1049, %v3774, %v3766
      %v3781 = vadd.f32 %v3757, %v3779
      %v3782 = vadd.f32 %v3758, %v3777
      %v3783 = vadd.f32 %v3759, %v3775
      %v3784 = vadd.f32 %v3760, %v3780
      %v3785 = vadd.f32 %v3761, %v3778
      %v3786 = vadd.f32 %v3762, %v3776
      %3787 = vrot.lane.b32.xlu0 %v3502, 17
      %v3788 = vpop.permute.xlu0 %3787
      %3789 = vrot.lane.b32.xlu0 %v3508, 17
      %v3790 = vpop.permute.xlu0 %3789
      %3791 = vrot.lane.b32.xlu0 %v3504, 17
      %v3792 = vpop.permute.xlu0 %3791
      %3793 = vrot.lane.b32.xlu0 %v3510, 17
      %v3794 = vpop.permute.xlu0 %3793
      %3795 = vrot.lane.b32.xlu0 %v3671, 17
      %v3796 = vpop.permute.xlu0 %3795
      %3797 = vrot.lane.b32.xlu0 %v3676, 17
      %v3798 = vpop.permute.xlu0 %3797
      %v3799 = vsel %vm1074, %v3792, %v3796
      %v3800 = vsel %vm1074, %v3794, %v3798
      %v3801 = vsel %vm1074, %v3788, %v3792
      %v3802 = vsel %vm1074, %v3790, %v3794
      %v3803 = vsel %vm1074, %v3796, %v3788
      %v3804 = vsel %vm1074, %v3798, %v3790
      %v3805 = vadd.f32 %v3781, %v3803
      %v3806 = vadd.f32 %v3782, %v3801
      %v3807 = vadd.f32 %v3783, %v3799
      %v3808 = vadd.f32 %v3784, %v3804
      %v3809 = vadd.f32 %v3785, %v3802
      %v3810 = vadd.f32 %v3786, %v3800
      %3811 = vrot.lane.b32.xlu0 %v3514, 1
      %v3812 = vpop.permute.xlu0 %3811
      %3813 = vrot.lane.b32.xlu0 %v3520, 1
      %v3814 = vpop.permute.xlu0 %3813
      %3815 = vrot.lane.b32.xlu0 %v3516, 1
      %v3816 = vpop.permute.xlu0 %3815
      %3817 = vrot.lane.b32.xlu0 %v3522, 1
      %v3818 = vpop.permute.xlu0 %3817
      %3819 = vrot.lane.b32.xlu0 %v3681, 1
      %v3820 = vpop.permute.xlu0 %3819
      %3821 = vrot.lane.b32.xlu0 %v3686, 1
      %v3822 = vpop.permute.xlu0 %3821
      %v3823 = vsel %vm1099, %v3816, %v3820
      %v3824 = vsel %vm1099, %v3818, %v3822
      %v3825 = vsel %vm1099, %v3812, %v3816
      %v3826 = vsel %vm1099, %v3814, %v3818
      %v3827 = vsel %vm1099, %v3820, %v3812
      %v3828 = vsel %vm1099, %v3822, %v3814
      %v3829 = vadd.f32 %v3805, %v3827
      %v3830 = vadd.f32 %v3806, %v3825
      %v3831 = vadd.f32 %v3807, %v3823
      %v3832 = vadd.f32 %v3808, %v3828
      %v3833 = vadd.f32 %v3809, %v3826
      %v3834 = vadd.f32 %v3810, %v3824
      %3835 = vrot.lane.b32.xlu0 %v3538, 127
      %v3836 = vpop.permute.xlu0 %3835
      %3837 = vrot.lane.b32.xlu0 %v3544, 127
      %v3838 = vpop.permute.xlu0 %3837
      %3839 = vrot.lane.b32.xlu0 %v3540, 127
      %v3840 = vpop.permute.xlu0 %3839
      %3841 = vrot.lane.b32.xlu0 %v3546, 127
      %v3842 = vpop.permute.xlu0 %3841
      %3843 = vrot.lane.b32.xlu0 %v3701, 127
      %v3844 = vpop.permute.xlu0 %3843
      %3845 = vrot.lane.b32.xlu0 %v3706, 127
      %v3846 = vpop.permute.xlu0 %3845
      %v3847 = vsel %vm1124, %v3840, %v3844
      %v3848 = vsel %vm1124, %v3842, %v3846
      %v3849 = vsel %vm1124, %v3836, %v3840
      %v3850 = vsel %vm1124, %v3838, %v3842
      %v3851 = vsel %vm1124, %v3844, %v3836
      %v3852 = vsel %vm1124, %v3846, %v3838
      %v3853 = vadd.f32 %v3829, %v3849
      %v3854 = vadd.f32 %v3830, %v3847
      %v3855 = vadd.f32 %v3831, %v3851
      %v3856 = vadd.f32 %v3832, %v3850
      %v3857 = vadd.f32 %v3833, %v3848
      %v3858 = vadd.f32 %v3834, %v3852
      %3859 = vrot.lane.b32.xlu0 %v3550, 111
      %v3860 = vpop.permute.xlu0 %3859
      %3861 = vrot.lane.b32.xlu0 %v3556, 111
      %v3862 = vpop.permute.xlu0 %3861
      %3863 = vrot.lane.b32.xlu0 %v3552, 111
      %v3864 = vpop.permute.xlu0 %3863
      %3865 = vrot.lane.b32.xlu0 %v3558, 111
      %v3866 = vpop.permute.xlu0 %3865
      %3867 = vrot.lane.b32.xlu0 %v3711, 111
      %v3868 = vpop.permute.xlu0 %3867
      %3869 = vrot.lane.b32.xlu0 %v3716, 111
      %v3870 = vpop.permute.xlu0 %3869
      %v3871 = vsel %vm1149, %v3864, %v3868
      %v3872 = vsel %vm1149, %v3866, %v3870
      %v3873 = vsel %vm1149, %v3860, %v3864
      %v3874 = vsel %vm1149, %v3862, %v3866
      %v3875 = vsel %vm1149, %v3868, %v3860
      %v3876 = vsel %vm1149, %v3870, %v3862
      %v3877 = vadd.f32 %v3853, %v3873
      %v3878 = vadd.f32 %v3854, %v3871
      %v3879 = vadd.f32 %v3855, %v3875
      %v3880 = vadd.f32 %v3856, %v3874
      %v3881 = vadd.f32 %v3857, %v3872
      %v3882 = vadd.f32 %v3858, %v3876
      %3883 = vrot.lane.b32.xlu0 %v3562, 110
      %v3884 = vpop.permute.xlu0 %3883
      %3885 = vrot.lane.b32.xlu0 %v3568, 110
      %v3886 = vpop.permute.xlu0 %3885
      %3887 = vrot.lane.b32.xlu0 %v3564, 110
      %v3888 = vpop.permute.xlu0 %3887
      %3889 = vrot.lane.b32.xlu0 %v3570, 110
      %v3890 = vpop.permute.xlu0 %3889
      %3891 = vrot.lane.b32.xlu0 %v3721, 110
      %v3892 = vpop.permute.xlu0 %3891
      %3893 = vrot.lane.b32.xlu0 %v3726, 110
      %v3894 = vpop.permute.xlu0 %3893
      %v3895 = vsel %vm1174, %v3888, %v3892
      %v3896 = vsel %vm1174, %v3890, %v3894
      %v3897 = vsel %vm1174, %v3884, %v3888
      %v3898 = vsel %vm1174, %v3886, %v3890
      %v3899 = vsel %vm1174, %v3892, %v3884
      %v3900 = vsel %vm1174, %v3894, %v3886
      %v3901 = vadd.f32 %v3877, %v3897
      %v3902 = vadd.f32 %v3878, %v3895
      %v3903 = vadd.f32 %v3879, %v3899
      %v3904 = vadd.f32 %v3880, %v3898
      %v3905 = vadd.f32 %v3881, %v3896
      %v3906 = vadd.f32 %v3882, %v3900
      %3907 = vrot.lane.b32.xlu0 %v3574, 109
      %v3908 = vpop.permute.xlu0 %3907
      %3909 = vrot.lane.b32.xlu0 %v3580, 109
      %v3910 = vpop.permute.xlu0 %3909
      %3911 = vrot.lane.b32.xlu0 %v3576, 109
      %v3912 = vpop.permute.xlu0 %3911
      %3913 = vrot.lane.b32.xlu0 %v3582, 109
      %v3914 = vpop.permute.xlu0 %3913
      %3915 = vrot.lane.b32.xlu0 %v3731, 109
      %v3916 = vpop.permute.xlu0 %3915
      %3917 = vrot.lane.b32.xlu0 %v3736, 109
      %v3918 = vpop.permute.xlu0 %3917
      %v3919 = vsel %vm1199, %v3912, %v3916
      %v3920 = vsel %vm1199, %v3914, %v3918
      %v3921 = vsel %vm1199, %v3908, %v3912
      %v3922 = vsel %vm1199, %v3910, %v3914
      %v3923 = vsel %vm1199, %v3916, %v3908
      %v3924 = vsel %vm1199, %v3918, %v3910
      %v3925 = vadd.f32 %v3901, %v3921
      %v3926 = vadd.f32 %v3902, %v3919
      %v3927 = vadd.f32 %v3903, %v3923
      %v3928 = vadd.f32 %v3904, %v3922
      %v3929 = vadd.f32 %v3905, %v3920
      %v3930 = vadd.f32 %v3906, %v3924
      %v3931 = vld [vmem:[%s15] sm:$0xff]
      %v3932 = vld [vmem:[%s15 + $0x8] sm:$0xff]
      %3934 = vset.pattern.permute.xlu0 0
      %3935 = vperm.xlu0 %3934, %v3931
      %v3936 = vpop.permute.xlu0 %3935
      %3939 = vset.pattern.permute.xlu0 0
      %3940 = vperm.xlu0 %3939, %v3932
      %v3941 = vpop.permute.xlu0 %3940
      %v3943 = vadd.f32 %v3925, %v3936
      %v3944 = vadd.f32 %v3926, %v3936
      %v3945 = vadd.f32 %v3927, %v3936
      %v3946 = vadd.f32 %v3928, %v3941
      %v3947 = vadd.f32 %v3929, %v3941
      %v3948 = vadd.f32 %v3930, %v3941
      %vm3949 = vcmp.ge.f32.partialorder %v3943, 0.0
      %vm3950 = vcmp.ge.f32.partialorder %v3944, 0.0
      %vm3951 = vcmp.ge.f32.partialorder %v3945, 0.0
      %vm3952 = vcmp.ge.f32.partialorder %v3946, 0.0
      %vm3953 = vcmp.ge.f32.partialorder %v3947, 0.0
      %vm3954 = vcmp.ge.f32.partialorder %v3948, 0.0
      %v3955 = vmul.f32 %v1236, %v3943
      %v3956 = vmul.f32 %v1236, %v3944
      %v3957 = vmul.f32 %v1236, %v3945
      %v3958 = vmul.f32 %v1236, %v3946
      %v3959 = vmul.f32 %v1236, %v3947
      %v3960 = vmul.f32 %v1236, %v3948
      %v3961 = vsel %vm3949, %v3943, %v3955
      %v3962 = vsel %vm3950, %v3944, %v3956
      %v3963 = vsel %vm3951, %v3945, %v3957
      %v3964 = vsel %vm3952, %v3946, %v3958
      %v3965 = vsel %vm3953, %v3947, %v3959
      %v3966 = vsel %vm3954, %v3948, %v3960
      %v3967 = vmul.f32 %v1253, %v3961
      %v3968 = vmul.f32 %v1257, %v3962
      %v3969 = vmul.f32 %v1261, %v3963
      %v3970 = vmul.f32 %v1253, %v3964
      %v3971 = vmul.f32 %v1257, %v3965
      %v3972 = vmul.f32 %v1261, %v3966
      %vm3973 = vcmp.ge.f32.partialorder %v3967, 0.0
      %vm3974 = vcmp.ge.f32.partialorder %v3968, 0.0
      %vm3975 = vcmp.ge.f32.partialorder %v3969, 0.0
      %vm3976 = vcmp.ge.f32.partialorder %v3970, 0.0
      %vm3977 = vcmp.ge.f32.partialorder %v3971, 0.0
      %vm3978 = vcmp.ge.f32.partialorder %v3972, 0.0
      %v3979 = vmul.f32 %v1236, %v3967
      %v3980 = vmul.f32 %v1236, %v3968
      %v3981 = vmul.f32 %v1236, %v3969
      %v3982 = vmul.f32 %v1236, %v3970
      %v3983 = vmul.f32 %v1236, %v3971
      %v3984 = vmul.f32 %v1236, %v3972
      %v3985 = vsel %vm3973, %v3967, %v3979
      %v3986 = vsel %vm3974, %v3968, %v3980
      %v3987 = vsel %vm3975, %v3969, %v3981
      %v3988 = vsel %vm3976, %v3970, %v3982
      %v3989 = vsel %vm3977, %v3971, %v3983
      %v3990 = vsel %vm3978, %v3972, %v3984
      %3991 = vst [vmem:[%s603 + $0xc0] sm:$0xff] %v3985
      %3992 = vst [vmem:[%s603 + $0xc8] sm:$0xff] %v3986
      %3993 = vst [vmem:[%s603 + $0xd0] sm:$0xff] %v3987
      %3994 = vst [vmem:[%s603 + $0xd8] sm:$0xff] %v3988
      %3995 = vst [vmem:[%s603 + $0xe0] sm:$0xff] %v3989
      %3996 = vst [vmem:[%s603 + $0xe8] sm:$0xff] %v3990
      %v3997 = vld [vmem:[%s603] sm:$0xff]
      %v3998 = vld [vmem:[%s603 + $0x8] sm:$0xff]
      %v3999 = vld [vmem:[%s603 + $0x10] sm:$0xff]
      %v4000 = vld [vmem:[%s603 + $0x18] sm:$0xff]
      %v4001 = vld [vmem:[%s603 + $0x20] sm:$0xff]
      %v4002 = vld [vmem:[%s603 + $0x28] sm:$0xff]
      %v4003 = vld [vmem:[%s603 + $0x30] sm:$0xff]
      %v4004 = vld [vmem:[%s603 + $0x38] sm:$0xff]
      %v4005 = vld [vmem:[%s603 + $0x40] sm:$0xff]
      %v4006 = vld [vmem:[%s603 + $0x48] sm:$0xff]
      %v4007 = vld [vmem:[%s603 + $0x50] sm:$0xff]
      %v4008 = vld [vmem:[%s603 + $0x58] sm:$0xff]
      %v4009 = vld [vmem:[%s603 + $0x60] sm:$0xff]
      %v4010 = vld [vmem:[%s603 + $0x68] sm:$0xff]
      %v4011 = vld [vmem:[%s603 + $0x70] sm:$0xff]
      %v4012 = vld [vmem:[%s603 + $0x78] sm:$0xff]
      %v4013 = vld [vmem:[%s603 + $0x80] sm:$0xff]
      %v4014 = vld [vmem:[%s603 + $0x88] sm:$0xff]
      %v4015 = vld [vmem:[%s603 + $0x90] sm:$0xff]
      %v4016 = vld [vmem:[%s603 + $0x98] sm:$0xff]
      %v4017 = vld [vmem:[%s603 + $0xa0] sm:$0xff]
      %v4018 = vld [vmem:[%s603 + $0xa8] sm:$0xff]
      %v4019 = vld [vmem:[%s603 + $0xb0] sm:$0xff]
      %v4020 = vld [vmem:[%s603 + $0xb8] sm:$0xff]
      %v4021 = vld [vmem:[%s603 + $0xc0] sm:$0xff]
      %v4022 = vld [vmem:[%s603 + $0xc8] sm:$0xff]
      %v4023 = vld [vmem:[%s603 + $0xd0] sm:$0xff]
      %v4024 = vld [vmem:[%s603 + $0xd8] sm:$0xff]
      %v4025 = vld [vmem:[%s603 + $0xe0] sm:$0xff]
      %v4026 = vld [vmem:[%s603 + $0xe8] sm:$0xff]
      %v4027 = vld [vmem:[%s8] sm:$0xff]
      %v4028 = vld [vmem:[%s8 + $0x8] sm:$0xff]
      %v4029 = vld [vmem:[%s8 + $0x10] sm:$0xff]
      %v4030 = vld [vmem:[%s8 + $0x18] sm:$0xff]
      %v4031 = vld [vmem:[%s8 + $0x20] sm:$0xff]
      %v4032 = vld [vmem:[%s8 + $0x28] sm:$0xff]
      %v4033 = vld [vmem:[%s8 + $0x30] sm:$0xff]
      %v4034 = vld [vmem:[%s8 + $0x38] sm:$0xff]
      %v4035 = vld [vmem:[%s8 + $0x40] sm:$0xff]
      %v4036 = vld [vmem:[%s8 + $0x48] sm:$0xff]
      %v4037 = vld [vmem:[%s8 + $0x50] sm:$0xff]
      %v4038 = vld [vmem:[%s8 + $0x58] sm:$0xff]
      %v4039 = vld [vmem:[%s8 + $0x60] sm:$0xff]
      %v4040 = vld [vmem:[%s8 + $0x68] sm:$0xff]
      %v4041 = vld [vmem:[%s8 + $0x70] sm:$0xff]
      %v4042 = vld [vmem:[%s8 + $0x78] sm:$0xff]
      %v4043 = vld [vmem:[%s8 + $0x80] sm:$0xff]
      %v4044 = vld [vmem:[%s8 + $0x88] sm:$0xff]
      %vm4045 = vcmask 654336
      %v4047 = vsel %vm4045, %v4027, 0
      %v4050 = vsel %vm4045, %v4028, 0
      %v4053 = vsel %vm4045, %v4029, 0
      %v4056 = vsel %vm4045, %v4030, 0
      %v4059 = vsel %vm4045, %v4031, 0
      %v4062 = vsel %vm4045, %v4032, 0
      %v4065 = vsel %vm4045, %v4033, 0
      %v4068 = vsel %vm4045, %v4034, 0
      %v4071 = vsel %vm4045, %v4035, 0
      %v4074 = vsel %vm4045, %v4036, 0
      %v4077 = vsel %vm4045, %v4037, 0
      %v4080 = vsel %vm4045, %v4038, 0
      %v4083 = vsel %vm4045, %v4039, 0
      %v4086 = vsel %vm4045, %v4040, 0
      %v4089 = vsel %vm4045, %v4041, 0
      %v4092 = vsel %vm4045, %v4042, 0
      %v4095 = vsel %vm4045, %v4043, 0
      %v4098 = vsel %vm4045, %v4044, 0
      %4100 = vmatprep.subr.mxu0 %v3998
      %4101 = vmatpush1.msra.mxu0 %v3997
      %4102 = vmatprep.subr.mxu0 %v4001
      %4103 = vmatpush1.msra.mxu0 %v4000
      %4104 = vmatprep.subr.mxu0 %v4004
      %4105 = vmatpush1.msra.mxu0 %v4003
      %4106 = vmatprep.subr.mxu0 %v4007
      %4107 = vmatpush1.msra.mxu0 %v4006
      %4108 = vmatprep.subr.mxu0 %v4010
      %4109 = vmatpush1.msra.mxu0 %v4009
      %4110 = vmatprep.subr.mxu0 %v4013
      %4111 = vmatpush1.msra.mxu0 %v4012
      %4112 = vmatprep.subr.mxu0 %v4016
      %4113 = vmatpush1.msra.mxu0 %v4015
      %4114 = vmatprep.subr.mxu0 %v4019
      %4115 = vmatpush1.msra.mxu0 %v4018
      %4116 = vmatprep.subr.mxu0 %v4022
      %4117 = vmatpush1.msra.mxu0 %v4021
      %4118 = vmatprep.subr.mxu0 %v4025
      %4119 = vmatpush1.msra.mxu0 %v4024
      %4120 = vmatprep.subr.mxu0 0.0
      %4121 = vmatpush1.msra.mxu0 0.0
      %4122 = vmatprep.subr.mxu0 0.0
      %4123 = vmatpush1.msra.mxu0 0.0
      %4124 = vmatprep.subr.mxu0 0.0
      %4125 = vmatpush1.msra.mxu0 0.0
      %4126 = vmatprep.subr.mxu0 0.0
      %4127 = vmatpush1.msra.mxu0 0.0
      %4128 = vmatprep.subr.mxu0 0.0
      %4129 = vmatpush1.msra.mxu0 0.0
      %4130 = vmatprep.subr.mxu0 0.0
      %4131 = vmatpush1.msra.mxu0 0.0
      %4132 = vmatprep.subr.mxu0 0.0
      %4133 = vmatpush1.msra.mxu0 0.0
      %4134 = vmatprep.subr.mxu0 0.0
      %4135 = vmatpush1.msra.mxu0 0.0
      %4136 = vmatprep.subr.mxu0 0.0
      %4137 = vmatpush1.msra.mxu0 0.0
      %4138 = vmatprep.subr.mxu0 0.0
      %4139 = vmatpush1.msra.mxu0 0.0
      %4140 = vmatprep.subr.mxu0 0.0
      %4141 = vmatpush1.msra.mxu0 0.0
      %4142 = vmatprep.subr.mxu0 0.0
      %4143 = vmatpush1.msra.mxu0 0.0
      %4144 = vmatprep.subr.mxu0 0.0
      %4145 = vmatpush1.msra.mxu0 0.0
      %4146 = vmatprep.subr.mxu0 0.0
      %4147 = vmatpush1.msra.mxu0 0.0
      %4148 = vmatprep.subr.mxu0 0.0
      %4149 = vmatpush1.msra.mxu0 0.0
      %4150 = vmatprep.subr.mxu0 0.0
      %4151 = vmatpush1.msra.mxu0 0.0
      %4152 = vmatprep.subr.mxu0 0.0
      %4153 = vmatpush1.msra.mxu0 0.0
      %4154 = vmatprep.subr.mxu0 0.0
      %4155 = vmatpush1.msra.mxu0 0.0
      %4156 = vmatprep.subr.mxu0 0.0
      %4157 = vmatpush1.msra.mxu0 0.0
      %4158 = vmatprep.subr.mxu0 0.0
      %4159 = vmatpush1.msra.mxu0 0.0
      %4160 = vmatprep.subr.mxu0 0.0
      %4161 = vmatpush1.msra.mxu0 0.0
      %4162 = vmatprep.subr.mxu0 0.0
      %4163 = vmatpush1.msra.mxu0 0.0
      %4164 = vmatprep.mubr.f32.mxu0 0.0
      %4165 = vmatmul.mubr.f32.gmra.mrb[0].mxu0 %v4047
      %v4166 = vpop.f32.mrb[0].mxu0
      %v4167 = vadd.f32 0.0, %v4166
      %v4168 = vpop.f32.mrb[0].mxu0
      %v4169 = vadd.f32 0.0, %v4168
      %4170 = vmatprep.mubr.f32.mxu0 0.0
      %4171 = vmatmul.mubr.f32.gmra.mrb[0].mxu0 %v4050
      %v4172 = vpop.f32.mrb[0].mxu0
      %v4173 = vadd.f32 0.0, %v4172
      %v4174 = vpop.f32.mrb[0].mxu0
      %v4175 = vadd.f32 0.0, %v4174
      %4176 = vmatprep.mubr.f32.mxu0 0.0
      %4177 = vmatmul.mubr.f32.gmra.mrb[0].mxu0 %v4053
      %v4178 = vpop.f32.mrb[0].mxu0
      %v4179 = vadd.f32 0.0, %v4178
      %v4180 = vpop.f32.mrb[0].mxu0
      %v4181 = vadd.f32 0.0, %v4180
      %4182 = vmatprep.mubr.f32.mxu0 0.0
      %4183 = vmatmul.mubr.f32.gmra.mrb[0].mxu0 %v4056
      %v4184 = vpop.f32.mrb[0].mxu0
      %v4185 = vadd.f32 0.0, %v4184
      %v4186 = vpop.f32.mrb[0].mxu0
      %v4187 = vadd.f32 0.0, %v4186
      %4188 = vmatprep.mubr.f32.mxu0 0.0
      %4189 = vmatmul.mubr.f32.gmra.mrb[0].mxu0 %v4059
      %v4190 = vpop.f32.mrb[0].mxu0
      %v4191 = vadd.f32 0.0, %v4190
      %v4192 = vpop.f32.mrb[0].mxu0
      %v4193 = vadd.f32 0.0, %v4192
      %4194 = vmatprep.mubr.f32.mxu0 0.0
      %4195 = vmatmul.mubr.f32.gmra.mrb[0].mxu0 %v4062
      %v4196 = vpop.f32.mrb[0].mxu0
      %v4197 = vadd.f32 0.0, %v4196
      %v4198 = vpop.f32.mrb[0].mxu0
      %v4199 = vadd.f32 0.0, %v4198
      %4200 = vmatprep.mubr.f32.mxu0 0.0
      %4201 = vmatmul.mubr.f32.gmra.mrb[0].mxu0 %v4065
      %v4202 = vpop.f32.mrb[0].mxu0
      %v4203 = vadd.f32 0.0, %v4202
      %v4204 = vpop.f32.mrb[0].mxu0
      %v4205 = vadd.f32 0.0, %v4204
      %4206 = vmatprep.mubr.f32.mxu0 0.0
      %4207 = vmatmul.mubr.f32.gmra.mrb[0].mxu0 %v4068
      %v4208 = vpop.f32.mrb[0].mxu0
      %v4209 = vadd.f32 0.0, %v4208
      %v4210 = vpop.f32.mrb[0].mxu0
      %v4211 = vadd.f32 0.0, %v4210
      %4212 = vmatprep.mubr.f32.mxu0 0.0
      %4213 = vmatmul.mubr.f32.gmra.mrb[0].mxu0 %v4071
      %v4214 = vpop.f32.mrb[0].mxu0
      %v4215 = vadd.f32 0.0, %v4214
      %v4216 = vpop.f32.mrb[0].mxu0
      %v4217 = vadd.f32 0.0, %v4216
      %4218 = vmatprep.mubr.f32.mxu0 0.0
      %4219 = vmatmul.mubr.f32.gmra.mrb[0].mxu0 %v4074
      %v4220 = vpop.f32.mrb[0].mxu0
      %v4221 = vadd.f32 0.0, %v4220
      %v4222 = vpop.f32.mrb[0].mxu0
      %v4223 = vadd.f32 0.0, %v4222
      %4224 = vmatprep.mubr.f32.mxu0 0.0
      %4225 = vmatmul.mubr.f32.gmra.mrb[0].mxu0 %v4077
      %v4226 = vpop.f32.mrb[0].mxu0
      %v4227 = vadd.f32 0.0, %v4226
      %v4228 = vpop.f32.mrb[0].mxu0
      %v4229 = vadd.f32 0.0, %v4228
      %4230 = vmatprep.mubr.f32.mxu0 0.0
      %4231 = vmatmul.mubr.f32.gmra.mrb[0].mxu0 %v4080
      %v4232 = vpop.f32.mrb[0].mxu0
      %v4233 = vadd.f32 0.0, %v4232
      %v4234 = vpop.f32.mrb[0].mxu0
      %v4235 = vadd.f32 0.0, %v4234
      %4236 = vmatprep.mubr.f32.mxu0 0.0
      %4237 = vmatmul.mubr.f32.gmra.mrb[0].mxu0 %v4083
      %v4238 = vpop.f32.mrb[0].mxu0
      %v4239 = vadd.f32 0.0, %v4238
      %v4240 = vpop.f32.mrb[0].mxu0
      %v4241 = vadd.f32 0.0, %v4240
      %4242 = vmatprep.mubr.f32.mxu0 0.0
      %4243 = vmatmul.mubr.f32.gmra.mrb[0].mxu0 %v4086
      %v4244 = vpop.f32.mrb[0].mxu0
      %v4245 = vadd.f32 0.0, %v4244
      %v4246 = vpop.f32.mrb[0].mxu0
      %v4247 = vadd.f32 0.0, %v4246
      %4248 = vmatprep.mubr.f32.mxu0 0.0
      %4249 = vmatmul.mubr.f32.gmra.mrb[0].mxu0 %v4089
      %v4250 = vpop.f32.mrb[0].mxu0
      %v4251 = vadd.f32 0.0, %v4250
      %v4252 = vpop.f32.mrb[0].mxu0
      %v4253 = vadd.f32 0.0, %v4252
      %4254 = vmatprep.mubr.f32.mxu0 0.0
      %4255 = vmatmul.mubr.f32.gmra.mrb[0].mxu0 %v4092
      %v4256 = vpop.f32.mrb[0].mxu0
      %v4257 = vadd.f32 0.0, %v4256
      %v4258 = vpop.f32.mrb[0].mxu0
      %v4259 = vadd.f32 0.0, %v4258
      %4260 = vmatprep.mubr.f32.mxu0 0.0
      %4261 = vmatmul.mubr.f32.gmra.mrb[0].mxu0 %v4095
      %v4262 = vpop.f32.mrb[0].mxu0
      %v4263 = vadd.f32 0.0, %v4262
      %v4264 = vpop.f32.mrb[0].mxu0
      %v4265 = vadd.f32 0.0, %v4264
      %4266 = vmatprep.mubr.f32.mxu0 0.0
      %4267 = vmatmul.mubr.f32.gmra.mrb[0].mxu0 %v4098
      %v4268 = vpop.f32.mrb[0].mxu0
      %v4269 = vadd.f32 0.0, %v4268
      %v4270 = vpop.f32.mrb[0].mxu0
      %v4271 = vadd.f32 0.0, %v4270
      %4272 = vdwg.mxu0
      %4273 = vmatprep.subr.mxu0 0.0
      %4274 = vmatpush1.msra.mxu0 %v3999
      %4275 = vmatprep.subr.mxu0 0.0
      %4276 = vmatpush1.msra.mxu0 %v4002
      %4277 = vmatprep.subr.mxu0 0.0
      %4278 = vmatpush1.msra.mxu0 %v4005
      %4279 = vmatprep.subr.mxu0 0.0
      %4280 = vmatpush1.msra.mxu0 %v4008
      %4281 = vmatprep.subr.mxu0 0.0
      %4282 = vmatpush1.msra.mxu0 %v4011
      %4283 = vmatprep.subr.mxu0 0.0
      %4284 = vmatpush1.msra.mxu0 %v4014
      %4285 = vmatprep.subr.mxu0 0.0
      %4286 = vmatpush1.msra.mxu0 %v4017
      %4287 = vmatprep.subr.mxu0 0.0
      %4288 = vmatpush1.msra.mxu0 %v4020
      %4289 = vmatprep.subr.mxu0 0.0
      %4290 = vmatpush1.msra.mxu0 %v4023
      %4291 = vmatprep.subr.mxu0 0.0
      %4292 = vmatpush1.msra.mxu0 %v4026
      %4293 = vmatprep.subr.mxu0 0.0
      %4294 = vmatpush1.msra.mxu0 0.0
      %4295 = vmatprep.subr.mxu0 0.0
      %4296 = vmatpush1.msra.mxu0 0.0
      %4297 = vmatprep.subr.mxu0 0.0
      %4298 = vmatpush1.msra.mxu0 0.0
      %4299 = vmatprep.subr.mxu0 0.0
      %4300 = vmatpush1.msra.mxu0 0.0
      %4301 = vmatprep.subr.mxu0 0.0
      %4302 = vmatpush1.msra.mxu0 0.0
      %4303 = vmatprep.subr.mxu0 0.0
      %4304 = vmatpush1.msra.mxu0 0.0
      %4305 = vmatprep.subr.mxu0 0.0
      %4306 = vmatpush1.msra.mxu0 0.0
      %4307 = vmatprep.subr.mxu0 0.0
      %4308 = vmatpush1.msra.mxu0 0.0
      %4309 = vmatprep.subr.mxu0 0.0
      %4310 = vmatpush1.msra.mxu0 0.0
      %4311 = vmatprep.subr.mxu0 0.0
      %4312 = vmatpush1.msra.mxu0 0.0
      %4313 = vmatprep.subr.mxu0 0.0
      %4314 = vmatpush1.msra.mxu0 0.0
      %4315 = vmatprep.subr.mxu0 0.0
      %4316 = vmatpush1.msra.mxu0 0.0
      %4317 = vmatprep.subr.mxu0 0.0
      %4318 = vmatpush1.msra.mxu0 0.0
      %4319 = vmatprep.subr.mxu0 0.0
      %4320 = vmatpush1.msra.mxu0 0.0
      %4321 = vmatprep.subr.mxu0 0.0
      %4322 = vmatpush1.msra.mxu0 0.0
      %4323 = vmatprep.subr.mxu0 0.0
      %4324 = vmatpush1.msra.mxu0 0.0
      %4325 = vmatprep.subr.mxu0 0.0
      %4326 = vmatpush1.msra.mxu0 0.0
      %4327 = vmatprep.subr.mxu0 0.0
      %4328 = vmatpush1.msra.mxu0 0.0
      %4329 = vmatprep.subr.mxu0 0.0
      %4330 = vmatpush1.msra.mxu0 0.0
      %4331 = vmatprep.subr.mxu0 0.0
      %4332 = vmatpush1.msra.mxu0 0.0
      %4333 = vmatprep.subr.mxu0 0.0
      %4334 = vmatpush1.msra.mxu0 0.0
      %4335 = vmatprep.subr.mxu0 0.0
      %4336 = vmatpush1.msra.mxu0 0.0
      %4337 = vmatprep.mubr.f32.mxu0 0.0
      %4338 = vmatmul.mubr.f32.gmra.mrb[0].mxu0 %v4047
      %v4339 = vpop.f32.mrb[0].mxu0
      %v4340 = vadd.f32 0.0, %v4339
      %v4341 = vpop.f32.mrb[0].mxu0
      %4342 = vmatprep.mubr.f32.mxu0 0.0
      %4343 = vmatmul.mubr.f32.gmra.mrb[0].mxu0 %v4050
      %v4344 = vpop.f32.mrb[0].mxu0
      %v4345 = vadd.f32 0.0, %v4344
      %v4346 = vpop.f32.mrb[0].mxu0
      %4347 = vmatprep.mubr.f32.mxu0 0.0
      %4348 = vmatmul.mubr.f32.gmra.mrb[0].mxu0 %v4053
      %v4349 = vpop.f32.mrb[0].mxu0
      %v4350 = vadd.f32 0.0, %v4349
      %v4351 = vpop.f32.mrb[0].mxu0
      %4352 = vmatprep.mubr.f32.mxu0 0.0
      %4353 = vmatmul.mubr.f32.gmra.mrb[0].mxu0 %v4056
      %v4354 = vpop.f32.mrb[0].mxu0
      %v4355 = vadd.f32 0.0, %v4354
      %v4356 = vpop.f32.mrb[0].mxu0
      %4357 = vmatprep.mubr.f32.mxu0 0.0
      %4358 = vmatmul.mubr.f32.gmra.mrb[0].mxu0 %v4059
      %v4359 = vpop.f32.mrb[0].mxu0
      %v4360 = vadd.f32 0.0, %v4359
      %v4361 = vpop.f32.mrb[0].mxu0
      %4362 = vmatprep.mubr.f32.mxu0 0.0
      %4363 = vmatmul.mubr.f32.gmra.mrb[0].mxu0 %v4062
      %v4364 = vpop.f32.mrb[0].mxu0
      %v4365 = vadd.f32 0.0, %v4364
      %v4366 = vpop.f32.mrb[0].mxu0
      %4367 = vmatprep.mubr.f32.mxu0 0.0
      %4368 = vmatmul.mubr.f32.gmra.mrb[0].mxu0 %v4065
      %v4369 = vpop.f32.mrb[0].mxu0
      %v4370 = vadd.f32 0.0, %v4369
      %v4371 = vpop.f32.mrb[0].mxu0
      %4372 = vmatprep.mubr.f32.mxu0 0.0
      %4373 = vmatmul.mubr.f32.gmra.mrb[0].mxu0 %v4068
      %v4374 = vpop.f32.mrb[0].mxu0
      %v4375 = vadd.f32 0.0, %v4374
      %v4376 = vpop.f32.mrb[0].mxu0
      %4377 = vmatprep.mubr.f32.mxu0 0.0
      %4378 = vmatmul.mubr.f32.gmra.mrb[0].mxu0 %v4071
      %v4379 = vpop.f32.mrb[0].mxu0
      %v4380 = vadd.f32 0.0, %v4379
      %v4381 = vpop.f32.mrb[0].mxu0
      %4382 = vmatprep.mubr.f32.mxu0 0.0
      %4383 = vmatmul.mubr.f32.gmra.mrb[0].mxu0 %v4074
      %v4384 = vpop.f32.mrb[0].mxu0
      %v4385 = vadd.f32 0.0, %v4384
      %v4386 = vpop.f32.mrb[0].mxu0
      %4387 = vmatprep.mubr.f32.mxu0 0.0
      %4388 = vmatmul.mubr.f32.gmra.mrb[0].mxu0 %v4077
      %v4389 = vpop.f32.mrb[0].mxu0
      %v4390 = vadd.f32 0.0, %v4389
      %v4391 = vpop.f32.mrb[0].mxu0
      %4392 = vmatprep.mubr.f32.mxu0 0.0
      %4393 = vmatmul.mubr.f32.gmra.mrb[0].mxu0 %v4080
      %v4394 = vpop.f32.mrb[0].mxu0
      %v4395 = vadd.f32 0.0, %v4394
      %v4396 = vpop.f32.mrb[0].mxu0
      %4397 = vmatprep.mubr.f32.mxu0 0.0
      %4398 = vmatmul.mubr.f32.gmra.mrb[0].mxu0 %v4083
      %v4399 = vpop.f32.mrb[0].mxu0
      %v4400 = vadd.f32 0.0, %v4399
      %v4401 = vpop.f32.mrb[0].mxu0
      %4402 = vmatprep.mubr.f32.mxu0 0.0
      %4403 = vmatmul.mubr.f32.gmra.mrb[0].mxu0 %v4086
      %v4404 = vpop.f32.mrb[0].mxu0
      %v4405 = vadd.f32 0.0, %v4404
      %v4406 = vpop.f32.mrb[0].mxu0
      %4407 = vmatprep.mubr.f32.mxu0 0.0
      %4408 = vmatmul.mubr.f32.gmra.mrb[0].mxu0 %v4089
      %v4409 = vpop.f32.mrb[0].mxu0
      %v4410 = vadd.f32 0.0, %v4409
      %v4411 = vpop.f32.mrb[0].mxu0
      %4412 = vmatprep.mubr.f32.mxu0 0.0
      %4413 = vmatmul.mubr.f32.gmra.mrb[0].mxu0 %v4092
      %v4414 = vpop.f32.mrb[0].mxu0
      %v4415 = vadd.f32 0.0, %v4414
      %v4416 = vpop.f32.mrb[0].mxu0
      %4417 = vmatprep.mubr.f32.mxu0 0.0
      %4418 = vmatmul.mubr.f32.gmra.mrb[0].mxu0 %v4095
      %v4419 = vpop.f32.mrb[0].mxu0
      %v4420 = vadd.f32 0.0, %v4419
      %v4421 = vpop.f32.mrb[0].mxu0
      %4422 = vmatprep.mubr.f32.mxu0 0.0
      %4423 = vmatmul.mubr.f32.gmra.mrb[0].mxu0 %v4098
      %v4424 = vpop.f32.mrb[0].mxu0
      %v4425 = vadd.f32 0.0, %v4424
      %v4426 = vpop.f32.mrb[0].mxu0
      %4427 = vdwg.mxu0
      %4428 = vrot.lane.b32.xlu0 %v4167, 19
      %v4429 = vpop.permute.xlu0 %4428
      %4430 = vrot.lane.b32.xlu0 %v4173, 19
      %v4431 = vpop.permute.xlu0 %4430
      %4432 = vrot.lane.b32.xlu0 %v4169, 19
      %v4433 = vpop.permute.xlu0 %4432
      %4434 = vrot.lane.b32.xlu0 %v4175, 19
      %v4435 = vpop.permute.xlu0 %4434
      %4436 = vrot.lane.b32.xlu0 %v4340, 19
      %v4437 = vpop.permute.xlu0 %4436
      %4438 = vrot.lane.b32.xlu0 %v4345, 19
      %v4439 = vpop.permute.xlu0 %4438
      %v4440 = vsel %vm1024, %v4433, %v4437
      %v4441 = vsel %vm1024, %v4435, %v4439
      %v4442 = vsel %vm1024, %v4429, %v4433
      %v4443 = vsel %vm1024, %v4431, %v4435
      %v4444 = vsel %vm1024, %v4437, %v4429
      %v4445 = vsel %vm1024, %v4439, %v4431
      %v4446 = vadd.f32 %v4215, %v4444
      %v4447 = vadd.f32 %v4217, %v4442
      %v4448 = vadd.f32 %v4380, %v4440
      %v4449 = vadd.f32 %v4221, %v4445
      %v4450 = vadd.f32 %v4223, %v4443
      %v4451 = vadd.f32 %v4385, %v4441
      %4452 = vrot.lane.b32.xlu0 %v4179, 18
      %v4453 = vpop.permute.xlu0 %4452
      %4454 = vrot.lane.b32.xlu0 %v4185, 18
      %v4455 = vpop.permute.xlu0 %4454
      %4456 = vrot.lane.b32.xlu0 %v4181, 18
      %v4457 = vpop.permute.xlu0 %4456
      %4458 = vrot.lane.b32.xlu0 %v4187, 18
      %v4459 = vpop.permute.xlu0 %4458
      %4460 = vrot.lane.b32.xlu0 %v4350, 18
      %v4461 = vpop.permute.xlu0 %4460
      %4462 = vrot.lane.b32.xlu0 %v4355, 18
      %v4463 = vpop.permute.xlu0 %4462
      %v4464 = vsel %vm1049, %v4457, %v4461
      %v4465 = vsel %vm1049, %v4459, %v4463
      %v4466 = vsel %vm1049, %v4453, %v4457
      %v4467 = vsel %vm1049, %v4455, %v4459
      %v4468 = vsel %vm1049, %v4461, %v4453
      %v4469 = vsel %vm1049, %v4463, %v4455
      %v4470 = vadd.f32 %v4446, %v4468
      %v4471 = vadd.f32 %v4447, %v4466
      %v4472 = vadd.f32 %v4448, %v4464
      %v4473 = vadd.f32 %v4449, %v4469
      %v4474 = vadd.f32 %v4450, %v4467
      %v4475 = vadd.f32 %v4451, %v4465
      %4476 = vrot.lane.b32.xlu0 %v4191, 17
      %v4477 = vpop.permute.xlu0 %4476
      %4478 = vrot.lane.b32.xlu0 %v4197, 17
      %v4479 = vpop.permute.xlu0 %4478
      %4480 = vrot.lane.b32.xlu0 %v4193, 17
      %v4481 = vpop.permute.xlu0 %4480
      %4482 = vrot.lane.b32.xlu0 %v4199, 17
      %v4483 = vpop.permute.xlu0 %4482
      %4484 = vrot.lane.b32.xlu0 %v4360, 17
      %v4485 = vpop.permute.xlu0 %4484
      %4486 = vrot.lane.b32.xlu0 %v4365, 17
      %v4487 = vpop.permute.xlu0 %4486
      %v4488 = vsel %vm1074, %v4481, %v4485
      %v4489 = vsel %vm1074, %v4483, %v4487
      %v4490 = vsel %vm1074, %v4477, %v4481
      %v4491 = vsel %vm1074, %v4479, %v4483
      %v4492 = vsel %vm1074, %v4485, %v4477
      %v4493 = vsel %vm1074, %v4487, %v4479
      %v4494 = vadd.f32 %v4470, %v4492
      %v4495 = vadd.f32 %v4471, %v4490
      %v4496 = vadd.f32 %v4472, %v4488
      %v4497 = vadd.f32 %v4473, %v4493
      %v4498 = vadd.f32 %v4474, %v4491
      %v4499 = vadd.f32 %v4475, %v4489
      %4500 = vrot.lane.b32.xlu0 %v4203, 1
      %v4501 = vpop.permute.xlu0 %4500
      %4502 = vrot.lane.b32.xlu0 %v4209, 1
      %v4503 = vpop.permute.xlu0 %4502
      %4504 = vrot.lane.b32.xlu0 %v4205, 1
      %v4505 = vpop.permute.xlu0 %4504
      %4506 = vrot.lane.b32.xlu0 %v4211, 1
      %v4507 = vpop.permute.xlu0 %4506
      %4508 = vrot.lane.b32.xlu0 %v4370, 1
      %v4509 = vpop.permute.xlu0 %4508
      %4510 = vrot.lane.b32.xlu0 %v4375, 1
      %v4511 = vpop.permute.xlu0 %4510
      %v4512 = vsel %vm1099, %v4505, %v4509
      %v4513 = vsel %vm1099, %v4507, %v4511
      %v4514 = vsel %vm1099, %v4501, %v4505
      %v4515 = vsel %vm1099, %v4503, %v4507
      %v4516 = vsel %vm1099, %v4509, %v4501
      %v4517 = vsel %vm1099, %v4511, %v4503
      %v4518 = vadd.f32 %v4494, %v4516
      %v4519 = vadd.f32 %v4495, %v4514
      %v4520 = vadd.f32 %v4496, %v4512
      %v4521 = vadd.f32 %v4497, %v4517
      %v4522 = vadd.f32 %v4498, %v4515
      %v4523 = vadd.f32 %v4499, %v4513
      %4524 = vrot.lane.b32.xlu0 %v4227, 127
      %v4525 = vpop.permute.xlu0 %4524
      %4526 = vrot.lane.b32.xlu0 %v4233, 127
      %v4527 = vpop.permute.xlu0 %4526
      %4528 = vrot.lane.b32.xlu0 %v4229, 127
      %v4529 = vpop.permute.xlu0 %4528
      %4530 = vrot.lane.b32.xlu0 %v4235, 127
      %v4531 = vpop.permute.xlu0 %4530
      %4532 = vrot.lane.b32.xlu0 %v4390, 127
      %v4533 = vpop.permute.xlu0 %4532
      %4534 = vrot.lane.b32.xlu0 %v4395, 127
      %v4535 = vpop.permute.xlu0 %4534
      %v4536 = vsel %vm1124, %v4529, %v4533
      %v4537 = vsel %vm1124, %v4531, %v4535
      %v4538 = vsel %vm1124, %v4525, %v4529
      %v4539 = vsel %vm1124, %v4527, %v4531
      %v4540 = vsel %vm1124, %v4533, %v4525
      %v4541 = vsel %vm1124, %v4535, %v4527
      %v4542 = vadd.f32 %v4518, %v4538
      %v4543 = vadd.f32 %v4519, %v4536
      %v4544 = vadd.f32 %v4520, %v4540
      %v4545 = vadd.f32 %v4521, %v4539
      %v4546 = vadd.f32 %v4522, %v4537
      %v4547 = vadd.f32 %v4523, %v4541
      %4548 = vrot.lane.b32.xlu0 %v4239, 111
      %v4549 = vpop.permute.xlu0 %4548
      %4550 = vrot.lane.b32.xlu0 %v4245, 111
      %v4551 = vpop.permute.xlu0 %4550
      %4552 = vrot.lane.b32.xlu0 %v4241, 111
      %v4553 = vpop.permute.xlu0 %4552
      %4554 = vrot.lane.b32.xlu0 %v4247, 111
      %v4555 = vpop.permute.xlu0 %4554
      %4556 = vrot.lane.b32.xlu0 %v4400, 111
      %v4557 = vpop.permute.xlu0 %4556
      %4558 = vrot.lane.b32.xlu0 %v4405, 111
      %v4559 = vpop.permute.xlu0 %4558
      %v4560 = vsel %vm1149, %v4553, %v4557
      %v4561 = vsel %vm1149, %v4555, %v4559
      %v4562 = vsel %vm1149, %v4549, %v4553
      %v4563 = vsel %vm1149, %v4551, %v4555
      %v4564 = vsel %vm1149, %v4557, %v4549
      %v4565 = vsel %vm1149, %v4559, %v4551
      %v4566 = vadd.f32 %v4542, %v4562
      %v4567 = vadd.f32 %v4543, %v4560
      %v4568 = vadd.f32 %v4544, %v4564
      %v4569 = vadd.f32 %v4545, %v4563
      %v4570 = vadd.f32 %v4546, %v4561
      %v4571 = vadd.f32 %v4547, %v4565
      %4572 = vrot.lane.b32.xlu0 %v4251, 110
      %v4573 = vpop.permute.xlu0 %4572
      %4574 = vrot.lane.b32.xlu0 %v4257, 110
      %v4575 = vpop.permute.xlu0 %4574
      %4576 = vrot.lane.b32.xlu0 %v4253, 110
      %v4577 = vpop.permute.xlu0 %4576
      %4578 = vrot.lane.b32.xlu0 %v4259, 110
      %v4579 = vpop.permute.xlu0 %4578
      %4580 = vrot.lane.b32.xlu0 %v4410, 110
      %v4581 = vpop.permute.xlu0 %4580
      %4582 = vrot.lane.b32.xlu0 %v4415, 110
      %v4583 = vpop.permute.xlu0 %4582
      %v4584 = vsel %vm1174, %v4577, %v4581
      %v4585 = vsel %vm1174, %v4579, %v4583
      %v4586 = vsel %vm1174, %v4573, %v4577
      %v4587 = vsel %vm1174, %v4575, %v4579
      %v4588 = vsel %vm1174, %v4581, %v4573
      %v4589 = vsel %vm1174, %v4583, %v4575
      %v4590 = vadd.f32 %v4566, %v4586
      %v4591 = vadd.f32 %v4567, %v4584
      %v4592 = vadd.f32 %v4568, %v4588
      %v4593 = vadd.f32 %v4569, %v4587
      %v4594 = vadd.f32 %v4570, %v4585
      %v4595 = vadd.f32 %v4571, %v4589
      %4596 = vrot.lane.b32.xlu0 %v4263, 109
      %v4597 = vpop.permute.xlu0 %4596
      %4598 = vrot.lane.b32.xlu0 %v4269, 109
      %v4599 = vpop.permute.xlu0 %4598
      %4600 = vrot.lane.b32.xlu0 %v4265, 109
      %v4601 = vpop.permute.xlu0 %4600
      %4602 = vrot.lane.b32.xlu0 %v4271, 109
      %v4603 = vpop.permute.xlu0 %4602
      %4604 = vrot.lane.b32.xlu0 %v4420, 109
      %v4605 = vpop.permute.xlu0 %4604
      %4606 = vrot.lane.b32.xlu0 %v4425, 109
      %v4607 = vpop.permute.xlu0 %4606
      %v4608 = vsel %vm1199, %v4601, %v4605
      %v4609 = vsel %vm1199, %v4603, %v4607
      %v4610 = vsel %vm1199, %v4597, %v4601
      %v4611 = vsel %vm1199, %v4599, %v4603
      %v4612 = vsel %vm1199, %v4605, %v4597
      %v4613 = vsel %vm1199, %v4607, %v4599
      %v4614 = vadd.f32 %v4590, %v4610
      %v4615 = vadd.f32 %v4591, %v4608
      %v4616 = vadd.f32 %v4592, %v4612
      %v4617 = vadd.f32 %v4593, %v4611
      %v4618 = vadd.f32 %v4594, %v4609
      %v4619 = vadd.f32 %v4595, %v4613
      %v4620 = vld [vmem:[%s16] sm:$0xff]
      %v4621 = vld [vmem:[%s16 + $0x8] sm:$0xff]
      %4623 = vset.pattern.permute.xlu0 0
      %4624 = vperm.xlu0 %4623, %v4620
      %v4625 = vpop.permute.xlu0 %4624
      %4628 = vset.pattern.permute.xlu0 0
      %4629 = vperm.xlu0 %4628, %v4621
      %v4630 = vpop.permute.xlu0 %4629
      %v4632 = vadd.f32 %v4614, %v4625
      %v4633 = vadd.f32 %v4615, %v4625
      %v4634 = vadd.f32 %v4616, %v4625
      %v4635 = vadd.f32 %v4617, %v4630
      %v4636 = vadd.f32 %v4618, %v4630
      %v4637 = vadd.f32 %v4619, %v4630
      %vm4638 = vcmp.ge.f32.partialorder %v4632, 0.0
      %vm4639 = vcmp.ge.f32.partialorder %v4633, 0.0
      %vm4640 = vcmp.ge.f32.partialorder %v4634, 0.0
      %vm4641 = vcmp.ge.f32.partialorder %v4635, 0.0
      %vm4642 = vcmp.ge.f32.partialorder %v4636, 0.0
      %vm4643 = vcmp.ge.f32.partialorder %v4637, 0.0
      %v4644 = vmul.f32 %v1236, %v4632
      %v4645 = vmul.f32 %v1236, %v4633
      %v4646 = vmul.f32 %v1236, %v4634
      %v4647 = vmul.f32 %v1236, %v4635
      %v4648 = vmul.f32 %v1236, %v4636
      %v4649 = vmul.f32 %v1236, %v4637
      %v4650 = vsel %vm4638, %v4632, %v4644
      %v4651 = vsel %vm4639, %v4633, %v4645
      %v4652 = vsel %vm4640, %v4634, %v4646
      %v4653 = vsel %vm4641, %v4635, %v4647
      %v4654 = vsel %vm4642, %v4636, %v4648
      %v4655 = vsel %vm4643, %v4637, %v4649
      %v4656 = vmul.f32 %v1253, %v4650
      %v4657 = vmul.f32 %v1257, %v4651
      %v4658 = vmul.f32 %v1261, %v4652
      %v4659 = vmul.f32 %v1253, %v4653
      %v4660 = vmul.f32 %v1257, %v4654
      %v4661 = vmul.f32 %v1261, %v4655
      %vm4662 = vcmp.ge.f32.partialorder %v4656, 0.0
      %vm4663 = vcmp.ge.f32.partialorder %v4657, 0.0
      %vm4664 = vcmp.ge.f32.partialorder %v4658, 0.0
      %vm4665 = vcmp.ge.f32.partialorder %v4659, 0.0
      %vm4666 = vcmp.ge.f32.partialorder %v4660, 0.0
      %vm4667 = vcmp.ge.f32.partialorder %v4661, 0.0
      %v4668 = vmul.f32 %v1236, %v4656
      %v4669 = vmul.f32 %v1236, %v4657
      %v4670 = vmul.f32 %v1236, %v4658
      %v4671 = vmul.f32 %v1236, %v4659
      %v4672 = vmul.f32 %v1236, %v4660
      %v4673 = vmul.f32 %v1236, %v4661
      %v4674 = vsel %vm4662, %v4656, %v4668
      %v4675 = vsel %vm4663, %v4657, %v4669
      %v4676 = vsel %vm4664, %v4658, %v4670
      %v4677 = vsel %vm4665, %v4659, %v4671
      %v4678 = vsel %vm4666, %v4660, %v4672
      %v4679 = vsel %vm4667, %v4661, %v4673
      %4680 = vst [vmem:[%s603 + $0xf0] sm:$0xff] %v4674
      %4681 = vst [vmem:[%s603 + $0xf8] sm:$0xff] %v4675
      %4682 = vst [vmem:[%s603 + $0x100] sm:$0xff] %v4676
      %4683 = vst [vmem:[%s603 + $0x108] sm:$0xff] %v4677
      %4684 = vst [vmem:[%s603 + $0x110] sm:$0xff] %v4678
      %4685 = vst [vmem:[%s603 + $0x118] sm:$0xff] %v4679
      %v4686 = vld [vmem:[%s603] sm:$0xff]
      %v4687 = vld [vmem:[%s603 + $0x8] sm:$0xff]
      %v4688 = vld [vmem:[%s603 + $0x10] sm:$0xff]
      %v4689 = vld [vmem:[%s603 + $0x18] sm:$0xff]
      %v4690 = vld [vmem:[%s603 + $0x20] sm:$0xff]
      %v4691 = vld [vmem:[%s603 + $0x28] sm:$0xff]
      %v4692 = vld [vmem:[%s603 + $0x30] sm:$0xff]
      %v4693 = vld [vmem:[%s603 + $0x38] sm:$0xff]
      %v4694 = vld [vmem:[%s603 + $0x40] sm:$0xff]
      %v4695 = vld [vmem:[%s603 + $0x48] sm:$0xff]
      %v4696 = vld [vmem:[%s603 + $0x50] sm:$0xff]
      %v4697 = vld [vmem:[%s603 + $0x58] sm:$0xff]
      %v4698 = vld [vmem:[%s603 + $0x60] sm:$0xff]
      %v4699 = vld [vmem:[%s603 + $0x68] sm:$0xff]
      %v4700 = vld [vmem:[%s603 + $0x70] sm:$0xff]
      %v4701 = vld [vmem:[%s603 + $0x78] sm:$0xff]
      %v4702 = vld [vmem:[%s603 + $0x80] sm:$0xff]
      %v4703 = vld [vmem:[%s603 + $0x88] sm:$0xff]
      %v4704 = vld [vmem:[%s603 + $0x90] sm:$0xff]
      %v4705 = vld [vmem:[%s603 + $0x98] sm:$0xff]
      %v4706 = vld [vmem:[%s603 + $0xa0] sm:$0xff]
      %v4707 = vld [vmem:[%s603 + $0xa8] sm:$0xff]
      %v4708 = vld [vmem:[%s603 + $0xb0] sm:$0xff]
      %v4709 = vld [vmem:[%s603 + $0xb8] sm:$0xff]
      %v4710 = vld [vmem:[%s603 + $0xc0] sm:$0xff]
      %v4711 = vld [vmem:[%s603 + $0xc8] sm:$0xff]
      %v4712 = vld [vmem:[%s603 + $0xd0] sm:$0xff]
      %v4713 = vld [vmem:[%s603 + $0xd8] sm:$0xff]
      %v4714 = vld [vmem:[%s603 + $0xe0] sm:$0xff]
      %v4715 = vld [vmem:[%s603 + $0xe8] sm:$0xff]
      %v4716 = vld [vmem:[%s603 + $0xf0] sm:$0xff]
      %v4717 = vld [vmem:[%s603 + $0xf8] sm:$0xff]
      %v4718 = vld [vmem:[%s603 + $0x100] sm:$0xff]
      %v4719 = vld [vmem:[%s603 + $0x108] sm:$0xff]
      %v4720 = vld [vmem:[%s603 + $0x110] sm:$0xff]
      %v4721 = vld [vmem:[%s603 + $0x118] sm:$0xff]
      %v4722 = vld [vmem:[%s9] sm:$0xff]
      %v4723 = vld [vmem:[%s9 + $0x8] sm:$0xff]
      %v4724 = vld [vmem:[%s9 + $0x10] sm:$0xff]
      %v4725 = vld [vmem:[%s9 + $0x18] sm:$0xff]
      %v4726 = vld [vmem:[%s9 + $0x20] sm:$0xff]
      %v4727 = vld [vmem:[%s9 + $0x28] sm:$0xff]
      %v4728 = vld [vmem:[%s9 + $0x30] sm:$0xff]
      %v4729 = vld [vmem:[%s9 + $0x38] sm:$0xff]
      %v4730 = vld [vmem:[%s9 + $0x40] sm:$0xff]
      %v4731 = vld [vmem:[%s9 + $0x48] sm:$0xff]
      %v4732 = vld [vmem:[%s9 + $0x50] sm:$0xff]
      %v4733 = vld [vmem:[%s9 + $0x58] sm:$0xff]
      %v4734 = vld [vmem:[%s9 + $0x60] sm:$0xff]
      %v4735 = vld [vmem:[%s9 + $0x68] sm:$0xff]
      %v4736 = vld [vmem:[%s9 + $0x70] sm:$0xff]
      %v4737 = vld [vmem:[%s9 + $0x78] sm:$0xff]
      %v4738 = vld [vmem:[%s9 + $0x80] sm:$0xff]
      %v4739 = vld [vmem:[%s9 + $0x88] sm:$0xff]
      %vm4740 = vcmask 785408
      %v4742 = vsel %vm4740, %v4722, 0
      %v4745 = vsel %vm4740, %v4723, 0
      %v4748 = vsel %vm4740, %v4724, 0
      %v4751 = vsel %vm4740, %v4725, 0
      %v4754 = vsel %vm4740, %v4726, 0
      %v4757 = vsel %vm4740, %v4727, 0
      %v4760 = vsel %vm4740, %v4728, 0
      %v4763 = vsel %vm4740, %v4729, 0
      %v4766 = vsel %vm4740, %v4730, 0
      %v4769 = vsel %vm4740, %v4731, 0
      %v4772 = vsel %vm4740, %v4732, 0
      %v4775 = vsel %vm4740, %v4733, 0
      %v4778 = vsel %vm4740, %v4734, 0
      %v4781 = vsel %vm4740, %v4735, 0
      %v4784 = vsel %vm4740, %v4736, 0
      %v4787 = vsel %vm4740, %v4737, 0
      %v4790 = vsel %vm4740, %v4738, 0
      %v4793 = vsel %vm4740, %v4739, 0
      %4795 = vmatprep.subr.mxu0 %v4687
      %4796 = vmatpush1.msra.mxu0 %v4686
      %4797 = vmatprep.subr.mxu0 %v4690
      %4798 = vmatpush1.msra.mxu0 %v4689
      %4799 = vmatprep.subr.mxu0 %v4693
      %4800 = vmatpush1.msra.mxu0 %v4692
      %4801 = vmatprep.subr.mxu0 %v4696
      %4802 = vmatpush1.msra.mxu0 %v4695
      %4803 = vmatprep.subr.mxu0 %v4699
      %4804 = vmatpush1.msra.mxu0 %v4698
      %4805 = vmatprep.subr.mxu0 %v4702
      %4806 = vmatpush1.msra.mxu0 %v4701
      %4807 = vmatprep.subr.mxu0 %v4705
      %4808 = vmatpush1.msra.mxu0 %v4704
      %4809 = vmatprep.subr.mxu0 %v4708
      %4810 = vmatpush1.msra.mxu0 %v4707
      %4811 = vmatprep.subr.mxu0 %v4711
      %4812 = vmatpush1.msra.mxu0 %v4710
      %4813 = vmatprep.subr.mxu0 %v4714
      %4814 = vmatpush1.msra.mxu0 %v4713
      %4815 = vmatprep.subr.mxu0 %v4717
      %4816 = vmatpush1.msra.mxu0 %v4716
      %4817 = vmatprep.subr.mxu0 %v4720
      %4818 = vmatpush1.msra.mxu0 %v4719
      %4819 = vmatprep.subr.mxu0 0.0
      %4820 = vmatpush1.msra.mxu0 0.0
      %4821 = vmatprep.subr.mxu0 0.0
      %4822 = vmatpush1.msra.mxu0 0.0
      %4823 = vmatprep.subr.mxu0 0.0
      %4824 = vmatpush1.msra.mxu0 0.0
      %4825 = vmatprep.subr.mxu0 0.0
      %4826 = vmatpush1.msra.mxu0 0.0
      %4827 = vmatprep.subr.mxu0 0.0
      %4828 = vmatpush1.msra.mxu0 0.0
      %4829 = vmatprep.subr.mxu0 0.0
      %4830 = vmatpush1.msra.mxu0 0.0
      %4831 = vmatprep.subr.mxu0 0.0
      %4832 = vmatpush1.msra.mxu0 0.0
      %4833 = vmatprep.subr.mxu0 0.0
      %4834 = vmatpush1.msra.mxu0 0.0
      %4835 = vmatprep.subr.mxu0 0.0
      %4836 = vmatpush1.msra.mxu0 0.0
      %4837 = vmatprep.subr.mxu0 0.0
      %4838 = vmatpush1.msra.mxu0 0.0
      %4839 = vmatprep.subr.mxu0 0.0
      %4840 = vmatpush1.msra.mxu0 0.0
      %4841 = vmatprep.subr.mxu0 0.0
      %4842 = vmatpush1.msra.mxu0 0.0
      %4843 = vmatprep.subr.mxu0 0.0
      %4844 = vmatpush1.msra.mxu0 0.0
      %4845 = vmatprep.subr.mxu0 0.0
      %4846 = vmatpush1.msra.mxu0 0.0
      %4847 = vmatprep.subr.mxu0 0.0
      %4848 = vmatpush1.msra.mxu0 0.0
      %4849 = vmatprep.subr.mxu0 0.0
      %4850 = vmatpush1.msra.mxu0 0.0
      %4851 = vmatprep.subr.mxu0 0.0
      %4852 = vmatpush1.msra.mxu0 0.0
      %4853 = vmatprep.subr.mxu0 0.0
      %4854 = vmatpush1.msra.mxu0 0.0
      %4855 = vmatprep.subr.mxu0 0.0
      %4856 = vmatpush1.msra.mxu0 0.0
      %4857 = vmatprep.subr.mxu0 0.0
      %4858 = vmatpush1.msra.mxu0 0.0
      %4859 = vmatprep.mubr.f32.mxu0 0.0
      %4860 = vmatmul.mubr.f32.gmra.mrb[0].mxu0 %v4742
      %v4861 = vpop.f32.mrb[0].mxu0
      %v4862 = vadd.f32 0.0, %v4861
      %v4863 = vpop.f32.mrb[0].mxu0
      %v4864 = vadd.f32 0.0, %v4863
      %4865 = vmatprep.mubr.f32.mxu0 0.0
      %4866 = vmatmul.mubr.f32.gmra.mrb[0].mxu0 %v4745
      %v4867 = vpop.f32.mrb[0].mxu0
      %v4868 = vadd.f32 0.0, %v4867
      %v4869 = vpop.f32.mrb[0].mxu0
      %v4870 = vadd.f32 0.0, %v4869
      %4871 = vmatprep.mubr.f32.mxu0 0.0
      %4872 = vmatmul.mubr.f32.gmra.mrb[0].mxu0 %v4748
      %v4873 = vpop.f32.mrb[0].mxu0
      %v4874 = vadd.f32 0.0, %v4873
      %v4875 = vpop.f32.mrb[0].mxu0
      %v4876 = vadd.f32 0.0, %v4875
      %4877 = vmatprep.mubr.f32.mxu0 0.0
      %4878 = vmatmul.mubr.f32.gmra.mrb[0].mxu0 %v4751
      %v4879 = vpop.f32.mrb[0].mxu0
      %v4880 = vadd.f32 0.0, %v4879
      %v4881 = vpop.f32.mrb[0].mxu0
      %v4882 = vadd.f32 0.0, %v4881
      %4883 = vmatprep.mubr.f32.mxu0 0.0
      %4884 = vmatmul.mubr.f32.gmra.mrb[0].mxu0 %v4754
      %v4885 = vpop.f32.mrb[0].mxu0
      %v4886 = vadd.f32 0.0, %v4885
      %v4887 = vpop.f32.mrb[0].mxu0
      %v4888 = vadd.f32 0.0, %v4887
      %4889 = vmatprep.mubr.f32.mxu0 0.0
      %4890 = vmatmul.mubr.f32.gmra.mrb[0].mxu0 %v4757
      %v4891 = vpop.f32.mrb[0].mxu0
      %v4892 = vadd.f32 0.0, %v4891
      %v4893 = vpop.f32.mrb[0].mxu0
      %v4894 = vadd.f32 0.0, %v4893
      %4895 = vmatprep.mubr.f32.mxu0 0.0
      %4896 = vmatmul.mubr.f32.gmra.mrb[0].mxu0 %v4760
      %v4897 = vpop.f32.mrb[0].mxu0
      %v4898 = vadd.f32 0.0, %v4897
      %v4899 = vpop.f32.mrb[0].mxu0
      %v4900 = vadd.f32 0.0, %v4899
      %4901 = vmatprep.mubr.f32.mxu0 0.0
      %4902 = vmatmul.mubr.f32.gmra.mrb[0].mxu0 %v4763
      %v4903 = vpop.f32.mrb[0].mxu0
      %v4904 = vadd.f32 0.0, %v4903
      %v4905 = vpop.f32.mrb[0].mxu0
      %v4906 = vadd.f32 0.0, %v4905
      %4907 = vmatprep.mubr.f32.mxu0 0.0
      %4908 = vmatmul.mubr.f32.gmra.mrb[0].mxu0 %v4766
      %v4909 = vpop.f32.mrb[0].mxu0
      %v4910 = vadd.f32 0.0, %v4909
      %v4911 = vpop.f32.mrb[0].mxu0
      %v4912 = vadd.f32 0.0, %v4911
      %4913 = vmatprep.mubr.f32.mxu0 0.0
      %4914 = vmatmul.mubr.f32.gmra.mrb[0].mxu0 %v4769
      %v4915 = vpop.f32.mrb[0].mxu0
      %v4916 = vadd.f32 0.0, %v4915
      %v4917 = vpop.f32.mrb[0].mxu0
      %v4918 = vadd.f32 0.0, %v4917
      %4919 = vmatprep.mubr.f32.mxu0 0.0
      %4920 = vmatmul.mubr.f32.gmra.mrb[0].mxu0 %v4772
      %v4921 = vpop.f32.mrb[0].mxu0
      %v4922 = vadd.f32 0.0, %v4921
      %v4923 = vpop.f32.mrb[0].mxu0
      %v4924 = vadd.f32 0.0, %v4923
      %4925 = vmatprep.mubr.f32.mxu0 0.0
      %4926 = vmatmul.mubr.f32.gmra.mrb[0].mxu0 %v4775
      %v4927 = vpop.f32.mrb[0].mxu0
      %v4928 = vadd.f32 0.0, %v4927
      %v4929 = vpop.f32.mrb[0].mxu0
      %v4930 = vadd.f32 0.0, %v4929
      %4931 = vmatprep.mubr.f32.mxu0 0.0
      %4932 = vmatmul.mubr.f32.gmra.mrb[0].mxu0 %v4778
      %v4933 = vpop.f32.mrb[0].mxu0
      %v4934 = vadd.f32 0.0, %v4933
      %v4935 = vpop.f32.mrb[0].mxu0
      %v4936 = vadd.f32 0.0, %v4935
      %4937 = vmatprep.mubr.f32.mxu0 0.0
      %4938 = vmatmul.mubr.f32.gmra.mrb[0].mxu0 %v4781
      %v4939 = vpop.f32.mrb[0].mxu0
      %v4940 = vadd.f32 0.0, %v4939
      %v4941 = vpop.f32.mrb[0].mxu0
      %v4942 = vadd.f32 0.0, %v4941
      %4943 = vmatprep.mubr.f32.mxu0 0.0
      %4944 = vmatmul.mubr.f32.gmra.mrb[0].mxu0 %v4784
      %v4945 = vpop.f32.mrb[0].mxu0
      %v4946 = vadd.f32 0.0, %v4945
      %v4947 = vpop.f32.mrb[0].mxu0
      %v4948 = vadd.f32 0.0, %v4947
      %4949 = vmatprep.mubr.f32.mxu0 0.0
      %4950 = vmatmul.mubr.f32.gmra.mrb[0].mxu0 %v4787
      %v4951 = vpop.f32.mrb[0].mxu0
      %v4952 = vadd.f32 0.0, %v4951
      %v4953 = vpop.f32.mrb[0].mxu0
      %v4954 = vadd.f32 0.0, %v4953
      %4955 = vmatprep.mubr.f32.mxu0 0.0
      %4956 = vmatmul.mubr.f32.gmra.mrb[0].mxu0 %v4790
      %v4957 = vpop.f32.mrb[0].mxu0
      %v4958 = vadd.f32 0.0, %v4957
      %v4959 = vpop.f32.mrb[0].mxu0
      %v4960 = vadd.f32 0.0, %v4959
      %4961 = vmatprep.mubr.f32.mxu0 0.0
      %4962 = vmatmul.mubr.f32.gmra.mrb[0].mxu0 %v4793
      %v4963 = vpop.f32.mrb[0].mxu0
      %v4964 = vadd.f32 0.0, %v4963
      %v4965 = vpop.f32.mrb[0].mxu0
      %v4966 = vadd.f32 0.0, %v4965
      %4967 = vdwg.mxu0
      %4968 = vmatprep.subr.mxu0 0.0
      %4969 = vmatpush1.msra.mxu0 %v4688
      %4970 = vmatprep.subr.mxu0 0.0
      %4971 = vmatpush1.msra.mxu0 %v4691
      %4972 = vmatprep.subr.mxu0 0.0
      %4973 = vmatpush1.msra.mxu0 %v4694
      %4974 = vmatprep.subr.mxu0 0.0
      %4975 = vmatpush1.msra.mxu0 %v4697
      %4976 = vmatprep.subr.mxu0 0.0
      %4977 = vmatpush1.msra.mxu0 %v4700
      %4978 = vmatprep.subr.mxu0 0.0
      %4979 = vmatpush1.msra.mxu0 %v4703
      %4980 = vmatprep.subr.mxu0 0.0
      %4981 = vmatpush1.msra.mxu0 %v4706
      %4982 = vmatprep.subr.mxu0 0.0
      %4983 = vmatpush1.msra.mxu0 %v4709
      %4984 = vmatprep.subr.mxu0 0.0
      %4985 = vmatpush1.msra.mxu0 %v4712
      %4986 = vmatprep.subr.mxu0 0.0
      %4987 = vmatpush1.msra.mxu0 %v4715
      %4988 = vmatprep.subr.mxu0 0.0
      %4989 = vmatpush1.msra.mxu0 %v4718
      %4990 = vmatprep.subr.mxu0 0.0
      %4991 = vmatpush1.msra.mxu0 %v4721
      %4992 = vmatprep.subr.mxu0 0.0
      %4993 = vmatpush1.msra.mxu0 0.0
      %4994 = vmatprep.subr.mxu0 0.0
      %4995 = vmatpush1.msra.mxu0 0.0
      %4996 = vmatprep.subr.mxu0 0.0
      %4997 = vmatpush1.msra.mxu0 0.0
      %4998 = vmatprep.subr.mxu0 0.0
      %4999 = vmatpush1.msra.mxu0 0.0
      %5000 = vmatprep.subr.mxu0 0.0
      %5001 = vmatpush1.msra.mxu0 0.0
      %5002 = vmatprep.subr.mxu0 0.0
      %5003 = vmatpush1.msra.mxu0 0.0
      %5004 = vmatprep.subr.mxu0 0.0
      %5005 = vmatpush1.msra.mxu0 0.0
      %5006 = vmatprep.subr.mxu0 0.0
      %5007 = vmatpush1.msra.mxu0 0.0
      %5008 = vmatprep.subr.mxu0 0.0
      %5009 = vmatpush1.msra.mxu0 0.0
      %5010 = vmatprep.subr.mxu0 0.0
      %5011 = vmatpush1.msra.mxu0 0.0
      %5012 = vmatprep.subr.mxu0 0.0
      %5013 = vmatpush1.msra.mxu0 0.0
      %5014 = vmatprep.subr.mxu0 0.0
      %5015 = vmatpush1.msra.mxu0 0.0
      %5016 = vmatprep.subr.mxu0 0.0
      %5017 = vmatpush1.msra.mxu0 0.0
      %5018 = vmatprep.subr.mxu0 0.0
      %5019 = vmatpush1.msra.mxu0 0.0
      %5020 = vmatprep.subr.mxu0 0.0
      %5021 = vmatpush1.msra.mxu0 0.0
      %5022 = vmatprep.subr.mxu0 0.0
      %5023 = vmatpush1.msra.mxu0 0.0
      %5024 = vmatprep.subr.mxu0 0.0
      %5025 = vmatpush1.msra.mxu0 0.0
      %5026 = vmatprep.subr.mxu0 0.0
      %5027 = vmatpush1.msra.mxu0 0.0
      %5028 = vmatprep.subr.mxu0 0.0
      %5029 = vmatpush1.msra.mxu0 0.0
      %5030 = vmatprep.subr.mxu0 0.0
      %5031 = vmatpush1.msra.mxu0 0.0
      %5032 = vmatprep.mubr.f32.mxu0 0.0
      %5033 = vmatmul.mubr.f32.gmra.mrb[0].mxu0 %v4742
      %v5034 = vpop.f32.mrb[0].mxu0
      %v5035 = vadd.f32 0.0, %v5034
      %v5036 = vpop.f32.mrb[0].mxu0
      %5037 = vmatprep.mubr.f32.mxu0 0.0
      %5038 = vmatmul.mubr.f32.gmra.mrb[0].mxu0 %v4745
      %v5039 = vpop.f32.mrb[0].mxu0
      %v5040 = vadd.f32 0.0, %v5039
      %v5041 = vpop.f32.mrb[0].mxu0
      %5042 = vmatprep.mubr.f32.mxu0 0.0
      %5043 = vmatmul.mubr.f32.gmra.mrb[0].mxu0 %v4748
      %v5044 = vpop.f32.mrb[0].mxu0
      %v5045 = vadd.f32 0.0, %v5044
      %v5046 = vpop.f32.mrb[0].mxu0
      %5047 = vmatprep.mubr.f32.mxu0 0.0
      %5048 = vmatmul.mubr.f32.gmra.mrb[0].mxu0 %v4751
      %v5049 = vpop.f32.mrb[0].mxu0
      %v5050 = vadd.f32 0.0, %v5049
      %v5051 = vpop.f32.mrb[0].mxu0
      %5052 = vmatprep.mubr.f32.mxu0 0.0
      %5053 = vmatmul.mubr.f32.gmra.mrb[0].mxu0 %v4754
      %v5054 = vpop.f32.mrb[0].mxu0
      %v5055 = vadd.f32 0.0, %v5054
      %v5056 = vpop.f32.mrb[0].mxu0
      %5057 = vmatprep.mubr.f32.mxu0 0.0
      %5058 = vmatmul.mubr.f32.gmra.mrb[0].mxu0 %v4757
      %v5059 = vpop.f32.mrb[0].mxu0
      %v5060 = vadd.f32 0.0, %v5059
      %v5061 = vpop.f32.mrb[0].mxu0
      %5062 = vmatprep.mubr.f32.mxu0 0.0
      %5063 = vmatmul.mubr.f32.gmra.mrb[0].mxu0 %v4760
      %v5064 = vpop.f32.mrb[0].mxu0
      %v5065 = vadd.f32 0.0, %v5064
      %v5066 = vpop.f32.mrb[0].mxu0
      %5067 = vmatprep.mubr.f32.mxu0 0.0
      %5068 = vmatmul.mubr.f32.gmra.mrb[0].mxu0 %v4763
      %v5069 = vpop.f32.mrb[0].mxu0
      %v5070 = vadd.f32 0.0, %v5069
      %v5071 = vpop.f32.mrb[0].mxu0
      %5072 = vmatprep.mubr.f32.mxu0 0.0
      %5073 = vmatmul.mubr.f32.gmra.mrb[0].mxu0 %v4766
      %v5074 = vpop.f32.mrb[0].mxu0
      %v5075 = vadd.f32 0.0, %v5074
      %v5076 = vpop.f32.mrb[0].mxu0
      %5077 = vmatprep.mubr.f32.mxu0 0.0
      %5078 = vmatmul.mubr.f32.gmra.mrb[0].mxu0 %v4769
      %v5079 = vpop.f32.mrb[0].mxu0
      %v5080 = vadd.f32 0.0, %v5079
      %v5081 = vpop.f32.mrb[0].mxu0
      %5082 = vmatprep.mubr.f32.mxu0 0.0
      %5083 = vmatmul.mubr.f32.gmra.mrb[0].mxu0 %v4772
      %v5084 = vpop.f32.mrb[0].mxu0
      %v5085 = vadd.f32 0.0, %v5084
      %v5086 = vpop.f32.mrb[0].mxu0
      %5087 = vmatprep.mubr.f32.mxu0 0.0
      %5088 = vmatmul.mubr.f32.gmra.mrb[0].mxu0 %v4775
      %v5089 = vpop.f32.mrb[0].mxu0
      %v5090 = vadd.f32 0.0, %v5089
      %v5091 = vpop.f32.mrb[0].mxu0
      %5092 = vmatprep.mubr.f32.mxu0 0.0
      %5093 = vmatmul.mubr.f32.gmra.mrb[0].mxu0 %v4778
      %v5094 = vpop.f32.mrb[0].mxu0
      %v5095 = vadd.f32 0.0, %v5094
      %v5096 = vpop.f32.mrb[0].mxu0
      %5097 = vmatprep.mubr.f32.mxu0 0.0
      %5098 = vmatmul.mubr.f32.gmra.mrb[0].mxu0 %v4781
      %v5099 = vpop.f32.mrb[0].mxu0
      %v5100 = vadd.f32 0.0, %v5099
      %v5101 = vpop.f32.mrb[0].mxu0
      %5102 = vmatprep.mubr.f32.mxu0 0.0
      %5103 = vmatmul.mubr.f32.gmra.mrb[0].mxu0 %v4784
      %v5104 = vpop.f32.mrb[0].mxu0
      %v5105 = vadd.f32 0.0, %v5104
      %v5106 = vpop.f32.mrb[0].mxu0
      %5107 = vmatprep.mubr.f32.mxu0 0.0
      %5108 = vmatmul.mubr.f32.gmra.mrb[0].mxu0 %v4787
      %v5109 = vpop.f32.mrb[0].mxu0
      %v5110 = vadd.f32 0.0, %v5109
      %v5111 = vpop.f32.mrb[0].mxu0
      %5112 = vmatprep.mubr.f32.mxu0 0.0
      %5113 = vmatmul.mubr.f32.gmra.mrb[0].mxu0 %v4790
      %v5114 = vpop.f32.mrb[0].mxu0
      %v5115 = vadd.f32 0.0, %v5114
      %v5116 = vpop.f32.mrb[0].mxu0
      %5117 = vmatprep.mubr.f32.mxu0 0.0
      %5118 = vmatmul.mubr.f32.gmra.mrb[0].mxu0 %v4793
      %v5119 = vpop.f32.mrb[0].mxu0
      %v5120 = vadd.f32 0.0, %v5119
      %v5121 = vpop.f32.mrb[0].mxu0
      %5122 = vdwg.mxu0
      %5123 = vrot.lane.b32.xlu0 %v4862, 19
      %v5124 = vpop.permute.xlu0 %5123
      %5125 = vrot.lane.b32.xlu0 %v4868, 19
      %v5126 = vpop.permute.xlu0 %5125
      %5127 = vrot.lane.b32.xlu0 %v4864, 19
      %v5128 = vpop.permute.xlu0 %5127
      %5129 = vrot.lane.b32.xlu0 %v4870, 19
      %v5130 = vpop.permute.xlu0 %5129
      %5131 = vrot.lane.b32.xlu0 %v5035, 19
      %v5132 = vpop.permute.xlu0 %5131
      %5133 = vrot.lane.b32.xlu0 %v5040, 19
      %v5134 = vpop.permute.xlu0 %5133
      %v5135 = vsel %vm1024, %v5128, %v5132
      %v5136 = vsel %vm1024, %v5130, %v5134
      %v5137 = vsel %vm1024, %v5124, %v5128
      %v5138 = vsel %vm1024, %v5126, %v5130
      %v5139 = vsel %vm1024, %v5132, %v5124
      %v5140 = vsel %vm1024, %v5134, %v5126
      %v5141 = vadd.f32 %v4910, %v5139
      %v5142 = vadd.f32 %v4912, %v5137
      %v5143 = vadd.f32 %v5075, %v5135
      %v5144 = vadd.f32 %v4916, %v5140
      %v5145 = vadd.f32 %v4918, %v5138
      %v5146 = vadd.f32 %v5080, %v5136
      %5147 = vrot.lane.b32.xlu0 %v4874, 18
      %v5148 = vpop.permute.xlu0 %5147
      %5149 = vrot.lane.b32.xlu0 %v4880, 18
      %v5150 = vpop.permute.xlu0 %5149
      %5151 = vrot.lane.b32.xlu0 %v4876, 18
      %v5152 = vpop.permute.xlu0 %5151
      %5153 = vrot.lane.b32.xlu0 %v4882, 18
      %v5154 = vpop.permute.xlu0 %5153
      %5155 = vrot.lane.b32.xlu0 %v5045, 18
      %v5156 = vpop.permute.xlu0 %5155
      %5157 = vrot.lane.b32.xlu0 %v5050, 18
      %v5158 = vpop.permute.xlu0 %5157
      %v5159 = vsel %vm1049, %v5152, %v5156
      %v5160 = vsel %vm1049, %v5154, %v5158
      %v5161 = vsel %vm1049, %v5148, %v5152
      %v5162 = vsel %vm1049, %v5150, %v5154
      %v5163 = vsel %vm1049, %v5156, %v5148
      %v5164 = vsel %vm1049, %v5158, %v5150
      %v5165 = vadd.f32 %v5141, %v5163
      %v5166 = vadd.f32 %v5142, %v5161
      %v5167 = vadd.f32 %v5143, %v5159
      %v5168 = vadd.f32 %v5144, %v5164
      %v5169 = vadd.f32 %v5145, %v5162
      %v5170 = vadd.f32 %v5146, %v5160
      %5171 = vrot.lane.b32.xlu0 %v4886, 17
      %v5172 = vpop.permute.xlu0 %5171
      %5173 = vrot.lane.b32.xlu0 %v4892, 17
      %v5174 = vpop.permute.xlu0 %5173
      %5175 = vrot.lane.b32.xlu0 %v4888, 17
      %v5176 = vpop.permute.xlu0 %5175
      %5177 = vrot.lane.b32.xlu0 %v4894, 17
      %v5178 = vpop.permute.xlu0 %5177
      %5179 = vrot.lane.b32.xlu0 %v5055, 17
      %v5180 = vpop.permute.xlu0 %5179
      %5181 = vrot.lane.b32.xlu0 %v5060, 17
      %v5182 = vpop.permute.xlu0 %5181
      %v5183 = vsel %vm1074, %v5176, %v5180
      %v5184 = vsel %vm1074, %v5178, %v5182
      %v5185 = vsel %vm1074, %v5172, %v5176
      %v5186 = vsel %vm1074, %v5174, %v5178
      %v5187 = vsel %vm1074, %v5180, %v5172
      %v5188 = vsel %vm1074, %v5182, %v5174
      %v5189 = vadd.f32 %v5165, %v5187
      %v5190 = vadd.f32 %v5166, %v5185
      %v5191 = vadd.f32 %v5167, %v5183
      %v5192 = vadd.f32 %v5168, %v5188
      %v5193 = vadd.f32 %v5169, %v5186
      %v5194 = vadd.f32 %v5170, %v5184
      %5195 = vrot.lane.b32.xlu0 %v4898, 1
      %v5196 = vpop.permute.xlu0 %5195
      %5197 = vrot.lane.b32.xlu0 %v4904, 1
      %v5198 = vpop.permute.xlu0 %5197
      %5199 = vrot.lane.b32.xlu0 %v4900, 1
      %v5200 = vpop.permute.xlu0 %5199
      %5201 = vrot.lane.b32.xlu0 %v4906, 1
      %v5202 = vpop.permute.xlu0 %5201
      %5203 = vrot.lane.b32.xlu0 %v5065, 1
      %v5204 = vpop.permute.xlu0 %5203
      %5205 = vrot.lane.b32.xlu0 %v5070, 1
      %v5206 = vpop.permute.xlu0 %5205
      %v5207 = vsel %vm1099, %v5200, %v5204
      %v5208 = vsel %vm1099, %v5202, %v5206
      %v5209 = vsel %vm1099, %v5196, %v5200
      %v5210 = vsel %vm1099, %v5198, %v5202
      %v5211 = vsel %vm1099, %v5204, %v5196
      %v5212 = vsel %vm1099, %v5206, %v5198
      %v5213 = vadd.f32 %v5189, %v5211
      %v5214 = vadd.f32 %v5190, %v5209
      %v5215 = vadd.f32 %v5191, %v5207
      %v5216 = vadd.f32 %v5192, %v5212
      %v5217 = vadd.f32 %v5193, %v5210
      %v5218 = vadd.f32 %v5194, %v5208
      %5219 = vrot.lane.b32.xlu0 %v4922, 127
      %v5220 = vpop.permute.xlu0 %5219
      %5221 = vrot.lane.b32.xlu0 %v4928, 127
      %v5222 = vpop.permute.xlu0 %5221
      %5223 = vrot.lane.b32.xlu0 %v4924, 127
      %v5224 = vpop.permute.xlu0 %5223
      %5225 = vrot.lane.b32.xlu0 %v4930, 127
      %v5226 = vpop.permute.xlu0 %5225
      %5227 = vrot.lane.b32.xlu0 %v5085, 127
      %v5228 = vpop.permute.xlu0 %5227
      %5229 = vrot.lane.b32.xlu0 %v5090, 127
      %v5230 = vpop.permute.xlu0 %5229
      %v5231 = vsel %vm1124, %v5224, %v5228
      %v5232 = vsel %vm1124, %v5226, %v5230
      %v5233 = vsel %vm1124, %v5220, %v5224
      %v5234 = vsel %vm1124, %v5222, %v5226
      %v5235 = vsel %vm1124, %v5228, %v5220
      %v5236 = vsel %vm1124, %v5230, %v5222
      %v5237 = vadd.f32 %v5213, %v5233
      %v5238 = vadd.f32 %v5214, %v5231
      %v5239 = vadd.f32 %v5215, %v5235
      %v5240 = vadd.f32 %v5216, %v5234
      %v5241 = vadd.f32 %v5217, %v5232
      %v5242 = vadd.f32 %v5218, %v5236
      %5243 = vrot.lane.b32.xlu0 %v4934, 111
      %v5244 = vpop.permute.xlu0 %5243
      %5245 = vrot.lane.b32.xlu0 %v4940, 111
      %v5246 = vpop.permute.xlu0 %5245
      %5247 = vrot.lane.b32.xlu0 %v4936, 111
      %v5248 = vpop.permute.xlu0 %5247
      %5249 = vrot.lane.b32.xlu0 %v4942, 111
      %v5250 = vpop.permute.xlu0 %5249
      %5251 = vrot.lane.b32.xlu0 %v5095, 111
      %v5252 = vpop.permute.xlu0 %5251
      %5253 = vrot.lane.b32.xlu0 %v5100, 111
      %v5254 = vpop.permute.xlu0 %5253
      %v5255 = vsel %vm1149, %v5248, %v5252
      %v5256 = vsel %vm1149, %v5250, %v5254
      %v5257 = vsel %vm1149, %v5244, %v5248
      %v5258 = vsel %vm1149, %v5246, %v5250
      %v5259 = vsel %vm1149, %v5252, %v5244
      %v5260 = vsel %vm1149, %v5254, %v5246
      %v5261 = vadd.f32 %v5237, %v5257
      %v5262 = vadd.f32 %v5238, %v5255
      %v5263 = vadd.f32 %v5239, %v5259
      %v5264 = vadd.f32 %v5240, %v5258
      %v5265 = vadd.f32 %v5241, %v5256
      %v5266 = vadd.f32 %v5242, %v5260
      %5267 = vrot.lane.b32.xlu0 %v4946, 110
      %v5268 = vpop.permute.xlu0 %5267
      %5269 = vrot.lane.b32.xlu0 %v4952, 110
      %v5270 = vpop.permute.xlu0 %5269
      %5271 = vrot.lane.b32.xlu0 %v4948, 110
      %v5272 = vpop.permute.xlu0 %5271
      %5273 = vrot.lane.b32.xlu0 %v4954, 110
      %v5274 = vpop.permute.xlu0 %5273
      %5275 = vrot.lane.b32.xlu0 %v5105, 110
      %v5276 = vpop.permute.xlu0 %5275
      %5277 = vrot.lane.b32.xlu0 %v5110, 110
      %v5278 = vpop.permute.xlu0 %5277
      %v5279 = vsel %vm1174, %v5272, %v5276
      %v5280 = vsel %vm1174, %v5274, %v5278
      %v5281 = vsel %vm1174, %v5268, %v5272
      %v5282 = vsel %vm1174, %v5270, %v5274
      %v5283 = vsel %vm1174, %v5276, %v5268
      %v5284 = vsel %vm1174, %v5278, %v5270
      %v5285 = vadd.f32 %v5261, %v5281
      %v5286 = vadd.f32 %v5262, %v5279
      %v5287 = vadd.f32 %v5263, %v5283
      %v5288 = vadd.f32 %v5264, %v5282
      %v5289 = vadd.f32 %v5265, %v5280
      %v5290 = vadd.f32 %v5266, %v5284
      %5291 = vrot.lane.b32.xlu0 %v4958, 109
      %v5292 = vpop.permute.xlu0 %5291
      %5293 = vrot.lane.b32.xlu0 %v4964, 109
      %v5294 = vpop.permute.xlu0 %5293
      %5295 = vrot.lane.b32.xlu0 %v4960, 109
      %v5296 = vpop.permute.xlu0 %5295
      %5297 = vrot.lane.b32.xlu0 %v4966, 109
      %v5298 = vpop.permute.xlu0 %5297
      %5299 = vrot.lane.b32.xlu0 %v5115, 109
      %v5300 = vpop.permute.xlu0 %5299
      %5301 = vrot.lane.b32.xlu0 %v5120, 109
      %v5302 = vpop.permute.xlu0 %5301
      %v5303 = vsel %vm1199, %v5296, %v5300
      %v5304 = vsel %vm1199, %v5298, %v5302
      %v5305 = vsel %vm1199, %v5292, %v5296
      %v5306 = vsel %vm1199, %v5294, %v5298
      %v5307 = vsel %vm1199, %v5300, %v5292
      %v5308 = vsel %vm1199, %v5302, %v5294
      %v5309 = vadd.f32 %v5285, %v5305
      %v5310 = vadd.f32 %v5286, %v5303
      %v5311 = vadd.f32 %v5287, %v5307
      %v5312 = vadd.f32 %v5288, %v5306
      %v5313 = vadd.f32 %v5289, %v5304
      %v5314 = vadd.f32 %v5290, %v5308
      %v5315 = vld [vmem:[%s17] sm:$0xff]
      %v5316 = vld [vmem:[%s17 + $0x8] sm:$0xff]
      %5318 = vset.pattern.permute.xlu0 0
      %5319 = vperm.xlu0 %5318, %v5315
      %v5320 = vpop.permute.xlu0 %5319
      %5323 = vset.pattern.permute.xlu0 0
      %5324 = vperm.xlu0 %5323, %v5316
      %v5325 = vpop.permute.xlu0 %5324
      %v5327 = vadd.f32 %v5309, %v5320
      %v5328 = vadd.f32 %v5310, %v5320
      %v5329 = vadd.f32 %v5311, %v5320
      %v5330 = vadd.f32 %v5312, %v5325
      %v5331 = vadd.f32 %v5313, %v5325
      %v5332 = vadd.f32 %v5314, %v5325
      %vm5333 = vcmp.ge.f32.partialorder %v5327, 0.0
      %vm5334 = vcmp.ge.f32.partialorder %v5328, 0.0
      %vm5335 = vcmp.ge.f32.partialorder %v5329, 0.0
      %vm5336 = vcmp.ge.f32.partialorder %v5330, 0.0
      %vm5337 = vcmp.ge.f32.partialorder %v5331, 0.0
      %vm5338 = vcmp.ge.f32.partialorder %v5332, 0.0
      %v5339 = vmul.f32 %v1236, %v5327
      %v5340 = vmul.f32 %v1236, %v5328
      %v5341 = vmul.f32 %v1236, %v5329
      %v5342 = vmul.f32 %v1236, %v5330
      %v5343 = vmul.f32 %v1236, %v5331
      %v5344 = vmul.f32 %v1236, %v5332
      %v5345 = vsel %vm5333, %v5327, %v5339
      %v5346 = vsel %vm5334, %v5328, %v5340
      %v5347 = vsel %vm5335, %v5329, %v5341
      %v5348 = vsel %vm5336, %v5330, %v5342
      %v5349 = vsel %vm5337, %v5331, %v5343
      %v5350 = vsel %vm5338, %v5332, %v5344
      %v5351 = vmul.f32 %v1253, %v5345
      %v5352 = vmul.f32 %v1257, %v5346
      %v5353 = vmul.f32 %v1261, %v5347
      %v5354 = vmul.f32 %v1253, %v5348
      %v5355 = vmul.f32 %v1257, %v5349
      %v5356 = vmul.f32 %v1261, %v5350
      %vm5357 = vcmp.ge.f32.partialorder %v5351, 0.0
      %vm5358 = vcmp.ge.f32.partialorder %v5352, 0.0
      %vm5359 = vcmp.ge.f32.partialorder %v5353, 0.0
      %vm5360 = vcmp.ge.f32.partialorder %v5354, 0.0
      %vm5361 = vcmp.ge.f32.partialorder %v5355, 0.0
      %vm5362 = vcmp.ge.f32.partialorder %v5356, 0.0
      %v5363 = vmul.f32 %v1236, %v5351
      %v5364 = vmul.f32 %v1236, %v5352
      %v5365 = vmul.f32 %v1236, %v5353
      %v5366 = vmul.f32 %v1236, %v5354
      %v5367 = vmul.f32 %v1236, %v5355
      %v5368 = vmul.f32 %v1236, %v5356
      %v5369 = vsel %vm5357, %v5351, %v5363
      %v5370 = vsel %vm5358, %v5352, %v5364
      %v5371 = vsel %vm5359, %v5353, %v5365
      %v5372 = vsel %vm5360, %v5354, %v5366
      %v5373 = vsel %vm5361, %v5355, %v5367
      %v5374 = vsel %vm5362, %v5356, %v5368
      %5375 = vst [vmem:[%s603 + $0x120] sm:$0xff] %v5369
      %5376 = vst [vmem:[%s603 + $0x128] sm:$0xff] %v5370
      %5377 = vst [vmem:[%s603 + $0x130] sm:$0xff] %v5371
      %5378 = vst [vmem:[%s603 + $0x138] sm:$0xff] %v5372
      %5379 = vst [vmem:[%s603 + $0x140] sm:$0xff] %v5373
      %5380 = vst [vmem:[%s603 + $0x148] sm:$0xff] %v5374
      %v5381 = vld [vmem:[%s603] sm:$0xff]
      %v5382 = vld [vmem:[%s603 + $0x8] sm:$0xff]
      %v5383 = vld [vmem:[%s603 + $0x10] sm:$0xff]
      %v5384 = vld [vmem:[%s603 + $0x18] sm:$0xff]
      %v5385 = vld [vmem:[%s603 + $0x20] sm:$0xff]
      %v5386 = vld [vmem:[%s603 + $0x28] sm:$0xff]
      %v5387 = vld [vmem:[%s603 + $0x30] sm:$0xff]
      %v5388 = vld [vmem:[%s603 + $0x38] sm:$0xff]
      %v5389 = vld [vmem:[%s603 + $0x40] sm:$0xff]
      %v5390 = vld [vmem:[%s603 + $0x48] sm:$0xff]
      %v5391 = vld [vmem:[%s603 + $0x50] sm:$0xff]
      %v5392 = vld [vmem:[%s603 + $0x58] sm:$0xff]
      %v5393 = vld [vmem:[%s603 + $0x60] sm:$0xff]
      %v5394 = vld [vmem:[%s603 + $0x68] sm:$0xff]
      %v5395 = vld [vmem:[%s603 + $0x70] sm:$0xff]
      %v5396 = vld [vmem:[%s603 + $0x78] sm:$0xff]
      %v5397 = vld [vmem:[%s603 + $0x80] sm:$0xff]
      %v5398 = vld [vmem:[%s603 + $0x88] sm:$0xff]
      %v5399 = vld [vmem:[%s603 + $0x90] sm:$0xff]
      %v5400 = vld [vmem:[%s603 + $0x98] sm:$0xff]
      %v5401 = vld [vmem:[%s603 + $0xa0] sm:$0xff]
      %v5402 = vld [vmem:[%s603 + $0xa8] sm:$0xff]
      %v5403 = vld [vmem:[%s603 + $0xb0] sm:$0xff]
      %v5404 = vld [vmem:[%s603 + $0xb8] sm:$0xff]
      %v5405 = vld [vmem:[%s603 + $0xc0] sm:$0xff]
      %v5406 = vld [vmem:[%s603 + $0xc8] sm:$0xff]
      %v5407 = vld [vmem:[%s603 + $0xd0] sm:$0xff]
      %v5408 = vld [vmem:[%s603 + $0xd8] sm:$0xff]
      %v5409 = vld [vmem:[%s603 + $0xe0] sm:$0xff]
      %v5410 = vld [vmem:[%s603 + $0xe8] sm:$0xff]
      %v5411 = vld [vmem:[%s603 + $0xf0] sm:$0xff]
      %v5412 = vld [vmem:[%s603 + $0xf8] sm:$0xff]
      %v5413 = vld [vmem:[%s603 + $0x100] sm:$0xff]
      %v5414 = vld [vmem:[%s603 + $0x108] sm:$0xff]
      %v5415 = vld [vmem:[%s603 + $0x110] sm:$0xff]
      %v5416 = vld [vmem:[%s603 + $0x118] sm:$0xff]
      %v5417 = vld [vmem:[%s603 + $0x120] sm:$0xff]
      %v5418 = vld [vmem:[%s603 + $0x128] sm:$0xff]
      %v5419 = vld [vmem:[%s603 + $0x130] sm:$0xff]
      %v5420 = vld [vmem:[%s603 + $0x138] sm:$0xff]
      %v5421 = vld [vmem:[%s603 + $0x140] sm:$0xff]
      %v5422 = vld [vmem:[%s603 + $0x148] sm:$0xff]
      %v5423 = vld [vmem:[%s10] sm:$0xff]
      %v5424 = vld [vmem:[%s10 + $0x8] sm:$0xff]
      %v5425 = vld [vmem:[%s10 + $0x10] sm:$0xff]
      %v5426 = vld [vmem:[%s10 + $0x18] sm:$0xff]
      %v5427 = vld [vmem:[%s10 + $0x20] sm:$0xff]
      %v5428 = vld [vmem:[%s10 + $0x28] sm:$0xff]
      %v5429 = vld [vmem:[%s10 + $0x30] sm:$0xff]
      %v5430 = vld [vmem:[%s10 + $0x38] sm:$0xff]
      %v5431 = vld [vmem:[%s10 + $0x40] sm:$0xff]
      %v5432 = vld [vmem:[%s10 + $0x48] sm:$0xff]
      %v5433 = vld [vmem:[%s10 + $0x50] sm:$0xff]
      %v5434 = vld [vmem:[%s10 + $0x58] sm:$0xff]
      %v5435 = vld [vmem:[%s10 + $0x60] sm:$0xff]
      %v5436 = vld [vmem:[%s10 + $0x68] sm:$0xff]
      %v5437 = vld [vmem:[%s10 + $0x70] sm:$0xff]
      %v5438 = vld [vmem:[%s10 + $0x78] sm:$0xff]
      %v5439 = vld [vmem:[%s10 + $0x80] sm:$0xff]
      %v5440 = vld [vmem:[%s10 + $0x88] sm:$0xff]
      %vm5441 = vcmask 916480
      %v5443 = vsel %vm5441, %v5423, 0
      %v5446 = vsel %vm5441, %v5424, 0
      %v5449 = vsel %vm5441, %v5425, 0
      %v5452 = vsel %vm5441, %v5426, 0
      %v5455 = vsel %vm5441, %v5427, 0
      %v5458 = vsel %vm5441, %v5428, 0
      %v5461 = vsel %vm5441, %v5429, 0
      %v5464 = vsel %vm5441, %v5430, 0
      %v5467 = vsel %vm5441, %v5431, 0
      %v5470 = vsel %vm5441, %v5432, 0
      %v5473 = vsel %vm5441, %v5433, 0
      %v5476 = vsel %vm5441, %v5434, 0
      %v5479 = vsel %vm5441, %v5435, 0
      %v5482 = vsel %vm5441, %v5436, 0
      %v5485 = vsel %vm5441, %v5437, 0
      %v5488 = vsel %vm5441, %v5438, 0
      %v5491 = vsel %vm5441, %v5439, 0
      %v5494 = vsel %vm5441, %v5440, 0
      %5496 = vmatprep.subr.mxu0 %v5382
      %5497 = vmatpush1.msra.mxu0 %v5381
      %5498 = vmatprep.subr.mxu0 %v5385
      %5499 = vmatpush1.msra.mxu0 %v5384
      %5500 = vmatprep.subr.mxu0 %v5388
      %5501 = vmatpush1.msra.mxu0 %v5387
      %5502 = vmatprep.subr.mxu0 %v5391
      %5503 = vmatpush1.msra.mxu0 %v5390
      %5504 = vmatprep.subr.mxu0 %v5394
      %5505 = vmatpush1.msra.mxu0 %v5393
      %5506 = vmatprep.subr.mxu0 %v5397
      %5507 = vmatpush1.msra.mxu0 %v5396
      %5508 = vmatprep.subr.mxu0 %v5400
      %5509 = vmatpush1.msra.mxu0 %v5399
      %5510 = vmatprep.subr.mxu0 %v5403
      %5511 = vmatpush1.msra.mxu0 %v5402
      %5512 = vmatprep.subr.mxu0 %v5406
      %5513 = vmatpush1.msra.mxu0 %v5405
      %5514 = vmatprep.subr.mxu0 %v5409
      %5515 = vmatpush1.msra.mxu0 %v5408
      %5516 = vmatprep.subr.mxu0 %v5412
      %5517 = vmatpush1.msra.mxu0 %v5411
      %5518 = vmatprep.subr.mxu0 %v5415
      %5519 = vmatpush1.msra.mxu0 %v5414
      %5520 = vmatprep.subr.mxu0 %v5418
      %5521 = vmatpush1.msra.mxu0 %v5417
      %5522 = vmatprep.subr.mxu0 %v5421
      %5523 = vmatpush1.msra.mxu0 %v5420
      %5524 = vmatprep.subr.mxu0 0.0
      %5525 = vmatpush1.msra.mxu0 0.0
      %5526 = vmatprep.subr.mxu0 0.0
      %5527 = vmatpush1.msra.mxu0 0.0
      %5528 = vmatprep.subr.mxu0 0.0
      %5529 = vmatpush1.msra.mxu0 0.0
      %5530 = vmatprep.subr.mxu0 0.0
      %5531 = vmatpush1.msra.mxu0 0.0
      %5532 = vmatprep.subr.mxu0 0.0
      %5533 = vmatpush1.msra.mxu0 0.0
      %5534 = vmatprep.subr.mxu0 0.0
      %5535 = vmatpush1.msra.mxu0 0.0
      %5536 = vmatprep.subr.mxu0 0.0
      %5537 = vmatpush1.msra.mxu0 0.0
      %5538 = vmatprep.subr.mxu0 0.0
      %5539 = vmatpush1.msra.mxu0 0.0
      %5540 = vmatprep.subr.mxu0 0.0
      %5541 = vmatpush1.msra.mxu0 0.0
      %5542 = vmatprep.subr.mxu0 0.0
      %5543 = vmatpush1.msra.mxu0 0.0
      %5544 = vmatprep.subr.mxu0 0.0
      %5545 = vmatpush1.msra.mxu0 0.0
      %5546 = vmatprep.subr.mxu0 0.0
      %5547 = vmatpush1.msra.mxu0 0.0
      %5548 = vmatprep.subr.mxu0 0.0
      %5549 = vmatpush1.msra.mxu0 0.0
      %5550 = vmatprep.subr.mxu0 0.0
      %5551 = vmatpush1.msra.mxu0 0.0
      %5552 = vmatprep.subr.mxu0 0.0
      %5553 = vmatpush1.msra.mxu0 0.0
      %5554 = vmatprep.subr.mxu0 0.0
      %5555 = vmatpush1.msra.mxu0 0.0
      %5556 = vmatprep.subr.mxu0 0.0
      %5557 = vmatpush1.msra.mxu0 0.0
      %5558 = vmatprep.subr.mxu0 0.0
      %5559 = vmatpush1.msra.mxu0 0.0
      %5560 = vmatprep.mubr.f32.mxu0 0.0
      %5561 = vmatmul.mubr.f32.gmra.mrb[0].mxu0 %v5443
      %v5562 = vpop.f32.mrb[0].mxu0
      %v5563 = vadd.f32 0.0, %v5562
      %v5564 = vpop.f32.mrb[0].mxu0
      %v5565 = vadd.f32 0.0, %v5564
      %5566 = vmatprep.mubr.f32.mxu0 0.0
      %5567 = vmatmul.mubr.f32.gmra.mrb[0].mxu0 %v5446
      %v5568 = vpop.f32.mrb[0].mxu0
      %v5569 = vadd.f32 0.0, %v5568
      %v5570 = vpop.f32.mrb[0].mxu0
      %v5571 = vadd.f32 0.0, %v5570
      %5572 = vmatprep.mubr.f32.mxu0 0.0
      %5573 = vmatmul.mubr.f32.gmra.mrb[0].mxu0 %v5449
      %v5574 = vpop.f32.mrb[0].mxu0
      %v5575 = vadd.f32 0.0, %v5574
      %v5576 = vpop.f32.mrb[0].mxu0
      %v5577 = vadd.f32 0.0, %v5576
      %5578 = vmatprep.mubr.f32.mxu0 0.0
      %5579 = vmatmul.mubr.f32.gmra.mrb[0].mxu0 %v5452
      %v5580 = vpop.f32.mrb[0].mxu0
      %v5581 = vadd.f32 0.0, %v5580
      %v5582 = vpop.f32.mrb[0].mxu0
      %v5583 = vadd.f32 0.0, %v5582
      %5584 = vmatprep.mubr.f32.mxu0 0.0
      %5585 = vmatmul.mubr.f32.gmra.mrb[0].mxu0 %v5455
      %v5586 = vpop.f32.mrb[0].mxu0
      %v5587 = vadd.f32 0.0, %v5586
      %v5588 = vpop.f32.mrb[0].mxu0
      %v5589 = vadd.f32 0.0, %v5588
      %5590 = vmatprep.mubr.f32.mxu0 0.0
      %5591 = vmatmul.mubr.f32.gmra.mrb[0].mxu0 %v5458
      %v5592 = vpop.f32.mrb[0].mxu0
      %v5593 = vadd.f32 0.0, %v5592
      %v5594 = vpop.f32.mrb[0].mxu0
      %v5595 = vadd.f32 0.0, %v5594
      %5596 = vmatprep.mubr.f32.mxu0 0.0
      %5597 = vmatmul.mubr.f32.gmra.mrb[0].mxu0 %v5461
      %v5598 = vpop.f32.mrb[0].mxu0
      %v5599 = vadd.f32 0.0, %v5598
      %v5600 = vpop.f32.mrb[0].mxu0
      %v5601 = vadd.f32 0.0, %v5600
      %5602 = vmatprep.mubr.f32.mxu0 0.0
      %5603 = vmatmul.mubr.f32.gmra.mrb[0].mxu0 %v5464
      %v5604 = vpop.f32.mrb[0].mxu0
      %v5605 = vadd.f32 0.0, %v5604
      %v5606 = vpop.f32.mrb[0].mxu0
      %v5607 = vadd.f32 0.0, %v5606
      %5608 = vmatprep.mubr.f32.mxu0 0.0
      %5609 = vmatmul.mubr.f32.gmra.mrb[0].mxu0 %v5467
      %v5610 = vpop.f32.mrb[0].mxu0
      %v5611 = vadd.f32 0.0, %v5610
      %v5612 = vpop.f32.mrb[0].mxu0
      %v5613 = vadd.f32 0.0, %v5612
      %5614 = vmatprep.mubr.f32.mxu0 0.0
      %5615 = vmatmul.mubr.f32.gmra.mrb[0].mxu0 %v5470
      %v5616 = vpop.f32.mrb[0].mxu0
      %v5617 = vadd.f32 0.0, %v5616
      %v5618 = vpop.f32.mrb[0].mxu0
      %v5619 = vadd.f32 0.0, %v5618
      %5620 = vmatprep.mubr.f32.mxu0 0.0
      %5621 = vmatmul.mubr.f32.gmra.mrb[0].mxu0 %v5473
      %v5622 = vpop.f32.mrb[0].mxu0
      %v5623 = vadd.f32 0.0, %v5622
      %v5624 = vpop.f32.mrb[0].mxu0
      %v5625 = vadd.f32 0.0, %v5624
      %5626 = vmatprep.mubr.f32.mxu0 0.0
      %5627 = vmatmul.mubr.f32.gmra.mrb[0].mxu0 %v5476
      %v5628 = vpop.f32.mrb[0].mxu0
      %v5629 = vadd.f32 0.0, %v5628
      %v5630 = vpop.f32.mrb[0].mxu0
      %v5631 = vadd.f32 0.0, %v5630
      %5632 = vmatprep.mubr.f32.mxu0 0.0
      %5633 = vmatmul.mubr.f32.gmra.mrb[0].mxu0 %v5479
      %v5634 = vpop.f32.mrb[0].mxu0
      %v5635 = vadd.f32 0.0, %v5634
      %v5636 = vpop.f32.mrb[0].mxu0
      %v5637 = vadd.f32 0.0, %v5636
      %5638 = vmatprep.mubr.f32.mxu0 0.0
      %5639 = vmatmul.mubr.f32.gmra.mrb[0].mxu0 %v5482
      %v5640 = vpop.f32.mrb[0].mxu0
      %v5641 = vadd.f32 0.0, %v5640
      %v5642 = vpop.f32.mrb[0].mxu0
      %v5643 = vadd.f32 0.0, %v5642
      %5644 = vmatprep.mubr.f32.mxu0 0.0
      %5645 = vmatmul.mubr.f32.gmra.mrb[0].mxu0 %v5485
      %v5646 = vpop.f32.mrb[0].mxu0
      %v5647 = vadd.f32 0.0, %v5646
      %v5648 = vpop.f32.mrb[0].mxu0
      %v5649 = vadd.f32 0.0, %v5648
      %5650 = vmatprep.mubr.f32.mxu0 0.0
      %5651 = vmatmul.mubr.f32.gmra.mrb[0].mxu0 %v5488
      %v5652 = vpop.f32.mrb[0].mxu0
      %v5653 = vadd.f32 0.0, %v5652
      %v5654 = vpop.f32.mrb[0].mxu0
      %v5655 = vadd.f32 0.0, %v5654
      %5656 = vmatprep.mubr.f32.mxu0 0.0
      %5657 = vmatmul.mubr.f32.gmra.mrb[0].mxu0 %v5491
      %v5658 = vpop.f32.mrb[0].mxu0
      %v5659 = vadd.f32 0.0, %v5658
      %v5660 = vpop.f32.mrb[0].mxu0
      %v5661 = vadd.f32 0.0, %v5660
      %5662 = vmatprep.mubr.f32.mxu0 0.0
      %5663 = vmatmul.mubr.f32.gmra.mrb[0].mxu0 %v5494
      %v5664 = vpop.f32.mrb[0].mxu0
      %v5665 = vadd.f32 0.0, %v5664
      %v5666 = vpop.f32.mrb[0].mxu0
      %v5667 = vadd.f32 0.0, %v5666
      %5668 = vdwg.mxu0
      %5669 = vmatprep.subr.mxu0 0.0
      %5670 = vmatpush1.msra.mxu0 %v5383
      %5671 = vmatprep.subr.mxu0 0.0
      %5672 = vmatpush1.msra.mxu0 %v5386
      %5673 = vmatprep.subr.mxu0 0.0
      %5674 = vmatpush1.msra.mxu0 %v5389
      %5675 = vmatprep.subr.mxu0 0.0
      %5676 = vmatpush1.msra.mxu0 %v5392
      %5677 = vmatprep.subr.mxu0 0.0
      %5678 = vmatpush1.msra.mxu0 %v5395
      %5679 = vmatprep.subr.mxu0 0.0
      %5680 = vmatpush1.msra.mxu0 %v5398
      %5681 = vmatprep.subr.mxu0 0.0
      %5682 = vmatpush1.msra.mxu0 %v5401
      %5683 = vmatprep.subr.mxu0 0.0
      %5684 = vmatpush1.msra.mxu0 %v5404
      %5685 = vmatprep.subr.mxu0 0.0
      %5686 = vmatpush1.msra.mxu0 %v5407
      %5687 = vmatprep.subr.mxu0 0.0
      %5688 = vmatpush1.msra.mxu0 %v5410
      %5689 = vmatprep.subr.mxu0 0.0
      %5690 = vmatpush1.msra.mxu0 %v5413
      %5691 = vmatprep.subr.mxu0 0.0
      %5692 = vmatpush1.msra.mxu0 %v5416
      %5693 = vmatprep.subr.mxu0 0.0
      %5694 = vmatpush1.msra.mxu0 %v5419
      %5695 = vmatprep.subr.mxu0 0.0
      %5696 = vmatpush1.msra.mxu0 %v5422
      %5697 = vmatprep.subr.mxu0 0.0
      %5698 = vmatpush1.msra.mxu0 0.0
      %5699 = vmatprep.subr.mxu0 0.0
      %5700 = vmatpush1.msra.mxu0 0.0
      %5701 = vmatprep.subr.mxu0 0.0
      %5702 = vmatpush1.msra.mxu0 0.0
      %5703 = vmatprep.subr.mxu0 0.0
      %5704 = vmatpush1.msra.mxu0 0.0
      %5705 = vmatprep.subr.mxu0 0.0
      %5706 = vmatpush1.msra.mxu0 0.0
      %5707 = vmatprep.subr.mxu0 0.0
      %5708 = vmatpush1.msra.mxu0 0.0
      %5709 = vmatprep.subr.mxu0 0.0
      %5710 = vmatpush1.msra.mxu0 0.0
      %5711 = vmatprep.subr.mxu0 0.0
      %5712 = vmatpush1.msra.mxu0 0.0
      %5713 = vmatprep.subr.mxu0 0.0
      %5714 = vmatpush1.msra.mxu0 0.0
      %5715 = vmatprep.subr.mxu0 0.0
      %5716 = vmatpush1.msra.mxu0 0.0
      %5717 = vmatprep.subr.mxu0 0.0
      %5718 = vmatpush1.msra.mxu0 0.0
      %5719 = vmatprep.subr.mxu0 0.0
      %5720 = vmatpush1.msra.mxu0 0.0
      %5721 = vmatprep.subr.mxu0 0.0
      %5722 = vmatpush1.msra.mxu0 0.0
      %5723 = vmatprep.subr.mxu0 0.0
      %5724 = vmatpush1.msra.mxu0 0.0
      %5725 = vmatprep.subr.mxu0 0.0
      %5726 = vmatpush1.msra.mxu0 0.0
      %5727 = vmatprep.subr.mxu0 0.0
      %5728 = vmatpush1.msra.mxu0 0.0
      %5729 = vmatprep.subr.mxu0 0.0
      %5730 = vmatpush1.msra.mxu0 0.0
      %5731 = vmatprep.subr.mxu0 0.0
      %5732 = vmatpush1.msra.mxu0 0.0
      %5733 = vmatprep.mubr.f32.mxu0 0.0
      %5734 = vmatmul.mubr.f32.gmra.mrb[0].mxu0 %v5443
      %v5735 = vpop.f32.mrb[0].mxu0
      %v5736 = vadd.f32 0.0, %v5735
      %v5737 = vpop.f32.mrb[0].mxu0
      %5738 = vmatprep.mubr.f32.mxu0 0.0
      %5739 = vmatmul.mubr.f32.gmra.mrb[0].mxu0 %v5446
      %v5740 = vpop.f32.mrb[0].mxu0
      %v5741 = vadd.f32 0.0, %v5740
      %v5742 = vpop.f32.mrb[0].mxu0
      %5743 = vmatprep.mubr.f32.mxu0 0.0
      %5744 = vmatmul.mubr.f32.gmra.mrb[0].mxu0 %v5449
      %v5745 = vpop.f32.mrb[0].mxu0
      %v5746 = vadd.f32 0.0, %v5745
      %v5747 = vpop.f32.mrb[0].mxu0
      %5748 = vmatprep.mubr.f32.mxu0 0.0
      %5749 = vmatmul.mubr.f32.gmra.mrb[0].mxu0 %v5452
      %v5750 = vpop.f32.mrb[0].mxu0
      %v5751 = vadd.f32 0.0, %v5750
      %v5752 = vpop.f32.mrb[0].mxu0
      %5753 = vmatprep.mubr.f32.mxu0 0.0
      %5754 = vmatmul.mubr.f32.gmra.mrb[0].mxu0 %v5455
      %v5755 = vpop.f32.mrb[0].mxu0
      %v5756 = vadd.f32 0.0, %v5755
      %v5757 = vpop.f32.mrb[0].mxu0
      %5758 = vmatprep.mubr.f32.mxu0 0.0
      %5759 = vmatmul.mubr.f32.gmra.mrb[0].mxu0 %v5458
      %v5760 = vpop.f32.mrb[0].mxu0
      %v5761 = vadd.f32 0.0, %v5760
      %v5762 = vpop.f32.mrb[0].mxu0
      %5763 = vmatprep.mubr.f32.mxu0 0.0
      %5764 = vmatmul.mubr.f32.gmra.mrb[0].mxu0 %v5461
      %v5765 = vpop.f32.mrb[0].mxu0
      %v5766 = vadd.f32 0.0, %v5765
      %v5767 = vpop.f32.mrb[0].mxu0
      %5768 = vmatprep.mubr.f32.mxu0 0.0
      %5769 = vmatmul.mubr.f32.gmra.mrb[0].mxu0 %v5464
      %v5770 = vpop.f32.mrb[0].mxu0
      %v5771 = vadd.f32 0.0, %v5770
      %v5772 = vpop.f32.mrb[0].mxu0
      %5773 = vmatprep.mubr.f32.mxu0 0.0
      %5774 = vmatmul.mubr.f32.gmra.mrb[0].mxu0 %v5467
      %v5775 = vpop.f32.mrb[0].mxu0
      %v5776 = vadd.f32 0.0, %v5775
      %v5777 = vpop.f32.mrb[0].mxu0
      %5778 = vmatprep.mubr.f32.mxu0 0.0
      %5779 = vmatmul.mubr.f32.gmra.mrb[0].mxu0 %v5470
      %v5780 = vpop.f32.mrb[0].mxu0
      %v5781 = vadd.f32 0.0, %v5780
      %v5782 = vpop.f32.mrb[0].mxu0
      %5783 = vmatprep.mubr.f32.mxu0 0.0
      %5784 = vmatmul.mubr.f32.gmra.mrb[0].mxu0 %v5473
      %v5785 = vpop.f32.mrb[0].mxu0
      %v5786 = vadd.f32 0.0, %v5785
      %v5787 = vpop.f32.mrb[0].mxu0
      %5788 = vmatprep.mubr.f32.mxu0 0.0
      %5789 = vmatmul.mubr.f32.gmra.mrb[0].mxu0 %v5476
      %v5790 = vpop.f32.mrb[0].mxu0
      %v5791 = vadd.f32 0.0, %v5790
      %v5792 = vpop.f32.mrb[0].mxu0
      %5793 = vmatprep.mubr.f32.mxu0 0.0
      %5794 = vmatmul.mubr.f32.gmra.mrb[0].mxu0 %v5479
      %v5795 = vpop.f32.mrb[0].mxu0
      %v5796 = vadd.f32 0.0, %v5795
      %v5797 = vpop.f32.mrb[0].mxu0
      %5798 = vmatprep.mubr.f32.mxu0 0.0
      %5799 = vmatmul.mubr.f32.gmra.mrb[0].mxu0 %v5482
      %v5800 = vpop.f32.mrb[0].mxu0
      %v5801 = vadd.f32 0.0, %v5800
      %v5802 = vpop.f32.mrb[0].mxu0
      %5803 = vmatprep.mubr.f32.mxu0 0.0
      %5804 = vmatmul.mubr.f32.gmra.mrb[0].mxu0 %v5485
      %v5805 = vpop.f32.mrb[0].mxu0
      %v5806 = vadd.f32 0.0, %v5805
      %v5807 = vpop.f32.mrb[0].mxu0
      %5808 = vmatprep.mubr.f32.mxu0 0.0
      %5809 = vmatmul.mubr.f32.gmra.mrb[0].mxu0 %v5488
      %v5810 = vpop.f32.mrb[0].mxu0
      %v5811 = vadd.f32 0.0, %v5810
      %v5812 = vpop.f32.mrb[0].mxu0
      %5813 = vmatprep.mubr.f32.mxu0 0.0
      %5814 = vmatmul.mubr.f32.gmra.mrb[0].mxu0 %v5491
      %v5815 = vpop.f32.mrb[0].mxu0
      %v5816 = vadd.f32 0.0, %v5815
      %v5817 = vpop.f32.mrb[0].mxu0
      %5818 = vmatprep.mubr.f32.mxu0 0.0
      %5819 = vmatmul.mubr.f32.gmra.mrb[0].mxu0 %v5494
      %v5820 = vpop.f32.mrb[0].mxu0
      %v5821 = vadd.f32 0.0, %v5820
      %v5822 = vpop.f32.mrb[0].mxu0
      %5823 = vdwg.mxu0
      %5824 = vrot.lane.b32.xlu0 %v5563, 19
      %v5825 = vpop.permute.xlu0 %5824
      %5826 = vrot.lane.b32.xlu0 %v5569, 19
      %v5827 = vpop.permute.xlu0 %5826
      %5828 = vrot.lane.b32.xlu0 %v5565, 19
      %v5829 = vpop.permute.xlu0 %5828
      %5830 = vrot.lane.b32.xlu0 %v5571, 19
      %v5831 = vpop.permute.xlu0 %5830
      %5832 = vrot.lane.b32.xlu0 %v5736, 19
      %v5833 = vpop.permute.xlu0 %5832
      %5834 = vrot.lane.b32.xlu0 %v5741, 19
      %v5835 = vpop.permute.xlu0 %5834
      %v5836 = vsel %vm1024, %v5829, %v5833
      %v5837 = vsel %vm1024, %v5831, %v5835
      %v5838 = vsel %vm1024, %v5825, %v5829
      %v5839 = vsel %vm1024, %v5827, %v5831
      %v5840 = vsel %vm1024, %v5833, %v5825
      %v5841 = vsel %vm1024, %v5835, %v5827
      %v5842 = vadd.f32 %v5611, %v5840
      %v5843 = vadd.f32 %v5613, %v5838
      %v5844 = vadd.f32 %v5776, %v5836
      %v5845 = vadd.f32 %v5617, %v5841
      %v5846 = vadd.f32 %v5619, %v5839
      %v5847 = vadd.f32 %v5781, %v5837
      %5848 = vrot.lane.b32.xlu0 %v5575, 18
      %v5849 = vpop.permute.xlu0 %5848
      %5850 = vrot.lane.b32.xlu0 %v5581, 18
      %v5851 = vpop.permute.xlu0 %5850
      %5852 = vrot.lane.b32.xlu0 %v5577, 18
      %v5853 = vpop.permute.xlu0 %5852
      %5854 = vrot.lane.b32.xlu0 %v5583, 18
      %v5855 = vpop.permute.xlu0 %5854
      %5856 = vrot.lane.b32.xlu0 %v5746, 18
      %v5857 = vpop.permute.xlu0 %5856
      %5858 = vrot.lane.b32.xlu0 %v5751, 18
      %v5859 = vpop.permute.xlu0 %5858
      %v5860 = vsel %vm1049, %v5853, %v5857
      %v5861 = vsel %vm1049, %v5855, %v5859
      %v5862 = vsel %vm1049, %v5849, %v5853
      %v5863 = vsel %vm1049, %v5851, %v5855
      %v5864 = vsel %vm1049, %v5857, %v5849
      %v5865 = vsel %vm1049, %v5859, %v5851
      %v5866 = vadd.f32 %v5842, %v5864
      %v5867 = vadd.f32 %v5843, %v5862
      %v5868 = vadd.f32 %v5844, %v5860
      %v5869 = vadd.f32 %v5845, %v5865
      %v5870 = vadd.f32 %v5846, %v5863
      %v5871 = vadd.f32 %v5847, %v5861
      %5872 = vrot.lane.b32.xlu0 %v5587, 17
      %v5873 = vpop.permute.xlu0 %5872
      %5874 = vrot.lane.b32.xlu0 %v5593, 17
      %v5875 = vpop.permute.xlu0 %5874
      %5876 = vrot.lane.b32.xlu0 %v5589, 17
      %v5877 = vpop.permute.xlu0 %5876
      %5878 = vrot.lane.b32.xlu0 %v5595, 17
      %v5879 = vpop.permute.xlu0 %5878
      %5880 = vrot.lane.b32.xlu0 %v5756, 17
      %v5881 = vpop.permute.xlu0 %5880
      %5882 = vrot.lane.b32.xlu0 %v5761, 17
      %v5883 = vpop.permute.xlu0 %5882
      %v5884 = vsel %vm1074, %v5877, %v5881
      %v5885 = vsel %vm1074, %v5879, %v5883
      %v5886 = vsel %vm1074, %v5873, %v5877
      %v5887 = vsel %vm1074, %v5875, %v5879
      %v5888 = vsel %vm1074, %v5881, %v5873
      %v5889 = vsel %vm1074, %v5883, %v5875
      %v5890 = vadd.f32 %v5866, %v5888
      %v5891 = vadd.f32 %v5867, %v5886
      %v5892 = vadd.f32 %v5868, %v5884
      %v5893 = vadd.f32 %v5869, %v5889
      %v5894 = vadd.f32 %v5870, %v5887
      %v5895 = vadd.f32 %v5871, %v5885
      %5896 = vrot.lane.b32.xlu0 %v5599, 1
      %v5897 = vpop.permute.xlu0 %5896
      %5898 = vrot.lane.b32.xlu0 %v5605, 1
      %v5899 = vpop.permute.xlu0 %5898
      %5900 = vrot.lane.b32.xlu0 %v5601, 1
      %v5901 = vpop.permute.xlu0 %5900
      %5902 = vrot.lane.b32.xlu0 %v5607, 1
      %v5903 = vpop.permute.xlu0 %5902
      %5904 = vrot.lane.b32.xlu0 %v5766, 1
      %v5905 = vpop.permute.xlu0 %5904
      %5906 = vrot.lane.b32.xlu0 %v5771, 1
      %v5907 = vpop.permute.xlu0 %5906
      %v5908 = vsel %vm1099, %v5901, %v5905
      %v5909 = vsel %vm1099, %v5903, %v5907
      %v5910 = vsel %vm1099, %v5897, %v5901
      %v5911 = vsel %vm1099, %v5899, %v5903
      %v5912 = vsel %vm1099, %v5905, %v5897
      %v5913 = vsel %vm1099, %v5907, %v5899
      %v5914 = vadd.f32 %v5890, %v5912
      %v5915 = vadd.f32 %v5891, %v5910
      %v5916 = vadd.f32 %v5892, %v5908
      %v5917 = vadd.f32 %v5893, %v5913
      %v5918 = vadd.f32 %v5894, %v5911
      %v5919 = vadd.f32 %v5895, %v5909
      %5920 = vrot.lane.b32.xlu0 %v5623, 127
      %v5921 = vpop.permute.xlu0 %5920
      %5922 = vrot.lane.b32.xlu0 %v5629, 127
      %v5923 = vpop.permute.xlu0 %5922
      %5924 = vrot.lane.b32.xlu0 %v5625, 127
      %v5925 = vpop.permute.xlu0 %5924
      %5926 = vrot.lane.b32.xlu0 %v5631, 127
      %v5927 = vpop.permute.xlu0 %5926
      %5928 = vrot.lane.b32.xlu0 %v5786, 127
      %v5929 = vpop.permute.xlu0 %5928
      %5930 = vrot.lane.b32.xlu0 %v5791, 127
      %v5931 = vpop.permute.xlu0 %5930
      %v5932 = vsel %vm1124, %v5925, %v5929
      %v5933 = vsel %vm1124, %v5927, %v5931
      %v5934 = vsel %vm1124, %v5921, %v5925
      %v5935 = vsel %vm1124, %v5923, %v5927
      %v5936 = vsel %vm1124, %v5929, %v5921
      %v5937 = vsel %vm1124, %v5931, %v5923
      %v5938 = vadd.f32 %v5914, %v5934
      %v5939 = vadd.f32 %v5915, %v5932
      %v5940 = vadd.f32 %v5916, %v5936
      %v5941 = vadd.f32 %v5917, %v5935
      %v5942 = vadd.f32 %v5918, %v5933
      %v5943 = vadd.f32 %v5919, %v5937
      %5944 = vrot.lane.b32.xlu0 %v5635, 111
      %v5945 = vpop.permute.xlu0 %5944
      %5946 = vrot.lane.b32.xlu0 %v5641, 111
      %v5947 = vpop.permute.xlu0 %5946
      %5948 = vrot.lane.b32.xlu0 %v5637, 111
      %v5949 = vpop.permute.xlu0 %5948
      %5950 = vrot.lane.b32.xlu0 %v5643, 111
      %v5951 = vpop.permute.xlu0 %5950
      %5952 = vrot.lane.b32.xlu0 %v5796, 111
      %v5953 = vpop.permute.xlu0 %5952
      %5954 = vrot.lane.b32.xlu0 %v5801, 111
      %v5955 = vpop.permute.xlu0 %5954
      %v5956 = vsel %vm1149, %v5949, %v5953
      %v5957 = vsel %vm1149, %v5951, %v5955
      %v5958 = vsel %vm1149, %v5945, %v5949
      %v5959 = vsel %vm1149, %v5947, %v5951
      %v5960 = vsel %vm1149, %v5953, %v5945
      %v5961 = vsel %vm1149, %v5955, %v5947
      %v5962 = vadd.f32 %v5938, %v5958
      %v5963 = vadd.f32 %v5939, %v5956
      %v5964 = vadd.f32 %v5940, %v5960
      %v5965 = vadd.f32 %v5941, %v5959
      %v5966 = vadd.f32 %v5942, %v5957
      %v5967 = vadd.f32 %v5943, %v5961
      %5968 = vrot.lane.b32.xlu0 %v5647, 110
      %v5969 = vpop.permute.xlu0 %5968
      %5970 = vrot.lane.b32.xlu0 %v5653, 110
      %v5971 = vpop.permute.xlu0 %5970
      %5972 = vrot.lane.b32.xlu0 %v5649, 110
      %v5973 = vpop.permute.xlu0 %5972
      %5974 = vrot.lane.b32.xlu0 %v5655, 110
      %v5975 = vpop.permute.xlu0 %5974
      %5976 = vrot.lane.b32.xlu0 %v5806, 110
      %v5977 = vpop.permute.xlu0 %5976
      %5978 = vrot.lane.b32.xlu0 %v5811, 110
      %v5979 = vpop.permute.xlu0 %5978
      %v5980 = vsel %vm1174, %v5973, %v5977
      %v5981 = vsel %vm1174, %v5975, %v5979
      %v5982 = vsel %vm1174, %v5969, %v5973
      %v5983 = vsel %vm1174, %v5971, %v5975
      %v5984 = vsel %vm1174, %v5977, %v5969
      %v5985 = vsel %vm1174, %v5979, %v5971
      %v5986 = vadd.f32 %v5962, %v5982
      %v5987 = vadd.f32 %v5963, %v5980
      %v5988 = vadd.f32 %v5964, %v5984
      %v5989 = vadd.f32 %v5965, %v5983
      %v5990 = vadd.f32 %v5966, %v5981
      %v5991 = vadd.f32 %v5967, %v5985
      %5992 = vrot.lane.b32.xlu0 %v5659, 109
      %v5993 = vpop.permute.xlu0 %5992
      %5994 = vrot.lane.b32.xlu0 %v5665, 109
      %v5995 = vpop.permute.xlu0 %5994
      %5996 = vrot.lane.b32.xlu0 %v5661, 109
      %v5997 = vpop.permute.xlu0 %5996
      %5998 = vrot.lane.b32.xlu0 %v5667, 109
      %v5999 = vpop.permute.xlu0 %5998
      %6000 = vrot.lane.b32.xlu0 %v5816, 109
      %v6001 = vpop.permute.xlu0 %6000
      %6002 = vrot.lane.b32.xlu0 %v5821, 109
      %v6003 = vpop.permute.xlu0 %6002
      %v6004 = vsel %vm1199, %v5997, %v6001
      %v6005 = vsel %vm1199, %v5999, %v6003
      %v6006 = vsel %vm1199, %v5993, %v5997
      %v6007 = vsel %vm1199, %v5995, %v5999
      %v6008 = vsel %vm1199, %v6001, %v5993
      %v6009 = vsel %vm1199, %v6003, %v5995
      %v6010 = vadd.f32 %v5986, %v6006
      %v6011 = vadd.f32 %v5987, %v6004
      %v6012 = vadd.f32 %v5988, %v6008
      %v6013 = vadd.f32 %v5989, %v6007
      %v6014 = vadd.f32 %v5990, %v6005
      %v6015 = vadd.f32 %v5991, %v6009
      %v6016 = vld [vmem:[%s18] sm:$0xff]
      %v6017 = vld [vmem:[%s18 + $0x8] sm:$0xff]
      %6019 = vset.pattern.permute.xlu0 0
      %6020 = vperm.xlu0 %6019, %v6016
      %v6021 = vpop.permute.xlu0 %6020
      %6024 = vset.pattern.permute.xlu0 0
      %6025 = vperm.xlu0 %6024, %v6017
      %v6026 = vpop.permute.xlu0 %6025
      %v6028 = vadd.f32 %v6010, %v6021
      %v6029 = vadd.f32 %v6011, %v6021
      %v6030 = vadd.f32 %v6012, %v6021
      %v6031 = vadd.f32 %v6013, %v6026
      %v6032 = vadd.f32 %v6014, %v6026
      %v6033 = vadd.f32 %v6015, %v6026
      %vm6034 = vcmp.ge.f32.partialorder %v6028, 0.0
      %vm6035 = vcmp.ge.f32.partialorder %v6029, 0.0
      %vm6036 = vcmp.ge.f32.partialorder %v6030, 0.0
      %vm6037 = vcmp.ge.f32.partialorder %v6031, 0.0
      %vm6038 = vcmp.ge.f32.partialorder %v6032, 0.0
      %vm6039 = vcmp.ge.f32.partialorder %v6033, 0.0
      %v6040 = vmul.f32 %v1236, %v6028
      %v6041 = vmul.f32 %v1236, %v6029
      %v6042 = vmul.f32 %v1236, %v6030
      %v6043 = vmul.f32 %v1236, %v6031
      %v6044 = vmul.f32 %v1236, %v6032
      %v6045 = vmul.f32 %v1236, %v6033
      %v6046 = vsel %vm6034, %v6028, %v6040
      %v6047 = vsel %vm6035, %v6029, %v6041
      %v6048 = vsel %vm6036, %v6030, %v6042
      %v6049 = vsel %vm6037, %v6031, %v6043
      %v6050 = vsel %vm6038, %v6032, %v6044
      %v6051 = vsel %vm6039, %v6033, %v6045
      %v6052 = vmul.f32 %v1253, %v6046
      %v6053 = vmul.f32 %v1257, %v6047
      %v6054 = vmul.f32 %v1261, %v6048
      %v6055 = vmul.f32 %v1253, %v6049
      %v6056 = vmul.f32 %v1257, %v6050
      %v6057 = vmul.f32 %v1261, %v6051
      %vm6058 = vcmp.ge.f32.partialorder %v6052, 0.0
      %vm6059 = vcmp.ge.f32.partialorder %v6053, 0.0
      %vm6060 = vcmp.ge.f32.partialorder %v6054, 0.0
      %vm6061 = vcmp.ge.f32.partialorder %v6055, 0.0
      %vm6062 = vcmp.ge.f32.partialorder %v6056, 0.0
      %vm6063 = vcmp.ge.f32.partialorder %v6057, 0.0
      %v6064 = vmul.f32 %v1236, %v6052
      %v6065 = vmul.f32 %v1236, %v6053
      %v6066 = vmul.f32 %v1236, %v6054
      %v6067 = vmul.f32 %v1236, %v6055
      %v6068 = vmul.f32 %v1236, %v6056
      %v6069 = vmul.f32 %v1236, %v6057
      %v6070 = vsel %vm6058, %v6052, %v6064
      %v6071 = vsel %vm6059, %v6053, %v6065
      %v6072 = vsel %vm6060, %v6054, %v6066
      %v6073 = vsel %vm6061, %v6055, %v6067
      %v6074 = vsel %vm6062, %v6056, %v6068
      %v6075 = vsel %vm6063, %v6057, %v6069
      %6076 = vst [vmem:[%s603 + $0x150] sm:$0xff] %v6070
      %6077 = vst [vmem:[%s603 + $0x158] sm:$0xff] %v6071
      %6078 = vst [vmem:[%s603 + $0x160] sm:$0xff] %v6072
      %6079 = vst [vmem:[%s603 + $0x168] sm:$0xff] %v6073
      %6080 = vst [vmem:[%s603 + $0x170] sm:$0xff] %v6074
      %6081 = vst [vmem:[%s603 + $0x178] sm:$0xff] %v6075
      %p6082 = scmp.lt.s32.totalorder %s31, 1
      %s6083 = scalar_select %p6082, %s31, 1
      %s6084 = smul.addr %s6083, 48
      %s6085 = smul.addr %s6084, 8
      %s6086 = scalar_lea.vmem %s19, %s6085
      // Predicated region
      $region97: #{dense_block_forward.1} parent=95 // pred_check
        %p6087 = pneg %p453
      $region98: #{dense_block_forward.1} parent=95 // pred_check_branch
        %6089 = sbr.rel (%p6087) target = $region100
      $region99: #{dense_block_forward.1} parent=95 // pred_region
        _
      $region100: #{dense_block_forward.1} parent=95 // pred_fallthru
        _
    $region96: #{dense_block_forward.1} parent=5 // pred_fallthru
      _
    %p6090 = scmp.le.s32.totalorder 2, %s26
    // Predicated region
    $region101: #{dense_block_forward.1} parent=5 // pred_check
      %p6091 = pneg %p6090
    $region102: #{dense_block_forward.1} parent=5 // pred_check_branch
      %6093 = sbr.rel (%p6091) target = $region104
    $region103: #{dense_block_forward.1} parent=5 // pred_region
      %s6094 = ssub.s32 %s26, 2
      // Predicated region
      $region105: #{dense_block_forward.1} parent=103 // pred_check
        %p6095 = pneg %p459
      $region106: #{dense_block_forward.1} parent=103 // pred_check_branch
        %6097 = sbr.rel (%p6095) target = $region108
      $region107: #{dense_block_forward.1} parent=103 // pred_region
        %p6098 = scmp.lt.s32.totalorder %s32, 1
        %s6099 = scalar_select %p6098, %s32, 1
        %s6100 = smul.addr %s6099, 48
        %s6101 = smul.addr %s6100, 8
        %s6102 = scalar_lea.vmem %s19, %s6101
      $region108: #{dense_block_forward.1} parent=103 // pred_fallthru
        _
    $region104: #{dense_block_forward.1} parent=5 // pred_fallthru
      _
  $region6: #{dense_block_forward.1} parent=0 // loop_footer
    %s30 = sadd.s32 1, %s26
  $region7: #{dense_block_forward.1} parent=0 // loop_footer_branch
    %25 = sbr.rel target = $region3
  $region8: #{dense_block_forward.1} parent=0 // loop_exit
    _

</llo_original>
